<compile_context>
chip_gen: v7x
topology: tpu7x:2x2x1
jax: 0.10.0
libtpu: 0.0.40
codegen_flags: <defaults>
</compile_context>

<pallas_src>
import jax
import jax.numpy as jnp
from jax.experimental import pallas as pl
from jax.experimental.pallas import tpu as pltpu

LEAKY_SLOPE = 0.2
BN_EPS = 1e-5
K_NN = 20
NEG = -1.0e30  # mask value for already-selected neighbors

_PARALLEL = pltpu.CompilerParams(dimension_semantics=("parallel",))


# ------------------------------------------------------------------
# Fused kernel: 4x edge-conv (in-kernel knn + gather + BN + LeakyReLU + max-K)
#               + conv5 head + residual tanh offset + 8-view Projection
# ------------------------------------------------------------------
def _refine_fused_kernel(pc_ref,
                         wd1_ref, wc1_ref, b1_ref,
                         wd2_ref, wc2_ref, b2_ref,
                         wd3_ref, wc3_ref, b3_ref,
                         wd4_ref, wc4_ref, b4_ref,
                         hw1_ref, hb1_ref, hw2_ref, hb2_ref, hw3_ref, hb3_ref,
                         a_ref, pb_ref,
                         res_ref, proj_ref,
                         e_ref, gmax_ref, yb_ref, feat_ref):
    f32 = jnp.float32
    bf16 = jnp.bfloat16
    n = e_ref.shape[0]

    def store_rank_matrix(xb, xf):
        # e[j, i] = 2*<x_i, x_j> - ||x_j||^2 ; per-column (query i) ranking is
        # identical to -||x_i - x_j||^2 (the dropped ||x_i||^2 is constant in j).
        inner = jax.lax.dot_general(xb, xb, (((0,), (0,)), ((), ())),
                                    preferred_element_type=f32)        # (N, N)
        sq = jnp.sum(xf * xf, axis=0, keepdims=True)                   # (1, N)
        e_ref[...] = 2.0 * inner - jnp.transpose(sq)

    def select_gather_max(cout):
        # K_NN iterations: per query column pick the best remaining neighbor,
        # gather its y projection via a one-hot MXU matmul, fold into a running
        # max, mask it out.  Intermediates never exceed (N, N).
        gmax_ref[0:cout, :] = jnp.full((cout, n), NEG, f32)

        def body(_, carry):
            e = e_ref[...]
            colmax = jnp.max(e, axis=0, keepdims=True)                 # (1, N)
            sel = e == colmax
            rowi = jax.lax.broadcasted_iota(jnp.int32, (n, n), 0).astype(f32)
            cand = jnp.where(sel, rowi, float(n))
            firstj = jnp.min(cand, axis=0, keepdims=True)              # (1, N)
            hit = rowi == firstj                            # exactly 1 per col
            onehot = jnp.where(hit, 1.0, 0.0).astype(bf16)             # (N, N)
            g = jnp.dot(yb_ref[0:cout, :], onehot,
                        preferred_element_type=f32)                    # (C, N)
            gmax_ref[0:cout, :] = jnp.maximum(gmax_ref[0:cout, :], g)
            e_ref[...] = jnp.where(hit, NEG, e)
            return carry

        jax.lax.fori_loop(0, K_NN, body, 0)

    def finish_layer(out_off, cout, zmy, last):
        pre = gmax_ref[0:cout, :] + zmy
        out = jnp.maximum(pre, LEAKY_SLOPE * pre)           # LeakyReLU(0.2)
        out_bf = out.astype(bf16)
        feat_ref[out_off:out_off + cout, :] = out_bf        # bf16 feature store
        if not last:
            store_rank_matrix(out_bf, out)                  # knn for next layer

    def mxu_layer(in_off, cin, out_off, cout, wd_ref, wc_ref, b_ref, last):
        xb = feat_ref[in_off:in_off + cin, :]               # bf16 input
        yb_ref[0:cout, :] = jnp.dot(wd_ref[...], xb,
                                    preferred_element_type=f32).astype(bf16)
        select_gather_max(cout)
        zmy = jnp.dot(wc_ref[...], feat_ref[in_off:in_off + cin, :],
                      preferred_element_type=f32) + b_ref[...]
        finish_layer(out_off, cout, zmy, last)

    # ---------------- layer 1: raw coords, depth-3 contraction on the VPU ----
    x8 = pc_ref[0]                                          # (8, N), rows 3..7 = 0
    p0, p1, p2 = x8[0:1, :], x8[1:2, :], x8[2:3, :]

    def fma3(w):                                            # w: (Cout, 3) f32
        return w[:, 0:1] * p0 + w[:, 1:2] * p1 + w[:, 2:3] * p2

    store_rank_matrix(x8.astype(bf16), x8)                  # knn on raw coords
    yb_ref[0:64, :] = fma3(wd1_ref[...]).astype(bf16)
    select_gather_max(64)
    finish_layer(0, 64, fma3(wc1_ref[...]) + b1_ref[...], last=False)

    # ---------------- layers 2..4 on the MXU ---------------------------------
    mxu_layer(0, 64, 64, 64, wd2_ref, wc2_ref, b2_ref, last=False)
    mxu_layer(64, 64, 128, 128, wd3_ref, wc3_ref, b3_ref, last=False)
    mxu_layer(128, 128, 256, 256, wd4_ref, wc4_ref, b4_ref, last=True)

    # ---------------- conv5 head: one full 512-deep matmul -------------------
    h = jnp.dot(hw1_ref[...], feat_ref[...], preferred_element_type=f32) + hb1_ref[...]
    h = jnp.maximum(h, 0.0)
    h = jnp.dot(hw2_ref[...], h.astype(bf16), preferred_element_type=f32) + hb2_ref[...]
    h = jnp.maximum(h, 0.0)
    off = jnp.dot(hw3_ref[...], h.astype(bf16), preferred_element_type=f32) + hb3_ref[...]

    # ---------------- residual refinement + 8-view projection ----------------
    pc3 = x8[0:3, :]
    res = pc3 + jnp.tanh(off) * 0.1
    res_ref[0] = res

    a = a_ref[0]                                            # (3V, 3)
    pb = pb_ref[0]                                          # (3V, 1)
    xyz = (a[:, 0:1] * res[0:1, :] + a[:, 1:2] * res[1:2, :]
           + a[:, 2:3] * res[2:3, :] + pb)                  # (3V, N): [x|y|z] x V
    v = a.shape[0] // 3
    xs, ys, zs = xyz[0:v, :], xyz[v:2 * v, :], xyz[2 * v:3 * v, :]
    zg = jnp.where(zs != 0.0, zs, jnp.float32(1e-8))
    inv = pl.reciprocal(zg, approx=True)                    # EUP, reused twice
    proj_ref[0, 0:v, :] = xs * inv
    proj_ref[0, v:2 * v, :] = 224.0 - ys * inv
    proj_ref[0, 2 * v:3 * v, :] = zg


def refine_fused(pc8, weights, a_mat, p_bias):
    b, _, n = pc8.shape
    vc = a_mat.shape[1]                                     # 3 * V
    wd1, wc1, b1 = weights['conv1']
    wd2, wc2, b2 = weights['conv2']
    wd3, wc3, b3 = weights['conv3']
    wd4, wc4, b4 = weights['conv4']
    (hw1, hb1), (hw2, hb2), (hw3, hb3) = weights['head']

    def per_batch(arr):
        return pl.BlockSpec((1,) + arr.shape[1:], lambda i: (i, 0, 0))

    def full2d(arr):
        return pl.BlockSpec(arr.shape, lambda i: (0, 0))

    return pl.pallas_call(
        _refine_fused_kernel,
        out_shape=(jax.ShapeDtypeStruct((b, 3, n), jnp.float32),
                   jax.ShapeDtypeStruct((b, vc, n), jnp.float32)),
        grid=(b,),
        in_specs=[
            per_batch(pc8),
            full2d(wd1), full2d(wc1), full2d(b1),
            full2d(wd2), full2d(wc2), full2d(b2),
            full2d(wd3), full2d(wc3), full2d(b3),
            full2d(wd4), full2d(wc4), full2d(b4),
            full2d(hw1), full2d(hb1), full2d(hw2), full2d(hb2),
            full2d(hw3), full2d(hb3),
            per_batch(a_mat), per_batch(p_bias),
        ],
        out_specs=(pl.BlockSpec((1, 3, n), lambda i: (i, 0, 0)),
                   pl.BlockSpec((1, vc, n), lambda i: (i, 0, 0))),
        scratch_shapes=[
            pltpu.VMEM((n, n), jnp.float32),      # e_ref: knn ranking matrix
            pltpu.VMEM((256, n), jnp.float32),    # gmax_ref: running neighbor max
            pltpu.VMEM((256, n), jnp.bfloat16),   # yb_ref: W_d @ x for the gather
            pltpu.VMEM((512, n), jnp.bfloat16),   # feat_ref: x1|x2|x3|x4 concat
        ],
        compiler_params=_PARALLEL,
    )(pc8, wd1, wc1, b1, wd2, wc2, b2, wd3, wc3, b3, wd4, wc4, b4,
      hw1, hb1, hw2, hb2, hw3, hb3, a_mat, p_bias)


# ------------------------------------------------------------------
# Refine.forward glue (single fused kernel dispatch)
# ------------------------------------------------------------------
def refine_forward(pc_stage1, params, weights):
    """
    pc_stage1: (B, N, 3) stand-in for the stage-1 (Cross_PCC) fine point cloud
    params:    (B, V, 4, 4) projection matrices
    Returns (res_output, proj_res, calib_res, pc) mirroring Refine.forward.
    """
    b, n, _ = pc_stage1.shape
    v = params.shape[1]
    pc_cf = jnp.transpose(pc_stage1, (0, 2, 1))             # (B, 3, N)
    pc8 = jnp.pad(pc_cf, ((0, 0), (0, 5), (0, 0)))          # pad C: 3 -> 8

    # Projection matrices rearranged so the kernel emits a lane-dense (3V, N)
    # block: A[c*V+v, d] = mat[v, d, c], pb = mat[v, 3, c].
    a_mat = jnp.transpose(params[:, :, 0:3, 0:3], (0, 3, 1, 2)).reshape(b, 3 * v, 3)
    p_bias = jnp.transpose(params[:, :, 3, 0:3], (0, 2, 1)).reshape(b, 3 * v, 1)

    res_cf, proj = refine_fused(pc8, weights, a_mat, p_bias)

    res = jnp.transpose(res_cf, (0, 2, 1))                                # (B, N, 3)
    proj_xy = jnp.stack([proj[:, 0:v, :], proj[:, v:2 * v, :]], axis=-1)  # (B, V, N, 2)

    # TODO(synk): Calibration (torch.nonzero, variable-length outliers,
    # pytorch3d knn_points, scatter update) has no clean Pallas equivalent.
    calib_res = None
    return res, proj_xy, calib_res, pc_stage1


# ------------------------------------------------------------------
# Deterministic synthetic parameters (torch layout -> folded kernel layout)
# ------------------------------------------------------------------
def init_weights(key):
    keys = iter(jax.random.split(key, 32))

    def conv_w(cout, cin):
        return (jax.random.normal(next(keys), (cout, cin), jnp.float32)
                / jnp.sqrt(cin))

    def bn_fold(cout):
        gamma = 1.0 + 0.1 * jax.random.normal(next(keys), (cout,), jnp.float32)
        beta = 0.1 * jax.random.normal(next(keys), (cout,), jnp.float32)
        mean = jnp.zeros((cout,), jnp.float32)     # eval-mode running stats
        var = jnp.ones((cout,), jnp.float32)
        scale = gamma / jnp.sqrt(var + BN_EPS)
        shift = beta - mean * scale
        return scale, shift

    ws = {}
    # DGCNN edge-convs: Conv2d(2*Cin, Cout, 1, bias=False) + BN2d + LeakyReLU(0.2)
    # torch weight layout is (Cout, 2*Cin), channels ordered [x_j - x_i ; x_i].
    dims = [(3, 64), (64, 64), (64, 128), (128, 256)]
    for li, (cin, cout) in enumerate(dims):
        w_t = conv_w(cout, 2 * cin)
        scale, shift = bn_fold(cout)
        w_s = w_t * scale[:, None]                 # fold BN scale into the conv
        w_d = w_s[:, :cin]                         # applies to (x_j - x_i)
        w_c = w_s[:, cin:]                         # applies to x_i
        w_cd = w_c - w_d                           # out = max_k(Wd x_j) + (Wc-Wd) x_i + b
        if li == 0:
            # layer 1 stays f32: it runs as depth-3 VPU broadcast-FMAs
            ws['conv1'] = (w_d, w_cd, shift.reshape(cout, 1))
        else:
            ws[f'conv{li + 1}'] = (w_d.astype(jnp.bfloat16),
                                   w_cd.astype(jnp.bfloat16),
                                   shift.reshape(cout, 1))

    # conv5 = MLP_CONV(512, [256, 64, 3], bn=True): Conv1d+BN+ReLU x2, then Conv1d.
    def conv_bn(cin, cout):
        w = conv_w(cout, cin)
        bias = 0.01 * jnp.ones((cout,), jnp.float32)
        scale, shift = bn_fold(cout)
        return ((w * scale[:, None]).astype(jnp.bfloat16),
                (bias * scale + shift).reshape(cout, 1))

    hw1, hb1 = conv_bn(512, 256)        # single (256, 512) block: one 512-deep matmul
    hw2, hb2 = conv_bn(256, 64)
    hw3 = conv_w(3, 64).astype(jnp.bfloat16)
    hb3 = jnp.zeros((3, 1), jnp.float32)
    ws['head'] = ((hw1, hb1), (hw2, hb2), (hw3, hb3))
    return ws


# ------------------------------------------------------------------
if __name__ == "__main__":
    key = jax.random.PRNGKey(0)
    k_pc, k_w, k_m = jax.random.split(key, 3)

    B, N, V = 2, 128, 8
    # TODO(synk): stage-1 Cross_PCC output is synthesized deterministically here.
    pc = (jax.random.uniform(k_pc, (B, N, 3), jnp.float32) - 0.5) * 0.98

    # deterministic projection matrices with a z-offset so z > 0
    base = jnp.eye(4, dtype=jnp.float32).at[3, 2].set(2.0)
    noise = 0.05 * jax.random.normal(k_m, (B, V, 4, 4), jnp.float32)
    params = base[None, None, :, :] + noise

    weights = init_weights(k_w)

    fwd = jax.jit(refine_forward)
    res, proj_xy, calib_res, pc_out = fwd(pc, params, weights)
    jax.block_until_ready((res, proj_xy, pc_out))

    assert res.shape == (B, N, 3)
    assert proj_xy.shape == (B, V, N, 2)
    assert pc_out.shape == (B, N, 3)
    assert bool(jnp.all(jnp.isfinite(res))) and bool(jnp.all(jnp.isfinite(proj_xy)))
    print("KERNEL_OK")
</pallas_src>

<mosaic_0001>
module attributes {stable_mosaic.version = 11 : i64} {
  func.func @_refine_fused_kernel(%arg0: i32, %arg1: memref<1x8x128xf32, #tpu.memory_space<vmem>>, %arg2: memref<64x3xf32, #tpu.memory_space<vmem>>, %arg3: memref<64x3xf32, #tpu.memory_space<vmem>>, %arg4: memref<64x1xf32, #tpu.memory_space<vmem>>, %arg5: memref<64x64xbf16, #tpu.memory_space<vmem>>, %arg6: memref<64x64xbf16, #tpu.memory_space<vmem>>, %arg7: memref<64x1xf32, #tpu.memory_space<vmem>>, %arg8: memref<128x64xbf16, #tpu.memory_space<vmem>>, %arg9: memref<128x64xbf16, #tpu.memory_space<vmem>>, %arg10: memref<128x1xf32, #tpu.memory_space<vmem>>, %arg11: memref<256x128xbf16, #tpu.memory_space<vmem>>, %arg12: memref<256x128xbf16, #tpu.memory_space<vmem>>, %arg13: memref<256x1xf32, #tpu.memory_space<vmem>>, %arg14: memref<256x512xbf16, #tpu.memory_space<vmem>>, %arg15: memref<256x1xf32, #tpu.memory_space<vmem>>, %arg16: memref<64x256xbf16, #tpu.memory_space<vmem>>, %arg17: memref<64x1xf32, #tpu.memory_space<vmem>>, %arg18: memref<3x64xbf16, #tpu.memory_space<vmem>>, %arg19: memref<3x1xf32, #tpu.memory_space<vmem>>, %arg20: memref<1x24x3xf32, #tpu.memory_space<vmem>>, %arg21: memref<1x24x1xf32, #tpu.memory_space<vmem>>, %arg22: memref<1x3x128xf32, #tpu.memory_space<vmem>>, %arg23: memref<1x24x128xf32, #tpu.memory_space<vmem>>, %arg24: memref<128x128xf32, #tpu.memory_space<vmem>>, %arg25: memref<256x128xf32, #tpu.memory_space<vmem>>, %arg26: memref<256x128xbf16, #tpu.memory_space<vmem>>, %arg27: memref<512x128xbf16, #tpu.memory_space<vmem>>) attributes {dimension_semantics = [#tpu.dimension_semantics<parallel>], iteration_bounds = array<i64: 2>, scalar_prefetch = 0 : i64, scratch_operands = 4 : i64, tpu.core_type = #tpu.core_type<tc>, window_params = [{transform_indices = @transform_0, window_bounds = array<i64: 1, 8, 128>}, {pipeline_mode = #tpu.pipeline_mode<synchronous>, transform_indices = @transform_1, window_bounds = array<i64: 64, 3>}, {pipeline_mode = #tpu.pipeline_mode<synchronous>, transform_indices = @transform_2, window_bounds = array<i64: 64, 3>}, {pipeline_mode = #tpu.pipeline_mode<synchronous>, transform_indices = @transform_3, window_bounds = array<i64: 64, 1>}, {pipeline_mode = #tpu.pipeline_mode<synchronous>, transform_indices = @transform_4, window_bounds = array<i64: 64, 64>}, {pipeline_mode = #tpu.pipeline_mode<synchronous>, transform_indices = @transform_5, window_bounds = array<i64: 64, 64>}, {pipeline_mode = #tpu.pipeline_mode<synchronous>, transform_indices = @transform_6, window_bounds = array<i64: 64, 1>}, {pipeline_mode = #tpu.pipeline_mode<synchronous>, transform_indices = @transform_7, window_bounds = array<i64: 128, 64>}, {pipeline_mode = #tpu.pipeline_mode<synchronous>, transform_indices = @transform_8, window_bounds = array<i64: 128, 64>}, {pipeline_mode = #tpu.pipeline_mode<synchronous>, transform_indices = @transform_9, window_bounds = array<i64: 128, 1>}, {pipeline_mode = #tpu.pipeline_mode<synchronous>, transform_indices = @transform_10, window_bounds = array<i64: 256, 128>}, {pipeline_mode = #tpu.pipeline_mode<synchronous>, transform_indices = @transform_11, window_bounds = array<i64: 256, 128>}, {pipeline_mode = #tpu.pipeline_mode<synchronous>, transform_indices = @transform_12, window_bounds = array<i64: 256, 1>}, {pipeline_mode = #tpu.pipeline_mode<synchronous>, transform_indices = @transform_13, window_bounds = array<i64: 256, 512>}, {pipeline_mode = #tpu.pipeline_mode<synchronous>, transform_indices = @transform_14, window_bounds = array<i64: 256, 1>}, {pipeline_mode = #tpu.pipeline_mode<synchronous>, transform_indices = @transform_15, window_bounds = array<i64: 64, 256>}, {pipeline_mode = #tpu.pipeline_mode<synchronous>, transform_indices = @transform_16, window_bounds = array<i64: 64, 1>}, {pipeline_mode = #tpu.pipeline_mode<synchronous>, transform_indices = @transform_17, window_bounds = array<i64: 3, 64>}, {pipeline_mode = #tpu.pipeline_mode<synchronous>, transform_indices = @transform_18, window_bounds = array<i64: 3, 1>}, {transform_indices = @transform_19, window_bounds = array<i64: 1, 24, 3>}, {transform_indices = @transform_20, window_bounds = array<i64: 1, 24, 1>}, {transform_indices = @transform_21, window_bounds = array<i64: 1, 3, 128>}, {transform_indices = @transform_22, window_bounds = array<i64: 1, 24, 128>}]} {
    %c0 = arith.constant 0 : index
    %c0_0 = arith.constant 0 : index
    %c0_1 = arith.constant 0 : index
    %0 = vector.load %arg1[%c0, %c0_0, %c0_1] : memref<1x8x128xf32, #tpu.memory_space<vmem>>, vector<1x8x128xf32>
    %1 = vector.shape_cast %0 : vector<1x8x128xf32> to vector<8x128xf32>
    %2 = vector.extract_strided_slice %1 {offsets = [0, 0], sizes = [1, 128], strides = [1, 1]} : vector<8x128xf32> to vector<1x128xf32>
    %3 = vector.extract_strided_slice %1 {offsets = [1, 0], sizes = [1, 128], strides = [1, 1]} : vector<8x128xf32> to vector<1x128xf32>
    %4 = vector.extract_strided_slice %1 {offsets = [2, 0], sizes = [1, 128], strides = [1, 1]} : vector<8x128xf32> to vector<1x128xf32>
    %5 = arith.truncf %1 : vector<8x128xf32> to vector<8x128xbf16>
    %cst = arith.constant dense<0.000000e+00> : vector<128x128xf32>
    %6 = tpu.matmul %5, %5, %cst {dimension_numbers = #tpu.dot_dimension_numbers<[0], [0], [1], [1], [0, 1, 1, 1], [], []>} : vector<8x128xbf16>, vector<8x128xbf16>, vector<128x128xf32> -> vector<128x128xf32>
    %7 = arith.mulf %1, %1 : vector<8x128xf32>
    %cst_2 = arith.constant dense<0.000000e+00> : vector<128xf32>
    %8 = vector.multi_reduction <add>, %7, %cst_2 [0] : vector<8x128xf32> to vector<128xf32>
    %9 = vector.shape_cast %8 : vector<128xf32> to vector<1x128xf32>
    %cst_3 = arith.constant 2.000000e+00 : f32
    %10 = vector.broadcast %cst_3 : f32 to vector<128x128xf32>
    %11 = arith.mulf %10, %6 : vector<128x128xf32>
    %12 = tpu.transpose %9, [1, 0] : vector<1x128xf32> -> vector<128x1xf32>
    %13 = vector.broadcast %12 : vector<128x1xf32> to vector<128x128xf32>
    %14 = arith.subf %11, %13 : vector<128x128xf32>
    %c0_4 = arith.constant 0 : index
    %c0_5 = arith.constant 0 : index
    %15 = vector.load %arg24[%c0_4, %c0_5] : memref<128x128xf32, #tpu.memory_space<vmem>>, vector<128x128xf32>
    tpu.vector_store %arg24[%c0_4, %c0_5], %14 {strides = array<i32>} : memref<128x128xf32, #tpu.memory_space<vmem>>, vector<128x128xf32>,
    %c0_6 = arith.constant 0 : index
    %c0_7 = arith.constant 0 : index
    %16 = vector.load %arg2[%c0_6, %c0_7] : memref<64x3xf32, #tpu.memory_space<vmem>>, vector<64x3xf32>
    %17 = vector.extract_strided_slice %16 {offsets = [0, 0], sizes = [64, 1], strides = [1, 1]} : vector<64x3xf32> to vector<64x1xf32>
    %18 = vector.broadcast %17 : vector<64x1xf32> to vector<64x128xf32>
    %19 = vector.broadcast %2 : vector<1x128xf32> to vector<64x128xf32>
    %20 = arith.mulf %18, %19 : vector<64x128xf32>
    %21 = vector.extract_strided_slice %16 {offsets = [0, 1], sizes = [64, 1], strides = [1, 1]} : vector<64x3xf32> to vector<64x1xf32>
    %22 = vector.broadcast %21 : vector<64x1xf32> to vector<64x128xf32>
    %23 = vector.broadcast %3 : vector<1x128xf32> to vector<64x128xf32>
    %24 = arith.mulf %22, %23 : vector<64x128xf32>
    %25 = arith.addf %20, %24 : vector<64x128xf32>
    %26 = vector.extract_strided_slice %16 {offsets = [0, 2], sizes = [64, 1], strides = [1, 1]} : vector<64x3xf32> to vector<64x1xf32>
    %27 = vector.broadcast %26 : vector<64x1xf32> to vector<64x128xf32>
    %28 = vector.broadcast %4 : vector<1x128xf32> to vector<64x128xf32>
    %29 = arith.mulf %27, %28 : vector<64x128xf32>
    %30 = arith.addf %25, %29 : vector<64x128xf32>
    %31 = arith.truncf %30 : vector<64x128xf32> to vector<64x128xbf16>
    %c0_8 = arith.constant 0 : index
    %c0_9 = arith.constant 0 : index
    %32 = vector.load %arg26[%c0_8, %c0_9] : memref<256x128xbf16, #tpu.memory_space<vmem>>, vector<64x128xbf16>
    tpu.vector_store %arg26[%c0_8, %c0_9], %31 {strides = array<i32>} : memref<256x128xbf16, #tpu.memory_space<vmem>>, vector<64x128xbf16>,
    %cst_10 = arith.constant -1.000000e+30 : f32
    %33 = vector.broadcast %cst_10 : f32 to vector<64x128xf32>
    %c0_11 = arith.constant 0 : index
    %c0_12 = arith.constant 0 : index
    %34 = vector.load %arg25[%c0_11, %c0_12] : memref<256x128xf32, #tpu.memory_space<vmem>>, vector<64x128xf32>
    tpu.vector_store %arg25[%c0_11, %c0_12], %33 {strides = array<i32>} : memref<256x128xf32, #tpu.memory_space<vmem>>, vector<64x128xf32>,
    %c0_i32 = arith.constant 0 : i32
    %c20_i32 = arith.constant 20 : i32
    %35 = arith.addi %c0_i32, %c20_i32 : i32
    %c1_i32 = arith.constant 1 : i32
    scf.for %arg28 = %c0_i32 to %35 step %c1_i32  : i32 {
      %c0_148 = arith.constant 0 : index
      %c0_149 = arith.constant 0 : index
      %228 = vector.load %arg24[%c0_148, %c0_149] : memref<128x128xf32, #tpu.memory_space<vmem>>, vector<128x128xf32>
      %cst_150 = arith.constant dense<0xFF800000> : vector<128xf32>
      %229 = vector.multi_reduction <maximumf>, %228, %cst_150 [0] : vector<128x128xf32> to vector<128xf32>
      %230 = vector.shape_cast %229 : vector<128xf32> to vector<1x128xf32>
      %231 = vector.broadcast %230 : vector<1x128xf32> to vector<128x128xf32>
      %232 = arith.cmpf oeq, %228, %231 : vector<128x128xf32>
      %233 = tpu.iota {dimensions = array<i32: 0>} : vector<128x128xi32>
      %234 = arith.sitofp %233 : vector<128x128xi32> to vector<128x128xf32>
      %cst_151 = arith.constant 1.280000e+02 : f32
      %235 = vector.broadcast %cst_151 : f32 to vector<128x128xf32>
      %236 = arith.select %232, %234, %235 : vector<128x128xi1>, vector<128x128xf32>
      %cst_152 = arith.constant dense<0x7F800000> : vector<128xf32>
      %237 = vector.multi_reduction <minimumf>, %236, %cst_152 [0] : vector<128x128xf32> to vector<128xf32>
      %238 = vector.shape_cast %237 : vector<128xf32> to vector<1x128xf32>
      %239 = vector.broadcast %238 : vector<1x128xf32> to vector<128x128xf32>
      %240 = arith.cmpf oeq, %234, %239 : vector<128x128xf32>
      %cst_153 = arith.constant 1.000000e+00 : f32
      %cst_154 = arith.constant 0.000000e+00 : f32
      %241 = vector.broadcast %cst_153 : f32 to vector<128x128xf32>
      %242 = vector.broadcast %cst_154 : f32 to vector<128x128xf32>
      %243 = arith.select %240, %241, %242 : vector<128x128xi1>, vector<128x128xf32>
      %244 = arith.truncf %243 : vector<128x128xf32> to vector<128x128xbf16>
      %c0_155 = arith.constant 0 : index
      %c0_156 = arith.constant 0 : index
      %245 = vector.load %arg26[%c0_155, %c0_156] : memref<256x128xbf16, #tpu.memory_space<vmem>>, vector<64x128xbf16>
      %cst_157 = arith.constant dense<0.000000e+00> : vector<64x128xf32>
      %246 = tpu.matmul %245, %244, %cst_157 {dimension_numbers = #tpu.dot_dimension_numbers<[1], [0], [0], [1], [0, 0, 1, 1], [], []>} : vector<64x128xbf16>, vector<128x128xbf16>, vector<64x128xf32> -> vector<64x128xf32>
      %c0_158 = arith.constant 0 : index
      %c0_159 = arith.constant 0 : index
      %247 = vector.load %arg25[%c0_158, %c0_159] : memref<256x128xf32, #tpu.memory_space<vmem>>, vector<64x128xf32>
      %248 = arith.maximumf %247, %246 : vector<64x128xf32>
      %c0_160 = arith.constant 0 : index
      %c0_161 = arith.constant 0 : index
      %249 = vector.load %arg25[%c0_160, %c0_161] : memref<256x128xf32, #tpu.memory_space<vmem>>, vector<64x128xf32>
      tpu.vector_store %arg25[%c0_160, %c0_161], %248 {strides = array<i32>} : memref<256x128xf32, #tpu.memory_space<vmem>>, vector<64x128xf32>,
      %cst_162 = arith.constant -1.000000e+30 : f32
      %250 = vector.broadcast %cst_162 : f32 to vector<128x128xf32>
      %251 = arith.select %240, %250, %228 : vector<128x128xi1>, vector<128x128xf32>
      %c0_163 = arith.constant 0 : index
      %c0_164 = arith.constant 0 : index
      %252 = vector.load %arg24[%c0_163, %c0_164] : memref<128x128xf32, #tpu.memory_space<vmem>>, vector<128x128xf32>
      tpu.vector_store %arg24[%c0_163, %c0_164], %251 {strides = array<i32>} : memref<128x128xf32, #tpu.memory_space<vmem>>, vector<128x128xf32>,
    }
    %c0_13 = arith.constant 0 : index
    %c0_14 = arith.constant 0 : index
    %36 = vector.load %arg3[%c0_13, %c0_14] : memref<64x3xf32, #tpu.memory_space<vmem>>, vector<64x3xf32>
    %37 = vector.extract_strided_slice %36 {offsets = [0, 0], sizes = [64, 1], strides = [1, 1]} : vector<64x3xf32> to vector<64x1xf32>
    %38 = vector.broadcast %37 : vector<64x1xf32> to vector<64x128xf32>
    %39 = vector.broadcast %2 : vector<1x128xf32> to vector<64x128xf32>
    %40 = arith.mulf %38, %39 : vector<64x128xf32>
    %41 = vector.extract_strided_slice %36 {offsets = [0, 1], sizes = [64, 1], strides = [1, 1]} : vector<64x3xf32> to vector<64x1xf32>
    %42 = vector.broadcast %41 : vector<64x1xf32> to vector<64x128xf32>
    %43 = vector.broadcast %3 : vector<1x128xf32> to vector<64x128xf32>
    %44 = arith.mulf %42, %43 : vector<64x128xf32>
    %45 = arith.addf %40, %44 : vector<64x128xf32>
    %46 = vector.extract_strided_slice %36 {offsets = [0, 2], sizes = [64, 1], strides = [1, 1]} : vector<64x3xf32> to vector<64x1xf32>
    %47 = vector.broadcast %46 : vector<64x1xf32> to vector<64x128xf32>
    %48 = vector.broadcast %4 : vector<1x128xf32> to vector<64x128xf32>
    %49 = arith.mulf %47, %48 : vector<64x128xf32>
    %50 = arith.addf %45, %49 : vector<64x128xf32>
    %c0_15 = arith.constant 0 : index
    %c0_16 = arith.constant 0 : index
    %51 = vector.load %arg4[%c0_15, %c0_16] : memref<64x1xf32, #tpu.memory_space<vmem>>, vector<64x1xf32>
    %52 = vector.broadcast %51 : vector<64x1xf32> to vector<64x128xf32>
    %53 = arith.addf %50, %52 : vector<64x128xf32>
    %c0_17 = arith.constant 0 : index
    %c0_18 = arith.constant 0 : index
    %54 = vector.load %arg25[%c0_17, %c0_18] : memref<256x128xf32, #tpu.memory_space<vmem>>, vector<64x128xf32>
    %55 = arith.addf %54, %53 : vector<64x128xf32>
    %cst_19 = arith.constant 2.000000e-01 : f32
    %56 = vector.broadcast %cst_19 : f32 to vector<64x128xf32>
    %57 = arith.mulf %56, %55 : vector<64x128xf32>
    %58 = arith.maximumf %55, %57 : vector<64x128xf32>
    %59 = arith.truncf %58 : vector<64x128xf32> to vector<64x128xbf16>
    %c0_20 = arith.constant 0 : index
    %c0_21 = arith.constant 0 : index
    %60 = vector.load %arg27[%c0_20, %c0_21] : memref<512x128xbf16, #tpu.memory_space<vmem>>, vector<64x128xbf16>
    tpu.vector_store %arg27[%c0_20, %c0_21], %59 {strides = array<i32>} : memref<512x128xbf16, #tpu.memory_space<vmem>>, vector<64x128xbf16>,
    %cst_22 = arith.constant dense<0.000000e+00> : vector<128x128xf32>
    %61 = tpu.matmul %59, %59, %cst_22 {dimension_numbers = #tpu.dot_dimension_numbers<[0], [0], [1], [1], [0, 1, 1, 1], [], []>} : vector<64x128xbf16>, vector<64x128xbf16>, vector<128x128xf32> -> vector<128x128xf32>
    %62 = arith.mulf %58, %58 : vector<64x128xf32>
    %cst_23 = arith.constant dense<0.000000e+00> : vector<128xf32>
    %63 = vector.multi_reduction <add>, %62, %cst_23 [0] : vector<64x128xf32> to vector<128xf32>
    %64 = vector.shape_cast %63 : vector<128xf32> to vector<1x128xf32>
    %cst_24 = arith.constant 2.000000e+00 : f32
    %65 = vector.broadcast %cst_24 : f32 to vector<128x128xf32>
    %66 = arith.mulf %65, %61 : vector<128x128xf32>
    %67 = tpu.transpose %64, [1, 0] : vector<1x128xf32> -> vector<128x1xf32>
    %68 = vector.broadcast %67 : vector<128x1xf32> to vector<128x128xf32>
    %69 = arith.subf %66, %68 : vector<128x128xf32>
    %c0_25 = arith.constant 0 : index
    %c0_26 = arith.constant 0 : index
    %70 = vector.load %arg24[%c0_25, %c0_26] : memref<128x128xf32, #tpu.memory_space<vmem>>, vector<128x128xf32>
    tpu.vector_store %arg24[%c0_25, %c0_26], %69 {strides = array<i32>} : memref<128x128xf32, #tpu.memory_space<vmem>>, vector<128x128xf32>,
    %c0_27 = arith.constant 0 : index
    %c0_28 = arith.constant 0 : index
    %71 = vector.load %arg27[%c0_27, %c0_28] : memref<512x128xbf16, #tpu.memory_space<vmem>>, vector<64x128xbf16>
    %c0_29 = arith.constant 0 : index
    %c0_30 = arith.constant 0 : index
    %72 = vector.load %arg5[%c0_29, %c0_30] : memref<64x64xbf16, #tpu.memory_space<vmem>>, vector<64x64xbf16>
    %cst_31 = arith.constant dense<0.000000e+00> : vector<64x128xf32>
    %73 = tpu.matmul %72, %71, %cst_31 {dimension_numbers = #tpu.dot_dimension_numbers<[1], [0], [0], [1], [0, 0, 1, 1], [], []>} : vector<64x64xbf16>, vector<64x128xbf16>, vector<64x128xf32> -> vector<64x128xf32>
    %74 = arith.truncf %73 : vector<64x128xf32> to vector<64x128xbf16>
    %c0_32 = arith.constant 0 : index
    %c0_33 = arith.constant 0 : index
    %75 = vector.load %arg26[%c0_32, %c0_33] : memref<256x128xbf16, #tpu.memory_space<vmem>>, vector<64x128xbf16>
    tpu.vector_store %arg26[%c0_32, %c0_33], %74 {strides = array<i32>} : memref<256x128xbf16, #tpu.memory_space<vmem>>, vector<64x128xbf16>,
    %cst_34 = arith.constant -1.000000e+30 : f32
    %76 = vector.broadcast %cst_34 : f32 to vector<64x128xf32>
    %c0_35 = arith.constant 0 : index
    %c0_36 = arith.constant 0 : index
    %77 = vector.load %arg25[%c0_35, %c0_36] : memref<256x128xf32, #tpu.memory_space<vmem>>, vector<64x128xf32>
    tpu.vector_store %arg25[%c0_35, %c0_36], %76 {strides = array<i32>} : memref<256x128xf32, #tpu.memory_space<vmem>>, vector<64x128xf32>,
    %c0_i32_37 = arith.constant 0 : i32
    %c20_i32_38 = arith.constant 20 : i32
    %78 = arith.addi %c0_i32_37, %c20_i32_38 : i32
    %c1_i32_39 = arith.constant 1 : i32
    scf.for %arg28 = %c0_i32_37 to %78 step %c1_i32_39  : i32 {
      %c0_148 = arith.constant 0 : index
      %c0_149 = arith.constant 0 : index
      %228 = vector.load %arg24[%c0_148, %c0_149] : memref<128x128xf32, #tpu.memory_space<vmem>>, vector<128x128xf32>
      %cst_150 = arith.constant dense<0xFF800000> : vector<128xf32>
      %229 = vector.multi_reduction <maximumf>, %228, %cst_150 [0] : vector<128x128xf32> to vector<128xf32>
      %230 = vector.shape_cast %229 : vector<128xf32> to vector<1x128xf32>
      %231 = vector.broadcast %230 : vector<1x128xf32> to vector<128x128xf32>
      %232 = arith.cmpf oeq, %228, %231 : vector<128x128xf32>
      %233 = tpu.iota {dimensions = array<i32: 0>} : vector<128x128xi32>
      %234 = arith.sitofp %233 : vector<128x128xi32> to vector<128x128xf32>
      %cst_151 = arith.constant 1.280000e+02 : f32
      %235 = vector.broadcast %cst_151 : f32 to vector<128x128xf32>
      %236 = arith.select %232, %234, %235 : vector<128x128xi1>, vector<128x128xf32>
      %cst_152 = arith.constant dense<0x7F800000> : vector<128xf32>
      %237 = vector.multi_reduction <minimumf>, %236, %cst_152 [0] : vector<128x128xf32> to vector<128xf32>
      %238 = vector.shape_cast %237 : vector<128xf32> to vector<1x128xf32>
      %239 = vector.broadcast %238 : vector<1x128xf32> to vector<128x128xf32>
      %240 = arith.cmpf oeq, %234, %239 : vector<128x128xf32>
      %cst_153 = arith.constant 1.000000e+00 : f32
      %cst_154 = arith.constant 0.000000e+00 : f32
      %241 = vector.broadcast %cst_153 : f32 to vector<128x128xf32>
      %242 = vector.broadcast %cst_154 : f32 to vector<128x128xf32>
      %243 = arith.select %240, %241, %242 : vector<128x128xi1>, vector<128x128xf32>
      %244 = arith.truncf %243 : vector<128x128xf32> to vector<128x128xbf16>
      %c0_155 = arith.constant 0 : index
      %c0_156 = arith.constant 0 : index
      %245 = vector.load %arg26[%c0_155, %c0_156] : memref<256x128xbf16, #tpu.memory_space<vmem>>, vector<64x128xbf16>
      %cst_157 = arith.constant dense<0.000000e+00> : vector<64x128xf32>
      %246 = tpu.matmul %245, %244, %cst_157 {dimension_numbers = #tpu.dot_dimension_numbers<[1], [0], [0], [1], [0, 0, 1, 1], [], []>} : vector<64x128xbf16>, vector<128x128xbf16>, vector<64x128xf32> -> vector<64x128xf32>
      %c0_158 = arith.constant 0 : index
      %c0_159 = arith.constant 0 : index
      %247 = vector.load %arg25[%c0_158, %c0_159] : memref<256x128xf32, #tpu.memory_space<vmem>>, vector<64x128xf32>
      %248 = arith.maximumf %247, %246 : vector<64x128xf32>
      %c0_160 = arith.constant 0 : index
      %c0_161 = arith.constant 0 : index
      %249 = vector.load %arg25[%c0_160, %c0_161] : memref<256x128xf32, #tpu.memory_space<vmem>>, vector<64x128xf32>
      tpu.vector_store %arg25[%c0_160, %c0_161], %248 {strides = array<i32>} : memref<256x128xf32, #tpu.memory_space<vmem>>, vector<64x128xf32>,
      %cst_162 = arith.constant -1.000000e+30 : f32
      %250 = vector.broadcast %cst_162 : f32 to vector<128x128xf32>
      %251 = arith.select %240, %250, %228 : vector<128x128xi1>, vector<128x128xf32>
      %c0_163 = arith.constant 0 : index
      %c0_164 = arith.constant 0 : index
      %252 = vector.load %arg24[%c0_163, %c0_164] : memref<128x128xf32, #tpu.memory_space<vmem>>, vector<128x128xf32>
      tpu.vector_store %arg24[%c0_163, %c0_164], %251 {strides = array<i32>} : memref<128x128xf32, #tpu.memory_space<vmem>>, vector<128x128xf32>,
    }
    %c0_40 = arith.constant 0 : index
    %c0_41 = arith.constant 0 : index
    %79 = vector.load %arg6[%c0_40, %c0_41] : memref<64x64xbf16, #tpu.memory_space<vmem>>, vector<64x64xbf16>
    %c0_42 = arith.constant 0 : index
    %c0_43 = arith.constant 0 : index
    %80 = vector.load %arg27[%c0_42, %c0_43] : memref<512x128xbf16, #tpu.memory_space<vmem>>, vector<64x128xbf16>
    %cst_44 = arith.constant dense<0.000000e+00> : vector<64x128xf32>
    %81 = tpu.matmul %79, %80, %cst_44 {dimension_numbers = #tpu.dot_dimension_numbers<[1], [0], [0], [1], [0, 0, 1, 1], [], []>} : vector<64x64xbf16>, vector<64x128xbf16>, vector<64x128xf32> -> vector<64x128xf32>
    %c0_45 = arith.constant 0 : index
    %c0_46 = arith.constant 0 : index
    %82 = vector.load %arg7[%c0_45, %c0_46] : memref<64x1xf32, #tpu.memory_space<vmem>>, vector<64x1xf32>
    %83 = vector.broadcast %82 : vector<64x1xf32> to vector<64x128xf32>
    %84 = arith.addf %81, %83 : vector<64x128xf32>
    %c0_47 = arith.constant 0 : index
    %c0_48 = arith.constant 0 : index
    %85 = vector.load %arg25[%c0_47, %c0_48] : memref<256x128xf32, #tpu.memory_space<vmem>>, vector<64x128xf32>
    %86 = arith.addf %85, %84 : vector<64x128xf32>
    %cst_49 = arith.constant 2.000000e-01 : f32
    %87 = vector.broadcast %cst_49 : f32 to vector<64x128xf32>
    %88 = arith.mulf %87, %86 : vector<64x128xf32>
    %89 = arith.maximumf %86, %88 : vector<64x128xf32>
    %90 = arith.truncf %89 : vector<64x128xf32> to vector<64x128xbf16>
    %c64 = arith.constant 64 : index
    %c0_50 = arith.constant 0 : index
    %91 = vector.load %arg27[%c64, %c0_50] : memref<512x128xbf16, #tpu.memory_space<vmem>>, vector<64x128xbf16>
    tpu.vector_store %arg27[%c64, %c0_50], %90 {strides = array<i32>} : memref<512x128xbf16, #tpu.memory_space<vmem>>, vector<64x128xbf16>,
    %cst_51 = arith.constant dense<0.000000e+00> : vector<128x128xf32>
    %92 = tpu.matmul %90, %90, %cst_51 {dimension_numbers = #tpu.dot_dimension_numbers<[0], [0], [1], [1], [0, 1, 1, 1], [], []>} : vector<64x128xbf16>, vector<64x128xbf16>, vector<128x128xf32> -> vector<128x128xf32>
    %93 = arith.mulf %89, %89 : vector<64x128xf32>
    %cst_52 = arith.constant dense<0.000000e+00> : vector<128xf32>
    %94 = vector.multi_reduction <add>, %93, %cst_52 [0] : vector<64x128xf32> to vector<128xf32>
    %95 = vector.shape_cast %94 : vector<128xf32> to vector<1x128xf32>
    %cst_53 = arith.constant 2.000000e+00 : f32
    %96 = vector.broadcast %cst_53 : f32 to vector<128x128xf32>
    %97 = arith.mulf %96, %92 : vector<128x128xf32>
    %98 = tpu.transpose %95, [1, 0] : vector<1x128xf32> -> vector<128x1xf32>
    %99 = vector.broadcast %98 : vector<128x1xf32> to vector<128x128xf32>
    %100 = arith.subf %97, %99 : vector<128x128xf32>
    %c0_54 = arith.constant 0 : index
    %c0_55 = arith.constant 0 : index
    %101 = vector.load %arg24[%c0_54, %c0_55] : memref<128x128xf32, #tpu.memory_space<vmem>>, vector<128x128xf32>
    tpu.vector_store %arg24[%c0_54, %c0_55], %100 {strides = array<i32>} : memref<128x128xf32, #tpu.memory_space<vmem>>, vector<128x128xf32>,
    %c64_56 = arith.constant 64 : index
    %c0_57 = arith.constant 0 : index
    %102 = vector.load %arg27[%c64_56, %c0_57] : memref<512x128xbf16, #tpu.memory_space<vmem>>, vector<64x128xbf16>
    %c0_58 = arith.constant 0 : index
    %c0_59 = arith.constant 0 : index
    %103 = vector.load %arg8[%c0_58, %c0_59] : memref<128x64xbf16, #tpu.memory_space<vmem>>, vector<128x64xbf16>
    %cst_60 = arith.constant dense<0.000000e+00> : vector<128x128xf32>
    %104 = tpu.matmul %103, %102, %cst_60 {dimension_numbers = #tpu.dot_dimension_numbers<[1], [0], [0], [1], [0, 0, 1, 1], [], []>} : vector<128x64xbf16>, vector<64x128xbf16>, vector<128x128xf32> -> vector<128x128xf32>
    %105 = arith.truncf %104 : vector<128x128xf32> to vector<128x128xbf16>
    %c0_61 = arith.constant 0 : index
    %c0_62 = arith.constant 0 : index
    %106 = vector.load %arg26[%c0_61, %c0_62] : memref<256x128xbf16, #tpu.memory_space<vmem>>, vector<128x128xbf16>
    tpu.vector_store %arg26[%c0_61, %c0_62], %105 {strides = array<i32>} : memref<256x128xbf16, #tpu.memory_space<vmem>>, vector<128x128xbf16>,
    %cst_63 = arith.constant -1.000000e+30 : f32
    %107 = vector.broadcast %cst_63 : f32 to vector<128x128xf32>
    %c0_64 = arith.constant 0 : index
    %c0_65 = arith.constant 0 : index
    %108 = vector.load %arg25[%c0_64, %c0_65] : memref<256x128xf32, #tpu.memory_space<vmem>>, vector<128x128xf32>
    tpu.vector_store %arg25[%c0_64, %c0_65], %107 {strides = array<i32>} : memref<256x128xf32, #tpu.memory_space<vmem>>, vector<128x128xf32>,
    %c0_i32_66 = arith.constant 0 : i32
    %c20_i32_67 = arith.constant 20 : i32
    %109 = arith.addi %c0_i32_66, %c20_i32_67 : i32
    %c1_i32_68 = arith.constant 1 : i32
    scf.for %arg28 = %c0_i32_66 to %109 step %c1_i32_68  : i32 {
      %c0_148 = arith.constant 0 : index
      %c0_149 = arith.constant 0 : index
      %228 = vector.load %arg24[%c0_148, %c0_149] : memref<128x128xf32, #tpu.memory_space<vmem>>, vector<128x128xf32>
      %cst_150 = arith.constant dense<0xFF800000> : vector<128xf32>
      %229 = vector.multi_reduction <maximumf>, %228, %cst_150 [0] : vector<128x128xf32> to vector<128xf32>
      %230 = vector.shape_cast %229 : vector<128xf32> to vector<1x128xf32>
      %231 = vector.broadcast %230 : vector<1x128xf32> to vector<128x128xf32>
      %232 = arith.cmpf oeq, %228, %231 : vector<128x128xf32>
      %233 = tpu.iota {dimensions = array<i32: 0>} : vector<128x128xi32>
      %234 = arith.sitofp %233 : vector<128x128xi32> to vector<128x128xf32>
      %cst_151 = arith.constant 1.280000e+02 : f32
      %235 = vector.broadcast %cst_151 : f32 to vector<128x128xf32>
      %236 = arith.select %232, %234, %235 : vector<128x128xi1>, vector<128x128xf32>
      %cst_152 = arith.constant dense<0x7F800000> : vector<128xf32>
      %237 = vector.multi_reduction <minimumf>, %236, %cst_152 [0] : vector<128x128xf32> to vector<128xf32>
      %238 = vector.shape_cast %237 : vector<128xf32> to vector<1x128xf32>
      %239 = vector.broadcast %238 : vector<1x128xf32> to vector<128x128xf32>
      %240 = arith.cmpf oeq, %234, %239 : vector<128x128xf32>
      %cst_153 = arith.constant 1.000000e+00 : f32
      %cst_154 = arith.constant 0.000000e+00 : f32
      %241 = vector.broadcast %cst_153 : f32 to vector<128x128xf32>
      %242 = vector.broadcast %cst_154 : f32 to vector<128x128xf32>
      %243 = arith.select %240, %241, %242 : vector<128x128xi1>, vector<128x128xf32>
      %244 = arith.truncf %243 : vector<128x128xf32> to vector<128x128xbf16>
      %c0_155 = arith.constant 0 : index
      %c0_156 = arith.constant 0 : index
      %245 = vector.load %arg26[%c0_155, %c0_156] : memref<256x128xbf16, #tpu.memory_space<vmem>>, vector<128x128xbf16>
      %cst_157 = arith.constant dense<0.000000e+00> : vector<128x128xf32>
      %246 = tpu.matmul %245, %244, %cst_157 {dimension_numbers = #tpu.dot_dimension_numbers<[1], [0], [0], [1], [0, 0, 1, 1], [], []>} : vector<128x128xbf16>, vector<128x128xbf16>, vector<128x128xf32> -> vector<128x128xf32>
      %c0_158 = arith.constant 0 : index
      %c0_159 = arith.constant 0 : index
      %247 = vector.load %arg25[%c0_158, %c0_159] : memref<256x128xf32, #tpu.memory_space<vmem>>, vector<128x128xf32>
      %248 = arith.maximumf %247, %246 : vector<128x128xf32>
      %c0_160 = arith.constant 0 : index
      %c0_161 = arith.constant 0 : index
      %249 = vector.load %arg25[%c0_160, %c0_161] : memref<256x128xf32, #tpu.memory_space<vmem>>, vector<128x128xf32>
      tpu.vector_store %arg25[%c0_160, %c0_161], %248 {strides = array<i32>} : memref<256x128xf32, #tpu.memory_space<vmem>>, vector<128x128xf32>,
      %cst_162 = arith.constant -1.000000e+30 : f32
      %250 = vector.broadcast %cst_162 : f32 to vector<128x128xf32>
      %251 = arith.select %240, %250, %228 : vector<128x128xi1>, vector<128x128xf32>
      %c0_163 = arith.constant 0 : index
      %c0_164 = arith.constant 0 : index
      %252 = vector.load %arg24[%c0_163, %c0_164] : memref<128x128xf32, #tpu.memory_space<vmem>>, vector<128x128xf32>
      tpu.vector_store %arg24[%c0_163, %c0_164], %251 {strides = array<i32>} : memref<128x128xf32, #tpu.memory_space<vmem>>, vector<128x128xf32>,
    }
    %c0_69 = arith.constant 0 : index
    %c0_70 = arith.constant 0 : index
    %110 = vector.load %arg9[%c0_69, %c0_70] : memref<128x64xbf16, #tpu.memory_space<vmem>>, vector<128x64xbf16>
    %c64_71 = arith.constant 64 : index
    %c0_72 = arith.constant 0 : index
    %111 = vector.load %arg27[%c64_71, %c0_72] : memref<512x128xbf16, #tpu.memory_space<vmem>>, vector<64x128xbf16>
    %cst_73 = arith.constant dense<0.000000e+00> : vector<128x128xf32>
    %112 = tpu.matmul %110, %111, %cst_73 {dimension_numbers = #tpu.dot_dimension_numbers<[1], [0], [0], [1], [0, 0, 1, 1], [], []>} : vector<128x64xbf16>, vector<64x128xbf16>, vector<128x128xf32> -> vector<128x128xf32>
    %c0_74 = arith.constant 0 : index
    %c0_75 = arith.constant 0 : index
    %113 = vector.load %arg10[%c0_74, %c0_75] : memref<128x1xf32, #tpu.memory_space<vmem>>, vector<128x1xf32>
    %114 = vector.broadcast %113 : vector<128x1xf32> to vector<128x128xf32>
    %115 = arith.addf %112, %114 : vector<128x128xf32>
    %c0_76 = arith.constant 0 : index
    %c0_77 = arith.constant 0 : index
    %116 = vector.load %arg25[%c0_76, %c0_77] : memref<256x128xf32, #tpu.memory_space<vmem>>, vector<128x128xf32>
    %117 = arith.addf %116, %115 : vector<128x128xf32>
    %cst_78 = arith.constant 2.000000e-01 : f32
    %118 = vector.broadcast %cst_78 : f32 to vector<128x128xf32>
    %119 = arith.mulf %118, %117 : vector<128x128xf32>
    %120 = arith.maximumf %117, %119 : vector<128x128xf32>
    %121 = arith.truncf %120 : vector<128x128xf32> to vector<128x128xbf16>
    %c128 = arith.constant 128 : index
    %c0_79 = arith.constant 0 : index
    %122 = vector.load %arg27[%c128, %c0_79] : memref<512x128xbf16, #tpu.memory_space<vmem>>, vector<128x128xbf16>
    tpu.vector_store %arg27[%c128, %c0_79], %121 {strides = array<i32>} : memref<512x128xbf16, #tpu.memory_space<vmem>>, vector<128x128xbf16>,
    %cst_80 = arith.constant dense<0.000000e+00> : vector<128x128xf32>
    %123 = tpu.matmul %121, %121, %cst_80 {dimension_numbers = #tpu.dot_dimension_numbers<[0], [0], [1], [1], [0, 1, 1, 1], [], []>} : vector<128x128xbf16>, vector<128x128xbf16>, vector<128x128xf32> -> vector<128x128xf32>
    %124 = arith.mulf %120, %120 : vector<128x128xf32>
    %cst_81 = arith.constant dense<0.000000e+00> : vector<128xf32>
    %125 = vector.multi_reduction <add>, %124, %cst_81 [0] : vector<128x128xf32> to vector<128xf32>
    %126 = vector.shape_cast %125 : vector<128xf32> to vector<1x128xf32>
    %cst_82 = arith.constant 2.000000e+00 : f32
    %127 = vector.broadcast %cst_82 : f32 to vector<128x128xf32>
    %128 = arith.mulf %127, %123 : vector<128x128xf32>
    %129 = tpu.transpose %126, [1, 0] : vector<1x128xf32> -> vector<128x1xf32>
    %130 = vector.broadcast %129 : vector<128x1xf32> to vector<128x128xf32>
    %131 = arith.subf %128, %130 : vector<128x128xf32>
    %c0_83 = arith.constant 0 : index
    %c0_84 = arith.constant 0 : index
    %132 = vector.load %arg24[%c0_83, %c0_84] : memref<128x128xf32, #tpu.memory_space<vmem>>, vector<128x128xf32>
    tpu.vector_store %arg24[%c0_83, %c0_84], %131 {strides = array<i32>} : memref<128x128xf32, #tpu.memory_space<vmem>>, vector<128x128xf32>,
    %c128_85 = arith.constant 128 : index
    %c0_86 = arith.constant 0 : index
    %133 = vector.load %arg27[%c128_85, %c0_86] : memref<512x128xbf16, #tpu.memory_space<vmem>>, vector<128x128xbf16>
    %c0_87 = arith.constant 0 : index
    %c0_88 = arith.constant 0 : index
    %134 = vector.load %arg11[%c0_87, %c0_88] : memref<256x128xbf16, #tpu.memory_space<vmem>>, vector<256x128xbf16>
    %cst_89 = arith.constant dense<0.000000e+00> : vector<256x128xf32>
    %135 = tpu.matmul %134, %133, %cst_89 {dimension_numbers = #tpu.dot_dimension_numbers<[1], [0], [0], [1], [0, 0, 1, 1], [], []>} : vector<256x128xbf16>, vector<128x128xbf16>, vector<256x128xf32> -> vector<256x128xf32>
    %136 = arith.truncf %135 : vector<256x128xf32> to vector<256x128xbf16>
    %c0_90 = arith.constant 0 : index
    %c0_91 = arith.constant 0 : index
    %137 = vector.load %arg26[%c0_90, %c0_91] : memref<256x128xbf16, #tpu.memory_space<vmem>>, vector<256x128xbf16>
    tpu.vector_store %arg26[%c0_90, %c0_91], %136 {strides = array<i32>} : memref<256x128xbf16, #tpu.memory_space<vmem>>, vector<256x128xbf16>,
    %cst_92 = arith.constant -1.000000e+30 : f32
    %138 = vector.broadcast %cst_92 : f32 to vector<256x128xf32>
    %c0_93 = arith.constant 0 : index
    %c0_94 = arith.constant 0 : index
    %139 = vector.load %arg25[%c0_93, %c0_94] : memref<256x128xf32, #tpu.memory_space<vmem>>, vector<256x128xf32>
    tpu.vector_store %arg25[%c0_93, %c0_94], %138 {strides = array<i32>} : memref<256x128xf32, #tpu.memory_space<vmem>>, vector<256x128xf32>,
    %c0_i32_95 = arith.constant 0 : i32
    %c20_i32_96 = arith.constant 20 : i32
    %140 = arith.addi %c0_i32_95, %c20_i32_96 : i32
    %c1_i32_97 = arith.constant 1 : i32
    scf.for %arg28 = %c0_i32_95 to %140 step %c1_i32_97  : i32 {
      %c0_148 = arith.constant 0 : index
      %c0_149 = arith.constant 0 : index
      %228 = vector.load %arg24[%c0_148, %c0_149] : memref<128x128xf32, #tpu.memory_space<vmem>>, vector<128x128xf32>
      %cst_150 = arith.constant dense<0xFF800000> : vector<128xf32>
      %229 = vector.multi_reduction <maximumf>, %228, %cst_150 [0] : vector<128x128xf32> to vector<128xf32>
      %230 = vector.shape_cast %229 : vector<128xf32> to vector<1x128xf32>
      %231 = vector.broadcast %230 : vector<1x128xf32> to vector<128x128xf32>
      %232 = arith.cmpf oeq, %228, %231 : vector<128x128xf32>
      %233 = tpu.iota {dimensions = array<i32: 0>} : vector<128x128xi32>
      %234 = arith.sitofp %233 : vector<128x128xi32> to vector<128x128xf32>
      %cst_151 = arith.constant 1.280000e+02 : f32
      %235 = vector.broadcast %cst_151 : f32 to vector<128x128xf32>
      %236 = arith.select %232, %234, %235 : vector<128x128xi1>, vector<128x128xf32>
      %cst_152 = arith.constant dense<0x7F800000> : vector<128xf32>
      %237 = vector.multi_reduction <minimumf>, %236, %cst_152 [0] : vector<128x128xf32> to vector<128xf32>
      %238 = vector.shape_cast %237 : vector<128xf32> to vector<1x128xf32>
      %239 = vector.broadcast %238 : vector<1x128xf32> to vector<128x128xf32>
      %240 = arith.cmpf oeq, %234, %239 : vector<128x128xf32>
      %cst_153 = arith.constant 1.000000e+00 : f32
      %cst_154 = arith.constant 0.000000e+00 : f32
      %241 = vector.broadcast %cst_153 : f32 to vector<128x128xf32>
      %242 = vector.broadcast %cst_154 : f32 to vector<128x128xf32>
      %243 = arith.select %240, %241, %242 : vector<128x128xi1>, vector<128x128xf32>
      %244 = arith.truncf %243 : vector<128x128xf32> to vector<128x128xbf16>
      %c0_155 = arith.constant 0 : index
      %c0_156 = arith.constant 0 : index
      %245 = vector.load %arg26[%c0_155, %c0_156] : memref<256x128xbf16, #tpu.memory_space<vmem>>, vector<256x128xbf16>
      %cst_157 = arith.constant dense<0.000000e+00> : vector<256x128xf32>
      %246 = tpu.matmul %245, %244, %cst_157 {dimension_numbers = #tpu.dot_dimension_numbers<[1], [0], [0], [1], [0, 0, 1, 1], [], []>} : vector<256x128xbf16>, vector<128x128xbf16>, vector<256x128xf32> -> vector<256x128xf32>
      %c0_158 = arith.constant 0 : index
      %c0_159 = arith.constant 0 : index
      %247 = vector.load %arg25[%c0_158, %c0_159] : memref<256x128xf32, #tpu.memory_space<vmem>>, vector<256x128xf32>
      %248 = arith.maximumf %247, %246 : vector<256x128xf32>
      %c0_160 = arith.constant 0 : index
      %c0_161 = arith.constant 0 : index
      %249 = vector.load %arg25[%c0_160, %c0_161] : memref<256x128xf32, #tpu.memory_space<vmem>>, vector<256x128xf32>
      tpu.vector_store %arg25[%c0_160, %c0_161], %248 {strides = array<i32>} : memref<256x128xf32, #tpu.memory_space<vmem>>, vector<256x128xf32>,
      %cst_162 = arith.constant -1.000000e+30 : f32
      %250 = vector.broadcast %cst_162 : f32 to vector<128x128xf32>
      %251 = arith.select %240, %250, %228 : vector<128x128xi1>, vector<128x128xf32>
      %c0_163 = arith.constant 0 : index
      %c0_164 = arith.constant 0 : index
      %252 = vector.load %arg24[%c0_163, %c0_164] : memref<128x128xf32, #tpu.memory_space<vmem>>, vector<128x128xf32>
      tpu.vector_store %arg24[%c0_163, %c0_164], %251 {strides = array<i32>} : memref<128x128xf32, #tpu.memory_space<vmem>>, vector<128x128xf32>,
    }
    %c0_98 = arith.constant 0 : index
    %c0_99 = arith.constant 0 : index
    %141 = vector.load %arg12[%c0_98, %c0_99] : memref<256x128xbf16, #tpu.memory_space<vmem>>, vector<256x128xbf16>
    %c128_100 = arith.constant 128 : index
    %c0_101 = arith.constant 0 : index
    %142 = vector.load %arg27[%c128_100, %c0_101] : memref<512x128xbf16, #tpu.memory_space<vmem>>, vector<128x128xbf16>
    %cst_102 = arith.constant dense<0.000000e+00> : vector<256x128xf32>
    %143 = tpu.matmul %141, %142, %cst_102 {dimension_numbers = #tpu.dot_dimension_numbers<[1], [0], [0], [1], [0, 0, 1, 1], [], []>} : vector<256x128xbf16>, vector<128x128xbf16>, vector<256x128xf32> -> vector<256x128xf32>
    %c0_103 = arith.constant 0 : index
    %c0_104 = arith.constant 0 : index
    %144 = vector.load %arg13[%c0_103, %c0_104] : memref<256x1xf32, #tpu.memory_space<vmem>>, vector<256x1xf32>
    %145 = vector.broadcast %144 : vector<256x1xf32> to vector<256x128xf32>
    %146 = arith.addf %143, %145 : vector<256x128xf32>
    %c0_105 = arith.constant 0 : index
    %c0_106 = arith.constant 0 : index
    %147 = vector.load %arg25[%c0_105, %c0_106] : memref<256x128xf32, #tpu.memory_space<vmem>>, vector<256x128xf32>
    %148 = arith.addf %147, %146 : vector<256x128xf32>
    %cst_107 = arith.constant 2.000000e-01 : f32
    %149 = vector.broadcast %cst_107 : f32 to vector<256x128xf32>
    %150 = arith.mulf %149, %148 : vector<256x128xf32>
    %151 = arith.maximumf %148, %150 : vector<256x128xf32>
    %152 = arith.truncf %151 : vector<256x128xf32> to vector<256x128xbf16>
    %c256 = arith.constant 256 : index
    %c0_108 = arith.constant 0 : index
    %153 = vector.load %arg27[%c256, %c0_108] : memref<512x128xbf16, #tpu.memory_space<vmem>>, vector<256x128xbf16>
    tpu.vector_store %arg27[%c256, %c0_108], %152 {strides = array<i32>} : memref<512x128xbf16, #tpu.memory_space<vmem>>, vector<256x128xbf16>,
    %c0_109 = arith.constant 0 : index
    %c0_110 = arith.constant 0 : index
    %154 = vector.load %arg14[%c0_109, %c0_110] : memref<256x512xbf16, #tpu.memory_space<vmem>>, vector<256x512xbf16>
    %c0_111 = arith.constant 0 : index
    %c0_112 = arith.constant 0 : index
    %155 = vector.load %arg27[%c0_111, %c0_112] : memref<512x128xbf16, #tpu.memory_space<vmem>>, vector<512x128xbf16>
    %cst_113 = arith.constant dense<0.000000e+00> : vector<256x128xf32>
    %156 = tpu.matmul %154, %155, %cst_113 {dimension_numbers = #tpu.dot_dimension_numbers<[1], [0], [0], [1], [0, 0, 1, 1], [], []>} : vector<256x512xbf16>, vector<512x128xbf16>, vector<256x128xf32> -> vector<256x128xf32>
    %c0_114 = arith.constant 0 : index
    %c0_115 = arith.constant 0 : index
    %157 = vector.load %arg15[%c0_114, %c0_115] : memref<256x1xf32, #tpu.memory_space<vmem>>, vector<256x1xf32>
    %158 = vector.broadcast %157 : vector<256x1xf32> to vector<256x128xf32>
    %159 = arith.addf %156, %158 : vector<256x128xf32>
    %cst_116 = arith.constant 0.000000e+00 : f32
    %160 = vector.broadcast %cst_116 : f32 to vector<256x128xf32>
    %161 = arith.maximumf %159, %160 : vector<256x128xf32>
    %c0_117 = arith.constant 0 : index
    %c0_118 = arith.constant 0 : index
    %162 = vector.load %arg16[%c0_117, %c0_118] : memref<64x256xbf16, #tpu.memory_space<vmem>>, vector<64x256xbf16>
    %163 = arith.truncf %161 : vector<256x128xf32> to vector<256x128xbf16>
    %cst_119 = arith.constant dense<0.000000e+00> : vector<64x128xf32>
    %164 = tpu.matmul %162, %163, %cst_119 {dimension_numbers = #tpu.dot_dimension_numbers<[1], [0], [0], [1], [0, 0, 1, 1], [], []>} : vector<64x256xbf16>, vector<256x128xbf16>, vector<64x128xf32> -> vector<64x128xf32>
    %c0_120 = arith.constant 0 : index
    %c0_121 = arith.constant 0 : index
    %165 = vector.load %arg17[%c0_120, %c0_121] : memref<64x1xf32, #tpu.memory_space<vmem>>, vector<64x1xf32>
    %166 = vector.broadcast %165 : vector<64x1xf32> to vector<64x128xf32>
    %167 = arith.addf %164, %166 : vector<64x128xf32>
    %cst_122 = arith.constant 0.000000e+00 : f32
    %168 = vector.broadcast %cst_122 : f32 to vector<64x128xf32>
    %169 = arith.maximumf %167, %168 : vector<64x128xf32>
    %c0_123 = arith.constant 0 : index
    %c0_124 = arith.constant 0 : index
    %170 = vector.load %arg18[%c0_123, %c0_124] : memref<3x64xbf16, #tpu.memory_space<vmem>>, vector<3x64xbf16>
    %171 = arith.truncf %169 : vector<64x128xf32> to vector<64x128xbf16>
    %cst_125 = arith.constant dense<0.000000e+00> : vector<3x128xf32>
    %172 = tpu.matmul %170, %171, %cst_125 {dimension_numbers = #tpu.dot_dimension_numbers<[1], [0], [0], [1], [0, 0, 1, 1], [], []>} : vector<3x64xbf16>, vector<64x128xbf16>, vector<3x128xf32> -> vector<3x128xf32>
    %c0_126 = arith.constant 0 : index
    %c0_127 = arith.constant 0 : index
    %173 = vector.load %arg19[%c0_126, %c0_127] : memref<3x1xf32, #tpu.memory_space<vmem>>, vector<3x1xf32>
    %174 = vector.broadcast %173 : vector<3x1xf32> to vector<3x128xf32>
    %175 = arith.addf %172, %174 : vector<3x128xf32>
    %176 = vector.extract_strided_slice %1 {offsets = [0, 0], sizes = [3, 128], strides = [1, 1]} : vector<8x128xf32> to vector<3x128xf32>
    %177 = math.tanh %175 : vector<3x128xf32>
    %cst_128 = arith.constant 1.000000e-01 : f32
    %178 = vector.broadcast %cst_128 : f32 to vector<3x128xf32>
    %179 = arith.mulf %177, %178 : vector<3x128xf32>
    %180 = arith.addf %176, %179 : vector<3x128xf32>
    %c0_129 = arith.constant 0 : index
    %c0_130 = arith.constant 0 : index
    %c0_131 = arith.constant 0 : index
    %181 = vector.load %arg22[%c0_129, %c0_130, %c0_131] : memref<1x3x128xf32, #tpu.memory_space<vmem>>, vector<1x3x128xf32>
    %182 = vector.shape_cast %181 : vector<1x3x128xf32> to vector<3x128xf32>
    %183 = vector.shape_cast %180 : vector<3x128xf32> to vector<1x3x128xf32>
    tpu.vector_store %arg22[%c0_129, %c0_130, %c0_131], %183 {strides = array<i32>} : memref<1x3x128xf32, #tpu.memory_space<vmem>>, vector<1x3x128xf32>,
    %c0_132 = arith.constant 0 : index
    %c0_133 = arith.constant 0 : index
    %c0_134 = arith.constant 0 : index
    %184 = vector.load %arg20[%c0_132, %c0_133, %c0_134] : memref<1x24x3xf32, #tpu.memory_space<vmem>>, vector<1x24x3xf32>
    %185 = vector.shape_cast %184 : vector<1x24x3xf32> to vector<24x3xf32>
    %c0_135 = arith.constant 0 : index
    %c0_136 = arith.constant 0 : index
    %c0_137 = arith.constant 0 : index
    %186 = vector.load %arg21[%c0_135, %c0_136, %c0_137] : memref<1x24x1xf32, #tpu.memory_space<vmem>>, vector<1x24x1xf32>
    %187 = vector.shape_cast %186 : vector<1x24x1xf32> to vector<24x1xf32>
    %188 = vector.extract_strided_slice %185 {offsets = [0, 0], sizes = [24, 1], strides = [1, 1]} : vector<24x3xf32> to vector<24x1xf32>
    %189 = vector.extract_strided_slice %180 {offsets = [0, 0], sizes = [1, 128], strides = [1, 1]} : vector<3x128xf32> to vector<1x128xf32>
    %190 = vector.broadcast %188 : vector<24x1xf32> to vector<24x128xf32>
    %191 = vector.broadcast %189 : vector<1x128xf32> to vector<24x128xf32>
    %192 = arith.mulf %190, %191 : vector<24x128xf32>
    %193 = vector.extract_strided_slice %185 {offsets = [0, 1], sizes = [24, 1], strides = [1, 1]} : vector<24x3xf32> to vector<24x1xf32>
    %194 = vector.extract_strided_slice %180 {offsets = [1, 0], sizes = [1, 128], strides = [1, 1]} : vector<3x128xf32> to vector<1x128xf32>
    %195 = vector.broadcast %193 : vector<24x1xf32> to vector<24x128xf32>
    %196 = vector.broadcast %194 : vector<1x128xf32> to vector<24x128xf32>
    %197 = arith.mulf %195, %196 : vector<24x128xf32>
    %198 = arith.addf %192, %197 : vector<24x128xf32>
    %199 = vector.extract_strided_slice %185 {offsets = [0, 2], sizes = [24, 1], strides = [1, 1]} : vector<24x3xf32> to vector<24x1xf32>
    %200 = vector.extract_strided_slice %180 {offsets = [2, 0], sizes = [1, 128], strides = [1, 1]} : vector<3x128xf32> to vector<1x128xf32>
    %201 = vector.broadcast %199 : vector<24x1xf32> to vector<24x128xf32>
    %202 = vector.broadcast %200 : vector<1x128xf32> to vector<24x128xf32>
    %203 = arith.mulf %201, %202 : vector<24x128xf32>
    %204 = arith.addf %198, %203 : vector<24x128xf32>
    %205 = vector.broadcast %187 : vector<24x1xf32> to vector<24x128xf32>
    %206 = arith.addf %204, %205 : vector<24x128xf32>
    %207 = vector.extract_strided_slice %206 {offsets = [0, 0], sizes = [8, 128], strides = [1, 1]} : vector<24x128xf32> to vector<8x128xf32>
    %208 = vector.extract_strided_slice %206 {offsets = [8, 0], sizes = [8, 128], strides = [1, 1]} : vector<24x128xf32> to vector<8x128xf32>
    %209 = vector.extract_strided_slice %206 {offsets = [16, 0], sizes = [8, 128], strides = [1, 1]} : vector<24x128xf32> to vector<8x128xf32>
    %cst_138 = arith.constant 0.000000e+00 : f32
    %210 = vector.broadcast %cst_138 : f32 to vector<8x128xf32>
    %211 = arith.cmpf one, %209, %210 : vector<8x128xf32>
    %cst_139 = arith.constant 9.99999993E-9 : f32
    %212 = vector.broadcast %cst_139 : f32 to vector<8x128xf32>
    %213 = arith.select %211, %209, %212 : vector<8x128xi1>, vector<8x128xf32>
    %214 = tpu.reciprocal %213 {approx = true} : vector<8x128xf32> -> vector<8x128xf32>
    %215 = arith.mulf %207, %214 : vector<8x128xf32>
    %c0_140 = arith.constant 0 : index
    %c0_141 = arith.constant 0 : index
    %c0_142 = arith.constant 0 : index
    %216 = vector.load %arg23[%c0_140, %c0_141, %c0_142] : memref<1x24x128xf32, #tpu.memory_space<vmem>>, vector<1x8x128xf32>
    %217 = vector.shape_cast %216 : vector<1x8x128xf32> to vector<8x128xf32>
    %218 = vector.shape_cast %215 : vector<8x128xf32> to vector<1x8x128xf32>
    tpu.vector_store %arg23[%c0_140, %c0_141, %c0_142], %218 {strides = array<i32>} : memref<1x24x128xf32, #tpu.memory_space<vmem>>, vector<1x8x128xf32>,
    %219 = arith.mulf %208, %214 : vector<8x128xf32>
    %cst_143 = arith.constant 2.240000e+02 : f32
    %220 = vector.broadcast %cst_143 : f32 to vector<8x128xf32>
    %221 = arith.subf %220, %219 : vector<8x128xf32>
    %c0_144 = arith.constant 0 : index
    %c8 = arith.constant 8 : index
    %c0_145 = arith.constant 0 : index
    %222 = vector.load %arg23[%c0_144, %c8, %c0_145] : memref<1x24x128xf32, #tpu.memory_space<vmem>>, vector<1x8x128xf32>
    %223 = vector.shape_cast %222 : vector<1x8x128xf32> to vector<8x128xf32>
    %224 = vector.shape_cast %221 : vector<8x128xf32> to vector<1x8x128xf32>
    tpu.vector_store %arg23[%c0_144, %c8, %c0_145], %224 {strides = array<i32>} : memref<1x24x128xf32, #tpu.memory_space<vmem>>, vector<1x8x128xf32>,
    %c0_146 = arith.constant 0 : index
    %c16 = arith.constant 16 : index
    %c0_147 = arith.constant 0 : index
    %225 = vector.load %arg23[%c0_146, %c16, %c0_147] : memref<1x24x128xf32, #tpu.memory_space<vmem>>, vector<1x8x128xf32>
    %226 = vector.shape_cast %225 : vector<1x8x128xf32> to vector<8x128xf32>
    %227 = vector.shape_cast %213 : vector<8x128xf32> to vector<1x8x128xf32>
    tpu.vector_store %arg23[%c0_146, %c16, %c0_147], %227 {strides = array<i32>} : memref<1x24x128xf32, #tpu.memory_space<vmem>>, vector<1x8x128xf32>,
    return
  }
  func.func @transform_0(%arg0: i32) -> (i32, i32, i32) {
    %c0_i32 = arith.constant 0 : i32
    %c0_i32_0 = arith.constant 0 : i32
    %c0_i32_1 = arith.constant 0 : i32
    return %arg0, %c0_i32, %c0_i32_0 : i32, i32, i32
  }
  func.func @transform_1(%arg0: i32) -> (i32, i32) {
    %c0_i32 = arith.constant 0 : i32
    %c0_i32_0 = arith.constant 0 : i32
    %c0_i32_1 = arith.constant 0 : i32
    return %c0_i32, %c0_i32_0 : i32, i32
  }
  func.func @transform_2(%arg0: i32) -> (i32, i32) {
    %c0_i32 = arith.constant 0 : i32
    %c0_i32_0 = arith.constant 0 : i32
    %c0_i32_1 = arith.constant 0 : i32
    return %c0_i32, %c0_i32_0 : i32, i32
  }
  func.func @transform_3(%arg0: i32) -> (i32, i32) {
    %c0_i32 = arith.constant 0 : i32
    %c0_i32_0 = arith.constant 0 : i32
    %c0_i32_1 = arith.constant 0 : i32
    return %c0_i32, %c0_i32_0 : i32, i32
  }
  func.func @transform_4(%arg0: i32) -> (i32, i32) {
    %c0_i32 = arith.constant 0 : i32
    %c0_i32_0 = arith.constant 0 : i32
    %c0_i32_1 = arith.constant 0 : i32
    return %c0_i32, %c0_i32_0 : i32, i32
  }
  func.func @transform_5(%arg0: i32) -> (i32, i32) {
    %c0_i32 = arith.constant 0 : i32
    %c0_i32_0 = arith.constant 0 : i32
    %c0_i32_1 = arith.constant 0 : i32
    return %c0_i32, %c0_i32_0 : i32, i32
  }
  func.func @transform_6(%arg0: i32) -> (i32, i32) {
    %c0_i32 = arith.constant 0 : i32
    %c0_i32_0 = arith.constant 0 : i32
    %c0_i32_1 = arith.constant 0 : i32
    return %c0_i32, %c0_i32_0 : i32, i32
  }
  func.func @transform_7(%arg0: i32) -> (i32, i32) {
    %c0_i32 = arith.constant 0 : i32
    %c0_i32_0 = arith.constant 0 : i32
    %c0_i32_1 = arith.constant 0 : i32
    return %c0_i32, %c0_i32_0 : i32, i32
  }
  func.func @transform_8(%arg0: i32) -> (i32, i32) {
    %c0_i32 = arith.constant 0 : i32
    %c0_i32_0 = arith.constant 0 : i32
    %c0_i32_1 = arith.constant 0 : i32
    return %c0_i32, %c0_i32_0 : i32, i32
  }
  func.func @transform_9(%arg0: i32) -> (i32, i32) {
    %c0_i32 = arith.constant 0 : i32
    %c0_i32_0 = arith.constant 0 : i32
    %c0_i32_1 = arith.constant 0 : i32
    return %c0_i32, %c0_i32_0 : i32, i32
  }
  func.func @transform_10(%arg0: i32) -> (i32, i32) {
    %c0_i32 = arith.constant 0 : i32
    %c0_i32_0 = arith.constant 0 : i32
    %c0_i32_1 = arith.constant 0 : i32
    return %c0_i32, %c0_i32_0 : i32, i32
  }
  func.func @transform_11(%arg0: i32) -> (i32, i32) {
    %c0_i32 = arith.constant 0 : i32
    %c0_i32_0 = arith.constant 0 : i32
    %c0_i32_1 = arith.constant 0 : i32
    return %c0_i32, %c0_i32_0 : i32, i32
  }
  func.func @transform_12(%arg0: i32) -> (i32, i32) {
    %c0_i32 = arith.constant 0 : i32
    %c0_i32_0 = arith.constant 0 : i32
    %c0_i32_1 = arith.constant 0 : i32
    return %c0_i32, %c0_i32_0 : i32, i32
  }
  func.func @transform_13(%arg0: i32) -> (i32, i32) {
    %c0_i32 = arith.constant 0 : i32
    %c0_i32_0 = arith.constant 0 : i32
    %c0_i32_1 = arith.constant 0 : i32
    return %c0_i32, %c0_i32_0 : i32, i32
  }
  func.func @transform_14(%arg0: i32) -> (i32, i32) {
    %c0_i32 = arith.constant 0 : i32
    %c0_i32_0 = arith.constant 0 : i32
    %c0_i32_1 = arith.constant 0 : i32
    return %c0_i32, %c0_i32_0 : i32, i32
  }
  func.func @transform_15(%arg0: i32) -> (i32, i32) {
    %c0_i32 = arith.constant 0 : i32
    %c0_i32_0 = arith.constant 0 : i32
    %c0_i32_1 = arith.constant 0 : i32
    return %c0_i32, %c0_i32_0 : i32, i32
  }
  func.func @transform_16(%arg0: i32) -> (i32, i32) {
    %c0_i32 = arith.constant 0 : i32
    %c0_i32_0 = arith.constant 0 : i32
    %c0_i32_1 = arith.constant 0 : i32
    return %c0_i32, %c0_i32_0 : i32, i32
  }
  func.func @transform_17(%arg0: i32) -> (i32, i32) {
    %c0_i32 = arith.constant 0 : i32
    %c0_i32_0 = arith.constant 0 : i32
    %c0_i32_1 = arith.constant 0 : i32
    return %c0_i32, %c0_i32_0 : i32, i32
  }
  func.func @transform_18(%arg0: i32) -> (i32, i32) {
    %c0_i32 = arith.constant 0 : i32
    %c0_i32_0 = arith.constant 0 : i32
    %c0_i32_1 = arith.constant 0 : i32
    return %c0_i32, %c0_i32_0 : i32, i32
  }
  func.func @transform_19(%arg0: i32) -> (i32, i32, i32) {
    %c0_i32 = arith.constant 0 : i32
    %c0_i32_0 = arith.constant 0 : i32
    %c0_i32_1 = arith.constant 0 : i32
    return %arg0, %c0_i32, %c0_i32_0 : i32, i32, i32
  }
  func.func @transform_20(%arg0: i32) -> (i32, i32, i32) {
    %c0_i32 = arith.constant 0 : i32
    %c0_i32_0 = arith.constant 0 : i32
    %c0_i32_1 = arith.constant 0 : i32
    return %arg0, %c0_i32, %c0_i32_0 : i32, i32, i32
  }
  func.func @transform_21(%arg0: i32) -> (i32, i32, i32) {
    %c0_i32 = arith.constant 0 : i32
    %c0_i32_0 = arith.constant 0 : i32
    %c0_i32_1 = arith.constant 0 : i32
    return %arg0, %c0_i32, %c0_i32_0 : i32, i32, i32
  }
  func.func @transform_22(%arg0: i32) -> (i32, i32, i32) {
    %c0_i32 = arith.constant 0 : i32
    %c0_i32_0 = arith.constant 0 : i32
    %c0_i32_1 = arith.constant 0 : i32
    return %arg0, %c0_i32, %c0_i32_0 : i32, i32, i32
  }
}

</mosaic_0001>

<llo_original>
// kernel: refine_forward.1
$region0: #{refine_forward.1}
  #allocation0 [shape = 'u32[]', space=smem, size = 0x4, offset = 0x4, fixed_abs, tag = 'smem constant byte address 0x4 - core index']
  #allocation1 [shape = 'u32[144,128]{1,0:T(1,128)}', space=vmem, size = 0x12000, scoped, tag = 'internal scratch']
  #allocation2 [shape = 'f32[128,128]{1,0:T(8,128)}', space=vmem, size = 0x10000, scoped, tag = 'scratch operand']
  #allocation3 [shape = 'f32[256,128]{1,0:T(8,128)}', space=vmem, size = 0x20000, scoped, tag = 'scratch operand']
  #allocation4 [shape = 'bf16[256,128]{1,0:T(16,128)(2,1)}', space=vmem, size = 0x10000, scoped, tag = 'scratch operand']
  #allocation5 [shape = 'bf16[512,128]{1,0:T(16,128)(2,1)}', space=vmem, size = 0x20000, scoped, tag = 'scratch operand']
  %s0 = inlined_call_operand.vmem [shape: f32[2,8,128], index: 0, kind: input, shape index: {}]
  %s1 = inlined_call_operand.vmem [shape: f32[64,3], index: 1, kind: input, shape index: {}]
  %s2 = inlined_call_operand.vmem [shape: f32[64,3], index: 2, kind: input, shape index: {}]
  %s3 = inlined_call_operand.vmem [shape: f32[64,1], index: 3, kind: input, shape index: {}]
  %s4 = inlined_call_operand.vmem [shape: bf16[64,64], index: 4, kind: input, shape index: {}]
  %s5 = inlined_call_operand.vmem [shape: bf16[64,64], index: 5, kind: input, shape index: {}]
  %s6 = inlined_call_operand.vmem [shape: f32[64,1], index: 6, kind: input, shape index: {}]
  %s7 = inlined_call_operand.vmem [shape: bf16[128,64], index: 7, kind: input, shape index: {}]
  %s8 = inlined_call_operand.vmem [shape: bf16[128,64], index: 8, kind: input, shape index: {}]
  %s9 = inlined_call_operand.vmem [shape: f32[128,1], index: 9, kind: input, shape index: {}]
  %s10 = inlined_call_operand.vmem [shape: bf16[256,128], index: 10, kind: input, shape index: {}]
  %s11 = inlined_call_operand.vmem [shape: bf16[256,128], index: 11, kind: input, shape index: {}]
  %s12 = inlined_call_operand.vmem [shape: f32[256,1], index: 12, kind: input, shape index: {}]
  %s13 = inlined_call_operand.vmem [shape: bf16[256,512], index: 13, kind: input, shape index: {}]
  %s14 = inlined_call_operand.vmem [shape: f32[256,1], index: 14, kind: input, shape index: {}]
  %s15 = inlined_call_operand.vmem [shape: bf16[64,256], index: 15, kind: input, shape index: {}]
  %s16 = inlined_call_operand.vmem [shape: f32[64,1], index: 16, kind: input, shape index: {}]
  %s17 = inlined_call_operand.vmem [shape: bf16[3,64], index: 17, kind: input, shape index: {}]
  %s18 = inlined_call_operand.vmem [shape: f32[3,1], index: 18, kind: input, shape index: {}]
  %s19 = inlined_call_operand.vmem [shape: f32[2,24,3], index: 19, kind: input, shape index: {}]
  %s20 = inlined_call_operand.vmem [shape: f32[2,24,1], index: 20, kind: input, shape index: {}]
  %s21 = inlined_call_operand.vmem [shape: f32[2,3,128], index: 21, kind: output, shape index: {0}]
  %s22 = inlined_call_operand.vmem [shape: f32[2,24,128], index: 22, kind: output, shape index: {1}]
  %23 = xla_tuple %s21, %s22
  %s24 = sld [smem:[#allocation0]]
  $region153: #{refine_forward.1} parent=0
    _
  %s26 = ssub.s32 1, %s24
  %s27 = scalar_select 0, %s26, %s24
  loop: start=0, step=1, limit=4
  $region2: #{refine_forward.1} parent=0 // loop_pre_header
    _
  $region3: #{refine_forward.1} parent=0 // loop_header
    %s29 = sphi 0, %s33
    %p30 = scmp.ge.s32.totalorder %s29, 4
    %s39 = sphi 0, %s41
    %s42 = sphi 0, %s39
    %s43 = sphi 0, %s42
    %s59 = sphi 0, %s43
    %s63 = sphi 0, %s63
    %s65 = sphi 0, %s63
    %s66 = sphi 0, %s65
    %s80 = sphi 0, %s66
    %s84 = sphi 0, %s84
    %s86 = sphi 0, %s84
    %s87 = sphi 0, %s86
    %s101 = sphi 0, %s87
    %s105 = sphi 0, %s105
    %s107 = sphi 0, %s105
    %s108 = sphi 0, %s107
    %s122 = sphi 0, %s108
    %s126 = sphi 0, %s126
    %s128 = sphi 0, %s126
    %s129 = sphi 0, %s128
    %s143 = sphi 0, %s129
    %s147 = sphi 0, %s147
    %s149 = sphi 0, %s147
    %s150 = sphi 0, %s149
    %s164 = sphi 0, %s150
    %s168 = sphi 0, %s168
    %s170 = sphi 0, %s168
    %s171 = sphi 0, %s170
    %s185 = sphi 0, %s171
    %s189 = sphi 0, %s189
    %s191 = sphi 0, %s189
    %s192 = sphi 0, %s191
    %s206 = sphi 0, %s192
    %s210 = sphi 0, %s210
    %s212 = sphi 0, %s210
    %s213 = sphi 0, %s212
    %s227 = sphi 0, %s213
    %s231 = sphi 0, %s231
    %s233 = sphi 0, %s231
    %s234 = sphi 0, %s233
    %s248 = sphi 0, %s234
    %s252 = sphi 0, %s252
    %s254 = sphi 0, %s252
    %s255 = sphi 0, %s254
    %s269 = sphi 0, %s255
    %s273 = sphi 0, %s273
    %s275 = sphi 0, %s273
    %s276 = sphi 0, %s275
    %s290 = sphi 0, %s276
    %s294 = sphi 0, %s294
    %s296 = sphi 0, %s294
    %s297 = sphi 0, %s296
    %s311 = sphi 0, %s297
    %s315 = sphi 0, %s315
    %s317 = sphi 0, %s315
    %s318 = sphi 0, %s317
    %s332 = sphi 0, %s318
    %s336 = sphi 0, %s336
    %s338 = sphi 0, %s336
    %s339 = sphi 0, %s338
    %s353 = sphi 0, %s339
    %s357 = sphi 0, %s357
    %s359 = sphi 0, %s357
    %s360 = sphi 0, %s359
    %s374 = sphi 0, %s360
    %s378 = sphi 0, %s378
    %s380 = sphi 0, %s378
    %s381 = sphi 0, %s380
    %s395 = sphi 0, %s381
    %s399 = sphi 0, %s399
    %s401 = sphi 0, %s399
    %s402 = sphi 0, %s401
    %s416 = sphi 0, %s402
    %s420 = sphi 0, %s420
    %s422 = sphi 0, %s420
    %s423 = sphi 0, %s422
    %s437 = sphi 0, %s423
    %s443 = sphi 0, %s445
    %s446 = sphi 0, %s443
    %s447 = sphi 0, %s446
    %s463 = sphi 0, %s447
    %s469 = sphi 0, %s471
    %s472 = sphi 0, %s469
    %s473 = sphi 0, %s472
    %s489 = sphi 0, %s473
    %s495 = sphi 0, %s497
    %s498 = sphi 0, %s495
    %s499 = sphi 0, %s498
    %s515 = sphi 0, %s499
    %s521 = sphi 0, %s523
    %s524 = sphi 0, %s521
    %s525 = sphi 0, %s524
    %s541 = sphi 0, %s525
  $region4: #{refine_forward.1} parent=0 // loop_header_branch
    %32 = sbr.rel (%p30) target = $region8
  $region5: #{refine_forward.1} parent=0 // loop_body
    %s34 = ssub.s32 %s29, 1
    %s35 = ssub.s32 %s29, 2
    %s36 = sadd.s32 %s29, 1
    %s37 = ssub.s32 %s29, %s36
    %p38 = scmp.eq.s32.totalorder %s37, 0
    %s40 = sadd.s32 %s39, 1
    %s41 = scalar_select %p38, %s39, %s40
    %p44 = pneg %p38
    %p45 = scmp.eq.s32.totalorder %s29, 1
    %p46 = por %p44, %p45
    %p47 = scmp.ne.s32.totalorder %s39, %s42
    %p48 = scmp.eq.s32.totalorder %s29, 0
    %p49 = por %p47, %p48
    %p50 = scmp.ne.s32.totalorder %s39, %s42
    %p51 = scmp.eq.s32.totalorder %s34, 1
    %p52 = por %p50, %p51
    %p53 = scmp.ne.s32.totalorder %s42, %s43
    %p54 = scmp.eq.s32.totalorder %s34, 0
    %p55 = por %p53, %p54
    %p56 = scmp.ne.s32.totalorder %s42, %s43
    %p57 = scmp.eq.s32.totalorder %s35, 1
    %p58 = por %p56, %p57
    %p60 = scmp.ne.s32.totalorder %s43, %s59
    %p61 = scmp.eq.s32.totalorder %s35, 0
    %p62 = por %p60, %p61
    %s64 = sadd.s32 %s63, 1
    %p67 = scmp.eq.s32.totalorder %s29, 1
    %p68 = scmp.ne.s32.totalorder %s63, %s65
    %p69 = scmp.eq.s32.totalorder %s29, 0
    %p70 = por %p68, %p69
    %p71 = scmp.ne.s32.totalorder %s63, %s65
    %p72 = scmp.eq.s32.totalorder %s34, 1
    %p73 = por %p71, %p72
    %p74 = scmp.ne.s32.totalorder %s65, %s66
    %p75 = scmp.eq.s32.totalorder %s34, 0
    %p76 = por %p74, %p75
    %p77 = scmp.ne.s32.totalorder %s65, %s66
    %p78 = scmp.eq.s32.totalorder %s35, 1
    %p79 = por %p77, %p78
    %p81 = scmp.ne.s32.totalorder %s66, %s80
    %p82 = scmp.eq.s32.totalorder %s35, 0
    %p83 = por %p81, %p82
    %s85 = sadd.s32 %s84, 1
    %p88 = scmp.eq.s32.totalorder %s29, 1
    %p89 = scmp.ne.s32.totalorder %s84, %s86
    %p90 = scmp.eq.s32.totalorder %s29, 0
    %p91 = por %p89, %p90
    %p92 = scmp.ne.s32.totalorder %s84, %s86
    %p93 = scmp.eq.s32.totalorder %s34, 1
    %p94 = por %p92, %p93
    %p95 = scmp.ne.s32.totalorder %s86, %s87
    %p96 = scmp.eq.s32.totalorder %s34, 0
    %p97 = por %p95, %p96
    %p98 = scmp.ne.s32.totalorder %s86, %s87
    %p99 = scmp.eq.s32.totalorder %s35, 1
    %p100 = por %p98, %p99
    %p102 = scmp.ne.s32.totalorder %s87, %s101
    %p103 = scmp.eq.s32.totalorder %s35, 0
    %p104 = por %p102, %p103
    %s106 = sadd.s32 %s105, 1
    %p109 = scmp.eq.s32.totalorder %s29, 1
    %p110 = scmp.ne.s32.totalorder %s105, %s107
    %p111 = scmp.eq.s32.totalorder %s29, 0
    %p112 = por %p110, %p111
    %p113 = scmp.ne.s32.totalorder %s105, %s107
    %p114 = scmp.eq.s32.totalorder %s34, 1
    %p115 = por %p113, %p114
    %p116 = scmp.ne.s32.totalorder %s107, %s108
    %p117 = scmp.eq.s32.totalorder %s34, 0
    %p118 = por %p116, %p117
    %p119 = scmp.ne.s32.totalorder %s107, %s108
    %p120 = scmp.eq.s32.totalorder %s35, 1
    %p121 = por %p119, %p120
    %p123 = scmp.ne.s32.totalorder %s108, %s122
    %p124 = scmp.eq.s32.totalorder %s35, 0
    %p125 = por %p123, %p124
    %s127 = sadd.s32 %s126, 1
    %p130 = scmp.eq.s32.totalorder %s29, 1
    %p131 = scmp.ne.s32.totalorder %s126, %s128
    %p132 = scmp.eq.s32.totalorder %s29, 0
    %p133 = por %p131, %p132
    %p134 = scmp.ne.s32.totalorder %s126, %s128
    %p135 = scmp.eq.s32.totalorder %s34, 1
    %p136 = por %p134, %p135
    %p137 = scmp.ne.s32.totalorder %s128, %s129
    %p138 = scmp.eq.s32.totalorder %s34, 0
    %p139 = por %p137, %p138
    %p140 = scmp.ne.s32.totalorder %s128, %s129
    %p141 = scmp.eq.s32.totalorder %s35, 1
    %p142 = por %p140, %p141
    %p144 = scmp.ne.s32.totalorder %s129, %s143
    %p145 = scmp.eq.s32.totalorder %s35, 0
    %p146 = por %p144, %p145
    %s148 = sadd.s32 %s147, 1
    %p151 = scmp.eq.s32.totalorder %s29, 1
    %p152 = scmp.ne.s32.totalorder %s147, %s149
    %p153 = scmp.eq.s32.totalorder %s29, 0
    %p154 = por %p152, %p153
    %p155 = scmp.ne.s32.totalorder %s147, %s149
    %p156 = scmp.eq.s32.totalorder %s34, 1
    %p157 = por %p155, %p156
    %p158 = scmp.ne.s32.totalorder %s149, %s150
    %p159 = scmp.eq.s32.totalorder %s34, 0
    %p160 = por %p158, %p159
    %p161 = scmp.ne.s32.totalorder %s149, %s150
    %p162 = scmp.eq.s32.totalorder %s35, 1
    %p163 = por %p161, %p162
    %p165 = scmp.ne.s32.totalorder %s150, %s164
    %p166 = scmp.eq.s32.totalorder %s35, 0
    %p167 = por %p165, %p166
    %s169 = sadd.s32 %s168, 1
    %p172 = scmp.eq.s32.totalorder %s29, 1
    %p173 = scmp.ne.s32.totalorder %s168, %s170
    %p174 = scmp.eq.s32.totalorder %s29, 0
    %p175 = por %p173, %p174
    %p176 = scmp.ne.s32.totalorder %s168, %s170
    %p177 = scmp.eq.s32.totalorder %s34, 1
    %p178 = por %p176, %p177
    %p179 = scmp.ne.s32.totalorder %s170, %s171
    %p180 = scmp.eq.s32.totalorder %s34, 0
    %p181 = por %p179, %p180
    %p182 = scmp.ne.s32.totalorder %s170, %s171
    %p183 = scmp.eq.s32.totalorder %s35, 1
    %p184 = por %p182, %p183
    %p186 = scmp.ne.s32.totalorder %s171, %s185
    %p187 = scmp.eq.s32.totalorder %s35, 0
    %p188 = por %p186, %p187
    %s190 = sadd.s32 %s189, 1
    %p193 = scmp.eq.s32.totalorder %s29, 1
    %p194 = scmp.ne.s32.totalorder %s189, %s191
    %p195 = scmp.eq.s32.totalorder %s29, 0
    %p196 = por %p194, %p195
    %p197 = scmp.ne.s32.totalorder %s189, %s191
    %p198 = scmp.eq.s32.totalorder %s34, 1
    %p199 = por %p197, %p198
    %p200 = scmp.ne.s32.totalorder %s191, %s192
    %p201 = scmp.eq.s32.totalorder %s34, 0
    %p202 = por %p200, %p201
    %p203 = scmp.ne.s32.totalorder %s191, %s192
    %p204 = scmp.eq.s32.totalorder %s35, 1
    %p205 = por %p203, %p204
    %p207 = scmp.ne.s32.totalorder %s192, %s206
    %p208 = scmp.eq.s32.totalorder %s35, 0
    %p209 = por %p207, %p208
    %s211 = sadd.s32 %s210, 1
    %p214 = scmp.eq.s32.totalorder %s29, 1
    %p215 = scmp.ne.s32.totalorder %s210, %s212
    %p216 = scmp.eq.s32.totalorder %s29, 0
    %p217 = por %p215, %p216
    %p218 = scmp.ne.s32.totalorder %s210, %s212
    %p219 = scmp.eq.s32.totalorder %s34, 1
    %p220 = por %p218, %p219
    %p221 = scmp.ne.s32.totalorder %s212, %s213
    %p222 = scmp.eq.s32.totalorder %s34, 0
    %p223 = por %p221, %p222
    %p224 = scmp.ne.s32.totalorder %s212, %s213
    %p225 = scmp.eq.s32.totalorder %s35, 1
    %p226 = por %p224, %p225
    %p228 = scmp.ne.s32.totalorder %s213, %s227
    %p229 = scmp.eq.s32.totalorder %s35, 0
    %p230 = por %p228, %p229
    %s232 = sadd.s32 %s231, 1
    %p235 = scmp.eq.s32.totalorder %s29, 1
    %p236 = scmp.ne.s32.totalorder %s231, %s233
    %p237 = scmp.eq.s32.totalorder %s29, 0
    %p238 = por %p236, %p237
    %p239 = scmp.ne.s32.totalorder %s231, %s233
    %p240 = scmp.eq.s32.totalorder %s34, 1
    %p241 = por %p239, %p240
    %p242 = scmp.ne.s32.totalorder %s233, %s234
    %p243 = scmp.eq.s32.totalorder %s34, 0
    %p244 = por %p242, %p243
    %p245 = scmp.ne.s32.totalorder %s233, %s234
    %p246 = scmp.eq.s32.totalorder %s35, 1
    %p247 = por %p245, %p246
    %p249 = scmp.ne.s32.totalorder %s234, %s248
    %p250 = scmp.eq.s32.totalorder %s35, 0
    %p251 = por %p249, %p250
    %s253 = sadd.s32 %s252, 1
    %p256 = scmp.eq.s32.totalorder %s29, 1
    %p257 = scmp.ne.s32.totalorder %s252, %s254
    %p258 = scmp.eq.s32.totalorder %s29, 0
    %p259 = por %p257, %p258
    %p260 = scmp.ne.s32.totalorder %s252, %s254
    %p261 = scmp.eq.s32.totalorder %s34, 1
    %p262 = por %p260, %p261
    %p263 = scmp.ne.s32.totalorder %s254, %s255
    %p264 = scmp.eq.s32.totalorder %s34, 0
    %p265 = por %p263, %p264
    %p266 = scmp.ne.s32.totalorder %s254, %s255
    %p267 = scmp.eq.s32.totalorder %s35, 1
    %p268 = por %p266, %p267
    %p270 = scmp.ne.s32.totalorder %s255, %s269
    %p271 = scmp.eq.s32.totalorder %s35, 0
    %p272 = por %p270, %p271
    %s274 = sadd.s32 %s273, 1
    %p277 = scmp.eq.s32.totalorder %s29, 1
    %p278 = scmp.ne.s32.totalorder %s273, %s275
    %p279 = scmp.eq.s32.totalorder %s29, 0
    %p280 = por %p278, %p279
    %p281 = scmp.ne.s32.totalorder %s273, %s275
    %p282 = scmp.eq.s32.totalorder %s34, 1
    %p283 = por %p281, %p282
    %p284 = scmp.ne.s32.totalorder %s275, %s276
    %p285 = scmp.eq.s32.totalorder %s34, 0
    %p286 = por %p284, %p285
    %p287 = scmp.ne.s32.totalorder %s275, %s276
    %p288 = scmp.eq.s32.totalorder %s35, 1
    %p289 = por %p287, %p288
    %p291 = scmp.ne.s32.totalorder %s276, %s290
    %p292 = scmp.eq.s32.totalorder %s35, 0
    %p293 = por %p291, %p292
    %s295 = sadd.s32 %s294, 1
    %p298 = scmp.eq.s32.totalorder %s29, 1
    %p299 = scmp.ne.s32.totalorder %s294, %s296
    %p300 = scmp.eq.s32.totalorder %s29, 0
    %p301 = por %p299, %p300
    %p302 = scmp.ne.s32.totalorder %s294, %s296
    %p303 = scmp.eq.s32.totalorder %s34, 1
    %p304 = por %p302, %p303
    %p305 = scmp.ne.s32.totalorder %s296, %s297
    %p306 = scmp.eq.s32.totalorder %s34, 0
    %p307 = por %p305, %p306
    %p308 = scmp.ne.s32.totalorder %s296, %s297
    %p309 = scmp.eq.s32.totalorder %s35, 1
    %p310 = por %p308, %p309
    %p312 = scmp.ne.s32.totalorder %s297, %s311
    %p313 = scmp.eq.s32.totalorder %s35, 0
    %p314 = por %p312, %p313
    %s316 = sadd.s32 %s315, 1
    %p319 = scmp.eq.s32.totalorder %s29, 1
    %p320 = scmp.ne.s32.totalorder %s315, %s317
    %p321 = scmp.eq.s32.totalorder %s29, 0
    %p322 = por %p320, %p321
    %p323 = scmp.ne.s32.totalorder %s315, %s317
    %p324 = scmp.eq.s32.totalorder %s34, 1
    %p325 = por %p323, %p324
    %p326 = scmp.ne.s32.totalorder %s317, %s318
    %p327 = scmp.eq.s32.totalorder %s34, 0
    %p328 = por %p326, %p327
    %p329 = scmp.ne.s32.totalorder %s317, %s318
    %p330 = scmp.eq.s32.totalorder %s35, 1
    %p331 = por %p329, %p330
    %p333 = scmp.ne.s32.totalorder %s318, %s332
    %p334 = scmp.eq.s32.totalorder %s35, 0
    %p335 = por %p333, %p334
    %s337 = sadd.s32 %s336, 1
    %p340 = scmp.eq.s32.totalorder %s29, 1
    %p341 = scmp.ne.s32.totalorder %s336, %s338
    %p342 = scmp.eq.s32.totalorder %s29, 0
    %p343 = por %p341, %p342
    %p344 = scmp.ne.s32.totalorder %s336, %s338
    %p345 = scmp.eq.s32.totalorder %s34, 1
    %p346 = por %p344, %p345
    %p347 = scmp.ne.s32.totalorder %s338, %s339
    %p348 = scmp.eq.s32.totalorder %s34, 0
    %p349 = por %p347, %p348
    %p350 = scmp.ne.s32.totalorder %s338, %s339
    %p351 = scmp.eq.s32.totalorder %s35, 1
    %p352 = por %p350, %p351
    %p354 = scmp.ne.s32.totalorder %s339, %s353
    %p355 = scmp.eq.s32.totalorder %s35, 0
    %p356 = por %p354, %p355
    %s358 = sadd.s32 %s357, 1
    %p361 = scmp.eq.s32.totalorder %s29, 1
    %p362 = scmp.ne.s32.totalorder %s357, %s359
    %p363 = scmp.eq.s32.totalorder %s29, 0
    %p364 = por %p362, %p363
    %p365 = scmp.ne.s32.totalorder %s357, %s359
    %p366 = scmp.eq.s32.totalorder %s34, 1
    %p367 = por %p365, %p366
    %p368 = scmp.ne.s32.totalorder %s359, %s360
    %p369 = scmp.eq.s32.totalorder %s34, 0
    %p370 = por %p368, %p369
    %p371 = scmp.ne.s32.totalorder %s359, %s360
    %p372 = scmp.eq.s32.totalorder %s35, 1
    %p373 = por %p371, %p372
    %p375 = scmp.ne.s32.totalorder %s360, %s374
    %p376 = scmp.eq.s32.totalorder %s35, 0
    %p377 = por %p375, %p376
    %s379 = sadd.s32 %s378, 1
    %p382 = scmp.eq.s32.totalorder %s29, 1
    %p383 = scmp.ne.s32.totalorder %s378, %s380
    %p384 = scmp.eq.s32.totalorder %s29, 0
    %p385 = por %p383, %p384
    %p386 = scmp.ne.s32.totalorder %s378, %s380
    %p387 = scmp.eq.s32.totalorder %s34, 1
    %p388 = por %p386, %p387
    %p389 = scmp.ne.s32.totalorder %s380, %s381
    %p390 = scmp.eq.s32.totalorder %s34, 0
    %p391 = por %p389, %p390
    %p392 = scmp.ne.s32.totalorder %s380, %s381
    %p393 = scmp.eq.s32.totalorder %s35, 1
    %p394 = por %p392, %p393
    %p396 = scmp.ne.s32.totalorder %s381, %s395
    %p397 = scmp.eq.s32.totalorder %s35, 0
    %p398 = por %p396, %p397
    %s400 = sadd.s32 %s399, 1
    %p403 = scmp.eq.s32.totalorder %s29, 1
    %p404 = scmp.ne.s32.totalorder %s399, %s401
    %p405 = scmp.eq.s32.totalorder %s29, 0
    %p406 = por %p404, %p405
    %p407 = scmp.ne.s32.totalorder %s399, %s401
    %p408 = scmp.eq.s32.totalorder %s34, 1
    %p409 = por %p407, %p408
    %p410 = scmp.ne.s32.totalorder %s401, %s402
    %p411 = scmp.eq.s32.totalorder %s34, 0
    %p412 = por %p410, %p411
    %p413 = scmp.ne.s32.totalorder %s401, %s402
    %p414 = scmp.eq.s32.totalorder %s35, 1
    %p415 = por %p413, %p414
    %p417 = scmp.ne.s32.totalorder %s402, %s416
    %p418 = scmp.eq.s32.totalorder %s35, 0
    %p419 = por %p417, %p418
    %s421 = sadd.s32 %s420, 1
    %p424 = scmp.eq.s32.totalorder %s29, 1
    %p425 = scmp.ne.s32.totalorder %s420, %s422
    %p426 = scmp.eq.s32.totalorder %s29, 0
    %p427 = por %p425, %p426
    %p428 = scmp.ne.s32.totalorder %s420, %s422
    %p429 = scmp.eq.s32.totalorder %s34, 1
    %p430 = por %p428, %p429
    %p431 = scmp.ne.s32.totalorder %s422, %s423
    %p432 = scmp.eq.s32.totalorder %s34, 0
    %p433 = por %p431, %p432
    %p434 = scmp.ne.s32.totalorder %s422, %s423
    %p435 = scmp.eq.s32.totalorder %s35, 1
    %p436 = por %p434, %p435
    %p438 = scmp.ne.s32.totalorder %s423, %s437
    %p439 = scmp.eq.s32.totalorder %s35, 0
    %p440 = por %p438, %p439
    %s441 = ssub.s32 %s29, %s36
    %p442 = scmp.eq.s32.totalorder %s441, 0
    %s444 = sadd.s32 %s443, 1
    %s445 = scalar_select %p442, %s443, %s444
    %p448 = pneg %p442
    %p449 = scmp.eq.s32.totalorder %s29, 1
    %p450 = por %p448, %p449
    %p451 = scmp.ne.s32.totalorder %s443, %s446
    %p452 = scmp.eq.s32.totalorder %s29, 0
    %p453 = por %p451, %p452
    %p454 = scmp.ne.s32.totalorder %s443, %s446
    %p455 = scmp.eq.s32.totalorder %s34, 1
    %p456 = por %p454, %p455
    %p457 = scmp.ne.s32.totalorder %s446, %s447
    %p458 = scmp.eq.s32.totalorder %s34, 0
    %p459 = por %p457, %p458
    %p460 = scmp.ne.s32.totalorder %s446, %s447
    %p461 = scmp.eq.s32.totalorder %s35, 1
    %p462 = por %p460, %p461
    %p464 = scmp.ne.s32.totalorder %s447, %s463
    %p465 = scmp.eq.s32.totalorder %s35, 0
    %p466 = por %p464, %p465
    %s467 = ssub.s32 %s29, %s36
    %p468 = scmp.eq.s32.totalorder %s467, 0
    %s470 = sadd.s32 %s469, 1
    %s471 = scalar_select %p468, %s469, %s470
    %p474 = pneg %p468
    %p475 = scmp.eq.s32.totalorder %s29, 1
    %p476 = por %p474, %p475
    %p477 = scmp.ne.s32.totalorder %s469, %s472
    %p478 = scmp.eq.s32.totalorder %s29, 0
    %p479 = por %p477, %p478
    %p480 = scmp.ne.s32.totalorder %s469, %s472
    %p481 = scmp.eq.s32.totalorder %s34, 1
    %p482 = por %p480, %p481
    %p483 = scmp.ne.s32.totalorder %s472, %s473
    %p484 = scmp.eq.s32.totalorder %s34, 0
    %p485 = por %p483, %p484
    %p486 = scmp.ne.s32.totalorder %s472, %s473
    %p487 = scmp.eq.s32.totalorder %s35, 1
    %p488 = por %p486, %p487
    %p490 = scmp.ne.s32.totalorder %s473, %s489
    %p491 = scmp.eq.s32.totalorder %s35, 0
    %p492 = por %p490, %p491
    %s493 = ssub.s32 %s29, %s36
    %p494 = scmp.eq.s32.totalorder %s493, 0
    %s496 = sadd.s32 %s495, 1
    %s497 = scalar_select %p494, %s495, %s496
    %p500 = pneg %p494
    %p501 = scmp.eq.s32.totalorder %s29, 1
    %p502 = por %p500, %p501
    %p503 = scmp.ne.s32.totalorder %s495, %s498
    %p504 = scmp.eq.s32.totalorder %s29, 0
    %p505 = por %p503, %p504
    %p506 = scmp.ne.s32.totalorder %s495, %s498
    %p507 = scmp.eq.s32.totalorder %s34, 1
    %p508 = por %p506, %p507
    %p509 = scmp.ne.s32.totalorder %s498, %s499
    %p510 = scmp.eq.s32.totalorder %s34, 0
    %p511 = por %p509, %p510
    %p512 = scmp.ne.s32.totalorder %s498, %s499
    %p513 = scmp.eq.s32.totalorder %s35, 1
    %p514 = por %p512, %p513
    %p516 = scmp.ne.s32.totalorder %s499, %s515
    %p517 = scmp.eq.s32.totalorder %s35, 0
    %p518 = por %p516, %p517
    %s519 = ssub.s32 %s29, %s36
    %p520 = scmp.eq.s32.totalorder %s519, 0
    %s522 = sadd.s32 %s521, 1
    %s523 = scalar_select %p520, %s521, %s522
    %p526 = pneg %p520
    %p527 = scmp.eq.s32.totalorder %s29, 1
    %p528 = por %p526, %p527
    %p529 = scmp.ne.s32.totalorder %s521, %s524
    %p530 = scmp.eq.s32.totalorder %s29, 0
    %p531 = por %p529, %p530
    %p532 = scmp.ne.s32.totalorder %s521, %s524
    %p533 = scmp.eq.s32.totalorder %s34, 1
    %p534 = por %p532, %p533
    %p535 = scmp.ne.s32.totalorder %s524, %s525
    %p536 = scmp.eq.s32.totalorder %s34, 0
    %p537 = por %p535, %p536
    %p538 = scmp.ne.s32.totalorder %s524, %s525
    %p539 = scmp.eq.s32.totalorder %s35, 1
    %p540 = por %p538, %p539
    %p542 = scmp.ne.s32.totalorder %s525, %s541
    %p543 = scmp.eq.s32.totalorder %s35, 0
    %p544 = por %p542, %p543
    %p545 = scmp.le.s32.totalorder 1, %s29
    %p546 = scmp.lt.s32.totalorder %s29, 3
    %p547 = pnand %p545, %p546
    %p548 = pneg %p547
    // Predicated region
    $region9: #{refine_forward.1} parent=5 // pred_check
      _
    $region10: #{refine_forward.1} parent=5 // pred_check_branch
      %550 = sbr.rel (%p547) target = $region12
    $region11: #{refine_forward.1} parent=5 // pred_region
      %s551 = ssub.s32 %s29, 1
      // Predicated region
      $region13: #{refine_forward.1} parent=11 // pred_check
        %p552 = pneg %p76
      $region14: #{refine_forward.1} parent=11 // pred_check_branch
        %554 = sbr.rel (%p552) target = $region16
      $region15: #{refine_forward.1} parent=11 // pred_region
        _
      $region16: #{refine_forward.1} parent=11 // pred_fallthru
        _
      // Predicated region
      $region17: #{refine_forward.1} parent=11 // pred_check
        %p555 = pneg %p97
      $region18: #{refine_forward.1} parent=11 // pred_check_branch
        %557 = sbr.rel (%p555) target = $region20
      $region19: #{refine_forward.1} parent=11 // pred_region
        _
      $region20: #{refine_forward.1} parent=11 // pred_fallthru
        _
      // Predicated region
      $region21: #{refine_forward.1} parent=11 // pred_check
        %p558 = pneg %p118
      $region22: #{refine_forward.1} parent=11 // pred_check_branch
        %560 = sbr.rel (%p558) target = $region24
      $region23: #{refine_forward.1} parent=11 // pred_region
        _
      $region24: #{refine_forward.1} parent=11 // pred_fallthru
        _
      // Predicated region
      $region25: #{refine_forward.1} parent=11 // pred_check
        %p561 = pneg %p139
      $region26: #{refine_forward.1} parent=11 // pred_check_branch
        %563 = sbr.rel (%p561) target = $region28
      $region27: #{refine_forward.1} parent=11 // pred_region
        _
      $region28: #{refine_forward.1} parent=11 // pred_fallthru
        _
      // Predicated region
      $region29: #{refine_forward.1} parent=11 // pred_check
        %p564 = pneg %p160
      $region30: #{refine_forward.1} parent=11 // pred_check_branch
        %566 = sbr.rel (%p564) target = $region32
      $region31: #{refine_forward.1} parent=11 // pred_region
        _
      $region32: #{refine_forward.1} parent=11 // pred_fallthru
        _
      // Predicated region
      $region33: #{refine_forward.1} parent=11 // pred_check
        %p567 = pneg %p181
      $region34: #{refine_forward.1} parent=11 // pred_check_branch
        %569 = sbr.rel (%p567) target = $region36
      $region35: #{refine_forward.1} parent=11 // pred_region
        _
      $region36: #{refine_forward.1} parent=11 // pred_fallthru
        _
      // Predicated region
      $region37: #{refine_forward.1} parent=11 // pred_check
        %p570 = pneg %p202
      $region38: #{refine_forward.1} parent=11 // pred_check_branch
        %572 = sbr.rel (%p570) target = $region40
      $region39: #{refine_forward.1} parent=11 // pred_region
        _
      $region40: #{refine_forward.1} parent=11 // pred_fallthru
        _
      // Predicated region
      $region41: #{refine_forward.1} parent=11 // pred_check
        %p573 = pneg %p223
      $region42: #{refine_forward.1} parent=11 // pred_check_branch
        %575 = sbr.rel (%p573) target = $region44
      $region43: #{refine_forward.1} parent=11 // pred_region
        _
      $region44: #{refine_forward.1} parent=11 // pred_fallthru
        _
      // Predicated region
      $region45: #{refine_forward.1} parent=11 // pred_check
        %p576 = pneg %p244
      $region46: #{refine_forward.1} parent=11 // pred_check_branch
        %578 = sbr.rel (%p576) target = $region48
      $region47: #{refine_forward.1} parent=11 // pred_region
        _
      $region48: #{refine_forward.1} parent=11 // pred_fallthru
        _
      // Predicated region
      $region49: #{refine_forward.1} parent=11 // pred_check
        %p579 = pneg %p265
      $region50: #{refine_forward.1} parent=11 // pred_check_branch
        %581 = sbr.rel (%p579) target = $region52
      $region51: #{refine_forward.1} parent=11 // pred_region
        _
      $region52: #{refine_forward.1} parent=11 // pred_fallthru
        _
      // Predicated region
      $region53: #{refine_forward.1} parent=11 // pred_check
        %p582 = pneg %p286
      $region54: #{refine_forward.1} parent=11 // pred_check_branch
        %584 = sbr.rel (%p582) target = $region56
      $region55: #{refine_forward.1} parent=11 // pred_region
        _
      $region56: #{refine_forward.1} parent=11 // pred_fallthru
        _
      // Predicated region
      $region57: #{refine_forward.1} parent=11 // pred_check
        %p585 = pneg %p307
      $region58: #{refine_forward.1} parent=11 // pred_check_branch
        %587 = sbr.rel (%p585) target = $region60
      $region59: #{refine_forward.1} parent=11 // pred_region
        _
      $region60: #{refine_forward.1} parent=11 // pred_fallthru
        _
      // Predicated region
      $region61: #{refine_forward.1} parent=11 // pred_check
        %p588 = pneg %p328
      $region62: #{refine_forward.1} parent=11 // pred_check_branch
        %590 = sbr.rel (%p588) target = $region64
      $region63: #{refine_forward.1} parent=11 // pred_region
        _
      $region64: #{refine_forward.1} parent=11 // pred_fallthru
        _
      // Predicated region
      $region65: #{refine_forward.1} parent=11 // pred_check
        %p591 = pneg %p349
      $region66: #{refine_forward.1} parent=11 // pred_check_branch
        %593 = sbr.rel (%p591) target = $region68
      $region67: #{refine_forward.1} parent=11 // pred_region
        _
      $region68: #{refine_forward.1} parent=11 // pred_fallthru
        _
      // Predicated region
      $region69: #{refine_forward.1} parent=11 // pred_check
        %p594 = pneg %p370
      $region70: #{refine_forward.1} parent=11 // pred_check_branch
        %596 = sbr.rel (%p594) target = $region72
      $region71: #{refine_forward.1} parent=11 // pred_region
        _
      $region72: #{refine_forward.1} parent=11 // pred_fallthru
        _
      // Predicated region
      $region73: #{refine_forward.1} parent=11 // pred_check
        %p597 = pneg %p391
      $region74: #{refine_forward.1} parent=11 // pred_check_branch
        %599 = sbr.rel (%p597) target = $region76
      $region75: #{refine_forward.1} parent=11 // pred_region
        _
      $region76: #{refine_forward.1} parent=11 // pred_fallthru
        _
      // Predicated region
      $region77: #{refine_forward.1} parent=11 // pred_check
        %p600 = pneg %p412
      $region78: #{refine_forward.1} parent=11 // pred_check_branch
        %602 = sbr.rel (%p600) target = $region80
      $region79: #{refine_forward.1} parent=11 // pred_region
        _
      $region80: #{refine_forward.1} parent=11 // pred_fallthru
        _
      // Predicated region
      $region81: #{refine_forward.1} parent=11 // pred_check
        %p603 = pneg %p433
      $region82: #{refine_forward.1} parent=11 // pred_check_branch
        %605 = sbr.rel (%p603) target = $region84
      $region83: #{refine_forward.1} parent=11 // pred_region
        _
      $region84: #{refine_forward.1} parent=11 // pred_fallthru
        _
    $region12: #{refine_forward.1} parent=5 // pred_fallthru
      _
    %p606 = scmp.lt.s32.totalorder %s29, 2
    // Predicated region
    $region85: #{refine_forward.1} parent=5 // pred_check
      %p607 = pneg %p606
    $region86: #{refine_forward.1} parent=5 // pred_check_branch
      %609 = sbr.rel (%p607) target = $region88
    $region87: #{refine_forward.1} parent=5 // pred_region
      // Predicated region
      $region89: #{refine_forward.1} parent=87 // pred_check
        %p610 = pneg %p49
      $region90: #{refine_forward.1} parent=87 // pred_check_branch
        %612 = sbr.rel (%p610) target = $region92
      $region91: #{refine_forward.1} parent=87 // pred_region
        %p613 = scmp.lt.s32.totalorder %s29, 1
        %s614 = scalar_select %p613, %s29, 1
        %s615 = smul.addr %s614, 8
        %s616 = scalar_lea.vmem %s0, %s615
      $region92: #{refine_forward.1} parent=87 // pred_fallthru
        _
      // Predicated region
      $region93: #{refine_forward.1} parent=87 // pred_check
        %p617 = pneg %p453
      $region94: #{refine_forward.1} parent=87 // pred_check_branch
        %619 = sbr.rel (%p617) target = $region96
      $region95: #{refine_forward.1} parent=87 // pred_region
        %p620 = scmp.lt.s32.totalorder %s29, 1
        %s621 = scalar_select %p620, %s29, 1
        %s622 = smul.addr %s621, 3
        %s623 = smul.addr %s622, 8
        %s624 = scalar_lea.vmem %s19, %s623
      $region96: #{refine_forward.1} parent=87 // pred_fallthru
        _
      // Predicated region
      $region97: #{refine_forward.1} parent=87 // pred_check
        %p625 = pneg %p479
      $region98: #{refine_forward.1} parent=87 // pred_check_branch
        %627 = sbr.rel (%p625) target = $region100
      $region99: #{refine_forward.1} parent=87 // pred_region
        %p628 = scmp.lt.s32.totalorder %s29, 1
        %s629 = scalar_select %p628, %s29, 1
        %s630 = smul.addr %s629, 3
        %s631 = smul.addr %s630, 8
        %s632 = scalar_lea.vmem %s20, %s631
      $region100: #{refine_forward.1} parent=87 // pred_fallthru
        _
    $region88: #{refine_forward.1} parent=5 // pred_fallthru
      _
    %p633 = scmp.le.s32.totalorder 1, %s29
    %p634 = scmp.lt.s32.totalorder %s29, 3
    %p635 = pnand %p633, %p634
    %p636 = pneg %p635
    // Predicated region
    $region101: #{refine_forward.1} parent=5 // pred_check
      _
    $region102: #{refine_forward.1} parent=5 // pred_check_branch
      %638 = sbr.rel (%p635) target = $region104
    $region103: #{refine_forward.1} parent=5 // pred_region
      %s639 = ssub.s32 %s29, 1
      %p640 = scmp.lt.s32.totalorder %s34, 1
      %s641 = scalar_select %p640, %s34, 1
      %s642 = smul.addr %s641, 8
      %s643 = scalar_lea.vmem %s0, %s642
      %p644 = pneg %p55
      %p645 = pneg %p52
      %p646 = pneg %p76
      %p647 = pneg %p73
      %p648 = pneg %p97
      %p649 = pneg %p94
      %p650 = pneg %p118
      %p651 = pneg %p115
      %p652 = pneg %p139
      %p653 = pneg %p136
      %p654 = pneg %p160
      %p655 = pneg %p157
      %p656 = pneg %p181
      %p657 = pneg %p178
      %p658 = pneg %p202
      %p659 = pneg %p199
      %p660 = pneg %p223
      %p661 = pneg %p220
      %p662 = pneg %p244
      %p663 = pneg %p241
      %p664 = pneg %p265
      %p665 = pneg %p262
      %p666 = pneg %p286
      %p667 = pneg %p283
      %p668 = pneg %p307
      %p669 = pneg %p304
      %p670 = pneg %p328
      %p671 = pneg %p325
      %p672 = pneg %p349
      %p673 = pneg %p346
      %p674 = pneg %p370
      %p675 = pneg %p367
      %p676 = pneg %p391
      %p677 = pneg %p388
      %p678 = pneg %p412
      %p679 = pneg %p409
      %p680 = pneg %p433
      %p681 = pneg %p430
      %p682 = scmp.lt.s32.totalorder %s34, 1
      %s683 = scalar_select %p682, %s34, 1
      %s684 = smul.addr %s683, 3
      %s685 = smul.addr %s684, 8
      %s686 = scalar_lea.vmem %s19, %s685
      %p687 = pneg %p459
      %p688 = pneg %p456
      %p689 = scmp.lt.s32.totalorder %s34, 1
      %s690 = scalar_select %p689, %s34, 1
      %s691 = smul.addr %s690, 3
      %s692 = smul.addr %s691, 8
      %s693 = scalar_lea.vmem %s20, %s692
      %p694 = pneg %p485
      %p695 = pneg %p482
      %p696 = pneg %p511
      %p697 = pneg %p508
      %p698 = scmp.lt.s32.totalorder %s34, 1
      %s699 = scalar_select %p698, %s34, 1
      %s700 = smul.addr %s699, 4
      %s701 = scalar_lea.vmem %s21, %s700
      %p702 = pneg %p537
      %p703 = pneg %p534
      %p704 = scmp.lt.s32.totalorder %s34, 1
      %s705 = scalar_select %p704, %s34, 1
      %s706 = smul.addr %s705, 3
      %s707 = smul.addr %s706, 8
      %s708 = scalar_lea.vmem %s22, %s707
      %p709 = scmp.lt.s32.totalorder %s34, 1
      %s710 = scalar_select %p709, %s34, 1
      %s711 = smul.addr %s710, 8
      %s712 = scalar_lea.vmem %s0, %s711
      %p713 = scmp.lt.s32.totalorder %s34, 1
      %s714 = scalar_select %p713, %s34, 1
      %s715 = smul.addr %s714, 3
      %s716 = smul.addr %s715, 8
      %s717 = scalar_lea.vmem %s19, %s716
      %p718 = scmp.lt.s32.totalorder %s34, 1
      %s719 = scalar_select %p718, %s34, 1
      %s720 = smul.addr %s719, 3
      %s721 = smul.addr %s720, 8
      %s722 = scalar_lea.vmem %s20, %s721
      %p723 = scmp.lt.s32.totalorder %s34, 1
      %s724 = scalar_select %p723, %s34, 1
      %s725 = smul.addr %s724, 4
      %s726 = scalar_lea.vmem %s21, %s725
      %p727 = scmp.lt.s32.totalorder %s34, 1
      %s728 = scalar_select %p727, %s34, 1
      %s729 = smul.addr %s728, 3
      %s730 = smul.addr %s729, 8
      %s731 = scalar_lea.vmem %s22, %s730
      %v733 = vld [vmem:[%s712] sm:$0xff]
      %v734 = vpack.c.bf16 %v733, %v733
      %735 = vxpose.xlu0.c.b16.start [1/8] %v734, 128
      %736 = vxpose.xlu0.c.b16.cont [2/8] 0, 128
      %737 = vxpose.xlu0.c.b16.cont [3/8] 0, 128
      %738 = vxpose.xlu0.c.b16.cont [4/8] 0, 128
      %739 = vxpose.xlu0.c.b16.cont [5/8] 0, 128
      %740 = vxpose.xlu0.c.b16.cont [6/8] 0, 128
      %741 = vxpose.xlu0.c.b16.cont [7/8] 0, 128
      %742 = vxpose.xlu0.c.b16.end [8/8] 0, 128
      %v743 = vpop.trf.xlu0
      %v744 = vpop.trf.xlu0
      %v745 = vpop.trf.xlu0
      %v746 = vpop.trf.xlu0
      %v747 = vpop.trf.xlu0
      %v748 = vpop.trf.xlu0
      %v749 = vpop.trf.xlu0
      %v750 = vpop.trf.xlu0
      %vm751 = vcmask 64512
      %v753 = vsel %vm751, %v743, 0
      %v756 = vsel %vm751, %v744, 0
      %v759 = vsel %vm751, %v745, 0
      %v762 = vsel %vm751, %v746, 0
      %v765 = vsel %vm751, %v747, 0
      %v768 = vsel %vm751, %v748, 0
      %v771 = vsel %vm751, %v749, 0
      %v774 = vsel %vm751, %v750, 0
      %vm776 = vcmask 1043456
      %v778 = vsel %vm776, %v734, 0
      %780 = vmatprep.subr.bf16.mxu0 0
      %781 = vmatpush1.bf16.msra.mxu0 %v778
      %782 = vmatprep.subr.bf16.mxu0 0
      %783 = vmatpush1.bf16.msra.mxu0 0
      %784 = vmatprep.subr.bf16.mxu0 0
      %785 = vmatpush1.bf16.msra.mxu0 0
      %786 = vmatprep.subr.bf16.mxu0 0
      %787 = vmatpush1.bf16.msra.mxu0 0
      %788 = vmatprep.subr.bf16.mxu0 0
      %789 = vmatpush1.bf16.msra.mxu0 0
      %790 = vmatprep.subr.bf16.mxu0 0
      %791 = vmatpush1.bf16.msra.mxu0 0
      %792 = vmatprep.subr.bf16.mxu0 0
      %793 = vmatpush1.bf16.msra.mxu0 0
      %794 = vmatprep.subr.bf16.mxu0 0
      %795 = vmatpush1.bf16.msra.mxu0 0
      %796 = vmatprep.subr.bf16.mxu0 0
      %797 = vmatpush1.bf16.msra.mxu0 0
      %798 = vmatprep.subr.bf16.mxu0 0
      %799 = vmatpush1.bf16.msra.mxu0 0
      %800 = vmatprep.subr.bf16.mxu0 0
      %801 = vmatpush1.bf16.msra.mxu0 0
      %802 = vmatprep.subr.bf16.mxu0 0
      %803 = vmatpush1.bf16.msra.mxu0 0
      %804 = vmatprep.subr.bf16.mxu0 0
      %805 = vmatpush1.bf16.msra.mxu0 0
      %806 = vmatprep.subr.bf16.mxu0 0
      %807 = vmatpush1.bf16.msra.mxu0 0
      %808 = vmatprep.subr.bf16.mxu0 0
      %809 = vmatpush1.bf16.msra.mxu0 0
      %810 = vmatprep.subr.bf16.mxu0 0
      %811 = vmatpush1.bf16.msra.mxu0 0
      %812 = vmatprep.mubr.bf16.mxu0 0
      %813 = vmatmul.mubr.bf16.gmra.mrb[0].mxu0 %v753
      %v814 = vpop.f32.mrb[0].mxu0
      %v815 = vadd.f32 0.0, %v814
      %v816 = vpop.f32.mrb[0].mxu0
      %v817 = vpop.f32.mrb[0].mxu0
      %v818 = vadd.f32 0.0, %v817
      %v819 = vpop.f32.mrb[0].mxu0
      %820 = vmatprep.mubr.bf16.mxu0 0
      %821 = vmatmul.mubr.bf16.gmra.mrb[0].mxu0 %v756
      %v822 = vpop.f32.mrb[0].mxu0
      %v823 = vadd.f32 0.0, %v822
      %v824 = vpop.f32.mrb[0].mxu0
      %v825 = vpop.f32.mrb[0].mxu0
      %v826 = vadd.f32 0.0, %v825
      %v827 = vpop.f32.mrb[0].mxu0
      %828 = vmatprep.mubr.bf16.mxu0 0
      %829 = vmatmul.mubr.bf16.gmra.mrb[0].mxu0 %v759
      %v830 = vpop.f32.mrb[0].mxu0
      %v831 = vadd.f32 0.0, %v830
      %v832 = vpop.f32.mrb[0].mxu0
      %v833 = vpop.f32.mrb[0].mxu0
      %v834 = vadd.f32 0.0, %v833
      %v835 = vpop.f32.mrb[0].mxu0
      %836 = vmatprep.mubr.bf16.mxu0 0
      %837 = vmatmul.mubr.bf16.gmra.mrb[0].mxu0 %v762
      %v838 = vpop.f32.mrb[0].mxu0
      %v839 = vadd.f32 0.0, %v838
      %v840 = vpop.f32.mrb[0].mxu0
      %v841 = vpop.f32.mrb[0].mxu0
      %v842 = vadd.f32 0.0, %v841
      %v843 = vpop.f32.mrb[0].mxu0
      %844 = vmatprep.mubr.bf16.mxu0 0
      %845 = vmatmul.mubr.bf16.gmra.mrb[0].mxu0 %v765
      %v846 = vpop.f32.mrb[0].mxu0
      %v847 = vadd.f32 0.0, %v846
      %v848 = vpop.f32.mrb[0].mxu0
      %v849 = vpop.f32.mrb[0].mxu0
      %v850 = vadd.f32 0.0, %v849
      %v851 = vpop.f32.mrb[0].mxu0
      %852 = vmatprep.mubr.bf16.mxu0 0
      %853 = vmatmul.mubr.bf16.gmra.mrb[0].mxu0 %v768
      %v854 = vpop.f32.mrb[0].mxu0
      %v855 = vadd.f32 0.0, %v854
      %v856 = vpop.f32.mrb[0].mxu0
      %v857 = vpop.f32.mrb[0].mxu0
      %v858 = vadd.f32 0.0, %v857
      %v859 = vpop.f32.mrb[0].mxu0
      %860 = vmatprep.mubr.bf16.mxu0 0
      %861 = vmatmul.mubr.bf16.gmra.mrb[0].mxu0 %v771
      %v862 = vpop.f32.mrb[0].mxu0
      %v863 = vadd.f32 0.0, %v862
      %v864 = vpop.f32.mrb[0].mxu0
      %v865 = vpop.f32.mrb[0].mxu0
      %v866 = vadd.f32 0.0, %v865
      %v867 = vpop.f32.mrb[0].mxu0
      %868 = vmatprep.mubr.bf16.mxu0 0
      %869 = vmatmul.mubr.bf16.gmra.mrb[0].mxu0 %v774
      %v870 = vpop.f32.mrb[0].mxu0
      %v871 = vadd.f32 0.0, %v870
      %v872 = vpop.f32.mrb[0].mxu0
      %v873 = vpop.f32.mrb[0].mxu0
      %v874 = vadd.f32 0.0, %v873
      %v875 = vpop.f32.mrb[0].mxu0
      %876 = vdwg.mxu0
      %v877 = vmul.f32 %v733, %v733
      %v878 = vrot.slane %v877, 4
      %v879 = vadd.f32 %v877, %v878
      %v880 = vrot.slane %v879, 2
      %v881 = vadd.f32 %v879, %v880
      %v882 = vrot.slane %v881, 1
      %v883 = vadd.f32 %v881, %v882
      %v884 = vmul.f32 %v815, 2.0
      %v885 = vmul.f32 %v818, 2.0
      %v886 = vmul.f32 %v823, 2.0
      %v887 = vmul.f32 %v826, 2.0
      %v888 = vmul.f32 %v831, 2.0
      %v889 = vmul.f32 %v834, 2.0
      %v890 = vmul.f32 %v839, 2.0
      %v891 = vmul.f32 %v842, 2.0
      %v892 = vmul.f32 %v847, 2.0
      %v893 = vmul.f32 %v850, 2.0
      %v894 = vmul.f32 %v855, 2.0
      %v895 = vmul.f32 %v858, 2.0
      %v896 = vmul.f32 %v863, 2.0
      %v897 = vmul.f32 %v866, 2.0
      %v898 = vmul.f32 %v871, 2.0
      %v899 = vmul.f32 %v874, 2.0
      %900 = vxpose.xlu0.b32.start [1/16] %v883, 128
      %901 = vxpose.xlu0.b32.cont [2/16] 0.0, 128
      %902 = vxpose.xlu0.b32.cont [3/16] 0.0, 128
      %903 = vxpose.xlu0.b32.cont [4/16] 0.0, 128
      %904 = vxpose.xlu0.b32.cont [5/16] 0.0, 128
      %905 = vxpose.xlu0.b32.cont [6/16] 0.0, 128
      %906 = vxpose.xlu0.b32.cont [7/16] 0.0, 128
      %907 = vxpose.xlu0.b32.cont [8/16] 0.0, 128
      %908 = vxpose.xlu0.b32.cont [9/16] 0.0, 128
      %909 = vxpose.xlu0.b32.cont [10/16] 0.0, 128
      %910 = vxpose.xlu0.b32.cont [11/16] 0.0, 128
      %911 = vxpose.xlu0.b32.cont [12/16] 0.0, 128
      %912 = vxpose.xlu0.b32.cont [13/16] 0.0, 128
      %913 = vxpose.xlu0.b32.cont [14/16] 0.0, 128
      %914 = vxpose.xlu0.b32.cont [15/16] 0.0, 128
      %915 = vxpose.xlu0.b32.end [16/16] 0.0, 128
      %v916 = vpop.trf.xlu0
      %v917 = vpop.trf.xlu0
      %v918 = vpop.trf.xlu0
      %v919 = vpop.trf.xlu0
      %v920 = vpop.trf.xlu0
      %v921 = vpop.trf.xlu0
      %v922 = vpop.trf.xlu0
      %v923 = vpop.trf.xlu0
      %v924 = vpop.trf.xlu0
      %v925 = vpop.trf.xlu0
      %v926 = vpop.trf.xlu0
      %v927 = vpop.trf.xlu0
      %v928 = vpop.trf.xlu0
      %v929 = vpop.trf.xlu0
      %v930 = vpop.trf.xlu0
      %v931 = vpop.trf.xlu0
      %933 = vset.pattern.permute.xlu0 0
      %934 = vperm.xlu0 %933, %v916
      %v935 = vpop.permute.xlu0 %934
      %938 = vset.pattern.permute.xlu0 0
      %939 = vperm.xlu0 %938, %v917
      %v940 = vpop.permute.xlu0 %939
      %943 = vset.pattern.permute.xlu0 0
      %944 = vperm.xlu0 %943, %v918
      %v945 = vpop.permute.xlu0 %944
      %948 = vset.pattern.permute.xlu0 0
      %949 = vperm.xlu0 %948, %v919
      %v950 = vpop.permute.xlu0 %949
      %953 = vset.pattern.permute.xlu0 0
      %954 = vperm.xlu0 %953, %v920
      %v955 = vpop.permute.xlu0 %954
      %958 = vset.pattern.permute.xlu0 0
      %959 = vperm.xlu0 %958, %v921
      %v960 = vpop.permute.xlu0 %959
      %963 = vset.pattern.permute.xlu0 0
      %964 = vperm.xlu0 %963, %v922
      %v965 = vpop.permute.xlu0 %964
      %968 = vset.pattern.permute.xlu0 0
      %969 = vperm.xlu0 %968, %v923
      %v970 = vpop.permute.xlu0 %969
      %973 = vset.pattern.permute.xlu0 0
      %974 = vperm.xlu0 %973, %v924
      %v975 = vpop.permute.xlu0 %974
      %978 = vset.pattern.permute.xlu0 0
      %979 = vperm.xlu0 %978, %v925
      %v980 = vpop.permute.xlu0 %979
      %983 = vset.pattern.permute.xlu0 0
      %984 = vperm.xlu0 %983, %v926
      %v985 = vpop.permute.xlu0 %984
      %988 = vset.pattern.permute.xlu0 0
      %989 = vperm.xlu0 %988, %v927
      %v990 = vpop.permute.xlu0 %989
      %993 = vset.pattern.permute.xlu0 0
      %994 = vperm.xlu0 %993, %v928
      %v995 = vpop.permute.xlu0 %994
      %998 = vset.pattern.permute.xlu0 0
      %999 = vperm.xlu0 %998, %v929
      %v1000 = vpop.permute.xlu0 %999
      %1003 = vset.pattern.permute.xlu0 0
      %1004 = vperm.xlu0 %1003, %v930
      %v1005 = vpop.permute.xlu0 %1004
      %1008 = vset.pattern.permute.xlu0 0
      %1009 = vperm.xlu0 %1008, %v931
      %v1010 = vpop.permute.xlu0 %1009
      %v1012 = vsub.f32 %v884, %v935
      %v1013 = vsub.f32 %v885, %v940
      %v1014 = vsub.f32 %v886, %v945
      %v1015 = vsub.f32 %v887, %v950
      %v1016 = vsub.f32 %v888, %v955
      %v1017 = vsub.f32 %v889, %v960
      %v1018 = vsub.f32 %v890, %v965
      %v1019 = vsub.f32 %v891, %v970
      %v1020 = vsub.f32 %v892, %v975
      %v1021 = vsub.f32 %v893, %v980
      %v1022 = vsub.f32 %v894, %v985
      %v1023 = vsub.f32 %v895, %v990
      %v1024 = vsub.f32 %v896, %v995
      %v1025 = vsub.f32 %v897, %v1000
      %v1026 = vsub.f32 %v898, %v1005
      %v1027 = vsub.f32 %v899, %v1010
      %1028 = vst [vmem:[#allocation2] sm:$0xff] %v1012
      %1029 = vst [vmem:[#allocation2 + $0x8] sm:$0xff] %v1013
      %1030 = vst [vmem:[#allocation2 + $0x10] sm:$0xff] %v1014
      %1031 = vst [vmem:[#allocation2 + $0x18] sm:$0xff] %v1015
      %1032 = vst [vmem:[#allocation2 + $0x20] sm:$0xff] %v1016
      %1033 = vst [vmem:[#allocation2 + $0x28] sm:$0xff] %v1017
      %1034 = vst [vmem:[#allocation2 + $0x30] sm:$0xff] %v1018
      %1035 = vst [vmem:[#allocation2 + $0x38] sm:$0xff] %v1019
      %1036 = vst [vmem:[#allocation2 + $0x40] sm:$0xff] %v1020
      %1037 = vst [vmem:[#allocation2 + $0x48] sm:$0xff] %v1021
      %1038 = vst [vmem:[#allocation2 + $0x50] sm:$0xff] %v1022
      %1039 = vst [vmem:[#allocation2 + $0x58] sm:$0xff] %v1023
      %1040 = vst [vmem:[#allocation2 + $0x60] sm:$0xff] %v1024
      %1041 = vst [vmem:[#allocation2 + $0x68] sm:$0xff] %v1025
      %1042 = vst [vmem:[#allocation2 + $0x70] sm:$0xff] %v1026
      %1043 = vst [vmem:[#allocation2 + $0x78] sm:$0xff] %v1027
      %v1044 = vld [vmem:[%s1] sm:$0xff]
      %v1045 = vld [vmem:[%s1 + $0x8] sm:$0xff]
      %v1046 = vld [vmem:[%s1 + $0x10] sm:$0xff]
      %v1047 = vld [vmem:[%s1 + $0x18] sm:$0xff]
      %v1048 = vld [vmem:[%s1 + $0x20] sm:$0xff]
      %v1049 = vld [vmem:[%s1 + $0x28] sm:$0xff]
      %v1050 = vld [vmem:[%s1 + $0x30] sm:$0xff]
      %v1051 = vld [vmem:[%s1 + $0x38] sm:$0xff]
      %1053 = vset.pattern.permute.xlu0 0
      %1054 = vperm.xlu0 %1053, %v1044
      %v1055 = vpop.permute.xlu0 %1054
      %1058 = vset.pattern.permute.xlu0 0
      %1059 = vperm.xlu0 %1058, %v1045
      %v1060 = vpop.permute.xlu0 %1059
      %1063 = vset.pattern.permute.xlu0 0
      %1064 = vperm.xlu0 %1063, %v1046
      %v1065 = vpop.permute.xlu0 %1064
      %1068 = vset.pattern.permute.xlu0 0
      %1069 = vperm.xlu0 %1068, %v1047
      %v1070 = vpop.permute.xlu0 %1069
      %1073 = vset.pattern.permute.xlu0 0
      %1074 = vperm.xlu0 %1073, %v1048
      %v1075 = vpop.permute.xlu0 %1074
      %1078 = vset.pattern.permute.xlu0 0
      %1079 = vperm.xlu0 %1078, %v1049
      %v1080 = vpop.permute.xlu0 %1079
      %1083 = vset.pattern.permute.xlu0 0
      %1084 = vperm.xlu0 %1083, %v1050
      %v1085 = vpop.permute.xlu0 %1084
      %1088 = vset.pattern.permute.xlu0 0
      %1089 = vperm.xlu0 %1088, %v1051
      %v1090 = vpop.permute.xlu0 %1089
      %v1092 = vlaneseq
      %v1093 = vshrl.u32 %v1092, 7
      %v1094 = vsub.s32 0, %v1093
      %v1095 = vrot.slane %v733, %v1094
      %v1096 = vmul.f32 %v1055, %v1095
      %v1097 = vmul.f32 %v1060, %v1095
      %v1098 = vmul.f32 %v1065, %v1095
      %v1099 = vmul.f32 %v1070, %v1095
      %v1100 = vmul.f32 %v1075, %v1095
      %v1101 = vmul.f32 %v1080, %v1095
      %v1102 = vmul.f32 %v1085, %v1095
      %v1103 = vmul.f32 %v1090, %v1095
      %1104 = vset.pattern.permute.xlu0 1
      %1105 = vperm.xlu0 %1104, %v1044
      %v1106 = vpop.permute.xlu0 %1105
      %1108 = vset.pattern.permute.xlu0 1
      %1109 = vperm.xlu0 %1108, %v1045
      %v1110 = vpop.permute.xlu0 %1109
      %1112 = vset.pattern.permute.xlu0 1
      %1113 = vperm.xlu0 %1112, %v1046
      %v1114 = vpop.permute.xlu0 %1113
      %1116 = vset.pattern.permute.xlu0 1
      %1117 = vperm.xlu0 %1116, %v1047
      %v1118 = vpop.permute.xlu0 %1117
      %1120 = vset.pattern.permute.xlu0 1
      %1121 = vperm.xlu0 %1120, %v1048
      %v1122 = vpop.permute.xlu0 %1121
      %1124 = vset.pattern.permute.xlu0 1
      %1125 = vperm.xlu0 %1124, %v1049
      %v1126 = vpop.permute.xlu0 %1125
      %1128 = vset.pattern.permute.xlu0 1
      %1129 = vperm.xlu0 %1128, %v1050
      %v1130 = vpop.permute.xlu0 %1129
      %1132 = vset.pattern.permute.xlu0 1
      %1133 = vperm.xlu0 %1132, %v1051
      %v1134 = vpop.permute.xlu0 %1133
      %v1136 = vlaneseq
      %v1137 = vshrl.u32 %v1136, 7
      %v1138 = vsub.s32 1, %v1137
      %v1139 = vrot.slane %v733, %v1138
      %v1140 = vmul.f32 %v1106, %v1139
      %v1141 = vmul.f32 %v1110, %v1139
      %v1142 = vmul.f32 %v1114, %v1139
      %v1143 = vmul.f32 %v1118, %v1139
      %v1144 = vmul.f32 %v1122, %v1139
      %v1145 = vmul.f32 %v1126, %v1139
      %v1146 = vmul.f32 %v1130, %v1139
      %v1147 = vmul.f32 %v1134, %v1139
      %v1148 = vadd.f32 %v1096, %v1140
      %v1149 = vadd.f32 %v1097, %v1141
      %v1150 = vadd.f32 %v1098, %v1142
      %v1151 = vadd.f32 %v1099, %v1143
      %v1152 = vadd.f32 %v1100, %v1144
      %v1153 = vadd.f32 %v1101, %v1145
      %v1154 = vadd.f32 %v1102, %v1146
      %v1155 = vadd.f32 %v1103, %v1147
      %1156 = vset.pattern.permute.xlu0 2
      %1157 = vperm.xlu0 %1156, %v1044
      %v1158 = vpop.permute.xlu0 %1157
      %1160 = vset.pattern.permute.xlu0 2
      %1161 = vperm.xlu0 %1160, %v1045
      %v1162 = vpop.permute.xlu0 %1161
      %1164 = vset.pattern.permute.xlu0 2
      %1165 = vperm.xlu0 %1164, %v1046
      %v1166 = vpop.permute.xlu0 %1165
      %1168 = vset.pattern.permute.xlu0 2
      %1169 = vperm.xlu0 %1168, %v1047
      %v1170 = vpop.permute.xlu0 %1169
      %1172 = vset.pattern.permute.xlu0 2
      %1173 = vperm.xlu0 %1172, %v1048
      %v1174 = vpop.permute.xlu0 %1173
      %1176 = vset.pattern.permute.xlu0 2
      %1177 = vperm.xlu0 %1176, %v1049
      %v1178 = vpop.permute.xlu0 %1177
      %1180 = vset.pattern.permute.xlu0 2
      %1181 = vperm.xlu0 %1180, %v1050
      %v1182 = vpop.permute.xlu0 %1181
      %1184 = vset.pattern.permute.xlu0 2
      %1185 = vperm.xlu0 %1184, %v1051
      %v1186 = vpop.permute.xlu0 %1185
      %v1188 = vlaneseq
      %v1189 = vshrl.u32 %v1188, 7
      %v1190 = vsub.s32 2, %v1189
      %v1191 = vrot.slane %v733, %v1190
      %v1192 = vmul.f32 %v1158, %v1191
      %v1193 = vmul.f32 %v1162, %v1191
      %v1194 = vmul.f32 %v1166, %v1191
      %v1195 = vmul.f32 %v1170, %v1191
      %v1196 = vmul.f32 %v1174, %v1191
      %v1197 = vmul.f32 %v1178, %v1191
      %v1198 = vmul.f32 %v1182, %v1191
      %v1199 = vmul.f32 %v1186, %v1191
      %v1200 = vadd.f32 %v1148, %v1192
      %v1201 = vadd.f32 %v1149, %v1193
      %v1202 = vadd.f32 %v1150, %v1194
      %v1203 = vadd.f32 %v1151, %v1195
      %v1204 = vadd.f32 %v1152, %v1196
      %v1205 = vadd.f32 %v1153, %v1197
      %v1206 = vadd.f32 %v1154, %v1198
      %v1207 = vadd.f32 %v1155, %v1199
      %v1208 = vpack.c.bf16 %v1201, %v1200
      %v1209 = vpack.c.bf16 %v1203, %v1202
      %v1210 = vpack.c.bf16 %v1205, %v1204
      %v1211 = vpack.c.bf16 %v1207, %v1206
      %1212 = vst [vmem:[#allocation4] sm:$0xff] %v1208
      %1213 = vst [vmem:[#allocation4 + $0x8] sm:$0xff] %v1209
      %1214 = vst [vmem:[#allocation4 + $0x10] sm:$0xff] %v1210
      %1215 = vst [vmem:[#allocation4 + $0x18] sm:$0xff] %v1211
      %1216 = vst [vmem:[#allocation3] sm:$0xff] -1e+30
      %1217 = vst [vmem:[#allocation3 + $0x8] sm:$0xff] -1e+30
      %1218 = vst [vmem:[#allocation3 + $0x10] sm:$0xff] -1e+30
      %1219 = vst [vmem:[#allocation3 + $0x18] sm:$0xff] -1e+30
      %1220 = vst [vmem:[#allocation3 + $0x20] sm:$0xff] -1e+30
      %1221 = vst [vmem:[#allocation3 + $0x28] sm:$0xff] -1e+30
      %1222 = vst [vmem:[#allocation3 + $0x30] sm:$0xff] -1e+30
      %1223 = vst [vmem:[#allocation3 + $0x38] sm:$0xff] -1e+30
      loop: start=0, step=1, limit=20
      $region105: #{refine_forward.1} parent=103 // loop_pre_header
        _
      $region106: #{refine_forward.1} parent=103 // loop_header
        %s1225 = sphi 0, %s1229
        %p1226 = scmp.ge.s32.totalorder %s1225, 20
      $region107: #{refine_forward.1} parent=103 // loop_header_branch
        %1228 = sbr.rel (%p1226) target = $region111
      $region108: #{refine_forward.1} parent=103 // loop_body
        %v1230 = vld [vmem:[#allocation2] sm:$0xff]
        %v1231 = vld [vmem:[#allocation2 + $0x8] sm:$0xff]
        %v1232 = vld [vmem:[#allocation2 + $0x10] sm:$0xff]
        %v1233 = vld [vmem:[#allocation2 + $0x18] sm:$0xff]
        %v1234 = vld [vmem:[#allocation2 + $0x20] sm:$0xff]
        %v1235 = vld [vmem:[#allocation2 + $0x28] sm:$0xff]
        %v1236 = vld [vmem:[#allocation2 + $0x30] sm:$0xff]
        %v1237 = vld [vmem:[#allocation2 + $0x38] sm:$0xff]
        %v1238 = vld [vmem:[#allocation2 + $0x40] sm:$0xff]
        %v1239 = vld [vmem:[#allocation2 + $0x48] sm:$0xff]
        %v1240 = vld [vmem:[#allocation2 + $0x50] sm:$0xff]
        %v1241 = vld [vmem:[#allocation2 + $0x58] sm:$0xff]
        %v1242 = vld [vmem:[#allocation2 + $0x60] sm:$0xff]
        %v1243 = vld [vmem:[#allocation2 + $0x68] sm:$0xff]
        %v1244 = vld [vmem:[#allocation2 + $0x70] sm:$0xff]
        %v1245 = vld [vmem:[#allocation2 + $0x78] sm:$0xff]
        %v1246 = vmax.f32 %v1230, %v1234
        %v1247 = vmax.f32 %v1231, %v1235
        %v1248 = vmax.f32 %v1232, %v1236
        %v1249 = vmax.f32 %v1233, %v1237
        %v1250 = vmax.f32 %v1246, %v1238
        %v1251 = vmax.f32 %v1247, %v1239
        %v1252 = vmax.f32 %v1248, %v1240
        %v1253 = vmax.f32 %v1249, %v1241
        %v1254 = vmax.f32 %v1250, %v1242
        %v1255 = vmax.f32 %v1251, %v1243
        %v1256 = vmax.f32 %v1252, %v1244
        %v1257 = vmax.f32 %v1253, %v1245
        %v1258 = vmax.f32 %v1254, %v1255
        %v1259 = vmax.f32 %v1256, %v1257
        %v1260 = vmax.f32 %v1258, %v1259
        %v1261 = vrot.slane %v1260, 4
        %v1262 = vmax.f32 %v1260, %v1261
        %v1263 = vrot.slane %v1262, 2
        %v1264 = vmax.f32 %v1262, %v1263
        %v1265 = vrot.slane %v1264, 1
        %v1266 = vmax.f32 %v1264, %v1265
        %vm1267 = vcmp.eq.f32.partialorder %v1230, %v1266
        %vm1268 = vcmp.eq.f32.partialorder %v1231, %v1266
        %vm1269 = vcmp.eq.f32.partialorder %v1232, %v1266
        %vm1270 = vcmp.eq.f32.partialorder %v1233, %v1266
        %vm1271 = vcmp.eq.f32.partialorder %v1234, %v1266
        %vm1272 = vcmp.eq.f32.partialorder %v1235, %v1266
        %vm1273 = vcmp.eq.f32.partialorder %v1236, %v1266
        %vm1274 = vcmp.eq.f32.partialorder %v1237, %v1266
        %vm1275 = vcmp.eq.f32.partialorder %v1238, %v1266
        %vm1276 = vcmp.eq.f32.partialorder %v1239, %v1266
        %vm1277 = vcmp.eq.f32.partialorder %v1240, %v1266
        %vm1278 = vcmp.eq.f32.partialorder %v1241, %v1266
        %vm1279 = vcmp.eq.f32.partialorder %v1242, %v1266
        %vm1280 = vcmp.eq.f32.partialorder %v1243, %v1266
        %vm1281 = vcmp.eq.f32.partialorder %v1244, %v1266
        %vm1282 = vcmp.eq.f32.partialorder %v1245, %v1266
        %v1283 = vlaneseq
        %v1284 = vshrl.u32 %v1283, 7
        %v1285 = vadd.s32 %v1284, 8
        %v1286 = vadd.s32 %v1284, 16
        %v1287 = vadd.s32 %v1284, 24
        %v1288 = vadd.s32 %v1284, 32
        %v1289 = vadd.s32 %v1284, 40
        %v1290 = vadd.s32 %v1284, 48
        %v1291 = vadd.s32 %v1284, 56
        %v1292 = vadd.s32 %v1284, 64
        %v1293 = vadd.s32 %v1284, 72
        %v1294 = vadd.s32 %v1284, 80
        %v1295 = vadd.s32 %v1284, 88
        %v1296 = vadd.s32 %v1284, 96
        %v1297 = vadd.s32 %v1284, 104
        %v1298 = vadd.s32 %v1284, 112
        %v1299 = vadd.s32 %v1284, 120
        %v1300 = vcvt.s32.f32 %v1284
        %v1301 = vcvt.s32.f32 %v1285
        %v1302 = vcvt.s32.f32 %v1286
        %v1303 = vcvt.s32.f32 %v1287
        %v1304 = vcvt.s32.f32 %v1288
        %v1305 = vcvt.s32.f32 %v1289
        %v1306 = vcvt.s32.f32 %v1290
        %v1307 = vcvt.s32.f32 %v1291
        %v1308 = vcvt.s32.f32 %v1292
        %v1309 = vcvt.s32.f32 %v1293
        %v1310 = vcvt.s32.f32 %v1294
        %v1311 = vcvt.s32.f32 %v1295
        %v1312 = vcvt.s32.f32 %v1296
        %v1313 = vcvt.s32.f32 %v1297
        %v1314 = vcvt.s32.f32 %v1298
        %v1315 = vcvt.s32.f32 %v1299
        %v1316 = vsel %vm1267, %v1300, 128.0
        %v1317 = vsel %vm1268, %v1301, 128.0
        %v1318 = vsel %vm1269, %v1302, 128.0
        %v1319 = vsel %vm1270, %v1303, 128.0
        %v1320 = vsel %vm1271, %v1304, 128.0
        %v1321 = vsel %vm1272, %v1305, 128.0
        %v1322 = vsel %vm1273, %v1306, 128.0
        %v1323 = vsel %vm1274, %v1307, 128.0
        %v1324 = vsel %vm1275, %v1308, 128.0
        %v1325 = vsel %vm1276, %v1309, 128.0
        %v1326 = vsel %vm1277, %v1310, 128.0
        %v1327 = vsel %vm1278, %v1311, 128.0
        %v1328 = vsel %vm1279, %v1312, 128.0
        %v1329 = vsel %vm1280, %v1313, 128.0
        %v1330 = vsel %vm1281, %v1314, 128.0
        %v1331 = vsel %vm1282, %v1315, 128.0
        %v1332 = vmin.f32 %v1316, %v1320
        %v1333 = vmin.f32 %v1317, %v1321
        %v1334 = vmin.f32 %v1318, %v1322
        %v1335 = vmin.f32 %v1319, %v1323
        %v1336 = vmin.f32 %v1332, %v1324
        %v1337 = vmin.f32 %v1333, %v1325
        %v1338 = vmin.f32 %v1334, %v1326
        %v1339 = vmin.f32 %v1335, %v1327
        %v1340 = vmin.f32 %v1336, %v1328
        %v1341 = vmin.f32 %v1337, %v1329
        %v1342 = vmin.f32 %v1338, %v1330
        %v1343 = vmin.f32 %v1339, %v1331
        %v1344 = vmin.f32 %v1340, %v1341
        %v1345 = vmin.f32 %v1342, %v1343
        %v1346 = vmin.f32 %v1344, %v1345
        %v1347 = vrot.slane %v1346, 4
        %v1348 = vmin.f32 %v1346, %v1347
        %v1349 = vrot.slane %v1348, 2
        %v1350 = vmin.f32 %v1348, %v1349
        %v1351 = vrot.slane %v1350, 1
        %v1352 = vmin.f32 %v1350, %v1351
        %vm1353 = vcmp.eq.f32.partialorder %v1300, %v1352
        %vm1354 = vcmp.eq.f32.partialorder %v1301, %v1352
        %vm1355 = vcmp.eq.f32.partialorder %v1302, %v1352
        %vm1356 = vcmp.eq.f32.partialorder %v1303, %v1352
        %vm1357 = vcmp.eq.f32.partialorder %v1304, %v1352
        %vm1358 = vcmp.eq.f32.partialorder %v1305, %v1352
        %vm1359 = vcmp.eq.f32.partialorder %v1306, %v1352
        %vm1360 = vcmp.eq.f32.partialorder %v1307, %v1352
        %vm1361 = vcmp.eq.f32.partialorder %v1308, %v1352
        %vm1362 = vcmp.eq.f32.partialorder %v1309, %v1352
        %vm1363 = vcmp.eq.f32.partialorder %v1310, %v1352
        %vm1364 = vcmp.eq.f32.partialorder %v1311, %v1352
        %vm1365 = vcmp.eq.f32.partialorder %v1312, %v1352
        %vm1366 = vcmp.eq.f32.partialorder %v1313, %v1352
        %vm1367 = vcmp.eq.f32.partialorder %v1314, %v1352
        %vm1368 = vcmp.eq.f32.partialorder %v1315, %v1352
        %v1369 = vsel %vm1353, 1.0, 0.0
        %v1370 = vsel %vm1354, 1.0, 0.0
        %v1371 = vsel %vm1355, 1.0, 0.0
        %v1372 = vsel %vm1356, 1.0, 0.0
        %v1373 = vsel %vm1357, 1.0, 0.0
        %v1374 = vsel %vm1358, 1.0, 0.0
        %v1375 = vsel %vm1359, 1.0, 0.0
        %v1376 = vsel %vm1360, 1.0, 0.0
        %v1377 = vsel %vm1361, 1.0, 0.0
        %v1378 = vsel %vm1362, 1.0, 0.0
        %v1379 = vsel %vm1363, 1.0, 0.0
        %v1380 = vsel %vm1364, 1.0, 0.0
        %v1381 = vsel %vm1365, 1.0, 0.0
        %v1382 = vsel %vm1366, 1.0, 0.0
        %v1383 = vsel %vm1367, 1.0, 0.0
        %v1384 = vsel %vm1368, 1.0, 0.0
        %v1385 = vpack.c.bf16 %v1370, %v1369
        %v1386 = vpack.c.bf16 %v1372, %v1371
        %v1387 = vpack.c.bf16 %v1374, %v1373
        %v1388 = vpack.c.bf16 %v1376, %v1375
        %v1389 = vpack.c.bf16 %v1378, %v1377
        %v1390 = vpack.c.bf16 %v1380, %v1379
        %v1391 = vpack.c.bf16 %v1382, %v1381
        %v1392 = vpack.c.bf16 %v1384, %v1383
        %v1393 = vld [vmem:[#allocation4] sm:$0xff]
        %v1394 = vld [vmem:[#allocation4 + $0x8] sm:$0xff]
        %v1395 = vld [vmem:[#allocation4 + $0x10] sm:$0xff]
        %v1396 = vld [vmem:[#allocation4 + $0x18] sm:$0xff]
        %1397 = vmatprep.subr.bf16.mxu0 0
        %1398 = vmatpush1.bf16.msra.mxu0 %v1385
        %1399 = vmatprep.subr.bf16.mxu0 0
        %1400 = vmatpush1.bf16.msra.mxu0 %v1386
        %1401 = vmatprep.subr.bf16.mxu0 0
        %1402 = vmatpush1.bf16.msra.mxu0 %v1387
        %1403 = vmatprep.subr.bf16.mxu0 0
        %1404 = vmatpush1.bf16.msra.mxu0 %v1388
        %1405 = vmatprep.subr.bf16.mxu0 0
        %1406 = vmatpush1.bf16.msra.mxu0 %v1389
        %1407 = vmatprep.subr.bf16.mxu0 0
        %1408 = vmatpush1.bf16.msra.mxu0 %v1390
        %1409 = vmatprep.subr.bf16.mxu0 0
        %1410 = vmatpush1.bf16.msra.mxu0 %v1391
        %1411 = vmatprep.subr.bf16.mxu0 0
        %1412 = vmatpush1.bf16.msra.mxu0 %v1392
        %1413 = vmatprep.subr.bf16.mxu0 0
        %1414 = vmatpush1.bf16.msra.mxu0 0
        %1415 = vmatprep.subr.bf16.mxu0 0
        %1416 = vmatpush1.bf16.msra.mxu0 0
        %1417 = vmatprep.subr.bf16.mxu0 0
        %1418 = vmatpush1.bf16.msra.mxu0 0
        %1419 = vmatprep.subr.bf16.mxu0 0
        %1420 = vmatpush1.bf16.msra.mxu0 0
        %1421 = vmatprep.subr.bf16.mxu0 0
        %1422 = vmatpush1.bf16.msra.mxu0 0
        %1423 = vmatprep.subr.bf16.mxu0 0
        %1424 = vmatpush1.bf16.msra.mxu0 0
        %1425 = vmatprep.subr.bf16.mxu0 0
        %1426 = vmatpush1.bf16.msra.mxu0 0
        %1427 = vmatprep.subr.bf16.mxu0 0
        %1428 = vmatpush1.bf16.msra.mxu0 0
        %1429 = vmatprep.mubr.bf16.mxu0 0
        %1430 = vmatmul.mubr.bf16.gmra.mrb[0].mxu0 %v1393
        %v1431 = vpop.f32.mrb[0].mxu0
        %v1432 = vadd.f32 0.0, %v1431
        %v1433 = vpop.f32.mrb[0].mxu0
        %v1434 = vpop.f32.mrb[0].mxu0
        %v1435 = vadd.f32 0.0, %v1434
        %v1436 = vpop.f32.mrb[0].mxu0
        %1437 = vmatprep.mubr.bf16.mxu0 0
        %1438 = vmatmul.mubr.bf16.gmra.mrb[0].mxu0 %v1394
        %v1439 = vpop.f32.mrb[0].mxu0
        %v1440 = vadd.f32 0.0, %v1439
        %v1441 = vpop.f32.mrb[0].mxu0
        %v1442 = vpop.f32.mrb[0].mxu0
        %v1443 = vadd.f32 0.0, %v1442
        %v1444 = vpop.f32.mrb[0].mxu0
        %1445 = vmatprep.mubr.bf16.mxu0 0
        %1446 = vmatmul.mubr.bf16.gmra.mrb[0].mxu0 %v1395
        %v1447 = vpop.f32.mrb[0].mxu0
        %v1448 = vadd.f32 0.0, %v1447
        %v1449 = vpop.f32.mrb[0].mxu0
        %v1450 = vpop.f32.mrb[0].mxu0
        %v1451 = vadd.f32 0.0, %v1450
        %v1452 = vpop.f32.mrb[0].mxu0
        %1453 = vmatprep.mubr.bf16.mxu0 0
        %1454 = vmatmul.mubr.bf16.gmra.mrb[0].mxu0 %v1396
        %v1455 = vpop.f32.mrb[0].mxu0
        %v1456 = vadd.f32 0.0, %v1455
        %v1457 = vpop.f32.mrb[0].mxu0
        %v1458 = vpop.f32.mrb[0].mxu0
        %v1459 = vadd.f32 0.0, %v1458
        %v1460 = vpop.f32.mrb[0].mxu0
        %1461 = vdwg.mxu0
        %v1462 = vld [vmem:[#allocation3] sm:$0xff]
        %v1463 = vld [vmem:[#allocation3 + $0x8] sm:$0xff]
        %v1464 = vld [vmem:[#allocation3 + $0x10] sm:$0xff]
        %v1465 = vld [vmem:[#allocation3 + $0x18] sm:$0xff]
        %v1466 = vld [vmem:[#allocation3 + $0x20] sm:$0xff]
        %v1467 = vld [vmem:[#allocation3 + $0x28] sm:$0xff]
        %v1468 = vld [vmem:[#allocation3 + $0x30] sm:$0xff]
        %v1469 = vld [vmem:[#allocation3 + $0x38] sm:$0xff]
        %v1470 = vmax.f32 %v1462, %v1432
        %v1471 = vmax.f32 %v1463, %v1435
        %v1472 = vmax.f32 %v1464, %v1440
        %v1473 = vmax.f32 %v1465, %v1443
        %v1474 = vmax.f32 %v1466, %v1448
        %v1475 = vmax.f32 %v1467, %v1451
        %v1476 = vmax.f32 %v1468, %v1456
        %v1477 = vmax.f32 %v1469, %v1459
        %1478 = vst [vmem:[#allocation3] sm:$0xff] %v1470
        %1479 = vst [vmem:[#allocation3 + $0x8] sm:$0xff] %v1471
        %1480 = vst [vmem:[#allocation3 + $0x10] sm:$0xff] %v1472
        %1481 = vst [vmem:[#allocation3 + $0x18] sm:$0xff] %v1473
        %1482 = vst [vmem:[#allocation3 + $0x20] sm:$0xff] %v1474
        %1483 = vst [vmem:[#allocation3 + $0x28] sm:$0xff] %v1475
        %1484 = vst [vmem:[#allocation3 + $0x30] sm:$0xff] %v1476
        %1485 = vst [vmem:[#allocation3 + $0x38] sm:$0xff] %v1477
        %v1486 = vsel %vm1353, -1e+30, %v1230
        %v1487 = vsel %vm1354, -1e+30, %v1231
        %v1488 = vsel %vm1355, -1e+30, %v1232
        %v1489 = vsel %vm1356, -1e+30, %v1233
        %v1490 = vsel %vm1357, -1e+30, %v1234
        %v1491 = vsel %vm1358, -1e+30, %v1235
        %v1492 = vsel %vm1359, -1e+30, %v1236
        %v1493 = vsel %vm1360, -1e+30, %v1237
        %v1494 = vsel %vm1361, -1e+30, %v1238
        %v1495 = vsel %vm1362, -1e+30, %v1239
        %v1496 = vsel %vm1363, -1e+30, %v1240
        %v1497 = vsel %vm1364, -1e+30, %v1241
        %v1498 = vsel %vm1365, -1e+30, %v1242
        %v1499 = vsel %vm1366, -1e+30, %v1243
        %v1500 = vsel %vm1367, -1e+30, %v1244
        %v1501 = vsel %vm1368, -1e+30, %v1245
        %1502 = vst [vmem:[#allocation2] sm:$0xff] %v1486
        %1503 = vst [vmem:[#allocation2 + $0x8] sm:$0xff] %v1487
        %1504 = vst [vmem:[#allocation2 + $0x10] sm:$0xff] %v1488
        %1505 = vst [vmem:[#allocation2 + $0x18] sm:$0xff] %v1489
        %1506 = vst [vmem:[#allocation2 + $0x20] sm:$0xff] %v1490
        %1507 = vst [vmem:[#allocation2 + $0x28] sm:$0xff] %v1491
        %1508 = vst [vmem:[#allocation2 + $0x30] sm:$0xff] %v1492
        %1509 = vst [vmem:[#allocation2 + $0x38] sm:$0xff] %v1493
        %1510 = vst [vmem:[#allocation2 + $0x40] sm:$0xff] %v1494
        %1511 = vst [vmem:[#allocation2 + $0x48] sm:$0xff] %v1495
        %1512 = vst [vmem:[#allocation2 + $0x50] sm:$0xff] %v1496
        %1513 = vst [vmem:[#allocation2 + $0x58] sm:$0xff] %v1497
        %1514 = vst [vmem:[#allocation2 + $0x60] sm:$0xff] %v1498
        %1515 = vst [vmem:[#allocation2 + $0x68] sm:$0xff] %v1499
        %1516 = vst [vmem:[#allocation2 + $0x70] sm:$0xff] %v1500
        %1517 = vst [vmem:[#allocation2 + $0x78] sm:$0xff] %v1501
      $region109: #{refine_forward.1} parent=103 // loop_footer
        %s1229 = sadd.s32 1, %s1225
      $region110: #{refine_forward.1} parent=103 // loop_footer_branch
        %1224 = sbr.rel target = $region106
      $region111: #{refine_forward.1} parent=103 // loop_exit
        _
      %v1518 = vld [vmem:[%s2] sm:$0xff]
      %v1519 = vld [vmem:[%s2 + $0x8] sm:$0xff]
      %v1520 = vld [vmem:[%s2 + $0x10] sm:$0xff]
      %v1521 = vld [vmem:[%s2 + $0x18] sm:$0xff]
      %v1522 = vld [vmem:[%s2 + $0x20] sm:$0xff]
      %v1523 = vld [vmem:[%s2 + $0x28] sm:$0xff]
      %v1524 = vld [vmem:[%s2 + $0x30] sm:$0xff]
      %v1525 = vld [vmem:[%s2 + $0x38] sm:$0xff]
      %1527 = vset.pattern.permute.xlu0 0
      %1528 = vperm.xlu0 %1527, %v1518
      %v1529 = vpop.permute.xlu0 %1528
      %1532 = vset.pattern.permute.xlu0 0
      %1533 = vperm.xlu0 %1532, %v1519
      %v1534 = vpop.permute.xlu0 %1533
      %1537 = vset.pattern.permute.xlu0 0
      %1538 = vperm.xlu0 %1537, %v1520
      %v1539 = vpop.permute.xlu0 %1538
      %1542 = vset.pattern.permute.xlu0 0
      %1543 = vperm.xlu0 %1542, %v1521
      %v1544 = vpop.permute.xlu0 %1543
      %1547 = vset.pattern.permute.xlu0 0
      %1548 = vperm.xlu0 %1547, %v1522
      %v1549 = vpop.permute.xlu0 %1548
      %1552 = vset.pattern.permute.xlu0 0
      %1553 = vperm.xlu0 %1552, %v1523
      %v1554 = vpop.permute.xlu0 %1553
      %1557 = vset.pattern.permute.xlu0 0
      %1558 = vperm.xlu0 %1557, %v1524
      %v1559 = vpop.permute.xlu0 %1558
      %1562 = vset.pattern.permute.xlu0 0
      %1563 = vperm.xlu0 %1562, %v1525
      %v1564 = vpop.permute.xlu0 %1563
      %v1566 = vmul.f32 %v1529, %v1095
      %v1567 = vmul.f32 %v1534, %v1095
      %v1568 = vmul.f32 %v1539, %v1095
      %v1569 = vmul.f32 %v1544, %v1095
      %v1570 = vmul.f32 %v1549, %v1095
      %v1571 = vmul.f32 %v1554, %v1095
      %v1572 = vmul.f32 %v1559, %v1095
      %v1573 = vmul.f32 %v1564, %v1095
      %1574 = vset.pattern.permute.xlu0 1
      %1575 = vperm.xlu0 %1574, %v1518
      %v1576 = vpop.permute.xlu0 %1575
      %1578 = vset.pattern.permute.xlu0 1
      %1579 = vperm.xlu0 %1578, %v1519
      %v1580 = vpop.permute.xlu0 %1579
      %1582 = vset.pattern.permute.xlu0 1
      %1583 = vperm.xlu0 %1582, %v1520
      %v1584 = vpop.permute.xlu0 %1583
      %1586 = vset.pattern.permute.xlu0 1
      %1587 = vperm.xlu0 %1586, %v1521
      %v1588 = vpop.permute.xlu0 %1587
      %1590 = vset.pattern.permute.xlu0 1
      %1591 = vperm.xlu0 %1590, %v1522
      %v1592 = vpop.permute.xlu0 %1591
      %1594 = vset.pattern.permute.xlu0 1
      %1595 = vperm.xlu0 %1594, %v1523
      %v1596 = vpop.permute.xlu0 %1595
      %1598 = vset.pattern.permute.xlu0 1
      %1599 = vperm.xlu0 %1598, %v1524
      %v1600 = vpop.permute.xlu0 %1599
      %1602 = vset.pattern.permute.xlu0 1
      %1603 = vperm.xlu0 %1602, %v1525
      %v1604 = vpop.permute.xlu0 %1603
      %v1606 = vmul.f32 %v1576, %v1139
      %v1607 = vmul.f32 %v1580, %v1139
      %v1608 = vmul.f32 %v1584, %v1139
      %v1609 = vmul.f32 %v1588, %v1139
      %v1610 = vmul.f32 %v1592, %v1139
      %v1611 = vmul.f32 %v1596, %v1139
      %v1612 = vmul.f32 %v1600, %v1139
      %v1613 = vmul.f32 %v1604, %v1139
      %v1614 = vadd.f32 %v1566, %v1606
      %v1615 = vadd.f32 %v1567, %v1607
      %v1616 = vadd.f32 %v1568, %v1608
      %v1617 = vadd.f32 %v1569, %v1609
      %v1618 = vadd.f32 %v1570, %v1610
      %v1619 = vadd.f32 %v1571, %v1611
      %v1620 = vadd.f32 %v1572, %v1612
      %v1621 = vadd.f32 %v1573, %v1613
      %1622 = vset.pattern.permute.xlu0 2
      %1623 = vperm.xlu0 %1622, %v1518
      %v1624 = vpop.permute.xlu0 %1623
      %1626 = vset.pattern.permute.xlu0 2
      %1627 = vperm.xlu0 %1626, %v1519
      %v1628 = vpop.permute.xlu0 %1627
      %1630 = vset.pattern.permute.xlu0 2
      %1631 = vperm.xlu0 %1630, %v1520
      %v1632 = vpop.permute.xlu0 %1631
      %1634 = vset.pattern.permute.xlu0 2
      %1635 = vperm.xlu0 %1634, %v1521
      %v1636 = vpop.permute.xlu0 %1635
      %1638 = vset.pattern.permute.xlu0 2
      %1639 = vperm.xlu0 %1638, %v1522
      %v1640 = vpop.permute.xlu0 %1639
      %1642 = vset.pattern.permute.xlu0 2
      %1643 = vperm.xlu0 %1642, %v1523
      %v1644 = vpop.permute.xlu0 %1643
      %1646 = vset.pattern.permute.xlu0 2
      %1647 = vperm.xlu0 %1646, %v1524
      %v1648 = vpop.permute.xlu0 %1647
      %1650 = vset.pattern.permute.xlu0 2
      %1651 = vperm.xlu0 %1650, %v1525
      %v1652 = vpop.permute.xlu0 %1651
      %v1654 = vmul.f32 %v1624, %v1191
      %v1655 = vmul.f32 %v1628, %v1191
      %v1656 = vmul.f32 %v1632, %v1191
      %v1657 = vmul.f32 %v1636, %v1191
      %v1658 = vmul.f32 %v1640, %v1191
      %v1659 = vmul.f32 %v1644, %v1191
      %v1660 = vmul.f32 %v1648, %v1191
      %v1661 = vmul.f32 %v1652, %v1191
      %v1662 = vadd.f32 %v1614, %v1654
      %v1663 = vadd.f32 %v1615, %v1655
      %v1664 = vadd.f32 %v1616, %v1656
      %v1665 = vadd.f32 %v1617, %v1657
      %v1666 = vadd.f32 %v1618, %v1658
      %v1667 = vadd.f32 %v1619, %v1659
      %v1668 = vadd.f32 %v1620, %v1660
      %v1669 = vadd.f32 %v1621, %v1661
      %v1670 = vld [vmem:[%s3] sm:$0xff]
      %v1671 = vld [vmem:[%s3 + $0x8] sm:$0xff]
      %v1672 = vld [vmem:[%s3 + $0x10] sm:$0xff]
      %v1673 = vld [vmem:[%s3 + $0x18] sm:$0xff]
      %v1674 = vld [vmem:[%s3 + $0x20] sm:$0xff]
      %v1675 = vld [vmem:[%s3 + $0x28] sm:$0xff]
      %v1676 = vld [vmem:[%s3 + $0x30] sm:$0xff]
      %v1677 = vld [vmem:[%s3 + $0x38] sm:$0xff]
      %1679 = vset.pattern.permute.xlu0 0
      %1680 = vperm.xlu0 %1679, %v1670
      %v1681 = vpop.permute.xlu0 %1680
      %1684 = vset.pattern.permute.xlu0 0
      %1685 = vperm.xlu0 %1684, %v1671
      %v1686 = vpop.permute.xlu0 %1685
      %1689 = vset.pattern.permute.xlu0 0
      %1690 = vperm.xlu0 %1689, %v1672
      %v1691 = vpop.permute.xlu0 %1690
      %1694 = vset.pattern.permute.xlu0 0
      %1695 = vperm.xlu0 %1694, %v1673
      %v1696 = vpop.permute.xlu0 %1695
      %1699 = vset.pattern.permute.xlu0 0
      %1700 = vperm.xlu0 %1699, %v1674
      %v1701 = vpop.permute.xlu0 %1700
      %1704 = vset.pattern.permute.xlu0 0
      %1705 = vperm.xlu0 %1704, %v1675
      %v1706 = vpop.permute.xlu0 %1705
      %1709 = vset.pattern.permute.xlu0 0
      %1710 = vperm.xlu0 %1709, %v1676
      %v1711 = vpop.permute.xlu0 %1710
      %1714 = vset.pattern.permute.xlu0 0
      %1715 = vperm.xlu0 %1714, %v1677
      %v1716 = vpop.permute.xlu0 %1715
      %v1718 = vadd.f32 %v1662, %v1681
      %v1719 = vadd.f32 %v1663, %v1686
      %v1720 = vadd.f32 %v1664, %v1691
      %v1721 = vadd.f32 %v1665, %v1696
      %v1722 = vadd.f32 %v1666, %v1701
      %v1723 = vadd.f32 %v1667, %v1706
      %v1724 = vadd.f32 %v1668, %v1711
      %v1725 = vadd.f32 %v1669, %v1716
      %v1726 = vld [vmem:[#allocation3] sm:$0xff]
      %v1727 = vld [vmem:[#allocation3 + $0x8] sm:$0xff]
      %v1728 = vld [vmem:[#allocation3 + $0x10] sm:$0xff]
      %v1729 = vld [vmem:[#allocation3 + $0x18] sm:$0xff]
      %v1730 = vld [vmem:[#allocation3 + $0x20] sm:$0xff]
      %v1731 = vld [vmem:[#allocation3 + $0x28] sm:$0xff]
      %v1732 = vld [vmem:[#allocation3 + $0x30] sm:$0xff]
      %v1733 = vld [vmem:[#allocation3 + $0x38] sm:$0xff]
      %v1734 = vadd.f32 %v1726, %v1718
      %v1735 = vadd.f32 %v1727, %v1719
      %v1736 = vadd.f32 %v1728, %v1720
      %v1737 = vadd.f32 %v1729, %v1721
      %v1738 = vadd.f32 %v1730, %v1722
      %v1739 = vadd.f32 %v1731, %v1723
      %v1740 = vadd.f32 %v1732, %v1724
      %v1741 = vadd.f32 %v1733, %v1725
      %v1742 = vmul.f32 %v1734, 0.2
      %v1743 = vmul.f32 %v1735, 0.2
      %v1744 = vmul.f32 %v1736, 0.2
      %v1745 = vmul.f32 %v1737, 0.2
      %v1746 = vmul.f32 %v1738, 0.2
      %v1747 = vmul.f32 %v1739, 0.2
      %v1748 = vmul.f32 %v1740, 0.2
      %v1749 = vmul.f32 %v1741, 0.2
      %v1750 = vmax.f32 %v1734, %v1742
      %v1751 = vmax.f32 %v1735, %v1743
      %v1752 = vmax.f32 %v1736, %v1744
      %v1753 = vmax.f32 %v1737, %v1745
      %v1754 = vmax.f32 %v1738, %v1746
      %v1755 = vmax.f32 %v1739, %v1747
      %v1756 = vmax.f32 %v1740, %v1748
      %v1757 = vmax.f32 %v1741, %v1749
      %v1758 = vpack.c.bf16 %v1751, %v1750
      %v1759 = vpack.c.bf16 %v1753, %v1752
      %v1760 = vpack.c.bf16 %v1755, %v1754
      %v1761 = vpack.c.bf16 %v1757, %v1756
      %1762 = vst [vmem:[#allocation5] sm:$0xff] %v1758
      %1763 = vst [vmem:[#allocation5 + $0x8] sm:$0xff] %v1759
      %1764 = vst [vmem:[#allocation5 + $0x10] sm:$0xff] %v1760
      %1765 = vst [vmem:[#allocation5 + $0x18] sm:$0xff] %v1761
      %1766 = vxpose.xlu0.c.b16.start [1/8] %v1758, 128
      %1767 = vxpose.xlu0.c.b16.cont [2/8] %v1759, 128
      %1768 = vxpose.xlu0.c.b16.cont [3/8] %v1760, 128
      %1769 = vxpose.xlu0.c.b16.cont [4/8] %v1761, 128
      %1770 = vxpose.xlu0.c.b16.cont [5/8] 0, 128
      %1771 = vxpose.xlu0.c.b16.cont [6/8] 0, 128
      %1772 = vxpose.xlu0.c.b16.cont [7/8] 0, 128
      %1773 = vxpose.xlu0.c.b16.end [8/8] 0, 128
      %v1774 = vpop.trf.xlu0
      %v1775 = vpop.trf.xlu0
      %v1776 = vpop.trf.xlu0
      %v1777 = vpop.trf.xlu0
      %v1778 = vpop.trf.xlu0
      %v1779 = vpop.trf.xlu0
      %v1780 = vpop.trf.xlu0
      %v1781 = vpop.trf.xlu0
      %vm1782 = vcmask 523264
      %v1784 = vsel %vm1782, %v1774, 0
      %v1787 = vsel %vm1782, %v1775, 0
      %v1790 = vsel %vm1782, %v1776, 0
      %v1793 = vsel %vm1782, %v1777, 0
      %v1796 = vsel %vm1782, %v1778, 0
      %v1799 = vsel %vm1782, %v1779, 0
      %v1802 = vsel %vm1782, %v1780, 0
      %v1805 = vsel %vm1782, %v1781, 0
      %1807 = vmatprep.subr.bf16.mxu0 0
      %1808 = vmatpush1.bf16.msra.mxu0 %v1758
      %1809 = vmatprep.subr.bf16.mxu0 0
      %1810 = vmatpush1.bf16.msra.mxu0 %v1759
      %1811 = vmatprep.subr.bf16.mxu0 0
      %1812 = vmatpush1.bf16.msra.mxu0 %v1760
      %1813 = vmatprep.subr.bf16.mxu0 0
      %1814 = vmatpush1.bf16.msra.mxu0 %v1761
      %1815 = vmatprep.subr.bf16.mxu0 0
      %1816 = vmatpush1.bf16.msra.mxu0 0
      %1817 = vmatprep.subr.bf16.mxu0 0
      %1818 = vmatpush1.bf16.msra.mxu0 0
      %1819 = vmatprep.subr.bf16.mxu0 0
      %1820 = vmatpush1.bf16.msra.mxu0 0
      %1821 = vmatprep.subr.bf16.mxu0 0
      %1822 = vmatpush1.bf16.msra.mxu0 0
      %1823 = vmatprep.subr.bf16.mxu0 0
      %1824 = vmatpush1.bf16.msra.mxu0 0
      %1825 = vmatprep.subr.bf16.mxu0 0
      %1826 = vmatpush1.bf16.msra.mxu0 0
      %1827 = vmatprep.subr.bf16.mxu0 0
      %1828 = vmatpush1.bf16.msra.mxu0 0
      %1829 = vmatprep.subr.bf16.mxu0 0
      %1830 = vmatpush1.bf16.msra.mxu0 0
      %1831 = vmatprep.subr.bf16.mxu0 0
      %1832 = vmatpush1.bf16.msra.mxu0 0
      %1833 = vmatprep.subr.bf16.mxu0 0
      %1834 = vmatpush1.bf16.msra.mxu0 0
      %1835 = vmatprep.subr.bf16.mxu0 0
      %1836 = vmatpush1.bf16.msra.mxu0 0
      %1837 = vmatprep.subr.bf16.mxu0 0
      %1838 = vmatpush1.bf16.msra.mxu0 0
      %1839 = vmatprep.mubr.bf16.mxu0 0
      %1840 = vmatmul.mubr.bf16.gmra.mrb[0].mxu0 %v1784
      %v1841 = vpop.f32.mrb[0].mxu0
      %v1842 = vadd.f32 0.0, %v1841
      %v1843 = vpop.f32.mrb[0].mxu0
      %v1844 = vpop.f32.mrb[0].mxu0
      %v1845 = vadd.f32 0.0, %v1844
      %v1846 = vpop.f32.mrb[0].mxu0
      %1847 = vmatprep.mubr.bf16.mxu0 0
      %1848 = vmatmul.mubr.bf16.gmra.mrb[0].mxu0 %v1787
      %v1849 = vpop.f32.mrb[0].mxu0
      %v1850 = vadd.f32 0.0, %v1849
      %v1851 = vpop.f32.mrb[0].mxu0
      %v1852 = vpop.f32.mrb[0].mxu0
      %v1853 = vadd.f32 0.0, %v1852
      %v1854 = vpop.f32.mrb[0].mxu0
      %1855 = vmatprep.mubr.bf16.mxu0 0
      %1856 = vmatmul.mubr.bf16.gmra.mrb[0].mxu0 %v1790
      %v1857 = vpop.f32.mrb[0].mxu0
      %v1858 = vadd.f32 0.0, %v1857
      %v1859 = vpop.f32.mrb[0].mxu0
      %v1860 = vpop.f32.mrb[0].mxu0
      %v1861 = vadd.f32 0.0, %v1860
      %v1862 = vpop.f32.mrb[0].mxu0
      %1863 = vmatprep.mubr.bf16.mxu0 0
      %1864 = vmatmul.mubr.bf16.gmra.mrb[0].mxu0 %v1793
      %v1865 = vpop.f32.mrb[0].mxu0
      %v1866 = vadd.f32 0.0, %v1865
      %v1867 = vpop.f32.mrb[0].mxu0
      %v1868 = vpop.f32.mrb[0].mxu0
      %v1869 = vadd.f32 0.0, %v1868
      %v1870 = vpop.f32.mrb[0].mxu0
      %1871 = vmatprep.mubr.bf16.mxu0 0
      %1872 = vmatmul.mubr.bf16.gmra.mrb[0].mxu0 %v1796
      %v1873 = vpop.f32.mrb[0].mxu0
      %v1874 = vadd.f32 0.0, %v1873
      %v1875 = vpop.f32.mrb[0].mxu0
      %v1876 = vpop.f32.mrb[0].mxu0
      %v1877 = vadd.f32 0.0, %v1876
      %v1878 = vpop.f32.mrb[0].mxu0
      %1879 = vmatprep.mubr.bf16.mxu0 0
      %1880 = vmatmul.mubr.bf16.gmra.mrb[0].mxu0 %v1799
      %v1881 = vpop.f32.mrb[0].mxu0
      %v1882 = vadd.f32 0.0, %v1881
      %v1883 = vpop.f32.mrb[0].mxu0
      %v1884 = vpop.f32.mrb[0].mxu0
      %v1885 = vadd.f32 0.0, %v1884
      %v1886 = vpop.f32.mrb[0].mxu0
      %1887 = vmatprep.mubr.bf16.mxu0 0
      %1888 = vmatmul.mubr.bf16.gmra.mrb[0].mxu0 %v1802
      %v1889 = vpop.f32.mrb[0].mxu0
      %v1890 = vadd.f32 0.0, %v1889
      %v1891 = vpop.f32.mrb[0].mxu0
      %v1892 = vpop.f32.mrb[0].mxu0
      %v1893 = vadd.f32 0.0, %v1892
      %v1894 = vpop.f32.mrb[0].mxu0
      %1895 = vmatprep.mubr.bf16.mxu0 0
      %1896 = vmatmul.mubr.bf16.gmra.mrb[0].mxu0 %v1805
      %v1897 = vpop.f32.mrb[0].mxu0
      %v1898 = vadd.f32 0.0, %v1897
      %v1899 = vpop.f32.mrb[0].mxu0
      %v1900 = vpop.f32.mrb[0].mxu0
      %v1901 = vadd.f32 0.0, %v1900
      %v1902 = vpop.f32.mrb[0].mxu0
      %1903 = vdwg.mxu0
      %v1904 = vmul.f32 %v1750, %v1750
      %v1905 = vmul.f32 %v1751, %v1751
      %v1906 = vmul.f32 %v1752, %v1752
      %v1907 = vmul.f32 %v1753, %v1753
      %v1908 = vmul.f32 %v1754, %v1754
      %v1909 = vmul.f32 %v1755, %v1755
      %v1910 = vmul.f32 %v1756, %v1756
      %v1911 = vmul.f32 %v1757, %v1757
      %v1912 = vadd.f32 %v1904, %v1905
      %v1913 = vadd.f32 %v1912, %v1906
      %v1914 = vadd.f32 %v1913, %v1907
      %v1915 = vadd.f32 %v1914, %v1908
      %v1916 = vadd.f32 %v1915, %v1909
      %v1917 = vadd.f32 %v1916, %v1910
      %v1918 = vadd.f32 %v1917, %v1911
      %v1919 = vrot.slane %v1918, 4
      %v1920 = vadd.f32 %v1918, %v1919
      %v1921 = vrot.slane %v1920, 2
      %v1922 = vadd.f32 %v1920, %v1921
      %v1923 = vrot.slane %v1922, 1
      %v1924 = vadd.f32 %v1922, %v1923
      %v1925 = vmul.f32 %v1842, 2.0
      %v1926 = vmul.f32 %v1845, 2.0
      %v1927 = vmul.f32 %v1850, 2.0
      %v1928 = vmul.f32 %v1853, 2.0
      %v1929 = vmul.f32 %v1858, 2.0
      %v1930 = vmul.f32 %v1861, 2.0
      %v1931 = vmul.f32 %v1866, 2.0
      %v1932 = vmul.f32 %v1869, 2.0
      %v1933 = vmul.f32 %v1874, 2.0
      %v1934 = vmul.f32 %v1877, 2.0
      %v1935 = vmul.f32 %v1882, 2.0
      %v1936 = vmul.f32 %v1885, 2.0
      %v1937 = vmul.f32 %v1890, 2.0
      %v1938 = vmul.f32 %v1893, 2.0
      %v1939 = vmul.f32 %v1898, 2.0
      %v1940 = vmul.f32 %v1901, 2.0
      %1941 = vxpose.xlu0.b32.start [1/16] %v1924, 128
      %1942 = vxpose.xlu0.b32.cont [2/16] 0.0, 128
      %1943 = vxpose.xlu0.b32.cont [3/16] 0.0, 128
      %1944 = vxpose.xlu0.b32.cont [4/16] 0.0, 128
      %1945 = vxpose.xlu0.b32.cont [5/16] 0.0, 128
      %1946 = vxpose.xlu0.b32.cont [6/16] 0.0, 128
      %1947 = vxpose.xlu0.b32.cont [7/16] 0.0, 128
      %1948 = vxpose.xlu0.b32.cont [8/16] 0.0, 128
      %1949 = vxpose.xlu0.b32.cont [9/16] 0.0, 128
      %1950 = vxpose.xlu0.b32.cont [10/16] 0.0, 128
      %1951 = vxpose.xlu0.b32.cont [11/16] 0.0, 128
      %1952 = vxpose.xlu0.b32.cont [12/16] 0.0, 128
      %1953 = vxpose.xlu0.b32.cont [13/16] 0.0, 128
      %1954 = vxpose.xlu0.b32.cont [14/16] 0.0, 128
      %1955 = vxpose.xlu0.b32.cont [15/16] 0.0, 128
      %1956 = vxpose.xlu0.b32.end [16/16] 0.0, 128
      %v1957 = vpop.trf.xlu0
      %v1958 = vpop.trf.xlu0
      %v1959 = vpop.trf.xlu0
      %v1960 = vpop.trf.xlu0
      %v1961 = vpop.trf.xlu0
      %v1962 = vpop.trf.xlu0
      %v1963 = vpop.trf.xlu0
      %v1964 = vpop.trf.xlu0
      %v1965 = vpop.trf.xlu0
      %v1966 = vpop.trf.xlu0
      %v1967 = vpop.trf.xlu0
      %v1968 = vpop.trf.xlu0
      %v1969 = vpop.trf.xlu0
      %v1970 = vpop.trf.xlu0
      %v1971 = vpop.trf.xlu0
      %v1972 = vpop.trf.xlu0
      %1974 = vset.pattern.permute.xlu0 0
      %1975 = vperm.xlu0 %1974, %v1957
      %v1976 = vpop.permute.xlu0 %1975
      %1979 = vset.pattern.permute.xlu0 0
      %1980 = vperm.xlu0 %1979, %v1958
      %v1981 = vpop.permute.xlu0 %1980
      %1984 = vset.pattern.permute.xlu0 0
      %1985 = vperm.xlu0 %1984, %v1959
      %v1986 = vpop.permute.xlu0 %1985
      %1989 = vset.pattern.permute.xlu0 0
      %1990 = vperm.xlu0 %1989, %v1960
      %v1991 = vpop.permute.xlu0 %1990
      %1994 = vset.pattern.permute.xlu0 0
      %1995 = vperm.xlu0 %1994, %v1961
      %v1996 = vpop.permute.xlu0 %1995
      %1999 = vset.pattern.permute.xlu0 0
      %2000 = vperm.xlu0 %1999, %v1962
      %v2001 = vpop.permute.xlu0 %2000
      %2004 = vset.pattern.permute.xlu0 0
      %2005 = vperm.xlu0 %2004, %v1963
      %v2006 = vpop.permute.xlu0 %2005
      %2009 = vset.pattern.permute.xlu0 0
      %2010 = vperm.xlu0 %2009, %v1964
      %v2011 = vpop.permute.xlu0 %2010
      %2014 = vset.pattern.permute.xlu0 0
      %2015 = vperm.xlu0 %2014, %v1965
      %v2016 = vpop.permute.xlu0 %2015
      %2019 = vset.pattern.permute.xlu0 0
      %2020 = vperm.xlu0 %2019, %v1966
      %v2021 = vpop.permute.xlu0 %2020
      %2024 = vset.pattern.permute.xlu0 0
      %2025 = vperm.xlu0 %2024, %v1967
      %v2026 = vpop.permute.xlu0 %2025
      %2029 = vset.pattern.permute.xlu0 0
      %2030 = vperm.xlu0 %2029, %v1968
      %v2031 = vpop.permute.xlu0 %2030
      %2034 = vset.pattern.permute.xlu0 0
      %2035 = vperm.xlu0 %2034, %v1969
      %v2036 = vpop.permute.xlu0 %2035
      %2039 = vset.pattern.permute.xlu0 0
      %2040 = vperm.xlu0 %2039, %v1970
      %v2041 = vpop.permute.xlu0 %2040
      %2044 = vset.pattern.permute.xlu0 0
      %2045 = vperm.xlu0 %2044, %v1971
      %v2046 = vpop.permute.xlu0 %2045
      %2049 = vset.pattern.permute.xlu0 0
      %2050 = vperm.xlu0 %2049, %v1972
      %v2051 = vpop.permute.xlu0 %2050
      %v2053 = vsub.f32 %v1925, %v1976
      %v2054 = vsub.f32 %v1926, %v1981
      %v2055 = vsub.f32 %v1927, %v1986
      %v2056 = vsub.f32 %v1928, %v1991
      %v2057 = vsub.f32 %v1929, %v1996
      %v2058 = vsub.f32 %v1930, %v2001
      %v2059 = vsub.f32 %v1931, %v2006
      %v2060 = vsub.f32 %v1932, %v2011
      %v2061 = vsub.f32 %v1933, %v2016
      %v2062 = vsub.f32 %v1934, %v2021
      %v2063 = vsub.f32 %v1935, %v2026
      %v2064 = vsub.f32 %v1936, %v2031
      %v2065 = vsub.f32 %v1937, %v2036
      %v2066 = vsub.f32 %v1938, %v2041
      %v2067 = vsub.f32 %v1939, %v2046
      %v2068 = vsub.f32 %v1940, %v2051
      %2069 = vst [vmem:[#allocation2] sm:$0xff] %v2053
      %2070 = vst [vmem:[#allocation2 + $0x8] sm:$0xff] %v2054
      %2071 = vst [vmem:[#allocation2 + $0x10] sm:$0xff] %v2055
      %2072 = vst [vmem:[#allocation2 + $0x18] sm:$0xff] %v2056
      %2073 = vst [vmem:[#allocation2 + $0x20] sm:$0xff] %v2057
      %2074 = vst [vmem:[#allocation2 + $0x28] sm:$0xff] %v2058
      %2075 = vst [vmem:[#allocation2 + $0x30] sm:$0xff] %v2059
      %2076 = vst [vmem:[#allocation2 + $0x38] sm:$0xff] %v2060
      %2077 = vst [vmem:[#allocation2 + $0x40] sm:$0xff] %v2061
      %2078 = vst [vmem:[#allocation2 + $0x48] sm:$0xff] %v2062
      %2079 = vst [vmem:[#allocation2 + $0x50] sm:$0xff] %v2063
      %2080 = vst [vmem:[#allocation2 + $0x58] sm:$0xff] %v2064
      %2081 = vst [vmem:[#allocation2 + $0x60] sm:$0xff] %v2065
      %2082 = vst [vmem:[#allocation2 + $0x68] sm:$0xff] %v2066
      %2083 = vst [vmem:[#allocation2 + $0x70] sm:$0xff] %v2067
      %2084 = vst [vmem:[#allocation2 + $0x78] sm:$0xff] %v2068
      %v2085 = vld [vmem:[#allocation5] sm:$0xff]
      %v2086 = vld [vmem:[#allocation5 + $0x8] sm:$0xff]
      %v2087 = vld [vmem:[#allocation5 + $0x10] sm:$0xff]
      %v2088 = vld [vmem:[#allocation5 + $0x18] sm:$0xff]
      %v2089 = vld [vmem:[%s4] sm:$0xf]
      %v2090 = vld [vmem:[%s4 + $0x4] sm:$0xf]
      %v2091 = vld [vmem:[%s4 + $0x8] sm:$0xf]
      %v2092 = vld [vmem:[%s4 + $0xc] sm:$0xf]
      %v2093 = vld [vmem:[%s4 + $0x10] sm:$0xf]
      %v2094 = vld [vmem:[%s4 + $0x14] sm:$0xf]
      %v2095 = vld [vmem:[%s4 + $0x18] sm:$0xf]
      %v2096 = vld [vmem:[%s4 + $0x1c] sm:$0xf]
      %v2105 = vunpack.c.l.b16 %v2089
      %v2106 = vunpack.c.l.b16 %v2090
      %v2107 = vunpack.c.l.b16 %v2091
      %v2108 = vunpack.c.l.b16 %v2092
      %v2109 = vunpack.c.l.b16 %v2093
      %v2110 = vunpack.c.l.b16 %v2094
      %v2111 = vunpack.c.l.b16 %v2095
      %v2112 = vunpack.c.l.b16 %v2096
      %v2113 = vpack.c.b16 %v2106, %v2105
      %v2114 = vpack.c.b16 %v2108, %v2107
      %v2115 = vpack.c.b16 %v2110, %v2109
      %v2116 = vpack.c.b16 %v2112, %v2111
      %v2118 = vsel %vm1782, %v2113, 0
      %v2121 = vsel %vm1782, %v2114, 0
      %v2124 = vsel %vm1782, %v2115, 0
      %v2127 = vsel %vm1782, %v2116, 0
      %2129 = vmatprep.subr.bf16.mxu0 0
      %2130 = vmatpush1.bf16.msra.mxu0 %v2085
      %2131 = vmatprep.subr.bf16.mxu0 0
      %2132 = vmatpush1.bf16.msra.mxu0 %v2086
      %2133 = vmatprep.subr.bf16.mxu0 0
      %2134 = vmatpush1.bf16.msra.mxu0 %v2087
      %2135 = vmatprep.subr.bf16.mxu0 0
      %2136 = vmatpush1.bf16.msra.mxu0 %v2088
      %2137 = vmatprep.subr.bf16.mxu0 0
      %2138 = vmatpush1.bf16.msra.mxu0 0
      %2139 = vmatprep.subr.bf16.mxu0 0
      %2140 = vmatpush1.bf16.msra.mxu0 0
      %2141 = vmatprep.subr.bf16.mxu0 0
      %2142 = vmatpush1.bf16.msra.mxu0 0
      %2143 = vmatprep.subr.bf16.mxu0 0
      %2144 = vmatpush1.bf16.msra.mxu0 0
      %2145 = vmatprep.subr.bf16.mxu0 0
      %2146 = vmatpush1.bf16.msra.mxu0 0
      %2147 = vmatprep.subr.bf16.mxu0 0
      %2148 = vmatpush1.bf16.msra.mxu0 0
      %2149 = vmatprep.subr.bf16.mxu0 0
      %2150 = vmatpush1.bf16.msra.mxu0 0
      %2151 = vmatprep.subr.bf16.mxu0 0
      %2152 = vmatpush1.bf16.msra.mxu0 0
      %2153 = vmatprep.subr.bf16.mxu0 0
      %2154 = vmatpush1.bf16.msra.mxu0 0
      %2155 = vmatprep.subr.bf16.mxu0 0
      %2156 = vmatpush1.bf16.msra.mxu0 0
      %2157 = vmatprep.subr.bf16.mxu0 0
      %2158 = vmatpush1.bf16.msra.mxu0 0
      %2159 = vmatprep.subr.bf16.mxu0 0
      %2160 = vmatpush1.bf16.msra.mxu0 0
      %2161 = vmatprep.mubr.bf16.mxu0 0
      %2162 = vmatmul.mubr.bf16.gmra.mrb[0].mxu0 %v2118
      %v2163 = vpop.f32.mrb[0].mxu0
      %v2164 = vadd.f32 0.0, %v2163
      %v2165 = vpop.f32.mrb[0].mxu0
      %v2166 = vpop.f32.mrb[0].mxu0
      %v2167 = vadd.f32 0.0, %v2166
      %v2168 = vpop.f32.mrb[0].mxu0
      %2169 = vmatprep.mubr.bf16.mxu0 0
      %2170 = vmatmul.mubr.bf16.gmra.mrb[0].mxu0 %v2121
      %v2171 = vpop.f32.mrb[0].mxu0
      %v2172 = vadd.f32 0.0, %v2171
      %v2173 = vpop.f32.mrb[0].mxu0
      %v2174 = vpop.f32.mrb[0].mxu0
      %v2175 = vadd.f32 0.0, %v2174
      %v2176 = vpop.f32.mrb[0].mxu0
      %2177 = vmatprep.mubr.bf16.mxu0 0
      %2178 = vmatmul.mubr.bf16.gmra.mrb[0].mxu0 %v2124
      %v2179 = vpop.f32.mrb[0].mxu0
      %v2180 = vadd.f32 0.0, %v2179
      %v2181 = vpop.f32.mrb[0].mxu0
      %v2182 = vpop.f32.mrb[0].mxu0
      %v2183 = vadd.f32 0.0, %v2182
      %v2184 = vpop.f32.mrb[0].mxu0
      %2185 = vmatprep.mubr.bf16.mxu0 0
      %2186 = vmatmul.mubr.bf16.gmra.mrb[0].mxu0 %v2127
      %v2187 = vpop.f32.mrb[0].mxu0
      %v2188 = vadd.f32 0.0, %v2187
      %v2189 = vpop.f32.mrb[0].mxu0
      %v2190 = vpop.f32.mrb[0].mxu0
      %v2191 = vadd.f32 0.0, %v2190
      %v2192 = vpop.f32.mrb[0].mxu0
      %2193 = vdwg.mxu0
      %v2194 = vpack.c.bf16 %v2167, %v2164
      %v2195 = vpack.c.bf16 %v2175, %v2172
      %v2196 = vpack.c.bf16 %v2183, %v2180
      %v2197 = vpack.c.bf16 %v2191, %v2188
      %2198 = vst [vmem:[#allocation4] sm:$0xff] %v2194
      %2199 = vst [vmem:[#allocation4 + $0x8] sm:$0xff] %v2195
      %2200 = vst [vmem:[#allocation4 + $0x10] sm:$0xff] %v2196
      %2201 = vst [vmem:[#allocation4 + $0x18] sm:$0xff] %v2197
      %2202 = vst [vmem:[#allocation3] sm:$0xff] -1e+30
      %2203 = vst [vmem:[#allocation3 + $0x8] sm:$0xff] -1e+30
      %2204 = vst [vmem:[#allocation3 + $0x10] sm:$0xff] -1e+30
      %2205 = vst [vmem:[#allocation3 + $0x18] sm:$0xff] -1e+30
      %2206 = vst [vmem:[#allocation3 + $0x20] sm:$0xff] -1e+30
      %2207 = vst [vmem:[#allocation3 + $0x28] sm:$0xff] -1e+30
      %2208 = vst [vmem:[#allocation3 + $0x30] sm:$0xff] -1e+30
      %2209 = vst [vmem:[#allocation3 + $0x38] sm:$0xff] -1e+30
      loop: start=0, step=1, limit=20
      $region112: #{refine_forward.1} parent=103 // loop_pre_header
        _
      $region113: #{refine_forward.1} parent=103 // loop_header
        %s2211 = sphi 0, %s2215
        %p2212 = scmp.ge.s32.totalorder %s2211, 20
      $region114: #{refine_forward.1} parent=103 // loop_header_branch
        %2214 = sbr.rel (%p2212) target = $region118
      $region115: #{refine_forward.1} parent=103 // loop_body
        %v2216 = vld [vmem:[#allocation2] sm:$0xff]
        %v2217 = vld [vmem:[#allocation2 + $0x8] sm:$0xff]
        %v2218 = vld [vmem:[#allocation2 + $0x10] sm:$0xff]
        %v2219 = vld [vmem:[#allocation2 + $0x18] sm:$0xff]
        %v2220 = vld [vmem:[#allocation2 + $0x20] sm:$0xff]
        %v2221 = vld [vmem:[#allocation2 + $0x28] sm:$0xff]
        %v2222 = vld [vmem:[#allocation2 + $0x30] sm:$0xff]
        %v2223 = vld [vmem:[#allocation2 + $0x38] sm:$0xff]
        %v2224 = vld [vmem:[#allocation2 + $0x40] sm:$0xff]
        %v2225 = vld [vmem:[#allocation2 + $0x48] sm:$0xff]
        %v2226 = vld [vmem:[#allocation2 + $0x50] sm:$0xff]
        %v2227 = vld [vmem:[#allocation2 + $0x58] sm:$0xff]
        %v2228 = vld [vmem:[#allocation2 + $0x60] sm:$0xff]
        %v2229 = vld [vmem:[#allocation2 + $0x68] sm:$0xff]
        %v2230 = vld [vmem:[#allocation2 + $0x70] sm:$0xff]
        %v2231 = vld [vmem:[#allocation2 + $0x78] sm:$0xff]
        %v2232 = vmax.f32 %v2216, %v2220
        %v2233 = vmax.f32 %v2217, %v2221
        %v2234 = vmax.f32 %v2218, %v2222
        %v2235 = vmax.f32 %v2219, %v2223
        %v2236 = vmax.f32 %v2232, %v2224
        %v2237 = vmax.f32 %v2233, %v2225
        %v2238 = vmax.f32 %v2234, %v2226
        %v2239 = vmax.f32 %v2235, %v2227
        %v2240 = vmax.f32 %v2236, %v2228
        %v2241 = vmax.f32 %v2237, %v2229
        %v2242 = vmax.f32 %v2238, %v2230
        %v2243 = vmax.f32 %v2239, %v2231
        %v2244 = vmax.f32 %v2240, %v2241
        %v2245 = vmax.f32 %v2242, %v2243
        %v2246 = vmax.f32 %v2244, %v2245
        %v2247 = vrot.slane %v2246, 4
        %v2248 = vmax.f32 %v2246, %v2247
        %v2249 = vrot.slane %v2248, 2
        %v2250 = vmax.f32 %v2248, %v2249
        %v2251 = vrot.slane %v2250, 1
        %v2252 = vmax.f32 %v2250, %v2251
        %vm2253 = vcmp.eq.f32.partialorder %v2216, %v2252
        %vm2254 = vcmp.eq.f32.partialorder %v2217, %v2252
        %vm2255 = vcmp.eq.f32.partialorder %v2218, %v2252
        %vm2256 = vcmp.eq.f32.partialorder %v2219, %v2252
        %vm2257 = vcmp.eq.f32.partialorder %v2220, %v2252
        %vm2258 = vcmp.eq.f32.partialorder %v2221, %v2252
        %vm2259 = vcmp.eq.f32.partialorder %v2222, %v2252
        %vm2260 = vcmp.eq.f32.partialorder %v2223, %v2252
        %vm2261 = vcmp.eq.f32.partialorder %v2224, %v2252
        %vm2262 = vcmp.eq.f32.partialorder %v2225, %v2252
        %vm2263 = vcmp.eq.f32.partialorder %v2226, %v2252
        %vm2264 = vcmp.eq.f32.partialorder %v2227, %v2252
        %vm2265 = vcmp.eq.f32.partialorder %v2228, %v2252
        %vm2266 = vcmp.eq.f32.partialorder %v2229, %v2252
        %vm2267 = vcmp.eq.f32.partialorder %v2230, %v2252
        %vm2268 = vcmp.eq.f32.partialorder %v2231, %v2252
        %v2269 = vlaneseq
        %v2270 = vshrl.u32 %v2269, 7
        %v2271 = vadd.s32 %v2270, 8
        %v2272 = vadd.s32 %v2270, 16
        %v2273 = vadd.s32 %v2270, 24
        %v2274 = vadd.s32 %v2270, 32
        %v2275 = vadd.s32 %v2270, 40
        %v2276 = vadd.s32 %v2270, 48
        %v2277 = vadd.s32 %v2270, 56
        %v2278 = vadd.s32 %v2270, 64
        %v2279 = vadd.s32 %v2270, 72
        %v2280 = vadd.s32 %v2270, 80
        %v2281 = vadd.s32 %v2270, 88
        %v2282 = vadd.s32 %v2270, 96
        %v2283 = vadd.s32 %v2270, 104
        %v2284 = vadd.s32 %v2270, 112
        %v2285 = vadd.s32 %v2270, 120
        %v2286 = vcvt.s32.f32 %v2270
        %v2287 = vcvt.s32.f32 %v2271
        %v2288 = vcvt.s32.f32 %v2272
        %v2289 = vcvt.s32.f32 %v2273
        %v2290 = vcvt.s32.f32 %v2274
        %v2291 = vcvt.s32.f32 %v2275
        %v2292 = vcvt.s32.f32 %v2276
        %v2293 = vcvt.s32.f32 %v2277
        %v2294 = vcvt.s32.f32 %v2278
        %v2295 = vcvt.s32.f32 %v2279
        %v2296 = vcvt.s32.f32 %v2280
        %v2297 = vcvt.s32.f32 %v2281
        %v2298 = vcvt.s32.f32 %v2282
        %v2299 = vcvt.s32.f32 %v2283
        %v2300 = vcvt.s32.f32 %v2284
        %v2301 = vcvt.s32.f32 %v2285
        %v2302 = vsel %vm2253, %v2286, 128.0
        %v2303 = vsel %vm2254, %v2287, 128.0
        %v2304 = vsel %vm2255, %v2288, 128.0
        %v2305 = vsel %vm2256, %v2289, 128.0
        %v2306 = vsel %vm2257, %v2290, 128.0
        %v2307 = vsel %vm2258, %v2291, 128.0
        %v2308 = vsel %vm2259, %v2292, 128.0
        %v2309 = vsel %vm2260, %v2293, 128.0
        %v2310 = vsel %vm2261, %v2294, 128.0
        %v2311 = vsel %vm2262, %v2295, 128.0
        %v2312 = vsel %vm2263, %v2296, 128.0
        %v2313 = vsel %vm2264, %v2297, 128.0
        %v2314 = vsel %vm2265, %v2298, 128.0
        %v2315 = vsel %vm2266, %v2299, 128.0
        %v2316 = vsel %vm2267, %v2300, 128.0
        %v2317 = vsel %vm2268, %v2301, 128.0
        %v2318 = vmin.f32 %v2302, %v2306
        %v2319 = vmin.f32 %v2303, %v2307
        %v2320 = vmin.f32 %v2304, %v2308
        %v2321 = vmin.f32 %v2305, %v2309
        %v2322 = vmin.f32 %v2318, %v2310
        %v2323 = vmin.f32 %v2319, %v2311
        %v2324 = vmin.f32 %v2320, %v2312
        %v2325 = vmin.f32 %v2321, %v2313
        %v2326 = vmin.f32 %v2322, %v2314
        %v2327 = vmin.f32 %v2323, %v2315
        %v2328 = vmin.f32 %v2324, %v2316
        %v2329 = vmin.f32 %v2325, %v2317
        %v2330 = vmin.f32 %v2326, %v2327
        %v2331 = vmin.f32 %v2328, %v2329
        %v2332 = vmin.f32 %v2330, %v2331
        %v2333 = vrot.slane %v2332, 4
        %v2334 = vmin.f32 %v2332, %v2333
        %v2335 = vrot.slane %v2334, 2
        %v2336 = vmin.f32 %v2334, %v2335
        %v2337 = vrot.slane %v2336, 1
        %v2338 = vmin.f32 %v2336, %v2337
        %vm2339 = vcmp.eq.f32.partialorder %v2286, %v2338
        %vm2340 = vcmp.eq.f32.partialorder %v2287, %v2338
        %vm2341 = vcmp.eq.f32.partialorder %v2288, %v2338
        %vm2342 = vcmp.eq.f32.partialorder %v2289, %v2338
        %vm2343 = vcmp.eq.f32.partialorder %v2290, %v2338
        %vm2344 = vcmp.eq.f32.partialorder %v2291, %v2338
        %vm2345 = vcmp.eq.f32.partialorder %v2292, %v2338
        %vm2346 = vcmp.eq.f32.partialorder %v2293, %v2338
        %vm2347 = vcmp.eq.f32.partialorder %v2294, %v2338
        %vm2348 = vcmp.eq.f32.partialorder %v2295, %v2338
        %vm2349 = vcmp.eq.f32.partialorder %v2296, %v2338
        %vm2350 = vcmp.eq.f32.partialorder %v2297, %v2338
        %vm2351 = vcmp.eq.f32.partialorder %v2298, %v2338
        %vm2352 = vcmp.eq.f32.partialorder %v2299, %v2338
        %vm2353 = vcmp.eq.f32.partialorder %v2300, %v2338
        %vm2354 = vcmp.eq.f32.partialorder %v2301, %v2338
        %v2355 = vsel %vm2339, 1.0, 0.0
        %v2356 = vsel %vm2340, 1.0, 0.0
        %v2357 = vsel %vm2341, 1.0, 0.0
        %v2358 = vsel %vm2342, 1.0, 0.0
        %v2359 = vsel %vm2343, 1.0, 0.0
        %v2360 = vsel %vm2344, 1.0, 0.0
        %v2361 = vsel %vm2345, 1.0, 0.0
        %v2362 = vsel %vm2346, 1.0, 0.0
        %v2363 = vsel %vm2347, 1.0, 0.0
        %v2364 = vsel %vm2348, 1.0, 0.0
        %v2365 = vsel %vm2349, 1.0, 0.0
        %v2366 = vsel %vm2350, 1.0, 0.0
        %v2367 = vsel %vm2351, 1.0, 0.0
        %v2368 = vsel %vm2352, 1.0, 0.0
        %v2369 = vsel %vm2353, 1.0, 0.0
        %v2370 = vsel %vm2354, 1.0, 0.0
        %v2371 = vpack.c.bf16 %v2356, %v2355
        %v2372 = vpack.c.bf16 %v2358, %v2357
        %v2373 = vpack.c.bf16 %v2360, %v2359
        %v2374 = vpack.c.bf16 %v2362, %v2361
        %v2375 = vpack.c.bf16 %v2364, %v2363
        %v2376 = vpack.c.bf16 %v2366, %v2365
        %v2377 = vpack.c.bf16 %v2368, %v2367
        %v2378 = vpack.c.bf16 %v2370, %v2369
        %v2379 = vld [vmem:[#allocation4] sm:$0xff]
        %v2380 = vld [vmem:[#allocation4 + $0x8] sm:$0xff]
        %v2381 = vld [vmem:[#allocation4 + $0x10] sm:$0xff]
        %v2382 = vld [vmem:[#allocation4 + $0x18] sm:$0xff]
        %2383 = vmatprep.subr.bf16.mxu0 0
        %2384 = vmatpush1.bf16.msra.mxu0 %v2371
        %2385 = vmatprep.subr.bf16.mxu0 0
        %2386 = vmatpush1.bf16.msra.mxu0 %v2372
        %2387 = vmatprep.subr.bf16.mxu0 0
        %2388 = vmatpush1.bf16.msra.mxu0 %v2373
        %2389 = vmatprep.subr.bf16.mxu0 0
        %2390 = vmatpush1.bf16.msra.mxu0 %v2374
        %2391 = vmatprep.subr.bf16.mxu0 0
        %2392 = vmatpush1.bf16.msra.mxu0 %v2375
        %2393 = vmatprep.subr.bf16.mxu0 0
        %2394 = vmatpush1.bf16.msra.mxu0 %v2376
        %2395 = vmatprep.subr.bf16.mxu0 0
        %2396 = vmatpush1.bf16.msra.mxu0 %v2377
        %2397 = vmatprep.subr.bf16.mxu0 0
        %2398 = vmatpush1.bf16.msra.mxu0 %v2378
        %2399 = vmatprep.subr.bf16.mxu0 0
        %2400 = vmatpush1.bf16.msra.mxu0 0
        %2401 = vmatprep.subr.bf16.mxu0 0
        %2402 = vmatpush1.bf16.msra.mxu0 0
        %2403 = vmatprep.subr.bf16.mxu0 0
        %2404 = vmatpush1.bf16.msra.mxu0 0
        %2405 = vmatprep.subr.bf16.mxu0 0
        %2406 = vmatpush1.bf16.msra.mxu0 0
        %2407 = vmatprep.subr.bf16.mxu0 0
        %2408 = vmatpush1.bf16.msra.mxu0 0
        %2409 = vmatprep.subr.bf16.mxu0 0
        %2410 = vmatpush1.bf16.msra.mxu0 0
        %2411 = vmatprep.subr.bf16.mxu0 0
        %2412 = vmatpush1.bf16.msra.mxu0 0
        %2413 = vmatprep.subr.bf16.mxu0 0
        %2414 = vmatpush1.bf16.msra.mxu0 0
        %2415 = vmatprep.mubr.bf16.mxu0 0
        %2416 = vmatmul.mubr.bf16.gmra.mrb[0].mxu0 %v2379
        %v2417 = vpop.f32.mrb[0].mxu0
        %v2418 = vadd.f32 0.0, %v2417
        %v2419 = vpop.f32.mrb[0].mxu0
        %v2420 = vpop.f32.mrb[0].mxu0
        %v2421 = vadd.f32 0.0, %v2420
        %v2422 = vpop.f32.mrb[0].mxu0
        %2423 = vmatprep.mubr.bf16.mxu0 0
        %2424 = vmatmul.mubr.bf16.gmra.mrb[0].mxu0 %v2380
        %v2425 = vpop.f32.mrb[0].mxu0
        %v2426 = vadd.f32 0.0, %v2425
        %v2427 = vpop.f32.mrb[0].mxu0
        %v2428 = vpop.f32.mrb[0].mxu0
        %v2429 = vadd.f32 0.0, %v2428
        %v2430 = vpop.f32.mrb[0].mxu0
        %2431 = vmatprep.mubr.bf16.mxu0 0
        %2432 = vmatmul.mubr.bf16.gmra.mrb[0].mxu0 %v2381
        %v2433 = vpop.f32.mrb[0].mxu0
        %v2434 = vadd.f32 0.0, %v2433
        %v2435 = vpop.f32.mrb[0].mxu0
        %v2436 = vpop.f32.mrb[0].mxu0
        %v2437 = vadd.f32 0.0, %v2436
        %v2438 = vpop.f32.mrb[0].mxu0
        %2439 = vmatprep.mubr.bf16.mxu0 0
        %2440 = vmatmul.mubr.bf16.gmra.mrb[0].mxu0 %v2382
        %v2441 = vpop.f32.mrb[0].mxu0
        %v2442 = vadd.f32 0.0, %v2441
        %v2443 = vpop.f32.mrb[0].mxu0
        %v2444 = vpop.f32.mrb[0].mxu0
        %v2445 = vadd.f32 0.0, %v2444
        %v2446 = vpop.f32.mrb[0].mxu0
        %2447 = vdwg.mxu0
        %v2448 = vld [vmem:[#allocation3] sm:$0xff]
        %v2449 = vld [vmem:[#allocation3 + $0x8] sm:$0xff]
        %v2450 = vld [vmem:[#allocation3 + $0x10] sm:$0xff]
        %v2451 = vld [vmem:[#allocation3 + $0x18] sm:$0xff]
        %v2452 = vld [vmem:[#allocation3 + $0x20] sm:$0xff]
        %v2453 = vld [vmem:[#allocation3 + $0x28] sm:$0xff]
        %v2454 = vld [vmem:[#allocation3 + $0x30] sm:$0xff]
        %v2455 = vld [vmem:[#allocation3 + $0x38] sm:$0xff]
        %v2456 = vmax.f32 %v2448, %v2418
        %v2457 = vmax.f32 %v2449, %v2421
        %v2458 = vmax.f32 %v2450, %v2426
        %v2459 = vmax.f32 %v2451, %v2429
        %v2460 = vmax.f32 %v2452, %v2434
        %v2461 = vmax.f32 %v2453, %v2437
        %v2462 = vmax.f32 %v2454, %v2442
        %v2463 = vmax.f32 %v2455, %v2445
        %2464 = vst [vmem:[#allocation3] sm:$0xff] %v2456
        %2465 = vst [vmem:[#allocation3 + $0x8] sm:$0xff] %v2457
        %2466 = vst [vmem:[#allocation3 + $0x10] sm:$0xff] %v2458
        %2467 = vst [vmem:[#allocation3 + $0x18] sm:$0xff] %v2459
        %2468 = vst [vmem:[#allocation3 + $0x20] sm:$0xff] %v2460
        %2469 = vst [vmem:[#allocation3 + $0x28] sm:$0xff] %v2461
        %2470 = vst [vmem:[#allocation3 + $0x30] sm:$0xff] %v2462
        %2471 = vst [vmem:[#allocation3 + $0x38] sm:$0xff] %v2463
        %v2472 = vsel %vm2339, -1e+30, %v2216
        %v2473 = vsel %vm2340, -1e+30, %v2217
        %v2474 = vsel %vm2341, -1e+30, %v2218
        %v2475 = vsel %vm2342, -1e+30, %v2219
        %v2476 = vsel %vm2343, -1e+30, %v2220
        %v2477 = vsel %vm2344, -1e+30, %v2221
        %v2478 = vsel %vm2345, -1e+30, %v2222
        %v2479 = vsel %vm2346, -1e+30, %v2223
        %v2480 = vsel %vm2347, -1e+30, %v2224
        %v2481 = vsel %vm2348, -1e+30, %v2225
        %v2482 = vsel %vm2349, -1e+30, %v2226
        %v2483 = vsel %vm2350, -1e+30, %v2227
        %v2484 = vsel %vm2351, -1e+30, %v2228
        %v2485 = vsel %vm2352, -1e+30, %v2229
        %v2486 = vsel %vm2353, -1e+30, %v2230
        %v2487 = vsel %vm2354, -1e+30, %v2231
        %2488 = vst [vmem:[#allocation2] sm:$0xff] %v2472
        %2489 = vst [vmem:[#allocation2 + $0x8] sm:$0xff] %v2473
        %2490 = vst [vmem:[#allocation2 + $0x10] sm:$0xff] %v2474
        %2491 = vst [vmem:[#allocation2 + $0x18] sm:$0xff] %v2475
        %2492 = vst [vmem:[#allocation2 + $0x20] sm:$0xff] %v2476
        %2493 = vst [vmem:[#allocation2 + $0x28] sm:$0xff] %v2477
        %2494 = vst [vmem:[#allocation2 + $0x30] sm:$0xff] %v2478
        %2495 = vst [vmem:[#allocation2 + $0x38] sm:$0xff] %v2479
        %2496 = vst [vmem:[#allocation2 + $0x40] sm:$0xff] %v2480
        %2497 = vst [vmem:[#allocation2 + $0x48] sm:$0xff] %v2481
        %2498 = vst [vmem:[#allocation2 + $0x50] sm:$0xff] %v2482
        %2499 = vst [vmem:[#allocation2 + $0x58] sm:$0xff] %v2483
        %2500 = vst [vmem:[#allocation2 + $0x60] sm:$0xff] %v2484
        %2501 = vst [vmem:[#allocation2 + $0x68] sm:$0xff] %v2485
        %2502 = vst [vmem:[#allocation2 + $0x70] sm:$0xff] %v2486
        %2503 = vst [vmem:[#allocation2 + $0x78] sm:$0xff] %v2487
      $region116: #{refine_forward.1} parent=103 // loop_footer
        %s2215 = sadd.s32 1, %s2211
      $region117: #{refine_forward.1} parent=103 // loop_footer_branch
        %2210 = sbr.rel target = $region113
      $region118: #{refine_forward.1} parent=103 // loop_exit
        _
      %v2504 = vld [vmem:[%s5] sm:$0xf]
      %v2505 = vld [vmem:[%s5 + $0x4] sm:$0xf]
      %v2506 = vld [vmem:[%s5 + $0x8] sm:$0xf]
      %v2507 = vld [vmem:[%s5 + $0xc] sm:$0xf]
      %v2508 = vld [vmem:[%s5 + $0x10] sm:$0xf]
      %v2509 = vld [vmem:[%s5 + $0x14] sm:$0xf]
      %v2510 = vld [vmem:[%s5 + $0x18] sm:$0xf]
      %v2511 = vld [vmem:[%s5 + $0x1c] sm:$0xf]
      %v2512 = vld [vmem:[#allocation5] sm:$0xff]
      %v2513 = vld [vmem:[#allocation5 + $0x8] sm:$0xff]
      %v2514 = vld [vmem:[#allocation5 + $0x10] sm:$0xff]
      %v2515 = vld [vmem:[#allocation5 + $0x18] sm:$0xff]
      %v2516 = vld [vmem:[%s6] sm:$0xff]
      %v2517 = vld [vmem:[%s6 + $0x8] sm:$0xff]
      %v2518 = vld [vmem:[%s6 + $0x10] sm:$0xff]
      %v2519 = vld [vmem:[%s6 + $0x18] sm:$0xff]
      %v2520 = vld [vmem:[%s6 + $0x20] sm:$0xff]
      %v2521 = vld [vmem:[%s6 + $0x28] sm:$0xff]
      %v2522 = vld [vmem:[%s6 + $0x30] sm:$0xff]
      %v2523 = vld [vmem:[%s6 + $0x38] sm:$0xff]
      %2525 = vset.pattern.permute.xlu0 0
      %2526 = vperm.xlu0 %2525, %v2516
      %v2527 = vpop.permute.xlu0 %2526
      %2530 = vset.pattern.permute.xlu0 0
      %2531 = vperm.xlu0 %2530, %v2517
      %v2532 = vpop.permute.xlu0 %2531
      %2535 = vset.pattern.permute.xlu0 0
      %2536 = vperm.xlu0 %2535, %v2518
      %v2537 = vpop.permute.xlu0 %2536
      %2540 = vset.pattern.permute.xlu0 0
      %2541 = vperm.xlu0 %2540, %v2519
      %v2542 = vpop.permute.xlu0 %2541
      %2545 = vset.pattern.permute.xlu0 0
      %2546 = vperm.xlu0 %2545, %v2520
      %v2547 = vpop.permute.xlu0 %2546
      %2550 = vset.pattern.permute.xlu0 0
      %2551 = vperm.xlu0 %2550, %v2521
      %v2552 = vpop.permute.xlu0 %2551
      %2555 = vset.pattern.permute.xlu0 0
      %2556 = vperm.xlu0 %2555, %v2522
      %v2557 = vpop.permute.xlu0 %2556
      %2560 = vset.pattern.permute.xlu0 0
      %2561 = vperm.xlu0 %2560, %v2523
      %v2562 = vpop.permute.xlu0 %2561
      %v2572 = vunpack.c.l.b16 %v2504
      %v2573 = vunpack.c.l.b16 %v2505
      %v2574 = vunpack.c.l.b16 %v2506
      %v2575 = vunpack.c.l.b16 %v2507
      %v2576 = vunpack.c.l.b16 %v2508
      %v2577 = vunpack.c.l.b16 %v2509
      %v2578 = vunpack.c.l.b16 %v2510
      %v2579 = vunpack.c.l.b16 %v2511
      %v2580 = vpack.c.b16 %v2573, %v2572
      %v2581 = vpack.c.b16 %v2575, %v2574
      %v2582 = vpack.c.b16 %v2577, %v2576
      %v2583 = vpack.c.b16 %v2579, %v2578
      %v2585 = vsel %vm1782, %v2580, 0
      %v2588 = vsel %vm1782, %v2581, 0
      %v2591 = vsel %vm1782, %v2582, 0
      %v2594 = vsel %vm1782, %v2583, 0
      %2596 = vmatprep.subr.bf16.mxu0 0
      %2597 = vmatpush1.bf16.msra.mxu0 %v2512
      %2598 = vmatprep.subr.bf16.mxu0 0
      %2599 = vmatpush1.bf16.msra.mxu0 %v2513
      %2600 = vmatprep.subr.bf16.mxu0 0
      %2601 = vmatpush1.bf16.msra.mxu0 %v2514
      %2602 = vmatprep.subr.bf16.mxu0 0
      %2603 = vmatpush1.bf16.msra.mxu0 %v2515
      %2604 = vmatprep.subr.bf16.mxu0 0
      %2605 = vmatpush1.bf16.msra.mxu0 0
      %2606 = vmatprep.subr.bf16.mxu0 0
      %2607 = vmatpush1.bf16.msra.mxu0 0
      %2608 = vmatprep.subr.bf16.mxu0 0
      %2609 = vmatpush1.bf16.msra.mxu0 0
      %2610 = vmatprep.subr.bf16.mxu0 0
      %2611 = vmatpush1.bf16.msra.mxu0 0
      %2612 = vmatprep.subr.bf16.mxu0 0
      %2613 = vmatpush1.bf16.msra.mxu0 0
      %2614 = vmatprep.subr.bf16.mxu0 0
      %2615 = vmatpush1.bf16.msra.mxu0 0
      %2616 = vmatprep.subr.bf16.mxu0 0
      %2617 = vmatpush1.bf16.msra.mxu0 0
      %2618 = vmatprep.subr.bf16.mxu0 0
      %2619 = vmatpush1.bf16.msra.mxu0 0
      %2620 = vmatprep.subr.bf16.mxu0 0
      %2621 = vmatpush1.bf16.msra.mxu0 0
      %2622 = vmatprep.subr.bf16.mxu0 0
      %2623 = vmatpush1.bf16.msra.mxu0 0
      %2624 = vmatprep.subr.bf16.mxu0 0
      %2625 = vmatpush1.bf16.msra.mxu0 0
      %2626 = vmatprep.subr.bf16.mxu0 0
      %2627 = vmatpush1.bf16.msra.mxu0 0
      %2628 = vmatprep.mubr.bf16.mxu0 0
      %2629 = vmatmul.mubr.bf16.gmra.mrb[0].mxu0 %v2585
      %v2630 = vpop.f32.mrb[0].mxu0
      %v2631 = vadd.f32 %v2527, %v2630
      %v2632 = vpop.f32.mrb[0].mxu0
      %v2633 = vpop.f32.mrb[0].mxu0
      %v2634 = vadd.f32 %v2532, %v2633
      %v2635 = vpop.f32.mrb[0].mxu0
      %2636 = vmatprep.mubr.bf16.mxu0 0
      %2637 = vmatmul.mubr.bf16.gmra.mrb[0].mxu0 %v2588
      %v2638 = vpop.f32.mrb[0].mxu0
      %v2639 = vadd.f32 %v2537, %v2638
      %v2640 = vpop.f32.mrb[0].mxu0
      %v2641 = vpop.f32.mrb[0].mxu0
      %v2642 = vadd.f32 %v2542, %v2641
      %v2643 = vpop.f32.mrb[0].mxu0
      %2644 = vmatprep.mubr.bf16.mxu0 0
      %2645 = vmatmul.mubr.bf16.gmra.mrb[0].mxu0 %v2591
      %v2646 = vpop.f32.mrb[0].mxu0
      %v2647 = vadd.f32 %v2547, %v2646
      %v2648 = vpop.f32.mrb[0].mxu0
      %v2649 = vpop.f32.mrb[0].mxu0
      %v2650 = vadd.f32 %v2552, %v2649
      %v2651 = vpop.f32.mrb[0].mxu0
      %2652 = vmatprep.mubr.bf16.mxu0 0
      %2653 = vmatmul.mubr.bf16.gmra.mrb[0].mxu0 %v2594
      %v2654 = vpop.f32.mrb[0].mxu0
      %v2655 = vadd.f32 %v2557, %v2654
      %v2656 = vpop.f32.mrb[0].mxu0
      %v2657 = vpop.f32.mrb[0].mxu0
      %v2658 = vadd.f32 %v2562, %v2657
      %v2659 = vpop.f32.mrb[0].mxu0
      %2660 = vdwg.mxu0
      %v2661 = vld [vmem:[#allocation3] sm:$0xff]
      %v2662 = vld [vmem:[#allocation3 + $0x8] sm:$0xff]
      %v2663 = vld [vmem:[#allocation3 + $0x10] sm:$0xff]
      %v2664 = vld [vmem:[#allocation3 + $0x18] sm:$0xff]
      %v2665 = vld [vmem:[#allocation3 + $0x20] sm:$0xff]
      %v2666 = vld [vmem:[#allocation3 + $0x28] sm:$0xff]
      %v2667 = vld [vmem:[#allocation3 + $0x30] sm:$0xff]
      %v2668 = vld [vmem:[#allocation3 + $0x38] sm:$0xff]
      %v2669 = vadd.f32 %v2661, %v2631
      %v2670 = vadd.f32 %v2662, %v2634
      %v2671 = vadd.f32 %v2663, %v2639
      %v2672 = vadd.f32 %v2664, %v2642
      %v2673 = vadd.f32 %v2665, %v2647
      %v2674 = vadd.f32 %v2666, %v2650
      %v2675 = vadd.f32 %v2667, %v2655
      %v2676 = vadd.f32 %v2668, %v2658
      %v2677 = vmul.f32 %v2669, 0.2
      %v2678 = vmul.f32 %v2670, 0.2
      %v2679 = vmul.f32 %v2671, 0.2
      %v2680 = vmul.f32 %v2672, 0.2
      %v2681 = vmul.f32 %v2673, 0.2
      %v2682 = vmul.f32 %v2674, 0.2
      %v2683 = vmul.f32 %v2675, 0.2
      %v2684 = vmul.f32 %v2676, 0.2
      %v2685 = vmax.f32 %v2669, %v2677
      %v2686 = vmax.f32 %v2670, %v2678
      %v2687 = vmax.f32 %v2671, %v2679
      %v2688 = vmax.f32 %v2672, %v2680
      %v2689 = vmax.f32 %v2673, %v2681
      %v2690 = vmax.f32 %v2674, %v2682
      %v2691 = vmax.f32 %v2675, %v2683
      %v2692 = vmax.f32 %v2676, %v2684
      %v2693 = vpack.c.bf16 %v2686, %v2685
      %v2694 = vpack.c.bf16 %v2688, %v2687
      %v2695 = vpack.c.bf16 %v2690, %v2689
      %v2696 = vpack.c.bf16 %v2692, %v2691
      %2697 = vst [vmem:[#allocation5 + $0x20] sm:$0xff] %v2693
      %2698 = vst [vmem:[#allocation5 + $0x28] sm:$0xff] %v2694
      %2699 = vst [vmem:[#allocation5 + $0x30] sm:$0xff] %v2695
      %2700 = vst [vmem:[#allocation5 + $0x38] sm:$0xff] %v2696
      %2701 = vxpose.xlu0.c.b16.start [1/8] %v2693, 128
      %2702 = vxpose.xlu0.c.b16.cont [2/8] %v2694, 128
      %2703 = vxpose.xlu0.c.b16.cont [3/8] %v2695, 128
      %2704 = vxpose.xlu0.c.b16.cont [4/8] %v2696, 128
      %2705 = vxpose.xlu0.c.b16.cont [5/8] 0, 128
      %2706 = vxpose.xlu0.c.b16.cont [6/8] 0, 128
      %2707 = vxpose.xlu0.c.b16.cont [7/8] 0, 128
      %2708 = vxpose.xlu0.c.b16.end [8/8] 0, 128
      %v2709 = vpop.trf.xlu0
      %v2710 = vpop.trf.xlu0
      %v2711 = vpop.trf.xlu0
      %v2712 = vpop.trf.xlu0
      %v2713 = vpop.trf.xlu0
      %v2714 = vpop.trf.xlu0
      %v2715 = vpop.trf.xlu0
      %v2716 = vpop.trf.xlu0
      %v2718 = vsel %vm1782, %v2709, 0
      %v2721 = vsel %vm1782, %v2710, 0
      %v2724 = vsel %vm1782, %v2711, 0
      %v2727 = vsel %vm1782, %v2712, 0
      %v2730 = vsel %vm1782, %v2713, 0
      %v2733 = vsel %vm1782, %v2714, 0
      %v2736 = vsel %vm1782, %v2715, 0
      %v2739 = vsel %vm1782, %v2716, 0
      %2741 = vmatprep.subr.bf16.mxu0 0
      %2742 = vmatpush1.bf16.msra.mxu0 %v2693
      %2743 = vmatprep.subr.bf16.mxu0 0
      %2744 = vmatpush1.bf16.msra.mxu0 %v2694
      %2745 = vmatprep.subr.bf16.mxu0 0
      %2746 = vmatpush1.bf16.msra.mxu0 %v2695
      %2747 = vmatprep.subr.bf16.mxu0 0
      %2748 = vmatpush1.bf16.msra.mxu0 %v2696
      %2749 = vmatprep.subr.bf16.mxu0 0
      %2750 = vmatpush1.bf16.msra.mxu0 0
      %2751 = vmatprep.subr.bf16.mxu0 0
      %2752 = vmatpush1.bf16.msra.mxu0 0
      %2753 = vmatprep.subr.bf16.mxu0 0
      %2754 = vmatpush1.bf16.msra.mxu0 0
      %2755 = vmatprep.subr.bf16.mxu0 0
      %2756 = vmatpush1.bf16.msra.mxu0 0
      %2757 = vmatprep.subr.bf16.mxu0 0
      %2758 = vmatpush1.bf16.msra.mxu0 0
      %2759 = vmatprep.subr.bf16.mxu0 0
      %2760 = vmatpush1.bf16.msra.mxu0 0
      %2761 = vmatprep.subr.bf16.mxu0 0
      %2762 = vmatpush1.bf16.msra.mxu0 0
      %2763 = vmatprep.subr.bf16.mxu0 0
      %2764 = vmatpush1.bf16.msra.mxu0 0
      %2765 = vmatprep.subr.bf16.mxu0 0
      %2766 = vmatpush1.bf16.msra.mxu0 0
      %2767 = vmatprep.subr.bf16.mxu0 0
      %2768 = vmatpush1.bf16.msra.mxu0 0
      %2769 = vmatprep.subr.bf16.mxu0 0
      %2770 = vmatpush1.bf16.msra.mxu0 0
      %2771 = vmatprep.subr.bf16.mxu0 0
      %2772 = vmatpush1.bf16.msra.mxu0 0
      %2773 = vmatprep.mubr.bf16.mxu0 0
      %2774 = vmatmul.mubr.bf16.gmra.mrb[0].mxu0 %v2718
      %v2775 = vpop.f32.mrb[0].mxu0
      %v2776 = vadd.f32 0.0, %v2775
      %v2777 = vpop.f32.mrb[0].mxu0
      %v2778 = vpop.f32.mrb[0].mxu0
      %v2779 = vadd.f32 0.0, %v2778
      %v2780 = vpop.f32.mrb[0].mxu0
      %2781 = vmatprep.mubr.bf16.mxu0 0
      %2782 = vmatmul.mubr.bf16.gmra.mrb[0].mxu0 %v2721
      %v2783 = vpop.f32.mrb[0].mxu0
      %v2784 = vadd.f32 0.0, %v2783
      %v2785 = vpop.f32.mrb[0].mxu0
      %v2786 = vpop.f32.mrb[0].mxu0
      %v2787 = vadd.f32 0.0, %v2786
      %v2788 = vpop.f32.mrb[0].mxu0
      %2789 = vmatprep.mubr.bf16.mxu0 0
      %2790 = vmatmul.mubr.bf16.gmra.mrb[0].mxu0 %v2724
      %v2791 = vpop.f32.mrb[0].mxu0
      %v2792 = vadd.f32 0.0, %v2791
      %v2793 = vpop.f32.mrb[0].mxu0
      %v2794 = vpop.f32.mrb[0].mxu0
      %v2795 = vadd.f32 0.0, %v2794
      %v2796 = vpop.f32.mrb[0].mxu0
      %2797 = vmatprep.mubr.bf16.mxu0 0
      %2798 = vmatmul.mubr.bf16.gmra.mrb[0].mxu0 %v2727
      %v2799 = vpop.f32.mrb[0].mxu0
      %v2800 = vadd.f32 0.0, %v2799
      %v2801 = vpop.f32.mrb[0].mxu0
      %v2802 = vpop.f32.mrb[0].mxu0
      %v2803 = vadd.f32 0.0, %v2802
      %v2804 = vpop.f32.mrb[0].mxu0
      %2805 = vmatprep.mubr.bf16.mxu0 0
      %2806 = vmatmul.mubr.bf16.gmra.mrb[0].mxu0 %v2730
      %v2807 = vpop.f32.mrb[0].mxu0
      %v2808 = vadd.f32 0.0, %v2807
      %v2809 = vpop.f32.mrb[0].mxu0
      %v2810 = vpop.f32.mrb[0].mxu0
      %v2811 = vadd.f32 0.0, %v2810
      %v2812 = vpop.f32.mrb[0].mxu0
      %2813 = vmatprep.mubr.bf16.mxu0 0
      %2814 = vmatmul.mubr.bf16.gmra.mrb[0].mxu0 %v2733
      %v2815 = vpop.f32.mrb[0].mxu0
      %v2816 = vadd.f32 0.0, %v2815
      %v2817 = vpop.f32.mrb[0].mxu0
      %v2818 = vpop.f32.mrb[0].mxu0
      %v2819 = vadd.f32 0.0, %v2818
      %v2820 = vpop.f32.mrb[0].mxu0
      %2821 = vmatprep.mubr.bf16.mxu0 0
      %2822 = vmatmul.mubr.bf16.gmra.mrb[0].mxu0 %v2736
      %v2823 = vpop.f32.mrb[0].mxu0
      %v2824 = vadd.f32 0.0, %v2823
      %v2825 = vpop.f32.mrb[0].mxu0
      %v2826 = vpop.f32.mrb[0].mxu0
      %v2827 = vadd.f32 0.0, %v2826
      %v2828 = vpop.f32.mrb[0].mxu0
      %2829 = vmatprep.mubr.bf16.mxu0 0
      %2830 = vmatmul.mubr.bf16.gmra.mrb[0].mxu0 %v2739
      %v2831 = vpop.f32.mrb[0].mxu0
      %v2832 = vadd.f32 0.0, %v2831
      %v2833 = vpop.f32.mrb[0].mxu0
      %v2834 = vpop.f32.mrb[0].mxu0
      %v2835 = vadd.f32 0.0, %v2834
      %v2836 = vpop.f32.mrb[0].mxu0
      %2837 = vdwg.mxu0
      %v2838 = vmul.f32 %v2685, %v2685
      %v2839 = vmul.f32 %v2686, %v2686
      %v2840 = vmul.f32 %v2687, %v2687
      %v2841 = vmul.f32 %v2688, %v2688
      %v2842 = vmul.f32 %v2689, %v2689
      %v2843 = vmul.f32 %v2690, %v2690
      %v2844 = vmul.f32 %v2691, %v2691
      %v2845 = vmul.f32 %v2692, %v2692
      %v2846 = vadd.f32 %v2838, %v2839
      %v2847 = vadd.f32 %v2846, %v2840
      %v2848 = vadd.f32 %v2847, %v2841
      %v2849 = vadd.f32 %v2848, %v2842
      %v2850 = vadd.f32 %v2849, %v2843
      %v2851 = vadd.f32 %v2850, %v2844
      %v2852 = vadd.f32 %v2851, %v2845
      %v2853 = vrot.slane %v2852, 4
      %v2854 = vadd.f32 %v2852, %v2853
      %v2855 = vrot.slane %v2854, 2
      %v2856 = vadd.f32 %v2854, %v2855
      %v2857 = vrot.slane %v2856, 1
      %v2858 = vadd.f32 %v2856, %v2857
      %v2859 = vmul.f32 %v2776, 2.0
      %v2860 = vmul.f32 %v2779, 2.0
      %v2861 = vmul.f32 %v2784, 2.0
      %v2862 = vmul.f32 %v2787, 2.0
      %v2863 = vmul.f32 %v2792, 2.0
      %v2864 = vmul.f32 %v2795, 2.0
      %v2865 = vmul.f32 %v2800, 2.0
      %v2866 = vmul.f32 %v2803, 2.0
      %v2867 = vmul.f32 %v2808, 2.0
      %v2868 = vmul.f32 %v2811, 2.0
      %v2869 = vmul.f32 %v2816, 2.0
      %v2870 = vmul.f32 %v2819, 2.0
      %v2871 = vmul.f32 %v2824, 2.0
      %v2872 = vmul.f32 %v2827, 2.0
      %v2873 = vmul.f32 %v2832, 2.0
      %v2874 = vmul.f32 %v2835, 2.0
      %2875 = vxpose.xlu0.b32.start [1/16] %v2858, 128
      %2876 = vxpose.xlu0.b32.cont [2/16] 0.0, 128
      %2877 = vxpose.xlu0.b32.cont [3/16] 0.0, 128
      %2878 = vxpose.xlu0.b32.cont [4/16] 0.0, 128
      %2879 = vxpose.xlu0.b32.cont [5/16] 0.0, 128
      %2880 = vxpose.xlu0.b32.cont [6/16] 0.0, 128
      %2881 = vxpose.xlu0.b32.cont [7/16] 0.0, 128
      %2882 = vxpose.xlu0.b32.cont [8/16] 0.0, 128
      %2883 = vxpose.xlu0.b32.cont [9/16] 0.0, 128
      %2884 = vxpose.xlu0.b32.cont [10/16] 0.0, 128
      %2885 = vxpose.xlu0.b32.cont [11/16] 0.0, 128
      %2886 = vxpose.xlu0.b32.cont [12/16] 0.0, 128
      %2887 = vxpose.xlu0.b32.cont [13/16] 0.0, 128
      %2888 = vxpose.xlu0.b32.cont [14/16] 0.0, 128
      %2889 = vxpose.xlu0.b32.cont [15/16] 0.0, 128
      %2890 = vxpose.xlu0.b32.end [16/16] 0.0, 128
      %v2891 = vpop.trf.xlu0
      %v2892 = vpop.trf.xlu0
      %v2893 = vpop.trf.xlu0
      %v2894 = vpop.trf.xlu0
      %v2895 = vpop.trf.xlu0
      %v2896 = vpop.trf.xlu0
      %v2897 = vpop.trf.xlu0
      %v2898 = vpop.trf.xlu0
      %v2899 = vpop.trf.xlu0
      %v2900 = vpop.trf.xlu0
      %v2901 = vpop.trf.xlu0
      %v2902 = vpop.trf.xlu0
      %v2903 = vpop.trf.xlu0
      %v2904 = vpop.trf.xlu0
      %v2905 = vpop.trf.xlu0
      %v2906 = vpop.trf.xlu0
      %2908 = vset.pattern.permute.xlu0 0
      %2909 = vperm.xlu0 %2908, %v2891
      %v2910 = vpop.permute.xlu0 %2909
      %2913 = vset.pattern.permute.xlu0 0
      %2914 = vperm.xlu0 %2913, %v2892
      %v2915 = vpop.permute.xlu0 %2914
      %2918 = vset.pattern.permute.xlu0 0
      %2919 = vperm.xlu0 %2918, %v2893
      %v2920 = vpop.permute.xlu0 %2919
      %2923 = vset.pattern.permute.xlu0 0
      %2924 = vperm.xlu0 %2923, %v2894
      %v2925 = vpop.permute.xlu0 %2924
      %2928 = vset.pattern.permute.xlu0 0
      %2929 = vperm.xlu0 %2928, %v2895
      %v2930 = vpop.permute.xlu0 %2929
      %2933 = vset.pattern.permute.xlu0 0
      %2934 = vperm.xlu0 %2933, %v2896
      %v2935 = vpop.permute.xlu0 %2934
      %2938 = vset.pattern.permute.xlu0 0
      %2939 = vperm.xlu0 %2938, %v2897
      %v2940 = vpop.permute.xlu0 %2939
      %2943 = vset.pattern.permute.xlu0 0
      %2944 = vperm.xlu0 %2943, %v2898
      %v2945 = vpop.permute.xlu0 %2944
      %2948 = vset.pattern.permute.xlu0 0
      %2949 = vperm.xlu0 %2948, %v2899
      %v2950 = vpop.permute.xlu0 %2949
      %2953 = vset.pattern.permute.xlu0 0
      %2954 = vperm.xlu0 %2953, %v2900
      %v2955 = vpop.permute.xlu0 %2954
      %2958 = vset.pattern.permute.xlu0 0
      %2959 = vperm.xlu0 %2958, %v2901
      %v2960 = vpop.permute.xlu0 %2959
      %2963 = vset.pattern.permute.xlu0 0
      %2964 = vperm.xlu0 %2963, %v2902
      %v2965 = vpop.permute.xlu0 %2964
      %2968 = vset.pattern.permute.xlu0 0
      %2969 = vperm.xlu0 %2968, %v2903
      %v2970 = vpop.permute.xlu0 %2969
      %2973 = vset.pattern.permute.xlu0 0
      %2974 = vperm.xlu0 %2973, %v2904
      %v2975 = vpop.permute.xlu0 %2974
      %2978 = vset.pattern.permute.xlu0 0
      %2979 = vperm.xlu0 %2978, %v2905
      %v2980 = vpop.permute.xlu0 %2979
      %2983 = vset.pattern.permute.xlu0 0
      %2984 = vperm.xlu0 %2983, %v2906
      %v2985 = vpop.permute.xlu0 %2984
      %v2987 = vsub.f32 %v2859, %v2910
      %v2988 = vsub.f32 %v2860, %v2915
      %v2989 = vsub.f32 %v2861, %v2920
      %v2990 = vsub.f32 %v2862, %v2925
      %v2991 = vsub.f32 %v2863, %v2930
      %v2992 = vsub.f32 %v2864, %v2935
      %v2993 = vsub.f32 %v2865, %v2940
      %v2994 = vsub.f32 %v2866, %v2945
      %v2995 = vsub.f32 %v2867, %v2950
      %v2996 = vsub.f32 %v2868, %v2955
      %v2997 = vsub.f32 %v2869, %v2960
      %v2998 = vsub.f32 %v2870, %v2965
      %v2999 = vsub.f32 %v2871, %v2970
      %v3000 = vsub.f32 %v2872, %v2975
      %v3001 = vsub.f32 %v2873, %v2980
      %v3002 = vsub.f32 %v2874, %v2985
      %3003 = vst [vmem:[#allocation2] sm:$0xff] %v2987
      %3004 = vst [vmem:[#allocation2 + $0x8] sm:$0xff] %v2988
      %3005 = vst [vmem:[#allocation2 + $0x10] sm:$0xff] %v2989
      %3006 = vst [vmem:[#allocation2 + $0x18] sm:$0xff] %v2990
      %3007 = vst [vmem:[#allocation2 + $0x20] sm:$0xff] %v2991
      %3008 = vst [vmem:[#allocation2 + $0x28] sm:$0xff] %v2992
      %3009 = vst [vmem:[#allocation2 + $0x30] sm:$0xff] %v2993
      %3010 = vst [vmem:[#allocation2 + $0x38] sm:$0xff] %v2994
      %3011 = vst [vmem:[#allocation2 + $0x40] sm:$0xff] %v2995
      %3012 = vst [vmem:[#allocation2 + $0x48] sm:$0xff] %v2996
      %3013 = vst [vmem:[#allocation2 + $0x50] sm:$0xff] %v2997
      %3014 = vst [vmem:[#allocation2 + $0x58] sm:$0xff] %v2998
      %3015 = vst [vmem:[#allocation2 + $0x60] sm:$0xff] %v2999
      %3016 = vst [vmem:[#allocation2 + $0x68] sm:$0xff] %v3000
      %3017 = vst [vmem:[#allocation2 + $0x70] sm:$0xff] %v3001
      %3018 = vst [vmem:[#allocation2 + $0x78] sm:$0xff] %v3002
      %v3019 = vld [vmem:[#allocation5 + $0x20] sm:$0xff]
      %v3020 = vld [vmem:[#allocation5 + $0x28] sm:$0xff]
      %v3021 = vld [vmem:[#allocation5 + $0x30] sm:$0xff]
      %v3022 = vld [vmem:[#allocation5 + $0x38] sm:$0xff]
      %v3023 = vld [vmem:[%s7] sm:$0xf]
      %v3024 = vld [vmem:[%s7 + $0x4] sm:$0xf]
      %v3025 = vld [vmem:[%s7 + $0x8] sm:$0xf]
      %v3026 = vld [vmem:[%s7 + $0xc] sm:$0xf]
      %v3027 = vld [vmem:[%s7 + $0x10] sm:$0xf]
      %v3028 = vld [vmem:[%s7 + $0x14] sm:$0xf]
      %v3029 = vld [vmem:[%s7 + $0x18] sm:$0xf]
      %v3030 = vld [vmem:[%s7 + $0x1c] sm:$0xf]
      %v3031 = vld [vmem:[%s7 + $0x20] sm:$0xf]
      %v3032 = vld [vmem:[%s7 + $0x24] sm:$0xf]
      %v3033 = vld [vmem:[%s7 + $0x28] sm:$0xf]
      %v3034 = vld [vmem:[%s7 + $0x2c] sm:$0xf]
      %v3035 = vld [vmem:[%s7 + $0x30] sm:$0xf]
      %v3036 = vld [vmem:[%s7 + $0x34] sm:$0xf]
      %v3037 = vld [vmem:[%s7 + $0x38] sm:$0xf]
      %v3038 = vld [vmem:[%s7 + $0x3c] sm:$0xf]
      %v3055 = vunpack.c.l.b16 %v3023
      %v3056 = vunpack.c.l.b16 %v3024
      %v3057 = vunpack.c.l.b16 %v3025
      %v3058 = vunpack.c.l.b16 %v3026
      %v3059 = vunpack.c.l.b16 %v3027
      %v3060 = vunpack.c.l.b16 %v3028
      %v3061 = vunpack.c.l.b16 %v3029
      %v3062 = vunpack.c.l.b16 %v3030
      %v3063 = vunpack.c.l.b16 %v3031
      %v3064 = vunpack.c.l.b16 %v3032
      %v3065 = vunpack.c.l.b16 %v3033
      %v3066 = vunpack.c.l.b16 %v3034
      %v3067 = vunpack.c.l.b16 %v3035
      %v3068 = vunpack.c.l.b16 %v3036
      %v3069 = vunpack.c.l.b16 %v3037
      %v3070 = vunpack.c.l.b16 %v3038
      %v3071 = vpack.c.b16 %v3056, %v3055
      %v3072 = vpack.c.b16 %v3058, %v3057
      %v3073 = vpack.c.b16 %v3060, %v3059
      %v3074 = vpack.c.b16 %v3062, %v3061
      %v3075 = vpack.c.b16 %v3064, %v3063
      %v3076 = vpack.c.b16 %v3066, %v3065
      %v3077 = vpack.c.b16 %v3068, %v3067
      %v3078 = vpack.c.b16 %v3070, %v3069
      %v3080 = vsel %vm1782, %v3071, 0
      %v3083 = vsel %vm1782, %v3072, 0
      %v3086 = vsel %vm1782, %v3073, 0
      %v3089 = vsel %vm1782, %v3074, 0
      %v3092 = vsel %vm1782, %v3075, 0
      %v3095 = vsel %vm1782, %v3076, 0
      %v3098 = vsel %vm1782, %v3077, 0
      %v3101 = vsel %vm1782, %v3078, 0
      %3103 = vmatprep.subr.bf16.mxu0 0
      %3104 = vmatpush1.bf16.msra.mxu0 %v3019
      %3105 = vmatprep.subr.bf16.mxu0 0
      %3106 = vmatpush1.bf16.msra.mxu0 %v3020
      %3107 = vmatprep.subr.bf16.mxu0 0
      %3108 = vmatpush1.bf16.msra.mxu0 %v3021
      %3109 = vmatprep.subr.bf16.mxu0 0
      %3110 = vmatpush1.bf16.msra.mxu0 %v3022
      %3111 = vmatprep.subr.bf16.mxu0 0
      %3112 = vmatpush1.bf16.msra.mxu0 0
      %3113 = vmatprep.subr.bf16.mxu0 0
      %3114 = vmatpush1.bf16.msra.mxu0 0
      %3115 = vmatprep.subr.bf16.mxu0 0
      %3116 = vmatpush1.bf16.msra.mxu0 0
      %3117 = vmatprep.subr.bf16.mxu0 0
      %3118 = vmatpush1.bf16.msra.mxu0 0
      %3119 = vmatprep.subr.bf16.mxu0 0
      %3120 = vmatpush1.bf16.msra.mxu0 0
      %3121 = vmatprep.subr.bf16.mxu0 0
      %3122 = vmatpush1.bf16.msra.mxu0 0
      %3123 = vmatprep.subr.bf16.mxu0 0
      %3124 = vmatpush1.bf16.msra.mxu0 0
      %3125 = vmatprep.subr.bf16.mxu0 0
      %3126 = vmatpush1.bf16.msra.mxu0 0
      %3127 = vmatprep.subr.bf16.mxu0 0
      %3128 = vmatpush1.bf16.msra.mxu0 0
      %3129 = vmatprep.subr.bf16.mxu0 0
      %3130 = vmatpush1.bf16.msra.mxu0 0
      %3131 = vmatprep.subr.bf16.mxu0 0
      %3132 = vmatpush1.bf16.msra.mxu0 0
      %3133 = vmatprep.subr.bf16.mxu0 0
      %3134 = vmatpush1.bf16.msra.mxu0 0
      %3135 = vmatprep.mubr.bf16.mxu0 0
      %3136 = vmatmul.mubr.bf16.gmra.mrb[0].mxu0 %v3080
      %v3137 = vpop.f32.mrb[0].mxu0
      %v3138 = vadd.f32 0.0, %v3137
      %v3139 = vpop.f32.mrb[0].mxu0
      %v3140 = vpop.f32.mrb[0].mxu0
      %v3141 = vadd.f32 0.0, %v3140
      %v3142 = vpop.f32.mrb[0].mxu0
      %3143 = vmatprep.mubr.bf16.mxu0 0
      %3144 = vmatmul.mubr.bf16.gmra.mrb[0].mxu0 %v3083
      %v3145 = vpop.f32.mrb[0].mxu0
      %v3146 = vadd.f32 0.0, %v3145
      %v3147 = vpop.f32.mrb[0].mxu0
      %v3148 = vpop.f32.mrb[0].mxu0
      %v3149 = vadd.f32 0.0, %v3148
      %v3150 = vpop.f32.mrb[0].mxu0
      %3151 = vmatprep.mubr.bf16.mxu0 0
      %3152 = vmatmul.mubr.bf16.gmra.mrb[0].mxu0 %v3086
      %v3153 = vpop.f32.mrb[0].mxu0
      %v3154 = vadd.f32 0.0, %v3153
      %v3155 = vpop.f32.mrb[0].mxu0
      %v3156 = vpop.f32.mrb[0].mxu0
      %v3157 = vadd.f32 0.0, %v3156
      %v3158 = vpop.f32.mrb[0].mxu0
      %3159 = vmatprep.mubr.bf16.mxu0 0
      %3160 = vmatmul.mubr.bf16.gmra.mrb[0].mxu0 %v3089
      %v3161 = vpop.f32.mrb[0].mxu0
      %v3162 = vadd.f32 0.0, %v3161
      %v3163 = vpop.f32.mrb[0].mxu0
      %v3164 = vpop.f32.mrb[0].mxu0
      %v3165 = vadd.f32 0.0, %v3164
      %v3166 = vpop.f32.mrb[0].mxu0
      %3167 = vmatprep.mubr.bf16.mxu0 0
      %3168 = vmatmul.mubr.bf16.gmra.mrb[0].mxu0 %v3092
      %v3169 = vpop.f32.mrb[0].mxu0
      %v3170 = vadd.f32 0.0, %v3169
      %v3171 = vpop.f32.mrb[0].mxu0
      %v3172 = vpop.f32.mrb[0].mxu0
      %v3173 = vadd.f32 0.0, %v3172
      %v3174 = vpop.f32.mrb[0].mxu0
      %3175 = vmatprep.mubr.bf16.mxu0 0
      %3176 = vmatmul.mubr.bf16.gmra.mrb[0].mxu0 %v3095
      %v3177 = vpop.f32.mrb[0].mxu0
      %v3178 = vadd.f32 0.0, %v3177
      %v3179 = vpop.f32.mrb[0].mxu0
      %v3180 = vpop.f32.mrb[0].mxu0
      %v3181 = vadd.f32 0.0, %v3180
      %v3182 = vpop.f32.mrb[0].mxu0
      %3183 = vmatprep.mubr.bf16.mxu0 0
      %3184 = vmatmul.mubr.bf16.gmra.mrb[0].mxu0 %v3098
      %v3185 = vpop.f32.mrb[0].mxu0
      %v3186 = vadd.f32 0.0, %v3185
      %v3187 = vpop.f32.mrb[0].mxu0
      %v3188 = vpop.f32.mrb[0].mxu0
      %v3189 = vadd.f32 0.0, %v3188
      %v3190 = vpop.f32.mrb[0].mxu0
      %3191 = vmatprep.mubr.bf16.mxu0 0
      %3192 = vmatmul.mubr.bf16.gmra.mrb[0].mxu0 %v3101
      %v3193 = vpop.f32.mrb[0].mxu0
      %v3194 = vadd.f32 0.0, %v3193
      %v3195 = vpop.f32.mrb[0].mxu0
      %v3196 = vpop.f32.mrb[0].mxu0
      %v3197 = vadd.f32 0.0, %v3196
      %v3198 = vpop.f32.mrb[0].mxu0
      %3199 = vdwg.mxu0
      %v3200 = vpack.c.bf16 %v3141, %v3138
      %v3201 = vpack.c.bf16 %v3149, %v3146
      %v3202 = vpack.c.bf16 %v3157, %v3154
      %v3203 = vpack.c.bf16 %v3165, %v3162
      %v3204 = vpack.c.bf16 %v3173, %v3170
      %v3205 = vpack.c.bf16 %v3181, %v3178
      %v3206 = vpack.c.bf16 %v3189, %v3186
      %v3207 = vpack.c.bf16 %v3197, %v3194
      %3208 = vst [vmem:[#allocation4] sm:$0xff] %v3200
      %3209 = vst [vmem:[#allocation4 + $0x8] sm:$0xff] %v3201
      %3210 = vst [vmem:[#allocation4 + $0x10] sm:$0xff] %v3202
      %3211 = vst [vmem:[#allocation4 + $0x18] sm:$0xff] %v3203
      %3212 = vst [vmem:[#allocation4 + $0x20] sm:$0xff] %v3204
      %3213 = vst [vmem:[#allocation4 + $0x28] sm:$0xff] %v3205
      %3214 = vst [vmem:[#allocation4 + $0x30] sm:$0xff] %v3206
      %3215 = vst [vmem:[#allocation4 + $0x38] sm:$0xff] %v3207
      %3216 = vst [vmem:[#allocation3] sm:$0xff] -1e+30
      %3217 = vst [vmem:[#allocation3 + $0x8] sm:$0xff] -1e+30
      %3218 = vst [vmem:[#allocation3 + $0x10] sm:$0xff] -1e+30
      %3219 = vst [vmem:[#allocation3 + $0x18] sm:$0xff] -1e+30
      %3220 = vst [vmem:[#allocation3 + $0x20] sm:$0xff] -1e+30
      %3221 = vst [vmem:[#allocation3 + $0x28] sm:$0xff] -1e+30
      %3222 = vst [vmem:[#allocation3 + $0x30] sm:$0xff] -1e+30
      %3223 = vst [vmem:[#allocation3 + $0x38] sm:$0xff] -1e+30
      %3224 = vst [vmem:[#allocation3 + $0x40] sm:$0xff] -1e+30
      %3225 = vst [vmem:[#allocation3 + $0x48] sm:$0xff] -1e+30
      %3226 = vst [vmem:[#allocation3 + $0x50] sm:$0xff] -1e+30
      %3227 = vst [vmem:[#allocation3 + $0x58] sm:$0xff] -1e+30
      %3228 = vst [vmem:[#allocation3 + $0x60] sm:$0xff] -1e+30
      %3229 = vst [vmem:[#allocation3 + $0x68] sm:$0xff] -1e+30
      %3230 = vst [vmem:[#allocation3 + $0x70] sm:$0xff] -1e+30
      %3231 = vst [vmem:[#allocation3 + $0x78] sm:$0xff] -1e+30
      loop: start=0, step=1, limit=20
      $region119: #{refine_forward.1} parent=103 // loop_pre_header
        _
      $region120: #{refine_forward.1} parent=103 // loop_header
        %s3233 = sphi 0, %s3237
        %p3234 = scmp.ge.s32.totalorder %s3233, 20
      $region121: #{refine_forward.1} parent=103 // loop_header_branch
        %3236 = sbr.rel (%p3234) target = $region125
      $region122: #{refine_forward.1} parent=103 // loop_body
        %v3238 = vld [vmem:[#allocation2] sm:$0xff]
        %v3239 = vld [vmem:[#allocation2 + $0x8] sm:$0xff]
        %v3240 = vld [vmem:[#allocation2 + $0x10] sm:$0xff]
        %v3241 = vld [vmem:[#allocation2 + $0x18] sm:$0xff]
        %v3242 = vld [vmem:[#allocation2 + $0x20] sm:$0xff]
        %v3243 = vld [vmem:[#allocation2 + $0x28] sm:$0xff]
        %v3244 = vld [vmem:[#allocation2 + $0x30] sm:$0xff]
        %v3245 = vld [vmem:[#allocation2 + $0x38] sm:$0xff]
        %v3246 = vld [vmem:[#allocation2 + $0x40] sm:$0xff]
        %v3247 = vld [vmem:[#allocation2 + $0x48] sm:$0xff]
        %v3248 = vld [vmem:[#allocation2 + $0x50] sm:$0xff]
        %v3249 = vld [vmem:[#allocation2 + $0x58] sm:$0xff]
        %v3250 = vld [vmem:[#allocation2 + $0x60] sm:$0xff]
        %v3251 = vld [vmem:[#allocation2 + $0x68] sm:$0xff]
        %v3252 = vld [vmem:[#allocation2 + $0x70] sm:$0xff]
        %v3253 = vld [vmem:[#allocation2 + $0x78] sm:$0xff]
        %v3254 = vmax.f32 %v3238, %v3242
        %v3255 = vmax.f32 %v3239, %v3243
        %v3256 = vmax.f32 %v3240, %v3244
        %v3257 = vmax.f32 %v3241, %v3245
        %v3258 = vmax.f32 %v3254, %v3246
        %v3259 = vmax.f32 %v3255, %v3247
        %v3260 = vmax.f32 %v3256, %v3248
        %v3261 = vmax.f32 %v3257, %v3249
        %v3262 = vmax.f32 %v3258, %v3250
        %v3263 = vmax.f32 %v3259, %v3251
        %v3264 = vmax.f32 %v3260, %v3252
        %v3265 = vmax.f32 %v3261, %v3253
        %v3266 = vmax.f32 %v3262, %v3263
        %v3267 = vmax.f32 %v3264, %v3265
        %v3268 = vmax.f32 %v3266, %v3267
        %v3269 = vrot.slane %v3268, 4
        %v3270 = vmax.f32 %v3268, %v3269
        %v3271 = vrot.slane %v3270, 2
        %v3272 = vmax.f32 %v3270, %v3271
        %v3273 = vrot.slane %v3272, 1
        %v3274 = vmax.f32 %v3272, %v3273
        %vm3275 = vcmp.eq.f32.partialorder %v3238, %v3274
        %vm3276 = vcmp.eq.f32.partialorder %v3239, %v3274
        %vm3277 = vcmp.eq.f32.partialorder %v3240, %v3274
        %vm3278 = vcmp.eq.f32.partialorder %v3241, %v3274
        %vm3279 = vcmp.eq.f32.partialorder %v3242, %v3274
        %vm3280 = vcmp.eq.f32.partialorder %v3243, %v3274
        %vm3281 = vcmp.eq.f32.partialorder %v3244, %v3274
        %vm3282 = vcmp.eq.f32.partialorder %v3245, %v3274
        %vm3283 = vcmp.eq.f32.partialorder %v3246, %v3274
        %vm3284 = vcmp.eq.f32.partialorder %v3247, %v3274
        %vm3285 = vcmp.eq.f32.partialorder %v3248, %v3274
        %vm3286 = vcmp.eq.f32.partialorder %v3249, %v3274
        %vm3287 = vcmp.eq.f32.partialorder %v3250, %v3274
        %vm3288 = vcmp.eq.f32.partialorder %v3251, %v3274
        %vm3289 = vcmp.eq.f32.partialorder %v3252, %v3274
        %vm3290 = vcmp.eq.f32.partialorder %v3253, %v3274
        %v3291 = vlaneseq
        %v3292 = vshrl.u32 %v3291, 7
        %v3293 = vadd.s32 %v3292, 8
        %v3294 = vadd.s32 %v3292, 16
        %v3295 = vadd.s32 %v3292, 24
        %v3296 = vadd.s32 %v3292, 32
        %v3297 = vadd.s32 %v3292, 40
        %v3298 = vadd.s32 %v3292, 48
        %v3299 = vadd.s32 %v3292, 56
        %v3300 = vadd.s32 %v3292, 64
        %v3301 = vadd.s32 %v3292, 72
        %v3302 = vadd.s32 %v3292, 80
        %v3303 = vadd.s32 %v3292, 88
        %v3304 = vadd.s32 %v3292, 96
        %v3305 = vadd.s32 %v3292, 104
        %v3306 = vadd.s32 %v3292, 112
        %v3307 = vadd.s32 %v3292, 120
        %v3308 = vcvt.s32.f32 %v3292
        %v3309 = vcvt.s32.f32 %v3293
        %v3310 = vcvt.s32.f32 %v3294
        %v3311 = vcvt.s32.f32 %v3295
        %v3312 = vcvt.s32.f32 %v3296
        %v3313 = vcvt.s32.f32 %v3297
        %v3314 = vcvt.s32.f32 %v3298
        %v3315 = vcvt.s32.f32 %v3299
        %v3316 = vcvt.s32.f32 %v3300
        %v3317 = vcvt.s32.f32 %v3301
        %v3318 = vcvt.s32.f32 %v3302
        %v3319 = vcvt.s32.f32 %v3303
        %v3320 = vcvt.s32.f32 %v3304
        %v3321 = vcvt.s32.f32 %v3305
        %v3322 = vcvt.s32.f32 %v3306
        %v3323 = vcvt.s32.f32 %v3307
        %v3324 = vsel %vm3275, %v3308, 128.0
        %v3325 = vsel %vm3276, %v3309, 128.0
        %v3326 = vsel %vm3277, %v3310, 128.0
        %v3327 = vsel %vm3278, %v3311, 128.0
        %v3328 = vsel %vm3279, %v3312, 128.0
        %v3329 = vsel %vm3280, %v3313, 128.0
        %v3330 = vsel %vm3281, %v3314, 128.0
        %v3331 = vsel %vm3282, %v3315, 128.0
        %v3332 = vsel %vm3283, %v3316, 128.0
        %v3333 = vsel %vm3284, %v3317, 128.0
        %v3334 = vsel %vm3285, %v3318, 128.0
        %v3335 = vsel %vm3286, %v3319, 128.0
        %v3336 = vsel %vm3287, %v3320, 128.0
        %v3337 = vsel %vm3288, %v3321, 128.0
        %v3338 = vsel %vm3289, %v3322, 128.0
        %v3339 = vsel %vm3290, %v3323, 128.0
        %v3340 = vmin.f32 %v3324, %v3328
        %v3341 = vmin.f32 %v3325, %v3329
        %v3342 = vmin.f32 %v3326, %v3330
        %v3343 = vmin.f32 %v3327, %v3331
        %v3344 = vmin.f32 %v3340, %v3332
        %v3345 = vmin.f32 %v3341, %v3333
        %v3346 = vmin.f32 %v3342, %v3334
        %v3347 = vmin.f32 %v3343, %v3335
        %v3348 = vmin.f32 %v3344, %v3336
        %v3349 = vmin.f32 %v3345, %v3337
        %v3350 = vmin.f32 %v3346, %v3338
        %v3351 = vmin.f32 %v3347, %v3339
        %v3352 = vmin.f32 %v3348, %v3349
        %v3353 = vmin.f32 %v3350, %v3351
        %v3354 = vmin.f32 %v3352, %v3353
        %v3355 = vrot.slane %v3354, 4
        %v3356 = vmin.f32 %v3354, %v3355
        %v3357 = vrot.slane %v3356, 2
        %v3358 = vmin.f32 %v3356, %v3357
        %v3359 = vrot.slane %v3358, 1
        %v3360 = vmin.f32 %v3358, %v3359
        %vm3361 = vcmp.eq.f32.partialorder %v3308, %v3360
        %vm3362 = vcmp.eq.f32.partialorder %v3309, %v3360
        %vm3363 = vcmp.eq.f32.partialorder %v3310, %v3360
        %vm3364 = vcmp.eq.f32.partialorder %v3311, %v3360
        %vm3365 = vcmp.eq.f32.partialorder %v3312, %v3360
        %vm3366 = vcmp.eq.f32.partialorder %v3313, %v3360
        %vm3367 = vcmp.eq.f32.partialorder %v3314, %v3360
        %vm3368 = vcmp.eq.f32.partialorder %v3315, %v3360
        %vm3369 = vcmp.eq.f32.partialorder %v3316, %v3360
        %vm3370 = vcmp.eq.f32.partialorder %v3317, %v3360
        %vm3371 = vcmp.eq.f32.partialorder %v3318, %v3360
        %vm3372 = vcmp.eq.f32.partialorder %v3319, %v3360
        %vm3373 = vcmp.eq.f32.partialorder %v3320, %v3360
        %vm3374 = vcmp.eq.f32.partialorder %v3321, %v3360
        %vm3375 = vcmp.eq.f32.partialorder %v3322, %v3360
        %vm3376 = vcmp.eq.f32.partialorder %v3323, %v3360
        %v3377 = vsel %vm3361, 1.0, 0.0
        %v3378 = vsel %vm3362, 1.0, 0.0
        %v3379 = vsel %vm3363, 1.0, 0.0
        %v3380 = vsel %vm3364, 1.0, 0.0
        %v3381 = vsel %vm3365, 1.0, 0.0
        %v3382 = vsel %vm3366, 1.0, 0.0
        %v3383 = vsel %vm3367, 1.0, 0.0
        %v3384 = vsel %vm3368, 1.0, 0.0
        %v3385 = vsel %vm3369, 1.0, 0.0
        %v3386 = vsel %vm3370, 1.0, 0.0
        %v3387 = vsel %vm3371, 1.0, 0.0
        %v3388 = vsel %vm3372, 1.0, 0.0
        %v3389 = vsel %vm3373, 1.0, 0.0
        %v3390 = vsel %vm3374, 1.0, 0.0
        %v3391 = vsel %vm3375, 1.0, 0.0
        %v3392 = vsel %vm3376, 1.0, 0.0
        %v3393 = vpack.c.bf16 %v3378, %v3377
        %v3394 = vpack.c.bf16 %v3380, %v3379
        %v3395 = vpack.c.bf16 %v3382, %v3381
        %v3396 = vpack.c.bf16 %v3384, %v3383
        %v3397 = vpack.c.bf16 %v3386, %v3385
        %v3398 = vpack.c.bf16 %v3388, %v3387
        %v3399 = vpack.c.bf16 %v3390, %v3389
        %v3400 = vpack.c.bf16 %v3392, %v3391
        %v3401 = vld [vmem:[#allocation4] sm:$0xff]
        %v3402 = vld [vmem:[#allocation4 + $0x8] sm:$0xff]
        %v3403 = vld [vmem:[#allocation4 + $0x10] sm:$0xff]
        %v3404 = vld [vmem:[#allocation4 + $0x18] sm:$0xff]
        %v3405 = vld [vmem:[#allocation4 + $0x20] sm:$0xff]
        %v3406 = vld [vmem:[#allocation4 + $0x28] sm:$0xff]
        %v3407 = vld [vmem:[#allocation4 + $0x30] sm:$0xff]
        %v3408 = vld [vmem:[#allocation4 + $0x38] sm:$0xff]
        %3409 = vmatprep.subr.bf16.mxu0 0
        %3410 = vmatpush1.bf16.msra.mxu0 %v3393
        %3411 = vmatprep.subr.bf16.mxu0 0
        %3412 = vmatpush1.bf16.msra.mxu0 %v3394
        %3413 = vmatprep.subr.bf16.mxu0 0
        %3414 = vmatpush1.bf16.msra.mxu0 %v3395
        %3415 = vmatprep.subr.bf16.mxu0 0
        %3416 = vmatpush1.bf16.msra.mxu0 %v3396
        %3417 = vmatprep.subr.bf16.mxu0 0
        %3418 = vmatpush1.bf16.msra.mxu0 %v3397
        %3419 = vmatprep.subr.bf16.mxu0 0
        %3420 = vmatpush1.bf16.msra.mxu0 %v3398
        %3421 = vmatprep.subr.bf16.mxu0 0
        %3422 = vmatpush1.bf16.msra.mxu0 %v3399
        %3423 = vmatprep.subr.bf16.mxu0 0
        %3424 = vmatpush1.bf16.msra.mxu0 %v3400
        %3425 = vmatprep.subr.bf16.mxu0 0
        %3426 = vmatpush1.bf16.msra.mxu0 0
        %3427 = vmatprep.subr.bf16.mxu0 0
        %3428 = vmatpush1.bf16.msra.mxu0 0
        %3429 = vmatprep.subr.bf16.mxu0 0
        %3430 = vmatpush1.bf16.msra.mxu0 0
        %3431 = vmatprep.subr.bf16.mxu0 0
        %3432 = vmatpush1.bf16.msra.mxu0 0
        %3433 = vmatprep.subr.bf16.mxu0 0
        %3434 = vmatpush1.bf16.msra.mxu0 0
        %3435 = vmatprep.subr.bf16.mxu0 0
        %3436 = vmatpush1.bf16.msra.mxu0 0
        %3437 = vmatprep.subr.bf16.mxu0 0
        %3438 = vmatpush1.bf16.msra.mxu0 0
        %3439 = vmatprep.subr.bf16.mxu0 0
        %3440 = vmatpush1.bf16.msra.mxu0 0
        %3441 = vmatprep.mubr.bf16.mxu0 0
        %3442 = vmatmul.mubr.bf16.gmra.mrb[0].mxu0 %v3401
        %v3443 = vpop.f32.mrb[0].mxu0
        %v3444 = vadd.f32 0.0, %v3443
        %v3445 = vpop.f32.mrb[0].mxu0
        %v3446 = vpop.f32.mrb[0].mxu0
        %v3447 = vadd.f32 0.0, %v3446
        %v3448 = vpop.f32.mrb[0].mxu0
        %3449 = vmatprep.mubr.bf16.mxu0 0
        %3450 = vmatmul.mubr.bf16.gmra.mrb[0].mxu0 %v3402
        %v3451 = vpop.f32.mrb[0].mxu0
        %v3452 = vadd.f32 0.0, %v3451
        %v3453 = vpop.f32.mrb[0].mxu0
        %v3454 = vpop.f32.mrb[0].mxu0
        %v3455 = vadd.f32 0.0, %v3454
        %v3456 = vpop.f32.mrb[0].mxu0
        %3457 = vmatprep.mubr.bf16.mxu0 0
        %3458 = vmatmul.mubr.bf16.gmra.mrb[0].mxu0 %v3403
        %v3459 = vpop.f32.mrb[0].mxu0
        %v3460 = vadd.f32 0.0, %v3459
        %v3461 = vpop.f32.mrb[0].mxu0
        %v3462 = vpop.f32.mrb[0].mxu0
        %v3463 = vadd.f32 0.0, %v3462
        %v3464 = vpop.f32.mrb[0].mxu0
        %3465 = vmatprep.mubr.bf16.mxu0 0
        %3466 = vmatmul.mubr.bf16.gmra.mrb[0].mxu0 %v3404
        %v3467 = vpop.f32.mrb[0].mxu0
        %v3468 = vadd.f32 0.0, %v3467
        %v3469 = vpop.f32.mrb[0].mxu0
        %v3470 = vpop.f32.mrb[0].mxu0
        %v3471 = vadd.f32 0.0, %v3470
        %v3472 = vpop.f32.mrb[0].mxu0
        %3473 = vmatprep.mubr.bf16.mxu0 0
        %3474 = vmatmul.mubr.bf16.gmra.mrb[0].mxu0 %v3405
        %v3475 = vpop.f32.mrb[0].mxu0
        %v3476 = vadd.f32 0.0, %v3475
        %v3477 = vpop.f32.mrb[0].mxu0
        %v3478 = vpop.f32.mrb[0].mxu0
        %v3479 = vadd.f32 0.0, %v3478
        %v3480 = vpop.f32.mrb[0].mxu0
        %3481 = vmatprep.mubr.bf16.mxu0 0
        %3482 = vmatmul.mubr.bf16.gmra.mrb[0].mxu0 %v3406
        %v3483 = vpop.f32.mrb[0].mxu0
        %v3484 = vadd.f32 0.0, %v3483
        %v3485 = vpop.f32.mrb[0].mxu0
        %v3486 = vpop.f32.mrb[0].mxu0
        %v3487 = vadd.f32 0.0, %v3486
        %v3488 = vpop.f32.mrb[0].mxu0
        %3489 = vmatprep.mubr.bf16.mxu0 0
        %3490 = vmatmul.mubr.bf16.gmra.mrb[0].mxu0 %v3407
        %v3491 = vpop.f32.mrb[0].mxu0
        %v3492 = vadd.f32 0.0, %v3491
        %v3493 = vpop.f32.mrb[0].mxu0
        %v3494 = vpop.f32.mrb[0].mxu0
        %v3495 = vadd.f32 0.0, %v3494
        %v3496 = vpop.f32.mrb[0].mxu0
        %3497 = vmatprep.mubr.bf16.mxu0 0
        %3498 = vmatmul.mubr.bf16.gmra.mrb[0].mxu0 %v3408
        %v3499 = vpop.f32.mrb[0].mxu0
        %v3500 = vadd.f32 0.0, %v3499
        %v3501 = vpop.f32.mrb[0].mxu0
        %v3502 = vpop.f32.mrb[0].mxu0
        %v3503 = vadd.f32 0.0, %v3502
        %v3504 = vpop.f32.mrb[0].mxu0
        %3505 = vdwg.mxu0
        %v3506 = vld [vmem:[#allocation3] sm:$0xff]
        %v3507 = vld [vmem:[#allocation3 + $0x8] sm:$0xff]
        %v3508 = vld [vmem:[#allocation3 + $0x10] sm:$0xff]
        %v3509 = vld [vmem:[#allocation3 + $0x18] sm:$0xff]
        %v3510 = vld [vmem:[#allocation3 + $0x20] sm:$0xff]
        %v3511 = vld [vmem:[#allocation3 + $0x28] sm:$0xff]
        %v3512 = vld [vmem:[#allocation3 + $0x30] sm:$0xff]
        %v3513 = vld [vmem:[#allocation3 + $0x38] sm:$0xff]
        %v3514 = vld [vmem:[#allocation3 + $0x40] sm:$0xff]
        %v3515 = vld [vmem:[#allocation3 + $0x48] sm:$0xff]
        %v3516 = vld [vmem:[#allocation3 + $0x50] sm:$0xff]
        %v3517 = vld [vmem:[#allocation3 + $0x58] sm:$0xff]
        %v3518 = vld [vmem:[#allocation3 + $0x60] sm:$0xff]
        %v3519 = vld [vmem:[#allocation3 + $0x68] sm:$0xff]
        %v3520 = vld [vmem:[#allocation3 + $0x70] sm:$0xff]
        %v3521 = vld [vmem:[#allocation3 + $0x78] sm:$0xff]
        %v3522 = vmax.f32 %v3506, %v3444
        %v3523 = vmax.f32 %v3507, %v3447
        %v3524 = vmax.f32 %v3508, %v3452
        %v3525 = vmax.f32 %v3509, %v3455
        %v3526 = vmax.f32 %v3510, %v3460
        %v3527 = vmax.f32 %v3511, %v3463
        %v3528 = vmax.f32 %v3512, %v3468
        %v3529 = vmax.f32 %v3513, %v3471
        %v3530 = vmax.f32 %v3514, %v3476
        %v3531 = vmax.f32 %v3515, %v3479
        %v3532 = vmax.f32 %v3516, %v3484
        %v3533 = vmax.f32 %v3517, %v3487
        %v3534 = vmax.f32 %v3518, %v3492
        %v3535 = vmax.f32 %v3519, %v3495
        %v3536 = vmax.f32 %v3520, %v3500
        %v3537 = vmax.f32 %v3521, %v3503
        %3538 = vst [vmem:[#allocation3] sm:$0xff] %v3522
        %3539 = vst [vmem:[#allocation3 + $0x8] sm:$0xff] %v3523
        %3540 = vst [vmem:[#allocation3 + $0x10] sm:$0xff] %v3524
        %3541 = vst [vmem:[#allocation3 + $0x18] sm:$0xff] %v3525
        %3542 = vst [vmem:[#allocation3 + $0x20] sm:$0xff] %v3526
        %3543 = vst [vmem:[#allocation3 + $0x28] sm:$0xff] %v3527
        %3544 = vst [vmem:[#allocation3 + $0x30] sm:$0xff] %v3528
        %3545 = vst [vmem:[#allocation3 + $0x38] sm:$0xff] %v3529
        %3546 = vst [vmem:[#allocation3 + $0x40] sm:$0xff] %v3530
        %3547 = vst [vmem:[#allocation3 + $0x48] sm:$0xff] %v3531
        %3548 = vst [vmem:[#allocation3 + $0x50] sm:$0xff] %v3532
        %3549 = vst [vmem:[#allocation3 + $0x58] sm:$0xff] %v3533
        %3550 = vst [vmem:[#allocation3 + $0x60] sm:$0xff] %v3534
        %3551 = vst [vmem:[#allocation3 + $0x68] sm:$0xff] %v3535
        %3552 = vst [vmem:[#allocation3 + $0x70] sm:$0xff] %v3536
        %3553 = vst [vmem:[#allocation3 + $0x78] sm:$0xff] %v3537
        %v3554 = vsel %vm3361, -1e+30, %v3238
        %v3555 = vsel %vm3362, -1e+30, %v3239
        %v3556 = vsel %vm3363, -1e+30, %v3240
        %v3557 = vsel %vm3364, -1e+30, %v3241
        %v3558 = vsel %vm3365, -1e+30, %v3242
        %v3559 = vsel %vm3366, -1e+30, %v3243
        %v3560 = vsel %vm3367, -1e+30, %v3244
        %v3561 = vsel %vm3368, -1e+30, %v3245
        %v3562 = vsel %vm3369, -1e+30, %v3246
        %v3563 = vsel %vm3370, -1e+30, %v3247
        %v3564 = vsel %vm3371, -1e+30, %v3248
        %v3565 = vsel %vm3372, -1e+30, %v3249
        %v3566 = vsel %vm3373, -1e+30, %v3250
        %v3567 = vsel %vm3374, -1e+30, %v3251
        %v3568 = vsel %vm3375, -1e+30, %v3252
        %v3569 = vsel %vm3376, -1e+30, %v3253
        %3570 = vst [vmem:[#allocation2] sm:$0xff] %v3554
        %3571 = vst [vmem:[#allocation2 + $0x8] sm:$0xff] %v3555
        %3572 = vst [vmem:[#allocation2 + $0x10] sm:$0xff] %v3556
        %3573 = vst [vmem:[#allocation2 + $0x18] sm:$0xff] %v3557
        %3574 = vst [vmem:[#allocation2 + $0x20] sm:$0xff] %v3558
        %3575 = vst [vmem:[#allocation2 + $0x28] sm:$0xff] %v3559
        %3576 = vst [vmem:[#allocation2 + $0x30] sm:$0xff] %v3560
        %3577 = vst [vmem:[#allocation2 + $0x38] sm:$0xff] %v3561
        %3578 = vst [vmem:[#allocation2 + $0x40] sm:$0xff] %v3562
        %3579 = vst [vmem:[#allocation2 + $0x48] sm:$0xff] %v3563
        %3580 = vst [vmem:[#allocation2 + $0x50] sm:$0xff] %v3564
        %3581 = vst [vmem:[#allocation2 + $0x58] sm:$0xff] %v3565
        %3582 = vst [vmem:[#allocation2 + $0x60] sm:$0xff] %v3566
        %3583 = vst [vmem:[#allocation2 + $0x68] sm:$0xff] %v3567
        %3584 = vst [vmem:[#allocation2 + $0x70] sm:$0xff] %v3568
        %3585 = vst [vmem:[#allocation2 + $0x78] sm:$0xff] %v3569
      $region123: #{refine_forward.1} parent=103 // loop_footer
        %s3237 = sadd.s32 1, %s3233
      $region124: #{refine_forward.1} parent=103 // loop_footer_branch
        %3232 = sbr.rel target = $region120
      $region125: #{refine_forward.1} parent=103 // loop_exit
        _
      %v3586 = vld [vmem:[%s8] sm:$0xf]
      %v3587 = vld [vmem:[%s8 + $0x4] sm:$0xf]
      %v3588 = vld [vmem:[%s8 + $0x8] sm:$0xf]
      %v3589 = vld [vmem:[%s8 + $0xc] sm:$0xf]
      %v3590 = vld [vmem:[%s8 + $0x10] sm:$0xf]
      %v3591 = vld [vmem:[%s8 + $0x14] sm:$0xf]
      %v3592 = vld [vmem:[%s8 + $0x18] sm:$0xf]
      %v3593 = vld [vmem:[%s8 + $0x1c] sm:$0xf]
      %v3594 = vld [vmem:[%s8 + $0x20] sm:$0xf]
      %v3595 = vld [vmem:[%s8 + $0x24] sm:$0xf]
      %v3596 = vld [vmem:[%s8 + $0x28] sm:$0xf]
      %v3597 = vld [vmem:[%s8 + $0x2c] sm:$0xf]
      %v3598 = vld [vmem:[%s8 + $0x30] sm:$0xf]
      %v3599 = vld [vmem:[%s8 + $0x34] sm:$0xf]
      %v3600 = vld [vmem:[%s8 + $0x38] sm:$0xf]
      %v3601 = vld [vmem:[%s8 + $0x3c] sm:$0xf]
      %v3602 = vld [vmem:[#allocation5 + $0x20] sm:$0xff]
      %v3603 = vld [vmem:[#allocation5 + $0x28] sm:$0xff]
      %v3604 = vld [vmem:[#allocation5 + $0x30] sm:$0xff]
      %v3605 = vld [vmem:[#allocation5 + $0x38] sm:$0xff]
      %v3606 = vld [vmem:[%s9] sm:$0xff]
      %v3607 = vld [vmem:[%s9 + $0x8] sm:$0xff]
      %v3608 = vld [vmem:[%s9 + $0x10] sm:$0xff]
      %v3609 = vld [vmem:[%s9 + $0x18] sm:$0xff]
      %v3610 = vld [vmem:[%s9 + $0x20] sm:$0xff]
      %v3611 = vld [vmem:[%s9 + $0x28] sm:$0xff]
      %v3612 = vld [vmem:[%s9 + $0x30] sm:$0xff]
      %v3613 = vld [vmem:[%s9 + $0x38] sm:$0xff]
      %v3614 = vld [vmem:[%s9 + $0x40] sm:$0xff]
      %v3615 = vld [vmem:[%s9 + $0x48] sm:$0xff]
      %v3616 = vld [vmem:[%s9 + $0x50] sm:$0xff]
      %v3617 = vld [vmem:[%s9 + $0x58] sm:$0xff]
      %v3618 = vld [vmem:[%s9 + $0x60] sm:$0xff]
      %v3619 = vld [vmem:[%s9 + $0x68] sm:$0xff]
      %v3620 = vld [vmem:[%s9 + $0x70] sm:$0xff]
      %v3621 = vld [vmem:[%s9 + $0x78] sm:$0xff]
      %3623 = vset.pattern.permute.xlu0 0
      %3624 = vperm.xlu0 %3623, %v3606
      %v3625 = vpop.permute.xlu0 %3624
      %3628 = vset.pattern.permute.xlu0 0
      %3629 = vperm.xlu0 %3628, %v3607
      %v3630 = vpop.permute.xlu0 %3629
      %3633 = vset.pattern.permute.xlu0 0
      %3634 = vperm.xlu0 %3633, %v3608
      %v3635 = vpop.permute.xlu0 %3634
      %3638 = vset.pattern.permute.xlu0 0
      %3639 = vperm.xlu0 %3638, %v3609
      %v3640 = vpop.permute.xlu0 %3639
      %3643 = vset.pattern.permute.xlu0 0
      %3644 = vperm.xlu0 %3643, %v3610
      %v3645 = vpop.permute.xlu0 %3644
      %3648 = vset.pattern.permute.xlu0 0
      %3649 = vperm.xlu0 %3648, %v3611
      %v3650 = vpop.permute.xlu0 %3649
      %3653 = vset.pattern.permute.xlu0 0
      %3654 = vperm.xlu0 %3653, %v3612
      %v3655 = vpop.permute.xlu0 %3654
      %3658 = vset.pattern.permute.xlu0 0
      %3659 = vperm.xlu0 %3658, %v3613
      %v3660 = vpop.permute.xlu0 %3659
      %3663 = vset.pattern.permute.xlu0 0
      %3664 = vperm.xlu0 %3663, %v3614
      %v3665 = vpop.permute.xlu0 %3664
      %3668 = vset.pattern.permute.xlu0 0
      %3669 = vperm.xlu0 %3668, %v3615
      %v3670 = vpop.permute.xlu0 %3669
      %3673 = vset.pattern.permute.xlu0 0
      %3674 = vperm.xlu0 %3673, %v3616
      %v3675 = vpop.permute.xlu0 %3674
      %3678 = vset.pattern.permute.xlu0 0
      %3679 = vperm.xlu0 %3678, %v3617
      %v3680 = vpop.permute.xlu0 %3679
      %3683 = vset.pattern.permute.xlu0 0
      %3684 = vperm.xlu0 %3683, %v3618
      %v3685 = vpop.permute.xlu0 %3684
      %3688 = vset.pattern.permute.xlu0 0
      %3689 = vperm.xlu0 %3688, %v3619
      %v3690 = vpop.permute.xlu0 %3689
      %3693 = vset.pattern.permute.xlu0 0
      %3694 = vperm.xlu0 %3693, %v3620
      %v3695 = vpop.permute.xlu0 %3694
      %3698 = vset.pattern.permute.xlu0 0
      %3699 = vperm.xlu0 %3698, %v3621
      %v3700 = vpop.permute.xlu0 %3699
      %v3718 = vunpack.c.l.b16 %v3586
      %v3719 = vunpack.c.l.b16 %v3587
      %v3720 = vunpack.c.l.b16 %v3588
      %v3721 = vunpack.c.l.b16 %v3589
      %v3722 = vunpack.c.l.b16 %v3590
      %v3723 = vunpack.c.l.b16 %v3591
      %v3724 = vunpack.c.l.b16 %v3592
      %v3725 = vunpack.c.l.b16 %v3593
      %v3726 = vunpack.c.l.b16 %v3594
      %v3727 = vunpack.c.l.b16 %v3595
      %v3728 = vunpack.c.l.b16 %v3596
      %v3729 = vunpack.c.l.b16 %v3597
      %v3730 = vunpack.c.l.b16 %v3598
      %v3731 = vunpack.c.l.b16 %v3599
      %v3732 = vunpack.c.l.b16 %v3600
      %v3733 = vunpack.c.l.b16 %v3601
      %v3734 = vpack.c.b16 %v3719, %v3718
      %v3735 = vpack.c.b16 %v3721, %v3720
      %v3736 = vpack.c.b16 %v3723, %v3722
      %v3737 = vpack.c.b16 %v3725, %v3724
      %v3738 = vpack.c.b16 %v3727, %v3726
      %v3739 = vpack.c.b16 %v3729, %v3728
      %v3740 = vpack.c.b16 %v3731, %v3730
      %v3741 = vpack.c.b16 %v3733, %v3732
      %v3743 = vsel %vm1782, %v3734, 0
      %v3746 = vsel %vm1782, %v3735, 0
      %v3749 = vsel %vm1782, %v3736, 0
      %v3752 = vsel %vm1782, %v3737, 0
      %v3755 = vsel %vm1782, %v3738, 0
      %v3758 = vsel %vm1782, %v3739, 0
      %v3761 = vsel %vm1782, %v3740, 0
      %v3764 = vsel %vm1782, %v3741, 0
      %3766 = vmatprep.subr.bf16.mxu0 0
      %3767 = vmatpush1.bf16.msra.mxu0 %v3602
      %3768 = vmatprep.subr.bf16.mxu0 0
      %3769 = vmatpush1.bf16.msra.mxu0 %v3603
      %3770 = vmatprep.subr.bf16.mxu0 0
      %3771 = vmatpush1.bf16.msra.mxu0 %v3604
      %3772 = vmatprep.subr.bf16.mxu0 0
      %3773 = vmatpush1.bf16.msra.mxu0 %v3605
      %3774 = vmatprep.subr.bf16.mxu0 0
      %3775 = vmatpush1.bf16.msra.mxu0 0
      %3776 = vmatprep.subr.bf16.mxu0 0
      %3777 = vmatpush1.bf16.msra.mxu0 0
      %3778 = vmatprep.subr.bf16.mxu0 0
      %3779 = vmatpush1.bf16.msra.mxu0 0
      %3780 = vmatprep.subr.bf16.mxu0 0
      %3781 = vmatpush1.bf16.msra.mxu0 0
      %3782 = vmatprep.subr.bf16.mxu0 0
      %3783 = vmatpush1.bf16.msra.mxu0 0
      %3784 = vmatprep.subr.bf16.mxu0 0
      %3785 = vmatpush1.bf16.msra.mxu0 0
      %3786 = vmatprep.subr.bf16.mxu0 0
      %3787 = vmatpush1.bf16.msra.mxu0 0
      %3788 = vmatprep.subr.bf16.mxu0 0
      %3789 = vmatpush1.bf16.msra.mxu0 0
      %3790 = vmatprep.subr.bf16.mxu0 0
      %3791 = vmatpush1.bf16.msra.mxu0 0
      %3792 = vmatprep.subr.bf16.mxu0 0
      %3793 = vmatpush1.bf16.msra.mxu0 0
      %3794 = vmatprep.subr.bf16.mxu0 0
      %3795 = vmatpush1.bf16.msra.mxu0 0
      %3796 = vmatprep.subr.bf16.mxu0 0
      %3797 = vmatpush1.bf16.msra.mxu0 0
      %3798 = vmatprep.mubr.bf16.mxu0 0
      %3799 = vmatmul.mubr.bf16.gmra.mrb[0].mxu0 %v3743
      %v3800 = vpop.f32.mrb[0].mxu0
      %v3801 = vadd.f32 %v3625, %v3800
      %v3802 = vpop.f32.mrb[0].mxu0
      %v3803 = vpop.f32.mrb[0].mxu0
      %v3804 = vadd.f32 %v3630, %v3803
      %v3805 = vpop.f32.mrb[0].mxu0
      %3806 = vmatprep.mubr.bf16.mxu0 0
      %3807 = vmatmul.mubr.bf16.gmra.mrb[0].mxu0 %v3746
      %v3808 = vpop.f32.mrb[0].mxu0
      %v3809 = vadd.f32 %v3635, %v3808
      %v3810 = vpop.f32.mrb[0].mxu0
      %v3811 = vpop.f32.mrb[0].mxu0
      %v3812 = vadd.f32 %v3640, %v3811
      %v3813 = vpop.f32.mrb[0].mxu0
      %3814 = vmatprep.mubr.bf16.mxu0 0
      %3815 = vmatmul.mubr.bf16.gmra.mrb[0].mxu0 %v3749
      %v3816 = vpop.f32.mrb[0].mxu0
      %v3817 = vadd.f32 %v3645, %v3816
      %v3818 = vpop.f32.mrb[0].mxu0
      %v3819 = vpop.f32.mrb[0].mxu0
      %v3820 = vadd.f32 %v3650, %v3819
      %v3821 = vpop.f32.mrb[0].mxu0
      %3822 = vmatprep.mubr.bf16.mxu0 0
      %3823 = vmatmul.mubr.bf16.gmra.mrb[0].mxu0 %v3752
      %v3824 = vpop.f32.mrb[0].mxu0
      %v3825 = vadd.f32 %v3655, %v3824
      %v3826 = vpop.f32.mrb[0].mxu0
      %v3827 = vpop.f32.mrb[0].mxu0
      %v3828 = vadd.f32 %v3660, %v3827
      %v3829 = vpop.f32.mrb[0].mxu0
      %3830 = vmatprep.mubr.bf16.mxu0 0
      %3831 = vmatmul.mubr.bf16.gmra.mrb[0].mxu0 %v3755
      %v3832 = vpop.f32.mrb[0].mxu0
      %v3833 = vadd.f32 %v3665, %v3832
      %v3834 = vpop.f32.mrb[0].mxu0
      %v3835 = vpop.f32.mrb[0].mxu0
      %v3836 = vadd.f32 %v3670, %v3835
      %v3837 = vpop.f32.mrb[0].mxu0
      %3838 = vmatprep.mubr.bf16.mxu0 0
      %3839 = vmatmul.mubr.bf16.gmra.mrb[0].mxu0 %v3758
      %v3840 = vpop.f32.mrb[0].mxu0
      %v3841 = vadd.f32 %v3675, %v3840
      %v3842 = vpop.f32.mrb[0].mxu0
      %v3843 = vpop.f32.mrb[0].mxu0
      %v3844 = vadd.f32 %v3680, %v3843
      %v3845 = vpop.f32.mrb[0].mxu0
      %3846 = vmatprep.mubr.bf16.mxu0 0
      %3847 = vmatmul.mubr.bf16.gmra.mrb[0].mxu0 %v3761
      %v3848 = vpop.f32.mrb[0].mxu0
      %v3849 = vadd.f32 %v3685, %v3848
      %v3850 = vpop.f32.mrb[0].mxu0
      %v3851 = vpop.f32.mrb[0].mxu0
      %v3852 = vadd.f32 %v3690, %v3851
      %v3853 = vpop.f32.mrb[0].mxu0
      %3854 = vmatprep.mubr.bf16.mxu0 0
      %3855 = vmatmul.mubr.bf16.gmra.mrb[0].mxu0 %v3764
      %v3856 = vpop.f32.mrb[0].mxu0
      %v3857 = vadd.f32 %v3695, %v3856
      %v3858 = vpop.f32.mrb[0].mxu0
      %v3859 = vpop.f32.mrb[0].mxu0
      %v3860 = vadd.f32 %v3700, %v3859
      %v3861 = vpop.f32.mrb[0].mxu0
      %3862 = vdwg.mxu0
      %v3863 = vld [vmem:[#allocation3] sm:$0xff]
      %v3864 = vld [vmem:[#allocation3 + $0x8] sm:$0xff]
      %v3865 = vld [vmem:[#allocation3 + $0x10] sm:$0xff]
      %v3866 = vld [vmem:[#allocation3 + $0x18] sm:$0xff]
      %v3867 = vld [vmem:[#allocation3 + $0x20] sm:$0xff]
      %v3868 = vld [vmem:[#allocation3 + $0x28] sm:$0xff]
      %v3869 = vld [vmem:[#allocation3 + $0x30] sm:$0xff]
      %v3870 = vld [vmem:[#allocation3 + $0x38] sm:$0xff]
      %v3871 = vld [vmem:[#allocation3 + $0x40] sm:$0xff]
      %v3872 = vld [vmem:[#allocation3 + $0x48] sm:$0xff]
      %v3873 = vld [vmem:[#allocation3 + $0x50] sm:$0xff]
      %v3874 = vld [vmem:[#allocation3 + $0x58] sm:$0xff]
      %v3875 = vld [vmem:[#allocation3 + $0x60] sm:$0xff]
      %v3876 = vld [vmem:[#allocation3 + $0x68] sm:$0xff]
      %v3877 = vld [vmem:[#allocation3 + $0x70] sm:$0xff]
      %v3878 = vld [vmem:[#allocation3 + $0x78] sm:$0xff]
      %v3879 = vadd.f32 %v3863, %v3801
      %v3880 = vadd.f32 %v3864, %v3804
      %v3881 = vadd.f32 %v3865, %v3809
      %v3882 = vadd.f32 %v3866, %v3812
      %v3883 = vadd.f32 %v3867, %v3817
      %v3884 = vadd.f32 %v3868, %v3820
      %v3885 = vadd.f32 %v3869, %v3825
      %v3886 = vadd.f32 %v3870, %v3828
      %v3887 = vadd.f32 %v3871, %v3833
      %v3888 = vadd.f32 %v3872, %v3836
      %v3889 = vadd.f32 %v3873, %v3841
      %v3890 = vadd.f32 %v3874, %v3844
      %v3891 = vadd.f32 %v3875, %v3849
      %v3892 = vadd.f32 %v3876, %v3852
      %v3893 = vadd.f32 %v3877, %v3857
      %v3894 = vadd.f32 %v3878, %v3860
      %v3895 = vmul.f32 %v3879, 0.2
      %v3896 = vmul.f32 %v3880, 0.2
      %v3897 = vmul.f32 %v3881, 0.2
      %v3898 = vmul.f32 %v3882, 0.2
      %v3899 = vmul.f32 %v3883, 0.2
      %v3900 = vmul.f32 %v3884, 0.2
      %v3901 = vmul.f32 %v3885, 0.2
      %v3902 = vmul.f32 %v3886, 0.2
      %v3903 = vmul.f32 %v3887, 0.2
      %v3904 = vmul.f32 %v3888, 0.2
      %v3905 = vmul.f32 %v3889, 0.2
      %v3906 = vmul.f32 %v3890, 0.2
      %v3907 = vmul.f32 %v3891, 0.2
      %v3908 = vmul.f32 %v3892, 0.2
      %v3909 = vmul.f32 %v3893, 0.2
      %v3910 = vmul.f32 %v3894, 0.2
      %v3911 = vmax.f32 %v3879, %v3895
      %v3912 = vmax.f32 %v3880, %v3896
      %v3913 = vmax.f32 %v3881, %v3897
      %v3914 = vmax.f32 %v3882, %v3898
      %v3915 = vmax.f32 %v3883, %v3899
      %v3916 = vmax.f32 %v3884, %v3900
      %v3917 = vmax.f32 %v3885, %v3901
      %v3918 = vmax.f32 %v3886, %v3902
      %v3919 = vmax.f32 %v3887, %v3903
      %v3920 = vmax.f32 %v3888, %v3904
      %v3921 = vmax.f32 %v3889, %v3905
      %v3922 = vmax.f32 %v3890, %v3906
      %v3923 = vmax.f32 %v3891, %v3907
      %v3924 = vmax.f32 %v3892, %v3908
      %v3925 = vmax.f32 %v3893, %v3909
      %v3926 = vmax.f32 %v3894, %v3910
      %v3927 = vpack.c.bf16 %v3912, %v3911
      %v3928 = vpack.c.bf16 %v3914, %v3913
      %v3929 = vpack.c.bf16 %v3916, %v3915
      %v3930 = vpack.c.bf16 %v3918, %v3917
      %v3931 = vpack.c.bf16 %v3920, %v3919
      %v3932 = vpack.c.bf16 %v3922, %v3921
      %v3933 = vpack.c.bf16 %v3924, %v3923
      %v3934 = vpack.c.bf16 %v3926, %v3925
      %3935 = vst [vmem:[#allocation5 + $0x40] sm:$0xff] %v3927
      %3936 = vst [vmem:[#allocation5 + $0x48] sm:$0xff] %v3928
      %3937 = vst [vmem:[#allocation5 + $0x50] sm:$0xff] %v3929
      %3938 = vst [vmem:[#allocation5 + $0x58] sm:$0xff] %v3930
      %3939 = vst [vmem:[#allocation5 + $0x60] sm:$0xff] %v3931
      %3940 = vst [vmem:[#allocation5 + $0x68] sm:$0xff] %v3932
      %3941 = vst [vmem:[#allocation5 + $0x70] sm:$0xff] %v3933
      %3942 = vst [vmem:[#allocation5 + $0x78] sm:$0xff] %v3934
      %3943 = vxpose.xlu0.c.b16.start [1/8] %v3927, 128
      %3944 = vxpose.xlu0.c.b16.cont [2/8] %v3928, 128
      %3945 = vxpose.xlu0.c.b16.cont [3/8] %v3929, 128
      %3946 = vxpose.xlu0.c.b16.cont [4/8] %v3930, 128
      %3947 = vxpose.xlu0.c.b16.cont [5/8] %v3931, 128
      %3948 = vxpose.xlu0.c.b16.cont [6/8] %v3932, 128
      %3949 = vxpose.xlu0.c.b16.cont [7/8] %v3933, 128
      %3950 = vxpose.xlu0.c.b16.end [8/8] %v3934, 128
      %v3951 = vpop.trf.xlu0
      %v3952 = vpop.trf.xlu0
      %v3953 = vpop.trf.xlu0
      %v3954 = vpop.trf.xlu0
      %v3955 = vpop.trf.xlu0
      %v3956 = vpop.trf.xlu0
      %v3957 = vpop.trf.xlu0
      %v3958 = vpop.trf.xlu0
      %3959 = vmatprep.subr.bf16.mxu0 0
      %3960 = vmatpush1.bf16.msra.mxu0 %v3927
      %3961 = vmatprep.subr.bf16.mxu0 0
      %3962 = vmatpush1.bf16.msra.mxu0 %v3928
      %3963 = vmatprep.subr.bf16.mxu0 0
      %3964 = vmatpush1.bf16.msra.mxu0 %v3929
      %3965 = vmatprep.subr.bf16.mxu0 0
      %3966 = vmatpush1.bf16.msra.mxu0 %v3930
      %3967 = vmatprep.subr.bf16.mxu0 0
      %3968 = vmatpush1.bf16.msra.mxu0 %v3931
      %3969 = vmatprep.subr.bf16.mxu0 0
      %3970 = vmatpush1.bf16.msra.mxu0 %v3932
      %3971 = vmatprep.subr.bf16.mxu0 0
      %3972 = vmatpush1.bf16.msra.mxu0 %v3933
      %3973 = vmatprep.subr.bf16.mxu0 0
      %3974 = vmatpush1.bf16.msra.mxu0 %v3934
      %3975 = vmatprep.subr.bf16.mxu0 0
      %3976 = vmatpush1.bf16.msra.mxu0 0
      %3977 = vmatprep.subr.bf16.mxu0 0
      %3978 = vmatpush1.bf16.msra.mxu0 0
      %3979 = vmatprep.subr.bf16.mxu0 0
      %3980 = vmatpush1.bf16.msra.mxu0 0
      %3981 = vmatprep.subr.bf16.mxu0 0
      %3982 = vmatpush1.bf16.msra.mxu0 0
      %3983 = vmatprep.subr.bf16.mxu0 0
      %3984 = vmatpush1.bf16.msra.mxu0 0
      %3985 = vmatprep.subr.bf16.mxu0 0
      %3986 = vmatpush1.bf16.msra.mxu0 0
      %3987 = vmatprep.subr.bf16.mxu0 0
      %3988 = vmatpush1.bf16.msra.mxu0 0
      %3989 = vmatprep.subr.bf16.mxu0 0
      %3990 = vmatpush1.bf16.msra.mxu0 0
      %3991 = vmatprep.mubr.bf16.mxu0 0
      %3992 = vmatmul.mubr.bf16.gmra.mrb[0].mxu0 %v3951
      %v3993 = vpop.f32.mrb[0].mxu0
      %v3994 = vadd.f32 0.0, %v3993
      %v3995 = vpop.f32.mrb[0].mxu0
      %v3996 = vpop.f32.mrb[0].mxu0
      %v3997 = vadd.f32 0.0, %v3996
      %v3998 = vpop.f32.mrb[0].mxu0
      %3999 = vmatprep.mubr.bf16.mxu0 0
      %4000 = vmatmul.mubr.bf16.gmra.mrb[0].mxu0 %v3952
      %v4001 = vpop.f32.mrb[0].mxu0
      %v4002 = vadd.f32 0.0, %v4001
      %v4003 = vpop.f32.mrb[0].mxu0
      %v4004 = vpop.f32.mrb[0].mxu0
      %v4005 = vadd.f32 0.0, %v4004
      %v4006 = vpop.f32.mrb[0].mxu0
      %4007 = vmatprep.mubr.bf16.mxu0 0
      %4008 = vmatmul.mubr.bf16.gmra.mrb[0].mxu0 %v3953
      %v4009 = vpop.f32.mrb[0].mxu0
      %v4010 = vadd.f32 0.0, %v4009
      %v4011 = vpop.f32.mrb[0].mxu0
      %v4012 = vpop.f32.mrb[0].mxu0
      %v4013 = vadd.f32 0.0, %v4012
      %v4014 = vpop.f32.mrb[0].mxu0
      %4015 = vmatprep.mubr.bf16.mxu0 0
      %4016 = vmatmul.mubr.bf16.gmra.mrb[0].mxu0 %v3954
      %v4017 = vpop.f32.mrb[0].mxu0
      %v4018 = vadd.f32 0.0, %v4017
      %v4019 = vpop.f32.mrb[0].mxu0
      %v4020 = vpop.f32.mrb[0].mxu0
      %v4021 = vadd.f32 0.0, %v4020
      %v4022 = vpop.f32.mrb[0].mxu0
      %4023 = vmatprep.mubr.bf16.mxu0 0
      %4024 = vmatmul.mubr.bf16.gmra.mrb[0].mxu0 %v3955
      %v4025 = vpop.f32.mrb[0].mxu0
      %v4026 = vadd.f32 0.0, %v4025
      %v4027 = vpop.f32.mrb[0].mxu0
      %v4028 = vpop.f32.mrb[0].mxu0
      %v4029 = vadd.f32 0.0, %v4028
      %v4030 = vpop.f32.mrb[0].mxu0
      %4031 = vmatprep.mubr.bf16.mxu0 0
      %4032 = vmatmul.mubr.bf16.gmra.mrb[0].mxu0 %v3956
      %v4033 = vpop.f32.mrb[0].mxu0
      %v4034 = vadd.f32 0.0, %v4033
      %v4035 = vpop.f32.mrb[0].mxu0
      %v4036 = vpop.f32.mrb[0].mxu0
      %v4037 = vadd.f32 0.0, %v4036
      %v4038 = vpop.f32.mrb[0].mxu0
      %4039 = vmatprep.mubr.bf16.mxu0 0
      %4040 = vmatmul.mubr.bf16.gmra.mrb[0].mxu0 %v3957
      %v4041 = vpop.f32.mrb[0].mxu0
      %v4042 = vadd.f32 0.0, %v4041
      %v4043 = vpop.f32.mrb[0].mxu0
      %v4044 = vpop.f32.mrb[0].mxu0
      %v4045 = vadd.f32 0.0, %v4044
      %v4046 = vpop.f32.mrb[0].mxu0
      %4047 = vmatprep.mubr.bf16.mxu0 0
      %4048 = vmatmul.mubr.bf16.gmra.mrb[0].mxu0 %v3958
      %v4049 = vpop.f32.mrb[0].mxu0
      %v4050 = vadd.f32 0.0, %v4049
      %v4051 = vpop.f32.mrb[0].mxu0
      %v4052 = vpop.f32.mrb[0].mxu0
      %v4053 = vadd.f32 0.0, %v4052
      %v4054 = vpop.f32.mrb[0].mxu0
      %4055 = vdwg.mxu0
      %v4056 = vmul.f32 %v3911, %v3911
      %v4057 = vmul.f32 %v3912, %v3912
      %v4058 = vmul.f32 %v3913, %v3913
      %v4059 = vmul.f32 %v3914, %v3914
      %v4060 = vmul.f32 %v3915, %v3915
      %v4061 = vmul.f32 %v3916, %v3916
      %v4062 = vmul.f32 %v3917, %v3917
      %v4063 = vmul.f32 %v3918, %v3918
      %v4064 = vmul.f32 %v3919, %v3919
      %v4065 = vmul.f32 %v3920, %v3920
      %v4066 = vmul.f32 %v3921, %v3921
      %v4067 = vmul.f32 %v3922, %v3922
      %v4068 = vmul.f32 %v3923, %v3923
      %v4069 = vmul.f32 %v3924, %v3924
      %v4070 = vmul.f32 %v3925, %v3925
      %v4071 = vmul.f32 %v3926, %v3926
      %v4072 = vadd.f32 %v4056, %v4057
      %v4073 = vadd.f32 %v4072, %v4058
      %v4074 = vadd.f32 %v4073, %v4059
      %v4075 = vadd.f32 %v4074, %v4060
      %v4076 = vadd.f32 %v4075, %v4061
      %v4077 = vadd.f32 %v4076, %v4062
      %v4078 = vadd.f32 %v4077, %v4063
      %v4079 = vadd.f32 %v4078, %v4064
      %v4080 = vadd.f32 %v4079, %v4065
      %v4081 = vadd.f32 %v4080, %v4066
      %v4082 = vadd.f32 %v4081, %v4067
      %v4083 = vadd.f32 %v4082, %v4068
      %v4084 = vadd.f32 %v4083, %v4069
      %v4085 = vadd.f32 %v4084, %v4070
      %v4086 = vadd.f32 %v4085, %v4071
      %v4087 = vrot.slane %v4086, 4
      %v4088 = vadd.f32 %v4086, %v4087
      %v4089 = vrot.slane %v4088, 2
      %v4090 = vadd.f32 %v4088, %v4089
      %v4091 = vrot.slane %v4090, 1
      %v4092 = vadd.f32 %v4090, %v4091
      %v4093 = vmul.f32 %v3994, 2.0
      %v4094 = vmul.f32 %v3997, 2.0
      %v4095 = vmul.f32 %v4002, 2.0
      %v4096 = vmul.f32 %v4005, 2.0
      %v4097 = vmul.f32 %v4010, 2.0
      %v4098 = vmul.f32 %v4013, 2.0
      %v4099 = vmul.f32 %v4018, 2.0
      %v4100 = vmul.f32 %v4021, 2.0
      %v4101 = vmul.f32 %v4026, 2.0
      %v4102 = vmul.f32 %v4029, 2.0
      %v4103 = vmul.f32 %v4034, 2.0
      %v4104 = vmul.f32 %v4037, 2.0
      %v4105 = vmul.f32 %v4042, 2.0
      %v4106 = vmul.f32 %v4045, 2.0
      %v4107 = vmul.f32 %v4050, 2.0
      %v4108 = vmul.f32 %v4053, 2.0
      %4109 = vxpose.xlu0.b32.start [1/16] %v4092, 128
      %4110 = vxpose.xlu0.b32.cont [2/16] 0.0, 128
      %4111 = vxpose.xlu0.b32.cont [3/16] 0.0, 128
      %4112 = vxpose.xlu0.b32.cont [4/16] 0.0, 128
      %4113 = vxpose.xlu0.b32.cont [5/16] 0.0, 128
      %4114 = vxpose.xlu0.b32.cont [6/16] 0.0, 128
      %4115 = vxpose.xlu0.b32.cont [7/16] 0.0, 128
      %4116 = vxpose.xlu0.b32.cont [8/16] 0.0, 128
      %4117 = vxpose.xlu0.b32.cont [9/16] 0.0, 128
      %4118 = vxpose.xlu0.b32.cont [10/16] 0.0, 128
      %4119 = vxpose.xlu0.b32.cont [11/16] 0.0, 128
      %4120 = vxpose.xlu0.b32.cont [12/16] 0.0, 128
      %4121 = vxpose.xlu0.b32.cont [13/16] 0.0, 128
      %4122 = vxpose.xlu0.b32.cont [14/16] 0.0, 128
      %4123 = vxpose.xlu0.b32.cont [15/16] 0.0, 128
      %4124 = vxpose.xlu0.b32.end [16/16] 0.0, 128
      %v4125 = vpop.trf.xlu0
      %v4126 = vpop.trf.xlu0
      %v4127 = vpop.trf.xlu0
      %v4128 = vpop.trf.xlu0
      %v4129 = vpop.trf.xlu0
      %v4130 = vpop.trf.xlu0
      %v4131 = vpop.trf.xlu0
      %v4132 = vpop.trf.xlu0
      %v4133 = vpop.trf.xlu0
      %v4134 = vpop.trf.xlu0
      %v4135 = vpop.trf.xlu0
      %v4136 = vpop.trf.xlu0
      %v4137 = vpop.trf.xlu0
      %v4138 = vpop.trf.xlu0
      %v4139 = vpop.trf.xlu0
      %v4140 = vpop.trf.xlu0
      %4142 = vset.pattern.permute.xlu0 0
      %4143 = vperm.xlu0 %4142, %v4125
      %v4144 = vpop.permute.xlu0 %4143
      %4147 = vset.pattern.permute.xlu0 0
      %4148 = vperm.xlu0 %4147, %v4126
      %v4149 = vpop.permute.xlu0 %4148
      %4152 = vset.pattern.permute.xlu0 0
      %4153 = vperm.xlu0 %4152, %v4127
      %v4154 = vpop.permute.xlu0 %4153
      %4157 = vset.pattern.permute.xlu0 0
      %4158 = vperm.xlu0 %4157, %v4128
      %v4159 = vpop.permute.xlu0 %4158
      %4162 = vset.pattern.permute.xlu0 0
      %4163 = vperm.xlu0 %4162, %v4129
      %v4164 = vpop.permute.xlu0 %4163
      %4167 = vset.pattern.permute.xlu0 0
      %4168 = vperm.xlu0 %4167, %v4130
      %v4169 = vpop.permute.xlu0 %4168
      %4172 = vset.pattern.permute.xlu0 0
      %4173 = vperm.xlu0 %4172, %v4131
      %v4174 = vpop.permute.xlu0 %4173
      %4177 = vset.pattern.permute.xlu0 0
      %4178 = vperm.xlu0 %4177, %v4132
      %v4179 = vpop.permute.xlu0 %4178
      %4182 = vset.pattern.permute.xlu0 0
      %4183 = vperm.xlu0 %4182, %v4133
      %v4184 = vpop.permute.xlu0 %4183
      %4187 = vset.pattern.permute.xlu0 0
      %4188 = vperm.xlu0 %4187, %v4134
      %v4189 = vpop.permute.xlu0 %4188
      %4192 = vset.pattern.permute.xlu0 0
      %4193 = vperm.xlu0 %4192, %v4135
      %v4194 = vpop.permute.xlu0 %4193
      %4197 = vset.pattern.permute.xlu0 0
      %4198 = vperm.xlu0 %4197, %v4136
      %v4199 = vpop.permute.xlu0 %4198
      %4202 = vset.pattern.permute.xlu0 0
      %4203 = vperm.xlu0 %4202, %v4137
      %v4204 = vpop.permute.xlu0 %4203
      %4207 = vset.pattern.permute.xlu0 0
      %4208 = vperm.xlu0 %4207, %v4138
      %v4209 = vpop.permute.xlu0 %4208
      %4212 = vset.pattern.permute.xlu0 0
      %4213 = vperm.xlu0 %4212, %v4139
      %v4214 = vpop.permute.xlu0 %4213
      %4217 = vset.pattern.permute.xlu0 0
      %4218 = vperm.xlu0 %4217, %v4140
      %v4219 = vpop.permute.xlu0 %4218
      %v4221 = vsub.f32 %v4093, %v4144
      %v4222 = vsub.f32 %v4094, %v4149
      %v4223 = vsub.f32 %v4095, %v4154
      %v4224 = vsub.f32 %v4096, %v4159
      %v4225 = vsub.f32 %v4097, %v4164
      %v4226 = vsub.f32 %v4098, %v4169
      %v4227 = vsub.f32 %v4099, %v4174
      %v4228 = vsub.f32 %v4100, %v4179
      %v4229 = vsub.f32 %v4101, %v4184
      %v4230 = vsub.f32 %v4102, %v4189
      %v4231 = vsub.f32 %v4103, %v4194
      %v4232 = vsub.f32 %v4104, %v4199
      %v4233 = vsub.f32 %v4105, %v4204
      %v4234 = vsub.f32 %v4106, %v4209
      %v4235 = vsub.f32 %v4107, %v4214
      %v4236 = vsub.f32 %v4108, %v4219
      %4237 = vst [vmem:[#allocation2] sm:$0xff] %v4221
      %4238 = vst [vmem:[#allocation2 + $0x8] sm:$0xff] %v4222
      %4239 = vst [vmem:[#allocation2 + $0x10] sm:$0xff] %v4223
      %4240 = vst [vmem:[#allocation2 + $0x18] sm:$0xff] %v4224
      %4241 = vst [vmem:[#allocation2 + $0x20] sm:$0xff] %v4225
      %4242 = vst [vmem:[#allocation2 + $0x28] sm:$0xff] %v4226
      %4243 = vst [vmem:[#allocation2 + $0x30] sm:$0xff] %v4227
      %4244 = vst [vmem:[#allocation2 + $0x38] sm:$0xff] %v4228
      %4245 = vst [vmem:[#allocation2 + $0x40] sm:$0xff] %v4229
      %4246 = vst [vmem:[#allocation2 + $0x48] sm:$0xff] %v4230
      %4247 = vst [vmem:[#allocation2 + $0x50] sm:$0xff] %v4231
      %4248 = vst [vmem:[#allocation2 + $0x58] sm:$0xff] %v4232
      %4249 = vst [vmem:[#allocation2 + $0x60] sm:$0xff] %v4233
      %4250 = vst [vmem:[#allocation2 + $0x68] sm:$0xff] %v4234
      %4251 = vst [vmem:[#allocation2 + $0x70] sm:$0xff] %v4235
      %4252 = vst [vmem:[#allocation2 + $0x78] sm:$0xff] %v4236
      %v4253 = vld [vmem:[#allocation5 + $0x40] sm:$0xff]
      %v4254 = vld [vmem:[#allocation5 + $0x48] sm:$0xff]
      %v4255 = vld [vmem:[#allocation5 + $0x50] sm:$0xff]
      %v4256 = vld [vmem:[#allocation5 + $0x58] sm:$0xff]
      %v4257 = vld [vmem:[#allocation5 + $0x60] sm:$0xff]
      %v4258 = vld [vmem:[#allocation5 + $0x68] sm:$0xff]
      %v4259 = vld [vmem:[#allocation5 + $0x70] sm:$0xff]
      %v4260 = vld [vmem:[#allocation5 + $0x78] sm:$0xff]
      %v4261 = vld [vmem:[%s10] sm:$0xf]
      %v4262 = vld [vmem:[%s10 + $0x4] sm:$0xf]
      %v4263 = vld [vmem:[%s10 + $0x8] sm:$0xf]
      %v4264 = vld [vmem:[%s10 + $0xc] sm:$0xf]
      %v4265 = vld [vmem:[%s10 + $0x10] sm:$0xf]
      %v4266 = vld [vmem:[%s10 + $0x14] sm:$0xf]
      %v4267 = vld [vmem:[%s10 + $0x18] sm:$0xf]
      %v4268 = vld [vmem:[%s10 + $0x1c] sm:$0xf]
      %v4269 = vld [vmem:[%s10 + $0x20] sm:$0xf]
      %v4270 = vld [vmem:[%s10 + $0x24] sm:$0xf]
      %v4271 = vld [vmem:[%s10 + $0x28] sm:$0xf]
      %v4272 = vld [vmem:[%s10 + $0x2c] sm:$0xf]
      %v4273 = vld [vmem:[%s10 + $0x30] sm:$0xf]
      %v4274 = vld [vmem:[%s10 + $0x34] sm:$0xf]
      %v4275 = vld [vmem:[%s10 + $0x38] sm:$0xf]
      %v4276 = vld [vmem:[%s10 + $0x3c] sm:$0xf]
      %v4277 = vld [vmem:[%s10 + $0x40] sm:$0xf]
      %v4278 = vld [vmem:[%s10 + $0x44] sm:$0xf]
      %v4279 = vld [vmem:[%s10 + $0x48] sm:$0xf]
      %v4280 = vld [vmem:[%s10 + $0x4c] sm:$0xf]
      %v4281 = vld [vmem:[%s10 + $0x50] sm:$0xf]
      %v4282 = vld [vmem:[%s10 + $0x54] sm:$0xf]
      %v4283 = vld [vmem:[%s10 + $0x58] sm:$0xf]
      %v4284 = vld [vmem:[%s10 + $0x5c] sm:$0xf]
      %v4285 = vld [vmem:[%s10 + $0x60] sm:$0xf]
      %v4286 = vld [vmem:[%s10 + $0x64] sm:$0xf]
      %v4287 = vld [vmem:[%s10 + $0x68] sm:$0xf]
      %v4288 = vld [vmem:[%s10 + $0x6c] sm:$0xf]
      %v4289 = vld [vmem:[%s10 + $0x70] sm:$0xf]
      %v4290 = vld [vmem:[%s10 + $0x74] sm:$0xf]
      %v4291 = vld [vmem:[%s10 + $0x78] sm:$0xf]
      %v4292 = vld [vmem:[%s10 + $0x7c] sm:$0xf]
      %v4325 = vunpack.c.l.b16 %v4261
      %v4326 = vunpack.c.l.b16 %v4262
      %v4327 = vunpack.c.l.b16 %v4263
      %v4328 = vunpack.c.l.b16 %v4264
      %v4329 = vunpack.c.l.b16 %v4265
      %v4330 = vunpack.c.l.b16 %v4266
      %v4331 = vunpack.c.l.b16 %v4267
      %v4332 = vunpack.c.l.b16 %v4268
      %v4333 = vunpack.c.l.b16 %v4269
      %v4334 = vunpack.c.l.b16 %v4270
      %v4335 = vunpack.c.l.b16 %v4271
      %v4336 = vunpack.c.l.b16 %v4272
      %v4337 = vunpack.c.l.b16 %v4273
      %v4338 = vunpack.c.l.b16 %v4274
      %v4339 = vunpack.c.l.b16 %v4275
      %v4340 = vunpack.c.l.b16 %v4276
      %v4341 = vunpack.c.l.b16 %v4277
      %v4342 = vunpack.c.l.b16 %v4278
      %v4343 = vunpack.c.l.b16 %v4279
      %v4344 = vunpack.c.l.b16 %v4280
      %v4345 = vunpack.c.l.b16 %v4281
      %v4346 = vunpack.c.l.b16 %v4282
      %v4347 = vunpack.c.l.b16 %v4283
      %v4348 = vunpack.c.l.b16 %v4284
      %v4349 = vunpack.c.l.b16 %v4285
      %v4350 = vunpack.c.l.b16 %v4286
      %v4351 = vunpack.c.l.b16 %v4287
      %v4352 = vunpack.c.l.b16 %v4288
      %v4353 = vunpack.c.l.b16 %v4289
      %v4354 = vunpack.c.l.b16 %v4290
      %v4355 = vunpack.c.l.b16 %v4291
      %v4356 = vunpack.c.l.b16 %v4292
      %v4357 = vpack.c.b16 %v4326, %v4325
      %v4358 = vpack.c.b16 %v4328, %v4327
      %v4359 = vpack.c.b16 %v4330, %v4329
      %v4360 = vpack.c.b16 %v4332, %v4331
      %v4361 = vpack.c.b16 %v4334, %v4333
      %v4362 = vpack.c.b16 %v4336, %v4335
      %v4363 = vpack.c.b16 %v4338, %v4337
      %v4364 = vpack.c.b16 %v4340, %v4339
      %v4365 = vpack.c.b16 %v4342, %v4341
      %v4366 = vpack.c.b16 %v4344, %v4343
      %v4367 = vpack.c.b16 %v4346, %v4345
      %v4368 = vpack.c.b16 %v4348, %v4347
      %v4369 = vpack.c.b16 %v4350, %v4349
      %v4370 = vpack.c.b16 %v4352, %v4351
      %v4371 = vpack.c.b16 %v4354, %v4353
      %v4372 = vpack.c.b16 %v4356, %v4355
      %4389 = vmatprep.subr.bf16.mxu0 0
      %4390 = vmatpush1.bf16.msra.mxu0 %v4253
      %4391 = vmatprep.subr.bf16.mxu0 0
      %4392 = vmatpush1.bf16.msra.mxu0 %v4254
      %4393 = vmatprep.subr.bf16.mxu0 0
      %4394 = vmatpush1.bf16.msra.mxu0 %v4255
      %4395 = vmatprep.subr.bf16.mxu0 0
      %4396 = vmatpush1.bf16.msra.mxu0 %v4256
      %4397 = vmatprep.subr.bf16.mxu0 0
      %4398 = vmatpush1.bf16.msra.mxu0 %v4257
      %4399 = vmatprep.subr.bf16.mxu0 0
      %4400 = vmatpush1.bf16.msra.mxu0 %v4258
      %4401 = vmatprep.subr.bf16.mxu0 0
      %4402 = vmatpush1.bf16.msra.mxu0 %v4259
      %4403 = vmatprep.subr.bf16.mxu0 0
      %4404 = vmatpush1.bf16.msra.mxu0 %v4260
      %4405 = vmatprep.subr.bf16.mxu0 0
      %4406 = vmatpush1.bf16.msra.mxu0 0
      %4407 = vmatprep.subr.bf16.mxu0 0
      %4408 = vmatpush1.bf16.msra.mxu0 0
      %4409 = vmatprep.subr.bf16.mxu0 0
      %4410 = vmatpush1.bf16.msra.mxu0 0
      %4411 = vmatprep.subr.bf16.mxu0 0
      %4412 = vmatpush1.bf16.msra.mxu0 0
      %4413 = vmatprep.subr.bf16.mxu0 0
      %4414 = vmatpush1.bf16.msra.mxu0 0
      %4415 = vmatprep.subr.bf16.mxu0 0
      %4416 = vmatpush1.bf16.msra.mxu0 0
      %4417 = vmatprep.subr.bf16.mxu0 0
      %4418 = vmatpush1.bf16.msra.mxu0 0
      %4419 = vmatprep.subr.bf16.mxu0 0
      %4420 = vmatpush1.bf16.msra.mxu0 0
      %4421 = vmatprep.mubr.bf16.mxu0 0
      %4422 = vmatmul.mubr.bf16.gmra.mrb[0].mxu0 %v4357
      %v4423 = vpop.f32.mrb[0].mxu0
      %v4424 = vadd.f32 0.0, %v4423
      %v4425 = vpop.f32.mrb[0].mxu0
      %v4426 = vpop.f32.mrb[0].mxu0
      %v4427 = vadd.f32 0.0, %v4426
      %v4428 = vpop.f32.mrb[0].mxu0
      %4429 = vmatprep.mubr.bf16.mxu0 0
      %4430 = vmatmul.mubr.bf16.gmra.mrb[0].mxu0 %v4358
      %v4431 = vpop.f32.mrb[0].mxu0
      %v4432 = vadd.f32 0.0, %v4431
      %v4433 = vpop.f32.mrb[0].mxu0
      %v4434 = vpop.f32.mrb[0].mxu0
      %v4435 = vadd.f32 0.0, %v4434
      %v4436 = vpop.f32.mrb[0].mxu0
      %4437 = vmatprep.mubr.bf16.mxu0 0
      %4438 = vmatmul.mubr.bf16.gmra.mrb[0].mxu0 %v4359
      %v4439 = vpop.f32.mrb[0].mxu0
      %v4440 = vadd.f32 0.0, %v4439
      %v4441 = vpop.f32.mrb[0].mxu0
      %v4442 = vpop.f32.mrb[0].mxu0
      %v4443 = vadd.f32 0.0, %v4442
      %v4444 = vpop.f32.mrb[0].mxu0
      %4445 = vmatprep.mubr.bf16.mxu0 0
      %4446 = vmatmul.mubr.bf16.gmra.mrb[0].mxu0 %v4360
      %v4447 = vpop.f32.mrb[0].mxu0
      %v4448 = vadd.f32 0.0, %v4447
      %v4449 = vpop.f32.mrb[0].mxu0
      %v4450 = vpop.f32.mrb[0].mxu0
      %v4451 = vadd.f32 0.0, %v4450
      %v4452 = vpop.f32.mrb[0].mxu0
      %4453 = vmatprep.mubr.bf16.mxu0 0
      %4454 = vmatmul.mubr.bf16.gmra.mrb[0].mxu0 %v4361
      %v4455 = vpop.f32.mrb[0].mxu0
      %v4456 = vadd.f32 0.0, %v4455
      %v4457 = vpop.f32.mrb[0].mxu0
      %v4458 = vpop.f32.mrb[0].mxu0
      %v4459 = vadd.f32 0.0, %v4458
      %v4460 = vpop.f32.mrb[0].mxu0
      %4461 = vmatprep.mubr.bf16.mxu0 0
      %4462 = vmatmul.mubr.bf16.gmra.mrb[0].mxu0 %v4362
      %v4463 = vpop.f32.mrb[0].mxu0
      %v4464 = vadd.f32 0.0, %v4463
      %v4465 = vpop.f32.mrb[0].mxu0
      %v4466 = vpop.f32.mrb[0].mxu0
      %v4467 = vadd.f32 0.0, %v4466
      %v4468 = vpop.f32.mrb[0].mxu0
      %4469 = vmatprep.mubr.bf16.mxu0 0
      %4470 = vmatmul.mubr.bf16.gmra.mrb[0].mxu0 %v4363
      %v4471 = vpop.f32.mrb[0].mxu0
      %v4472 = vadd.f32 0.0, %v4471
      %v4473 = vpop.f32.mrb[0].mxu0
      %v4474 = vpop.f32.mrb[0].mxu0
      %v4475 = vadd.f32 0.0, %v4474
      %v4476 = vpop.f32.mrb[0].mxu0
      %4477 = vmatprep.mubr.bf16.mxu0 0
      %4478 = vmatmul.mubr.bf16.gmra.mrb[0].mxu0 %v4364
      %v4479 = vpop.f32.mrb[0].mxu0
      %v4480 = vadd.f32 0.0, %v4479
      %v4481 = vpop.f32.mrb[0].mxu0
      %v4482 = vpop.f32.mrb[0].mxu0
      %v4483 = vadd.f32 0.0, %v4482
      %v4484 = vpop.f32.mrb[0].mxu0
      %4485 = vmatprep.mubr.bf16.mxu0 0
      %4486 = vmatmul.mubr.bf16.gmra.mrb[0].mxu0 %v4365
      %v4487 = vpop.f32.mrb[0].mxu0
      %v4488 = vadd.f32 0.0, %v4487
      %v4489 = vpop.f32.mrb[0].mxu0
      %v4490 = vpop.f32.mrb[0].mxu0
      %v4491 = vadd.f32 0.0, %v4490
      %v4492 = vpop.f32.mrb[0].mxu0
      %4493 = vmatprep.mubr.bf16.mxu0 0
      %4494 = vmatmul.mubr.bf16.gmra.mrb[0].mxu0 %v4366
      %v4495 = vpop.f32.mrb[0].mxu0
      %v4496 = vadd.f32 0.0, %v4495
      %v4497 = vpop.f32.mrb[0].mxu0
      %v4498 = vpop.f32.mrb[0].mxu0
      %v4499 = vadd.f32 0.0, %v4498
      %v4500 = vpop.f32.mrb[0].mxu0
      %4501 = vmatprep.mubr.bf16.mxu0 0
      %4502 = vmatmul.mubr.bf16.gmra.mrb[0].mxu0 %v4367
      %v4503 = vpop.f32.mrb[0].mxu0
      %v4504 = vadd.f32 0.0, %v4503
      %v4505 = vpop.f32.mrb[0].mxu0
      %v4506 = vpop.f32.mrb[0].mxu0
      %v4507 = vadd.f32 0.0, %v4506
      %v4508 = vpop.f32.mrb[0].mxu0
      %4509 = vmatprep.mubr.bf16.mxu0 0
      %4510 = vmatmul.mubr.bf16.gmra.mrb[0].mxu0 %v4368
      %v4511 = vpop.f32.mrb[0].mxu0
      %v4512 = vadd.f32 0.0, %v4511
      %v4513 = vpop.f32.mrb[0].mxu0
      %v4514 = vpop.f32.mrb[0].mxu0
      %v4515 = vadd.f32 0.0, %v4514
      %v4516 = vpop.f32.mrb[0].mxu0
      %4517 = vmatprep.mubr.bf16.mxu0 0
      %4518 = vmatmul.mubr.bf16.gmra.mrb[0].mxu0 %v4369
      %v4519 = vpop.f32.mrb[0].mxu0
      %v4520 = vadd.f32 0.0, %v4519
      %v4521 = vpop.f32.mrb[0].mxu0
      %v4522 = vpop.f32.mrb[0].mxu0
      %v4523 = vadd.f32 0.0, %v4522
      %v4524 = vpop.f32.mrb[0].mxu0
      %4525 = vmatprep.mubr.bf16.mxu0 0
      %4526 = vmatmul.mubr.bf16.gmra.mrb[0].mxu0 %v4370
      %v4527 = vpop.f32.mrb[0].mxu0
      %v4528 = vadd.f32 0.0, %v4527
      %v4529 = vpop.f32.mrb[0].mxu0
      %v4530 = vpop.f32.mrb[0].mxu0
      %v4531 = vadd.f32 0.0, %v4530
      %v4532 = vpop.f32.mrb[0].mxu0
      %4533 = vmatprep.mubr.bf16.mxu0 0
      %4534 = vmatmul.mubr.bf16.gmra.mrb[0].mxu0 %v4371
      %v4535 = vpop.f32.mrb[0].mxu0
      %v4536 = vadd.f32 0.0, %v4535
      %v4537 = vpop.f32.mrb[0].mxu0
      %v4538 = vpop.f32.mrb[0].mxu0
      %v4539 = vadd.f32 0.0, %v4538
      %v4540 = vpop.f32.mrb[0].mxu0
      %4541 = vmatprep.mubr.bf16.mxu0 0
      %4542 = vmatmul.mubr.bf16.gmra.mrb[0].mxu0 %v4372
      %v4543 = vpop.f32.mrb[0].mxu0
      %v4544 = vadd.f32 0.0, %v4543
      %v4545 = vpop.f32.mrb[0].mxu0
      %v4546 = vpop.f32.mrb[0].mxu0
      %v4547 = vadd.f32 0.0, %v4546
      %v4548 = vpop.f32.mrb[0].mxu0
      %4549 = vdwg.mxu0
      %v4550 = vpack.c.bf16 %v4427, %v4424
      %v4551 = vpack.c.bf16 %v4435, %v4432
      %v4552 = vpack.c.bf16 %v4443, %v4440
      %v4553 = vpack.c.bf16 %v4451, %v4448
      %v4554 = vpack.c.bf16 %v4459, %v4456
      %v4555 = vpack.c.bf16 %v4467, %v4464
      %v4556 = vpack.c.bf16 %v4475, %v4472
      %v4557 = vpack.c.bf16 %v4483, %v4480
      %v4558 = vpack.c.bf16 %v4491, %v4488
      %v4559 = vpack.c.bf16 %v4499, %v4496
      %v4560 = vpack.c.bf16 %v4507, %v4504
      %v4561 = vpack.c.bf16 %v4515, %v4512
      %v4562 = vpack.c.bf16 %v4523, %v4520
      %v4563 = vpack.c.bf16 %v4531, %v4528
      %v4564 = vpack.c.bf16 %v4539, %v4536
      %v4565 = vpack.c.bf16 %v4547, %v4544
      %4566 = vst [vmem:[#allocation4] sm:$0xff] %v4550
      %4567 = vst [vmem:[#allocation4 + $0x8] sm:$0xff] %v4551
      %4568 = vst [vmem:[#allocation4 + $0x10] sm:$0xff] %v4552
      %4569 = vst [vmem:[#allocation4 + $0x18] sm:$0xff] %v4553
      %4570 = vst [vmem:[#allocation4 + $0x20] sm:$0xff] %v4554
      %4571 = vst [vmem:[#allocation4 + $0x28] sm:$0xff] %v4555
      %4572 = vst [vmem:[#allocation4 + $0x30] sm:$0xff] %v4556
      %4573 = vst [vmem:[#allocation4 + $0x38] sm:$0xff] %v4557
      %4574 = vst [vmem:[#allocation4 + $0x40] sm:$0xff] %v4558
      %4575 = vst [vmem:[#allocation4 + $0x48] sm:$0xff] %v4559
      %4576 = vst [vmem:[#allocation4 + $0x50] sm:$0xff] %v4560
      %4577 = vst [vmem:[#allocation4 + $0x58] sm:$0xff] %v4561
      %4578 = vst [vmem:[#allocation4 + $0x60] sm:$0xff] %v4562
      %4579 = vst [vmem:[#allocation4 + $0x68] sm:$0xff] %v4563
      %4580 = vst [vmem:[#allocation4 + $0x70] sm:$0xff] %v4564
      %4581 = vst [vmem:[#allocation4 + $0x78] sm:$0xff] %v4565
      %4582 = vst [vmem:[#allocation3] sm:$0xff] -1e+30
      %4583 = vst [vmem:[#allocation3 + $0x8] sm:$0xff] -1e+30
      %4584 = vst [vmem:[#allocation3 + $0x10] sm:$0xff] -1e+30
      %4585 = vst [vmem:[#allocation3 + $0x18] sm:$0xff] -1e+30
      %4586 = vst [vmem:[#allocation3 + $0x20] sm:$0xff] -1e+30
      %4587 = vst [vmem:[#allocation3 + $0x28] sm:$0xff] -1e+30
      %4588 = vst [vmem:[#allocation3 + $0x30] sm:$0xff] -1e+30
      %4589 = vst [vmem:[#allocation3 + $0x38] sm:$0xff] -1e+30
      %4590 = vst [vmem:[#allocation3 + $0x40] sm:$0xff] -1e+30
      %4591 = vst [vmem:[#allocation3 + $0x48] sm:$0xff] -1e+30
      %4592 = vst [vmem:[#allocation3 + $0x50] sm:$0xff] -1e+30
      %4593 = vst [vmem:[#allocation3 + $0x58] sm:$0xff] -1e+30
      %4594 = vst [vmem:[#allocation3 + $0x60] sm:$0xff] -1e+30
      %4595 = vst [vmem:[#allocation3 + $0x68] sm:$0xff] -1e+30
      %4596 = vst [vmem:[#allocation3 + $0x70] sm:$0xff] -1e+30
      %4597 = vst [vmem:[#allocation3 + $0x78] sm:$0xff] -1e+30
      %4598 = vst [vmem:[#allocation3 + $0x80] sm:$0xff] -1e+30
      %4599 = vst [vmem:[#allocation3 + $0x88] sm:$0xff] -1e+30
      %4600 = vst [vmem:[#allocation3 + $0x90] sm:$0xff] -1e+30
      %4601 = vst [vmem:[#allocation3 + $0x98] sm:$0xff] -1e+30
      %4602 = vst [vmem:[#allocation3 + $0xa0] sm:$0xff] -1e+30
      %4603 = vst [vmem:[#allocation3 + $0xa8] sm:$0xff] -1e+30
      %4604 = vst [vmem:[#allocation3 + $0xb0] sm:$0xff] -1e+30
      %4605 = vst [vmem:[#allocation3 + $0xb8] sm:$0xff] -1e+30
      %4606 = vst [vmem:[#allocation3 + $0xc0] sm:$0xff] -1e+30
      %4607 = vst [vmem:[#allocation3 + $0xc8] sm:$0xff] -1e+30
      %4608 = vst [vmem:[#allocation3 + $0xd0] sm:$0xff] -1e+30
      %4609 = vst [vmem:[#allocation3 + $0xd8] sm:$0xff] -1e+30
      %4610 = vst [vmem:[#allocation3 + $0xe0] sm:$0xff] -1e+30
      %4611 = vst [vmem:[#allocation3 + $0xe8] sm:$0xff] -1e+30
      %4612 = vst [vmem:[#allocation3 + $0xf0] sm:$0xff] -1e+30
      %4613 = vst [vmem:[#allocation3 + $0xf8] sm:$0xff] -1e+30
      loop: start=0, step=1, limit=20
      $region126: #{refine_forward.1} parent=103 // loop_pre_header
        _
      $region127: #{refine_forward.1} parent=103 // loop_header
        %s4615 = sphi 0, %s4619
        %p4616 = scmp.ge.s32.totalorder %s4615, 20
      $region128: #{refine_forward.1} parent=103 // loop_header_branch
        %4618 = sbr.rel (%p4616) target = $region132
      $region129: #{refine_forward.1} parent=103 // loop_body
        %v4620 = vld [vmem:[#allocation2] sm:$0xff]
        %v4621 = vld [vmem:[#allocation2 + $0x8] sm:$0xff]
        %v4622 = vld [vmem:[#allocation2 + $0x10] sm:$0xff]
        %v4623 = vld [vmem:[#allocation2 + $0x18] sm:$0xff]
        %v4624 = vld [vmem:[#allocation2 + $0x20] sm:$0xff]
        %v4625 = vld [vmem:[#allocation2 + $0x28] sm:$0xff]
        %v4626 = vld [vmem:[#allocation2 + $0x30] sm:$0xff]
        %v4627 = vld [vmem:[#allocation2 + $0x38] sm:$0xff]
        %v4628 = vld [vmem:[#allocation2 + $0x40] sm:$0xff]
        %v4629 = vld [vmem:[#allocation2 + $0x48] sm:$0xff]
        %v4630 = vld [vmem:[#allocation2 + $0x50] sm:$0xff]
        %v4631 = vld [vmem:[#allocation2 + $0x58] sm:$0xff]
        %v4632 = vld [vmem:[#allocation2 + $0x60] sm:$0xff]
        %v4633 = vld [vmem:[#allocation2 + $0x68] sm:$0xff]
        %v4634 = vld [vmem:[#allocation2 + $0x70] sm:$0xff]
        %v4635 = vld [vmem:[#allocation2 + $0x78] sm:$0xff]
        %v4636 = vmax.f32 %v4620, %v4624
        %v4637 = vmax.f32 %v4621, %v4625
        %v4638 = vmax.f32 %v4622, %v4626
        %v4639 = vmax.f32 %v4623, %v4627
        %v4640 = vmax.f32 %v4636, %v4628
        %v4641 = vmax.f32 %v4637, %v4629
        %v4642 = vmax.f32 %v4638, %v4630
        %v4643 = vmax.f32 %v4639, %v4631
        %v4644 = vmax.f32 %v4640, %v4632
        %v4645 = vmax.f32 %v4641, %v4633
        %v4646 = vmax.f32 %v4642, %v4634
        %v4647 = vmax.f32 %v4643, %v4635
        %v4648 = vmax.f32 %v4644, %v4645
        %v4649 = vmax.f32 %v4646, %v4647
        %v4650 = vmax.f32 %v4648, %v4649
        %v4651 = vrot.slane %v4650, 4
        %v4652 = vmax.f32 %v4650, %v4651
        %v4653 = vrot.slane %v4652, 2
        %v4654 = vmax.f32 %v4652, %v4653
        %v4655 = vrot.slane %v4654, 1
        %v4656 = vmax.f32 %v4654, %v4655
        %vm4657 = vcmp.eq.f32.partialorder %v4620, %v4656
        %vm4658 = vcmp.eq.f32.partialorder %v4621, %v4656
        %vm4659 = vcmp.eq.f32.partialorder %v4622, %v4656
        %vm4660 = vcmp.eq.f32.partialorder %v4623, %v4656
        %vm4661 = vcmp.eq.f32.partialorder %v4624, %v4656
        %vm4662 = vcmp.eq.f32.partialorder %v4625, %v4656
        %vm4663 = vcmp.eq.f32.partialorder %v4626, %v4656
        %vm4664 = vcmp.eq.f32.partialorder %v4627, %v4656
        %vm4665 = vcmp.eq.f32.partialorder %v4628, %v4656
        %vm4666 = vcmp.eq.f32.partialorder %v4629, %v4656
        %vm4667 = vcmp.eq.f32.partialorder %v4630, %v4656
        %vm4668 = vcmp.eq.f32.partialorder %v4631, %v4656
        %vm4669 = vcmp.eq.f32.partialorder %v4632, %v4656
        %vm4670 = vcmp.eq.f32.partialorder %v4633, %v4656
        %vm4671 = vcmp.eq.f32.partialorder %v4634, %v4656
        %vm4672 = vcmp.eq.f32.partialorder %v4635, %v4656
        %v4673 = vlaneseq
        %v4674 = vshrl.u32 %v4673, 7
        %v4675 = vadd.s32 %v4674, 8
        %v4676 = vadd.s32 %v4674, 16
        %v4677 = vadd.s32 %v4674, 24
        %v4678 = vadd.s32 %v4674, 32
        %v4679 = vadd.s32 %v4674, 40
        %v4680 = vadd.s32 %v4674, 48
        %v4681 = vadd.s32 %v4674, 56
        %v4682 = vadd.s32 %v4674, 64
        %v4683 = vadd.s32 %v4674, 72
        %v4684 = vadd.s32 %v4674, 80
        %v4685 = vadd.s32 %v4674, 88
        %v4686 = vadd.s32 %v4674, 96
        %v4687 = vadd.s32 %v4674, 104
        %v4688 = vadd.s32 %v4674, 112
        %v4689 = vadd.s32 %v4674, 120
        %v4690 = vcvt.s32.f32 %v4674
        %v4691 = vcvt.s32.f32 %v4675
        %v4692 = vcvt.s32.f32 %v4676
        %v4693 = vcvt.s32.f32 %v4677
        %v4694 = vcvt.s32.f32 %v4678
        %v4695 = vcvt.s32.f32 %v4679
        %v4696 = vcvt.s32.f32 %v4680
        %v4697 = vcvt.s32.f32 %v4681
        %v4698 = vcvt.s32.f32 %v4682
        %v4699 = vcvt.s32.f32 %v4683
        %v4700 = vcvt.s32.f32 %v4684
        %v4701 = vcvt.s32.f32 %v4685
        %v4702 = vcvt.s32.f32 %v4686
        %v4703 = vcvt.s32.f32 %v4687
        %v4704 = vcvt.s32.f32 %v4688
        %v4705 = vcvt.s32.f32 %v4689
        %v4706 = vsel %vm4657, %v4690, 128.0
        %v4707 = vsel %vm4658, %v4691, 128.0
        %v4708 = vsel %vm4659, %v4692, 128.0
        %v4709 = vsel %vm4660, %v4693, 128.0
        %v4710 = vsel %vm4661, %v4694, 128.0
        %v4711 = vsel %vm4662, %v4695, 128.0
        %v4712 = vsel %vm4663, %v4696, 128.0
        %v4713 = vsel %vm4664, %v4697, 128.0
        %v4714 = vsel %vm4665, %v4698, 128.0
        %v4715 = vsel %vm4666, %v4699, 128.0
        %v4716 = vsel %vm4667, %v4700, 128.0
        %v4717 = vsel %vm4668, %v4701, 128.0
        %v4718 = vsel %vm4669, %v4702, 128.0
        %v4719 = vsel %vm4670, %v4703, 128.0
        %v4720 = vsel %vm4671, %v4704, 128.0
        %v4721 = vsel %vm4672, %v4705, 128.0
        %v4722 = vmin.f32 %v4706, %v4710
        %v4723 = vmin.f32 %v4707, %v4711
        %v4724 = vmin.f32 %v4708, %v4712
        %v4725 = vmin.f32 %v4709, %v4713
        %v4726 = vmin.f32 %v4722, %v4714
        %v4727 = vmin.f32 %v4723, %v4715
        %v4728 = vmin.f32 %v4724, %v4716
        %v4729 = vmin.f32 %v4725, %v4717
        %v4730 = vmin.f32 %v4726, %v4718
        %v4731 = vmin.f32 %v4727, %v4719
        %v4732 = vmin.f32 %v4728, %v4720
        %v4733 = vmin.f32 %v4729, %v4721
        %v4734 = vmin.f32 %v4730, %v4731
        %v4735 = vmin.f32 %v4732, %v4733
        %v4736 = vmin.f32 %v4734, %v4735
        %v4737 = vrot.slane %v4736, 4
        %v4738 = vmin.f32 %v4736, %v4737
        %v4739 = vrot.slane %v4738, 2
        %v4740 = vmin.f32 %v4738, %v4739
        %v4741 = vrot.slane %v4740, 1
        %v4742 = vmin.f32 %v4740, %v4741
        %vm4743 = vcmp.eq.f32.partialorder %v4690, %v4742
        %vm4744 = vcmp.eq.f32.partialorder %v4691, %v4742
        %vm4745 = vcmp.eq.f32.partialorder %v4692, %v4742
        %vm4746 = vcmp.eq.f32.partialorder %v4693, %v4742
        %vm4747 = vcmp.eq.f32.partialorder %v4694, %v4742
        %vm4748 = vcmp.eq.f32.partialorder %v4695, %v4742
        %vm4749 = vcmp.eq.f32.partialorder %v4696, %v4742
        %vm4750 = vcmp.eq.f32.partialorder %v4697, %v4742
        %vm4751 = vcmp.eq.f32.partialorder %v4698, %v4742
        %vm4752 = vcmp.eq.f32.partialorder %v4699, %v4742
        %vm4753 = vcmp.eq.f32.partialorder %v4700, %v4742
        %vm4754 = vcmp.eq.f32.partialorder %v4701, %v4742
        %vm4755 = vcmp.eq.f32.partialorder %v4702, %v4742
        %vm4756 = vcmp.eq.f32.partialorder %v4703, %v4742
        %vm4757 = vcmp.eq.f32.partialorder %v4704, %v4742
        %vm4758 = vcmp.eq.f32.partialorder %v4705, %v4742
        %v4759 = vsel %vm4743, 1.0, 0.0
        %v4760 = vsel %vm4744, 1.0, 0.0
        %v4761 = vsel %vm4745, 1.0, 0.0
        %v4762 = vsel %vm4746, 1.0, 0.0
        %v4763 = vsel %vm4747, 1.0, 0.0
        %v4764 = vsel %vm4748, 1.0, 0.0
        %v4765 = vsel %vm4749, 1.0, 0.0
        %v4766 = vsel %vm4750, 1.0, 0.0
        %v4767 = vsel %vm4751, 1.0, 0.0
        %v4768 = vsel %vm4752, 1.0, 0.0
        %v4769 = vsel %vm4753, 1.0, 0.0
        %v4770 = vsel %vm4754, 1.0, 0.0
        %v4771 = vsel %vm4755, 1.0, 0.0
        %v4772 = vsel %vm4756, 1.0, 0.0
        %v4773 = vsel %vm4757, 1.0, 0.0
        %v4774 = vsel %vm4758, 1.0, 0.0
        %v4775 = vpack.c.bf16 %v4760, %v4759
        %v4776 = vpack.c.bf16 %v4762, %v4761
        %v4777 = vpack.c.bf16 %v4764, %v4763
        %v4778 = vpack.c.bf16 %v4766, %v4765
        %v4779 = vpack.c.bf16 %v4768, %v4767
        %v4780 = vpack.c.bf16 %v4770, %v4769
        %v4781 = vpack.c.bf16 %v4772, %v4771
        %v4782 = vpack.c.bf16 %v4774, %v4773
        %v4783 = vld [vmem:[#allocation4] sm:$0xff]
        %v4784 = vld [vmem:[#allocation4 + $0x8] sm:$0xff]
        %v4785 = vld [vmem:[#allocation4 + $0x10] sm:$0xff]
        %v4786 = vld [vmem:[#allocation4 + $0x18] sm:$0xff]
        %v4787 = vld [vmem:[#allocation4 + $0x20] sm:$0xff]
        %v4788 = vld [vmem:[#allocation4 + $0x28] sm:$0xff]
        %v4789 = vld [vmem:[#allocation4 + $0x30] sm:$0xff]
        %v4790 = vld [vmem:[#allocation4 + $0x38] sm:$0xff]
        %v4791 = vld [vmem:[#allocation4 + $0x40] sm:$0xff]
        %v4792 = vld [vmem:[#allocation4 + $0x48] sm:$0xff]
        %v4793 = vld [vmem:[#allocation4 + $0x50] sm:$0xff]
        %v4794 = vld [vmem:[#allocation4 + $0x58] sm:$0xff]
        %v4795 = vld [vmem:[#allocation4 + $0x60] sm:$0xff]
        %v4796 = vld [vmem:[#allocation4 + $0x68] sm:$0xff]
        %v4797 = vld [vmem:[#allocation4 + $0x70] sm:$0xff]
        %v4798 = vld [vmem:[#allocation4 + $0x78] sm:$0xff]
        %4799 = vmatprep.subr.bf16.mxu0 0
        %4800 = vmatpush1.bf16.msra.mxu0 %v4775
        %4801 = vmatprep.subr.bf16.mxu0 0
        %4802 = vmatpush1.bf16.msra.mxu0 %v4776
        %4803 = vmatprep.subr.bf16.mxu0 0
        %4804 = vmatpush1.bf16.msra.mxu0 %v4777
        %4805 = vmatprep.subr.bf16.mxu0 0
        %4806 = vmatpush1.bf16.msra.mxu0 %v4778
        %4807 = vmatprep.subr.bf16.mxu0 0
        %4808 = vmatpush1.bf16.msra.mxu0 %v4779
        %4809 = vmatprep.subr.bf16.mxu0 0
        %4810 = vmatpush1.bf16.msra.mxu0 %v4780
        %4811 = vmatprep.subr.bf16.mxu0 0
        %4812 = vmatpush1.bf16.msra.mxu0 %v4781
        %4813 = vmatprep.subr.bf16.mxu0 0
        %4814 = vmatpush1.bf16.msra.mxu0 %v4782
        %4815 = vmatprep.subr.bf16.mxu0 0
        %4816 = vmatpush1.bf16.msra.mxu0 0
        %4817 = vmatprep.subr.bf16.mxu0 0
        %4818 = vmatpush1.bf16.msra.mxu0 0
        %4819 = vmatprep.subr.bf16.mxu0 0
        %4820 = vmatpush1.bf16.msra.mxu0 0
        %4821 = vmatprep.subr.bf16.mxu0 0
        %4822 = vmatpush1.bf16.msra.mxu0 0
        %4823 = vmatprep.subr.bf16.mxu0 0
        %4824 = vmatpush1.bf16.msra.mxu0 0
        %4825 = vmatprep.subr.bf16.mxu0 0
        %4826 = vmatpush1.bf16.msra.mxu0 0
        %4827 = vmatprep.subr.bf16.mxu0 0
        %4828 = vmatpush1.bf16.msra.mxu0 0
        %4829 = vmatprep.subr.bf16.mxu0 0
        %4830 = vmatpush1.bf16.msra.mxu0 0
        %4831 = vmatprep.mubr.bf16.mxu0 0
        %4832 = vmatmul.mubr.bf16.gmra.mrb[0].mxu0 %v4783
        %v4833 = vpop.f32.mrb[0].mxu0
        %v4834 = vadd.f32 0.0, %v4833
        %v4835 = vpop.f32.mrb[0].mxu0
        %v4836 = vpop.f32.mrb[0].mxu0
        %v4837 = vadd.f32 0.0, %v4836
        %v4838 = vpop.f32.mrb[0].mxu0
        %4839 = vmatprep.mubr.bf16.mxu0 0
        %4840 = vmatmul.mubr.bf16.gmra.mrb[0].mxu0 %v4784
        %v4841 = vpop.f32.mrb[0].mxu0
        %v4842 = vadd.f32 0.0, %v4841
        %v4843 = vpop.f32.mrb[0].mxu0
        %v4844 = vpop.f32.mrb[0].mxu0
        %v4845 = vadd.f32 0.0, %v4844
        %v4846 = vpop.f32.mrb[0].mxu0
        %4847 = vmatprep.mubr.bf16.mxu0 0
        %4848 = vmatmul.mubr.bf16.gmra.mrb[0].mxu0 %v4785
        %v4849 = vpop.f32.mrb[0].mxu0
        %v4850 = vadd.f32 0.0, %v4849
        %v4851 = vpop.f32.mrb[0].mxu0
        %v4852 = vpop.f32.mrb[0].mxu0
        %v4853 = vadd.f32 0.0, %v4852
        %v4854 = vpop.f32.mrb[0].mxu0
        %4855 = vmatprep.mubr.bf16.mxu0 0
        %4856 = vmatmul.mubr.bf16.gmra.mrb[0].mxu0 %v4786
        %v4857 = vpop.f32.mrb[0].mxu0
        %v4858 = vadd.f32 0.0, %v4857
        %v4859 = vpop.f32.mrb[0].mxu0
        %v4860 = vpop.f32.mrb[0].mxu0
        %v4861 = vadd.f32 0.0, %v4860
        %v4862 = vpop.f32.mrb[0].mxu0
        %4863 = vmatprep.mubr.bf16.mxu0 0
        %4864 = vmatmul.mubr.bf16.gmra.mrb[0].mxu0 %v4787
        %v4865 = vpop.f32.mrb[0].mxu0
        %v4866 = vadd.f32 0.0, %v4865
        %v4867 = vpop.f32.mrb[0].mxu0
        %v4868 = vpop.f32.mrb[0].mxu0
        %v4869 = vadd.f32 0.0, %v4868
        %v4870 = vpop.f32.mrb[0].mxu0
        %4871 = vmatprep.mubr.bf16.mxu0 0
        %4872 = vmatmul.mubr.bf16.gmra.mrb[0].mxu0 %v4788
        %v4873 = vpop.f32.mrb[0].mxu0
        %v4874 = vadd.f32 0.0, %v4873
        %v4875 = vpop.f32.mrb[0].mxu0
        %v4876 = vpop.f32.mrb[0].mxu0
        %v4877 = vadd.f32 0.0, %v4876
        %v4878 = vpop.f32.mrb[0].mxu0
        %4879 = vmatprep.mubr.bf16.mxu0 0
        %4880 = vmatmul.mubr.bf16.gmra.mrb[0].mxu0 %v4789
        %v4881 = vpop.f32.mrb[0].mxu0
        %v4882 = vadd.f32 0.0, %v4881
        %v4883 = vpop.f32.mrb[0].mxu0
        %v4884 = vpop.f32.mrb[0].mxu0
        %v4885 = vadd.f32 0.0, %v4884
        %v4886 = vpop.f32.mrb[0].mxu0
        %4887 = vmatprep.mubr.bf16.mxu0 0
        %4888 = vmatmul.mubr.bf16.gmra.mrb[0].mxu0 %v4790
        %v4889 = vpop.f32.mrb[0].mxu0
        %v4890 = vadd.f32 0.0, %v4889
        %v4891 = vpop.f32.mrb[0].mxu0
        %v4892 = vpop.f32.mrb[0].mxu0
        %v4893 = vadd.f32 0.0, %v4892
        %v4894 = vpop.f32.mrb[0].mxu0
        %4895 = vmatprep.mubr.bf16.mxu0 0
        %4896 = vmatmul.mubr.bf16.gmra.mrb[0].mxu0 %v4791
        %v4897 = vpop.f32.mrb[0].mxu0
        %v4898 = vadd.f32 0.0, %v4897
        %v4899 = vpop.f32.mrb[0].mxu0
        %v4900 = vpop.f32.mrb[0].mxu0
        %v4901 = vadd.f32 0.0, %v4900
        %v4902 = vpop.f32.mrb[0].mxu0
        %4903 = vmatprep.mubr.bf16.mxu0 0
        %4904 = vmatmul.mubr.bf16.gmra.mrb[0].mxu0 %v4792
        %v4905 = vpop.f32.mrb[0].mxu0
        %v4906 = vadd.f32 0.0, %v4905
        %v4907 = vpop.f32.mrb[0].mxu0
        %v4908 = vpop.f32.mrb[0].mxu0
        %v4909 = vadd.f32 0.0, %v4908
        %v4910 = vpop.f32.mrb[0].mxu0
        %4911 = vmatprep.mubr.bf16.mxu0 0
        %4912 = vmatmul.mubr.bf16.gmra.mrb[0].mxu0 %v4793
        %v4913 = vpop.f32.mrb[0].mxu0
        %v4914 = vadd.f32 0.0, %v4913
        %v4915 = vpop.f32.mrb[0].mxu0
        %v4916 = vpop.f32.mrb[0].mxu0
        %v4917 = vadd.f32 0.0, %v4916
        %v4918 = vpop.f32.mrb[0].mxu0
        %4919 = vmatprep.mubr.bf16.mxu0 0
        %4920 = vmatmul.mubr.bf16.gmra.mrb[0].mxu0 %v4794
        %v4921 = vpop.f32.mrb[0].mxu0
        %v4922 = vadd.f32 0.0, %v4921
        %v4923 = vpop.f32.mrb[0].mxu0
        %v4924 = vpop.f32.mrb[0].mxu0
        %v4925 = vadd.f32 0.0, %v4924
        %v4926 = vpop.f32.mrb[0].mxu0
        %4927 = vmatprep.mubr.bf16.mxu0 0
        %4928 = vmatmul.mubr.bf16.gmra.mrb[0].mxu0 %v4795
        %v4929 = vpop.f32.mrb[0].mxu0
        %v4930 = vadd.f32 0.0, %v4929
        %v4931 = vpop.f32.mrb[0].mxu0
        %v4932 = vpop.f32.mrb[0].mxu0
        %v4933 = vadd.f32 0.0, %v4932
        %v4934 = vpop.f32.mrb[0].mxu0
        %4935 = vmatprep.mubr.bf16.mxu0 0
        %4936 = vmatmul.mubr.bf16.gmra.mrb[0].mxu0 %v4796
        %v4937 = vpop.f32.mrb[0].mxu0
        %v4938 = vadd.f32 0.0, %v4937
        %v4939 = vpop.f32.mrb[0].mxu0
        %v4940 = vpop.f32.mrb[0].mxu0
        %v4941 = vadd.f32 0.0, %v4940
        %v4942 = vpop.f32.mrb[0].mxu0
        %4943 = vmatprep.mubr.bf16.mxu0 0
        %4944 = vmatmul.mubr.bf16.gmra.mrb[0].mxu0 %v4797
        %v4945 = vpop.f32.mrb[0].mxu0
        %v4946 = vadd.f32 0.0, %v4945
        %v4947 = vpop.f32.mrb[0].mxu0
        %v4948 = vpop.f32.mrb[0].mxu0
        %v4949 = vadd.f32 0.0, %v4948
        %v4950 = vpop.f32.mrb[0].mxu0
        %4951 = vmatprep.mubr.bf16.mxu0 0
        %4952 = vmatmul.mubr.bf16.gmra.mrb[0].mxu0 %v4798
        %v4953 = vpop.f32.mrb[0].mxu0
        %v4954 = vadd.f32 0.0, %v4953
        %v4955 = vpop.f32.mrb[0].mxu0
        %v4956 = vpop.f32.mrb[0].mxu0
        %v4957 = vadd.f32 0.0, %v4956
        %v4958 = vpop.f32.mrb[0].mxu0
        %4959 = vdwg.mxu0
        %v4960 = vld [vmem:[#allocation3] sm:$0xff]
        %v4961 = vld [vmem:[#allocation3 + $0x8] sm:$0xff]
        %v4962 = vld [vmem:[#allocation3 + $0x10] sm:$0xff]
        %v4963 = vld [vmem:[#allocation3 + $0x18] sm:$0xff]
        %v4964 = vld [vmem:[#allocation3 + $0x20] sm:$0xff]
        %v4965 = vld [vmem:[#allocation3 + $0x28] sm:$0xff]
        %v4966 = vld [vmem:[#allocation3 + $0x30] sm:$0xff]
        %v4967 = vld [vmem:[#allocation3 + $0x38] sm:$0xff]
        %v4968 = vld [vmem:[#allocation3 + $0x40] sm:$0xff]
        %v4969 = vld [vmem:[#allocation3 + $0x48] sm:$0xff]
        %v4970 = vld [vmem:[#allocation3 + $0x50] sm:$0xff]
        %v4971 = vld [vmem:[#allocation3 + $0x58] sm:$0xff]
        %v4972 = vld [vmem:[#allocation3 + $0x60] sm:$0xff]
        %v4973 = vld [vmem:[#allocation3 + $0x68] sm:$0xff]
        %v4974 = vld [vmem:[#allocation3 + $0x70] sm:$0xff]
        %v4975 = vld [vmem:[#allocation3 + $0x78] sm:$0xff]
        %v4976 = vld [vmem:[#allocation3 + $0x80] sm:$0xff]
        %v4977 = vld [vmem:[#allocation3 + $0x88] sm:$0xff]
        %v4978 = vld [vmem:[#allocation3 + $0x90] sm:$0xff]
        %v4979 = vld [vmem:[#allocation3 + $0x98] sm:$0xff]
        %v4980 = vld [vmem:[#allocation3 + $0xa0] sm:$0xff]
        %v4981 = vld [vmem:[#allocation3 + $0xa8] sm:$0xff]
        %v4982 = vld [vmem:[#allocation3 + $0xb0] sm:$0xff]
        %v4983 = vld [vmem:[#allocation3 + $0xb8] sm:$0xff]
        %v4984 = vld [vmem:[#allocation3 + $0xc0] sm:$0xff]
        %v4985 = vld [vmem:[#allocation3 + $0xc8] sm:$0xff]
        %v4986 = vld [vmem:[#allocation3 + $0xd0] sm:$0xff]
        %v4987 = vld [vmem:[#allocation3 + $0xd8] sm:$0xff]
        %v4988 = vld [vmem:[#allocation3 + $0xe0] sm:$0xff]
        %v4989 = vld [vmem:[#allocation3 + $0xe8] sm:$0xff]
        %v4990 = vld [vmem:[#allocation3 + $0xf0] sm:$0xff]
        %v4991 = vld [vmem:[#allocation3 + $0xf8] sm:$0xff]
        %v4992 = vmax.f32 %v4960, %v4834
        %v4993 = vmax.f32 %v4961, %v4837
        %v4994 = vmax.f32 %v4962, %v4842
        %v4995 = vmax.f32 %v4963, %v4845
        %v4996 = vmax.f32 %v4964, %v4850
        %v4997 = vmax.f32 %v4965, %v4853
        %v4998 = vmax.f32 %v4966, %v4858
        %v4999 = vmax.f32 %v4967, %v4861
        %v5000 = vmax.f32 %v4968, %v4866
        %v5001 = vmax.f32 %v4969, %v4869
        %v5002 = vmax.f32 %v4970, %v4874
        %v5003 = vmax.f32 %v4971, %v4877
        %v5004 = vmax.f32 %v4972, %v4882
        %v5005 = vmax.f32 %v4973, %v4885
        %v5006 = vmax.f32 %v4974, %v4890
        %v5007 = vmax.f32 %v4975, %v4893
        %v5008 = vmax.f32 %v4976, %v4898
        %v5009 = vmax.f32 %v4977, %v4901
        %v5010 = vmax.f32 %v4978, %v4906
        %v5011 = vmax.f32 %v4979, %v4909
        %v5012 = vmax.f32 %v4980, %v4914
        %v5013 = vmax.f32 %v4981, %v4917
        %v5014 = vmax.f32 %v4982, %v4922
        %v5015 = vmax.f32 %v4983, %v4925
        %v5016 = vmax.f32 %v4984, %v4930
        %v5017 = vmax.f32 %v4985, %v4933
        %v5018 = vmax.f32 %v4986, %v4938
        %v5019 = vmax.f32 %v4987, %v4941
        %v5020 = vmax.f32 %v4988, %v4946
        %v5021 = vmax.f32 %v4989, %v4949
        %v5022 = vmax.f32 %v4990, %v4954
        %v5023 = vmax.f32 %v4991, %v4957
        %5024 = vst [vmem:[#allocation3] sm:$0xff] %v4992
        %5025 = vst [vmem:[#allocation3 + $0x8] sm:$0xff] %v4993
        %5026 = vst [vmem:[#allocation3 + $0x10] sm:$0xff] %v4994
        %5027 = vst [vmem:[#allocation3 + $0x18] sm:$0xff] %v4995
        %5028 = vst [vmem:[#allocation3 + $0x20] sm:$0xff] %v4996
        %5029 = vst [vmem:[#allocation3 + $0x28] sm:$0xff] %v4997
        %5030 = vst [vmem:[#allocation3 + $0x30] sm:$0xff] %v4998
        %5031 = vst [vmem:[#allocation3 + $0x38] sm:$0xff] %v4999
        %5032 = vst [vmem:[#allocation3 + $0x40] sm:$0xff] %v5000
        %5033 = vst [vmem:[#allocation3 + $0x48] sm:$0xff] %v5001
        %5034 = vst [vmem:[#allocation3 + $0x50] sm:$0xff] %v5002
        %5035 = vst [vmem:[#allocation3 + $0x58] sm:$0xff] %v5003
        %5036 = vst [vmem:[#allocation3 + $0x60] sm:$0xff] %v5004
        %5037 = vst [vmem:[#allocation3 + $0x68] sm:$0xff] %v5005
        %5038 = vst [vmem:[#allocation3 + $0x70] sm:$0xff] %v5006
        %5039 = vst [vmem:[#allocation3 + $0x78] sm:$0xff] %v5007
        %5040 = vst [vmem:[#allocation3 + $0x80] sm:$0xff] %v5008
        %5041 = vst [vmem:[#allocation3 + $0x88] sm:$0xff] %v5009
        %5042 = vst [vmem:[#allocation3 + $0x90] sm:$0xff] %v5010
        %5043 = vst [vmem:[#allocation3 + $0x98] sm:$0xff] %v5011
        %5044 = vst [vmem:[#allocation3 + $0xa0] sm:$0xff] %v5012
        %5045 = vst [vmem:[#allocation3 + $0xa8] sm:$0xff] %v5013
        %5046 = vst [vmem:[#allocation3 + $0xb0] sm:$0xff] %v5014
        %5047 = vst [vmem:[#allocation3 + $0xb8] sm:$0xff] %v5015
        %5048 = vst [vmem:[#allocation3 + $0xc0] sm:$0xff] %v5016
        %5049 = vst [vmem:[#allocation3 + $0xc8] sm:$0xff] %v5017
        %5050 = vst [vmem:[#allocation3 + $0xd0] sm:$0xff] %v5018
        %5051 = vst [vmem:[#allocation3 + $0xd8] sm:$0xff] %v5019
        %5052 = vst [vmem:[#allocation3 + $0xe0] sm:$0xff] %v5020
        %5053 = vst [vmem:[#allocation3 + $0xe8] sm:$0xff] %v5021
        %5054 = vst [vmem:[#allocation3 + $0xf0] sm:$0xff] %v5022
        %5055 = vst [vmem:[#allocation3 + $0xf8] sm:$0xff] %v5023
        %v5056 = vsel %vm4743, -1e+30, %v4620
        %v5057 = vsel %vm4744, -1e+30, %v4621
        %v5058 = vsel %vm4745, -1e+30, %v4622
        %v5059 = vsel %vm4746, -1e+30, %v4623
        %v5060 = vsel %vm4747, -1e+30, %v4624
        %v5061 = vsel %vm4748, -1e+30, %v4625
        %v5062 = vsel %vm4749, -1e+30, %v4626
        %v5063 = vsel %vm4750, -1e+30, %v4627
        %v5064 = vsel %vm4751, -1e+30, %v4628
        %v5065 = vsel %vm4752, -1e+30, %v4629
        %v5066 = vsel %vm4753, -1e+30, %v4630
        %v5067 = vsel %vm4754, -1e+30, %v4631
        %v5068 = vsel %vm4755, -1e+30, %v4632
        %v5069 = vsel %vm4756, -1e+30, %v4633
        %v5070 = vsel %vm4757, -1e+30, %v4634
        %v5071 = vsel %vm4758, -1e+30, %v4635
        %5072 = vst [vmem:[#allocation2] sm:$0xff] %v5056
        %5073 = vst [vmem:[#allocation2 + $0x8] sm:$0xff] %v5057
        %5074 = vst [vmem:[#allocation2 + $0x10] sm:$0xff] %v5058
        %5075 = vst [vmem:[#allocation2 + $0x18] sm:$0xff] %v5059
        %5076 = vst [vmem:[#allocation2 + $0x20] sm:$0xff] %v5060
        %5077 = vst [vmem:[#allocation2 + $0x28] sm:$0xff] %v5061
        %5078 = vst [vmem:[#allocation2 + $0x30] sm:$0xff] %v5062
        %5079 = vst [vmem:[#allocation2 + $0x38] sm:$0xff] %v5063
        %5080 = vst [vmem:[#allocation2 + $0x40] sm:$0xff] %v5064
        %5081 = vst [vmem:[#allocation2 + $0x48] sm:$0xff] %v5065
        %5082 = vst [vmem:[#allocation2 + $0x50] sm:$0xff] %v5066
        %5083 = vst [vmem:[#allocation2 + $0x58] sm:$0xff] %v5067
        %5084 = vst [vmem:[#allocation2 + $0x60] sm:$0xff] %v5068
        %5085 = vst [vmem:[#allocation2 + $0x68] sm:$0xff] %v5069
        %5086 = vst [vmem:[#allocation2 + $0x70] sm:$0xff] %v5070
        %5087 = vst [vmem:[#allocation2 + $0x78] sm:$0xff] %v5071
      $region130: #{refine_forward.1} parent=103 // loop_footer
        %s4619 = sadd.s32 1, %s4615
      $region131: #{refine_forward.1} parent=103 // loop_footer_branch
        %4614 = sbr.rel target = $region127
      $region132: #{refine_forward.1} parent=103 // loop_exit
        _
      %v5088 = vld [vmem:[%s11] sm:$0xf]
      %v5089 = vld [vmem:[%s11 + $0x4] sm:$0xf]
      %v5090 = vld [vmem:[%s11 + $0x8] sm:$0xf]
      %v5091 = vld [vmem:[%s11 + $0xc] sm:$0xf]
      %v5092 = vld [vmem:[%s11 + $0x10] sm:$0xf]
      %v5093 = vld [vmem:[%s11 + $0x14] sm:$0xf]
      %v5094 = vld [vmem:[%s11 + $0x18] sm:$0xf]
      %v5095 = vld [vmem:[%s11 + $0x1c] sm:$0xf]
      %v5096 = vld [vmem:[%s11 + $0x20] sm:$0xf]
      %v5097 = vld [vmem:[%s11 + $0x24] sm:$0xf]
      %v5098 = vld [vmem:[%s11 + $0x28] sm:$0xf]
      %v5099 = vld [vmem:[%s11 + $0x2c] sm:$0xf]
      %v5100 = vld [vmem:[%s11 + $0x30] sm:$0xf]
      %v5101 = vld [vmem:[%s11 + $0x34] sm:$0xf]
      %v5102 = vld [vmem:[%s11 + $0x38] sm:$0xf]
      %v5103 = vld [vmem:[%s11 + $0x3c] sm:$0xf]
      %v5104 = vld [vmem:[%s11 + $0x40] sm:$0xf]
      %v5105 = vld [vmem:[%s11 + $0x44] sm:$0xf]
      %v5106 = vld [vmem:[%s11 + $0x48] sm:$0xf]
      %v5107 = vld [vmem:[%s11 + $0x4c] sm:$0xf]
      %v5108 = vld [vmem:[%s11 + $0x50] sm:$0xf]
      %v5109 = vld [vmem:[%s11 + $0x54] sm:$0xf]
      %v5110 = vld [vmem:[%s11 + $0x58] sm:$0xf]
      %v5111 = vld [vmem:[%s11 + $0x5c] sm:$0xf]
      %v5112 = vld [vmem:[%s11 + $0x60] sm:$0xf]
      %v5113 = vld [vmem:[%s11 + $0x64] sm:$0xf]
      %v5114 = vld [vmem:[%s11 + $0x68] sm:$0xf]
      %v5115 = vld [vmem:[%s11 + $0x6c] sm:$0xf]
      %v5116 = vld [vmem:[%s11 + $0x70] sm:$0xf]
      %v5117 = vld [vmem:[%s11 + $0x74] sm:$0xf]
      %v5118 = vld [vmem:[%s11 + $0x78] sm:$0xf]
      %v5119 = vld [vmem:[%s11 + $0x7c] sm:$0xf]
      %v5120 = vld [vmem:[#allocation5 + $0x40] sm:$0xff]
      %v5121 = vld [vmem:[#allocation5 + $0x48] sm:$0xff]
      %v5122 = vld [vmem:[#allocation5 + $0x50] sm:$0xff]
      %v5123 = vld [vmem:[#allocation5 + $0x58] sm:$0xff]
      %v5124 = vld [vmem:[#allocation5 + $0x60] sm:$0xff]
      %v5125 = vld [vmem:[#allocation5 + $0x68] sm:$0xff]
      %v5126 = vld [vmem:[#allocation5 + $0x70] sm:$0xff]
      %v5127 = vld [vmem:[#allocation5 + $0x78] sm:$0xff]
      %v5128 = vld [vmem:[%s12] sm:$0xff]
      %v5129 = vld [vmem:[%s12 + $0x8] sm:$0xff]
      %v5130 = vld [vmem:[%s12 + $0x10] sm:$0xff]
      %v5131 = vld [vmem:[%s12 + $0x18] sm:$0xff]
      %v5132 = vld [vmem:[%s12 + $0x20] sm:$0xff]
      %v5133 = vld [vmem:[%s12 + $0x28] sm:$0xff]
      %v5134 = vld [vmem:[%s12 + $0x30] sm:$0xff]
      %v5135 = vld [vmem:[%s12 + $0x38] sm:$0xff]
      %v5136 = vld [vmem:[%s12 + $0x40] sm:$0xff]
      %v5137 = vld [vmem:[%s12 + $0x48] sm:$0xff]
      %v5138 = vld [vmem:[%s12 + $0x50] sm:$0xff]
      %v5139 = vld [vmem:[%s12 + $0x58] sm:$0xff]
      %v5140 = vld [vmem:[%s12 + $0x60] sm:$0xff]
      %v5141 = vld [vmem:[%s12 + $0x68] sm:$0xff]
      %v5142 = vld [vmem:[%s12 + $0x70] sm:$0xff]
      %v5143 = vld [vmem:[%s12 + $0x78] sm:$0xff]
      %v5144 = vld [vmem:[%s12 + $0x80] sm:$0xff]
      %v5145 = vld [vmem:[%s12 + $0x88] sm:$0xff]
      %v5146 = vld [vmem:[%s12 + $0x90] sm:$0xff]
      %v5147 = vld [vmem:[%s12 + $0x98] sm:$0xff]
      %v5148 = vld [vmem:[%s12 + $0xa0] sm:$0xff]
      %v5149 = vld [vmem:[%s12 + $0xa8] sm:$0xff]
      %v5150 = vld [vmem:[%s12 + $0xb0] sm:$0xff]
      %v5151 = vld [vmem:[%s12 + $0xb8] sm:$0xff]
      %v5152 = vld [vmem:[%s12 + $0xc0] sm:$0xff]
      %v5153 = vld [vmem:[%s12 + $0xc8] sm:$0xff]
      %v5154 = vld [vmem:[%s12 + $0xd0] sm:$0xff]
      %v5155 = vld [vmem:[%s12 + $0xd8] sm:$0xff]
      %v5156 = vld [vmem:[%s12 + $0xe0] sm:$0xff]
      %v5157 = vld [vmem:[%s12 + $0xe8] sm:$0xff]
      %v5158 = vld [vmem:[%s12 + $0xf0] sm:$0xff]
      %v5159 = vld [vmem:[%s12 + $0xf8] sm:$0xff]
      %5161 = vset.pattern.permute.xlu0 0
      %5162 = vperm.xlu0 %5161, %v5128
      %v5163 = vpop.permute.xlu0 %5162
      %5166 = vset.pattern.permute.xlu0 0
      %5167 = vperm.xlu0 %5166, %v5129
      %v5168 = vpop.permute.xlu0 %5167
      %5171 = vset.pattern.permute.xlu0 0
      %5172 = vperm.xlu0 %5171, %v5130
      %v5173 = vpop.permute.xlu0 %5172
      %5176 = vset.pattern.permute.xlu0 0
      %5177 = vperm.xlu0 %5176, %v5131
      %v5178 = vpop.permute.xlu0 %5177
      %5181 = vset.pattern.permute.xlu0 0
      %5182 = vperm.xlu0 %5181, %v5132
      %v5183 = vpop.permute.xlu0 %5182
      %5186 = vset.pattern.permute.xlu0 0
      %5187 = vperm.xlu0 %5186, %v5133
      %v5188 = vpop.permute.xlu0 %5187
      %5191 = vset.pattern.permute.xlu0 0
      %5192 = vperm.xlu0 %5191, %v5134
      %v5193 = vpop.permute.xlu0 %5192
      %5196 = vset.pattern.permute.xlu0 0
      %5197 = vperm.xlu0 %5196, %v5135
      %v5198 = vpop.permute.xlu0 %5197
      %5201 = vset.pattern.permute.xlu0 0
      %5202 = vperm.xlu0 %5201, %v5136
      %v5203 = vpop.permute.xlu0 %5202
      %5206 = vset.pattern.permute.xlu0 0
      %5207 = vperm.xlu0 %5206, %v5137
      %v5208 = vpop.permute.xlu0 %5207
      %5211 = vset.pattern.permute.xlu0 0
      %5212 = vperm.xlu0 %5211, %v5138
      %v5213 = vpop.permute.xlu0 %5212
      %5216 = vset.pattern.permute.xlu0 0
      %5217 = vperm.xlu0 %5216, %v5139
      %v5218 = vpop.permute.xlu0 %5217
      %5221 = vset.pattern.permute.xlu0 0
      %5222 = vperm.xlu0 %5221, %v5140
      %v5223 = vpop.permute.xlu0 %5222
      %5226 = vset.pattern.permute.xlu0 0
      %5227 = vperm.xlu0 %5226, %v5141
      %v5228 = vpop.permute.xlu0 %5227
      %5231 = vset.pattern.permute.xlu0 0
      %5232 = vperm.xlu0 %5231, %v5142
      %v5233 = vpop.permute.xlu0 %5232
      %5236 = vset.pattern.permute.xlu0 0
      %5237 = vperm.xlu0 %5236, %v5143
      %v5238 = vpop.permute.xlu0 %5237
      %5241 = vset.pattern.permute.xlu0 0
      %5242 = vperm.xlu0 %5241, %v5144
      %v5243 = vpop.permute.xlu0 %5242
      %5246 = vset.pattern.permute.xlu0 0
      %5247 = vperm.xlu0 %5246, %v5145
      %v5248 = vpop.permute.xlu0 %5247
      %5251 = vset.pattern.permute.xlu0 0
      %5252 = vperm.xlu0 %5251, %v5146
      %v5253 = vpop.permute.xlu0 %5252
      %5256 = vset.pattern.permute.xlu0 0
      %5257 = vperm.xlu0 %5256, %v5147
      %v5258 = vpop.permute.xlu0 %5257
      %5261 = vset.pattern.permute.xlu0 0
      %5262 = vperm.xlu0 %5261, %v5148
      %v5263 = vpop.permute.xlu0 %5262
      %5266 = vset.pattern.permute.xlu0 0
      %5267 = vperm.xlu0 %5266, %v5149
      %v5268 = vpop.permute.xlu0 %5267
      %5271 = vset.pattern.permute.xlu0 0
      %5272 = vperm.xlu0 %5271, %v5150
      %v5273 = vpop.permute.xlu0 %5272
      %5276 = vset.pattern.permute.xlu0 0
      %5277 = vperm.xlu0 %5276, %v5151
      %v5278 = vpop.permute.xlu0 %5277
      %5281 = vset.pattern.permute.xlu0 0
      %5282 = vperm.xlu0 %5281, %v5152
      %v5283 = vpop.permute.xlu0 %5282
      %5286 = vset.pattern.permute.xlu0 0
      %5287 = vperm.xlu0 %5286, %v5153
      %v5288 = vpop.permute.xlu0 %5287
      %5291 = vset.pattern.permute.xlu0 0
      %5292 = vperm.xlu0 %5291, %v5154
      %v5293 = vpop.permute.xlu0 %5292
      %5296 = vset.pattern.permute.xlu0 0
      %5297 = vperm.xlu0 %5296, %v5155
      %v5298 = vpop.permute.xlu0 %5297
      %5301 = vset.pattern.permute.xlu0 0
      %5302 = vperm.xlu0 %5301, %v5156
      %v5303 = vpop.permute.xlu0 %5302
      %5306 = vset.pattern.permute.xlu0 0
      %5307 = vperm.xlu0 %5306, %v5157
      %v5308 = vpop.permute.xlu0 %5307
      %5311 = vset.pattern.permute.xlu0 0
      %5312 = vperm.xlu0 %5311, %v5158
      %v5313 = vpop.permute.xlu0 %5312
      %5316 = vset.pattern.permute.xlu0 0
      %5317 = vperm.xlu0 %5316, %v5159
      %v5318 = vpop.permute.xlu0 %5317
      %v5352 = vunpack.c.l.b16 %v5088
      %v5353 = vunpack.c.l.b16 %v5089
      %v5354 = vunpack.c.l.b16 %v5090
      %v5355 = vunpack.c.l.b16 %v5091
      %v5356 = vunpack.c.l.b16 %v5092
      %v5357 = vunpack.c.l.b16 %v5093
      %v5358 = vunpack.c.l.b16 %v5094
      %v5359 = vunpack.c.l.b16 %v5095
      %v5360 = vunpack.c.l.b16 %v5096
      %v5361 = vunpack.c.l.b16 %v5097
      %v5362 = vunpack.c.l.b16 %v5098
      %v5363 = vunpack.c.l.b16 %v5099
      %v5364 = vunpack.c.l.b16 %v5100
      %v5365 = vunpack.c.l.b16 %v5101
      %v5366 = vunpack.c.l.b16 %v5102
      %v5367 = vunpack.c.l.b16 %v5103
      %v5368 = vunpack.c.l.b16 %v5104
      %v5369 = vunpack.c.l.b16 %v5105
      %v5370 = vunpack.c.l.b16 %v5106
      %v5371 = vunpack.c.l.b16 %v5107
      %v5372 = vunpack.c.l.b16 %v5108
      %v5373 = vunpack.c.l.b16 %v5109
      %v5374 = vunpack.c.l.b16 %v5110
      %v5375 = vunpack.c.l.b16 %v5111
      %v5376 = vunpack.c.l.b16 %v5112
      %v5377 = vunpack.c.l.b16 %v5113
      %v5378 = vunpack.c.l.b16 %v5114
      %v5379 = vunpack.c.l.b16 %v5115
      %v5380 = vunpack.c.l.b16 %v5116
      %v5381 = vunpack.c.l.b16 %v5117
      %v5382 = vunpack.c.l.b16 %v5118
      %v5383 = vunpack.c.l.b16 %v5119
      %v5384 = vpack.c.b16 %v5353, %v5352
      %v5385 = vpack.c.b16 %v5355, %v5354
      %v5386 = vpack.c.b16 %v5357, %v5356
      %v5387 = vpack.c.b16 %v5359, %v5358
      %v5388 = vpack.c.b16 %v5361, %v5360
      %v5389 = vpack.c.b16 %v5363, %v5362
      %v5390 = vpack.c.b16 %v5365, %v5364
      %v5391 = vpack.c.b16 %v5367, %v5366
      %v5392 = vpack.c.b16 %v5369, %v5368
      %v5393 = vpack.c.b16 %v5371, %v5370
      %v5394 = vpack.c.b16 %v5373, %v5372
      %v5395 = vpack.c.b16 %v5375, %v5374
      %v5396 = vpack.c.b16 %v5377, %v5376
      %v5397 = vpack.c.b16 %v5379, %v5378
      %v5398 = vpack.c.b16 %v5381, %v5380
      %v5399 = vpack.c.b16 %v5383, %v5382
      %5416 = vmatprep.subr.bf16.mxu0 0
      %5417 = vmatpush1.bf16.msra.mxu0 %v5120
      %5418 = vmatprep.subr.bf16.mxu0 0
      %5419 = vmatpush1.bf16.msra.mxu0 %v5121
      %5420 = vmatprep.subr.bf16.mxu0 0
      %5421 = vmatpush1.bf16.msra.mxu0 %v5122
      %5422 = vmatprep.subr.bf16.mxu0 0
      %5423 = vmatpush1.bf16.msra.mxu0 %v5123
      %5424 = vmatprep.subr.bf16.mxu0 0
      %5425 = vmatpush1.bf16.msra.mxu0 %v5124
      %5426 = vmatprep.subr.bf16.mxu0 0
      %5427 = vmatpush1.bf16.msra.mxu0 %v5125
      %5428 = vmatprep.subr.bf16.mxu0 0
      %5429 = vmatpush1.bf16.msra.mxu0 %v5126
      %5430 = vmatprep.subr.bf16.mxu0 0
      %5431 = vmatpush1.bf16.msra.mxu0 %v5127
      %5432 = vmatprep.subr.bf16.mxu0 0
      %5433 = vmatpush1.bf16.msra.mxu0 0
      %5434 = vmatprep.subr.bf16.mxu0 0
      %5435 = vmatpush1.bf16.msra.mxu0 0
      %5436 = vmatprep.subr.bf16.mxu0 0
      %5437 = vmatpush1.bf16.msra.mxu0 0
      %5438 = vmatprep.subr.bf16.mxu0 0
      %5439 = vmatpush1.bf16.msra.mxu0 0
      %5440 = vmatprep.subr.bf16.mxu0 0
      %5441 = vmatpush1.bf16.msra.mxu0 0
      %5442 = vmatprep.subr.bf16.mxu0 0
      %5443 = vmatpush1.bf16.msra.mxu0 0
      %5444 = vmatprep.subr.bf16.mxu0 0
      %5445 = vmatpush1.bf16.msra.mxu0 0
      %5446 = vmatprep.subr.bf16.mxu0 0
      %5447 = vmatpush1.bf16.msra.mxu0 0
      %5448 = vmatprep.mubr.bf16.mxu0 0
      %5449 = vmatmul.mubr.bf16.gmra.mrb[0].mxu0 %v5384
      %v5450 = vpop.f32.mrb[0].mxu0
      %v5451 = vadd.f32 %v5163, %v5450
      %v5452 = vpop.f32.mrb[0].mxu0
      %v5453 = vpop.f32.mrb[0].mxu0
      %v5454 = vadd.f32 %v5168, %v5453
      %v5455 = vpop.f32.mrb[0].mxu0
      %5456 = vmatprep.mubr.bf16.mxu0 0
      %5457 = vmatmul.mubr.bf16.gmra.mrb[0].mxu0 %v5385
      %v5458 = vpop.f32.mrb[0].mxu0
      %v5459 = vadd.f32 %v5173, %v5458
      %v5460 = vpop.f32.mrb[0].mxu0
      %v5461 = vpop.f32.mrb[0].mxu0
      %v5462 = vadd.f32 %v5178, %v5461
      %v5463 = vpop.f32.mrb[0].mxu0
      %5464 = vmatprep.mubr.bf16.mxu0 0
      %5465 = vmatmul.mubr.bf16.gmra.mrb[0].mxu0 %v5386
      %v5466 = vpop.f32.mrb[0].mxu0
      %v5467 = vadd.f32 %v5183, %v5466
      %v5468 = vpop.f32.mrb[0].mxu0
      %v5469 = vpop.f32.mrb[0].mxu0
      %v5470 = vadd.f32 %v5188, %v5469
      %v5471 = vpop.f32.mrb[0].mxu0
      %5472 = vmatprep.mubr.bf16.mxu0 0
      %5473 = vmatmul.mubr.bf16.gmra.mrb[0].mxu0 %v5387
      %v5474 = vpop.f32.mrb[0].mxu0
      %v5475 = vadd.f32 %v5193, %v5474
      %v5476 = vpop.f32.mrb[0].mxu0
      %v5477 = vpop.f32.mrb[0].mxu0
      %v5478 = vadd.f32 %v5198, %v5477
      %v5479 = vpop.f32.mrb[0].mxu0
      %5480 = vmatprep.mubr.bf16.mxu0 0
      %5481 = vmatmul.mubr.bf16.gmra.mrb[0].mxu0 %v5388
      %v5482 = vpop.f32.mrb[0].mxu0
      %v5483 = vadd.f32 %v5203, %v5482
      %v5484 = vpop.f32.mrb[0].mxu0
      %v5485 = vpop.f32.mrb[0].mxu0
      %v5486 = vadd.f32 %v5208, %v5485
      %v5487 = vpop.f32.mrb[0].mxu0
      %5488 = vmatprep.mubr.bf16.mxu0 0
      %5489 = vmatmul.mubr.bf16.gmra.mrb[0].mxu0 %v5389
      %v5490 = vpop.f32.mrb[0].mxu0
      %v5491 = vadd.f32 %v5213, %v5490
      %v5492 = vpop.f32.mrb[0].mxu0
      %v5493 = vpop.f32.mrb[0].mxu0
      %v5494 = vadd.f32 %v5218, %v5493
      %v5495 = vpop.f32.mrb[0].mxu0
      %5496 = vmatprep.mubr.bf16.mxu0 0
      %5497 = vmatmul.mubr.bf16.gmra.mrb[0].mxu0 %v5390
      %v5498 = vpop.f32.mrb[0].mxu0
      %v5499 = vadd.f32 %v5223, %v5498
      %v5500 = vpop.f32.mrb[0].mxu0
      %v5501 = vpop.f32.mrb[0].mxu0
      %v5502 = vadd.f32 %v5228, %v5501
      %v5503 = vpop.f32.mrb[0].mxu0
      %5504 = vmatprep.mubr.bf16.mxu0 0
      %5505 = vmatmul.mubr.bf16.gmra.mrb[0].mxu0 %v5391
      %v5506 = vpop.f32.mrb[0].mxu0
      %v5507 = vadd.f32 %v5233, %v5506
      %v5508 = vpop.f32.mrb[0].mxu0
      %v5509 = vpop.f32.mrb[0].mxu0
      %v5510 = vadd.f32 %v5238, %v5509
      %v5511 = vpop.f32.mrb[0].mxu0
      %5512 = vmatprep.mubr.bf16.mxu0 0
      %5513 = vmatmul.mubr.bf16.gmra.mrb[0].mxu0 %v5392
      %v5514 = vpop.f32.mrb[0].mxu0
      %v5515 = vadd.f32 %v5243, %v5514
      %v5516 = vpop.f32.mrb[0].mxu0
      %v5517 = vpop.f32.mrb[0].mxu0
      %v5518 = vadd.f32 %v5248, %v5517
      %v5519 = vpop.f32.mrb[0].mxu0
      %5520 = vmatprep.mubr.bf16.mxu0 0
      %5521 = vmatmul.mubr.bf16.gmra.mrb[0].mxu0 %v5393
      %v5522 = vpop.f32.mrb[0].mxu0
      %v5523 = vadd.f32 %v5253, %v5522
      %v5524 = vpop.f32.mrb[0].mxu0
      %v5525 = vpop.f32.mrb[0].mxu0
      %v5526 = vadd.f32 %v5258, %v5525
      %v5527 = vpop.f32.mrb[0].mxu0
      %5528 = vmatprep.mubr.bf16.mxu0 0
      %5529 = vmatmul.mubr.bf16.gmra.mrb[0].mxu0 %v5394
      %v5530 = vpop.f32.mrb[0].mxu0
      %v5531 = vadd.f32 %v5263, %v5530
      %v5532 = vpop.f32.mrb[0].mxu0
      %v5533 = vpop.f32.mrb[0].mxu0
      %v5534 = vadd.f32 %v5268, %v5533
      %v5535 = vpop.f32.mrb[0].mxu0
      %5536 = vmatprep.mubr.bf16.mxu0 0
      %5537 = vmatmul.mubr.bf16.gmra.mrb[0].mxu0 %v5395
      %v5538 = vpop.f32.mrb[0].mxu0
      %v5539 = vadd.f32 %v5273, %v5538
      %v5540 = vpop.f32.mrb[0].mxu0
      %v5541 = vpop.f32.mrb[0].mxu0
      %v5542 = vadd.f32 %v5278, %v5541
      %v5543 = vpop.f32.mrb[0].mxu0
      %5544 = vmatprep.mubr.bf16.mxu0 0
      %5545 = vmatmul.mubr.bf16.gmra.mrb[0].mxu0 %v5396
      %v5546 = vpop.f32.mrb[0].mxu0
      %v5547 = vadd.f32 %v5283, %v5546
      %v5548 = vpop.f32.mrb[0].mxu0
      %v5549 = vpop.f32.mrb[0].mxu0
      %v5550 = vadd.f32 %v5288, %v5549
      %v5551 = vpop.f32.mrb[0].mxu0
      %5552 = vmatprep.mubr.bf16.mxu0 0
      %5553 = vmatmul.mubr.bf16.gmra.mrb[0].mxu0 %v5397
      %v5554 = vpop.f32.mrb[0].mxu0
      %v5555 = vadd.f32 %v5293, %v5554
      %v5556 = vpop.f32.mrb[0].mxu0
      %v5557 = vpop.f32.mrb[0].mxu0
      %v5558 = vadd.f32 %v5298, %v5557
      %v5559 = vpop.f32.mrb[0].mxu0
      %5560 = vmatprep.mubr.bf16.mxu0 0
      %5561 = vmatmul.mubr.bf16.gmra.mrb[0].mxu0 %v5398
      %v5562 = vpop.f32.mrb[0].mxu0
      %v5563 = vadd.f32 %v5303, %v5562
      %v5564 = vpop.f32.mrb[0].mxu0
      %v5565 = vpop.f32.mrb[0].mxu0
      %v5566 = vadd.f32 %v5308, %v5565
      %v5567 = vpop.f32.mrb[0].mxu0
      %5568 = vmatprep.mubr.bf16.mxu0 0
      %5569 = vmatmul.mubr.bf16.gmra.mrb[0].mxu0 %v5399
      %v5570 = vpop.f32.mrb[0].mxu0
      %v5571 = vadd.f32 %v5313, %v5570
      %v5572 = vpop.f32.mrb[0].mxu0
      %v5573 = vpop.f32.mrb[0].mxu0
      %v5574 = vadd.f32 %v5318, %v5573
      %v5575 = vpop.f32.mrb[0].mxu0
      %5576 = vdwg.mxu0
      %v5577 = vld [vmem:[#allocation3] sm:$0xff]
      %v5578 = vld [vmem:[#allocation3 + $0x8] sm:$0xff]
      %v5579 = vld [vmem:[#allocation3 + $0x10] sm:$0xff]
      %v5580 = vld [vmem:[#allocation3 + $0x18] sm:$0xff]
      %v5581 = vld [vmem:[#allocation3 + $0x20] sm:$0xff]
      %v5582 = vld [vmem:[#allocation3 + $0x28] sm:$0xff]
      %v5583 = vld [vmem:[#allocation3 + $0x30] sm:$0xff]
      %v5584 = vld [vmem:[#allocation3 + $0x38] sm:$0xff]
      %v5585 = vld [vmem:[#allocation3 + $0x40] sm:$0xff]
      %v5586 = vld [vmem:[#allocation3 + $0x48] sm:$0xff]
      %v5587 = vld [vmem:[#allocation3 + $0x50] sm:$0xff]
      %v5588 = vld [vmem:[#allocation3 + $0x58] sm:$0xff]
      %v5589 = vld [vmem:[#allocation3 + $0x60] sm:$0xff]
      %v5590 = vld [vmem:[#allocation3 + $0x68] sm:$0xff]
      %v5591 = vld [vmem:[#allocation3 + $0x70] sm:$0xff]
      %v5592 = vld [vmem:[#allocation3 + $0x78] sm:$0xff]
      %v5593 = vld [vmem:[#allocation3 + $0x80] sm:$0xff]
      %v5594 = vld [vmem:[#allocation3 + $0x88] sm:$0xff]
      %v5595 = vld [vmem:[#allocation3 + $0x90] sm:$0xff]
      %v5596 = vld [vmem:[#allocation3 + $0x98] sm:$0xff]
      %v5597 = vld [vmem:[#allocation3 + $0xa0] sm:$0xff]
      %v5598 = vld [vmem:[#allocation3 + $0xa8] sm:$0xff]
      %v5599 = vld [vmem:[#allocation3 + $0xb0] sm:$0xff]
      %v5600 = vld [vmem:[#allocation3 + $0xb8] sm:$0xff]
      %v5601 = vld [vmem:[#allocation3 + $0xc0] sm:$0xff]
      %v5602 = vld [vmem:[#allocation3 + $0xc8] sm:$0xff]
      %v5603 = vld [vmem:[#allocation3 + $0xd0] sm:$0xff]
      %v5604 = vld [vmem:[#allocation3 + $0xd8] sm:$0xff]
      %v5605 = vld [vmem:[#allocation3 + $0xe0] sm:$0xff]
      %v5606 = vld [vmem:[#allocation3 + $0xe8] sm:$0xff]
      %v5607 = vld [vmem:[#allocation3 + $0xf0] sm:$0xff]
      %v5608 = vld [vmem:[#allocation3 + $0xf8] sm:$0xff]
      %v5609 = vadd.f32 %v5577, %v5451
      %v5610 = vadd.f32 %v5578, %v5454
      %v5611 = vadd.f32 %v5579, %v5459
      %v5612 = vadd.f32 %v5580, %v5462
      %v5613 = vadd.f32 %v5581, %v5467
      %v5614 = vadd.f32 %v5582, %v5470
      %v5615 = vadd.f32 %v5583, %v5475
      %v5616 = vadd.f32 %v5584, %v5478
      %v5617 = vadd.f32 %v5585, %v5483
      %v5618 = vadd.f32 %v5586, %v5486
      %v5619 = vadd.f32 %v5587, %v5491
      %v5620 = vadd.f32 %v5588, %v5494
      %v5621 = vadd.f32 %v5589, %v5499
      %v5622 = vadd.f32 %v5590, %v5502
      %v5623 = vadd.f32 %v5591, %v5507
      %v5624 = vadd.f32 %v5592, %v5510
      %v5625 = vadd.f32 %v5593, %v5515
      %v5626 = vadd.f32 %v5594, %v5518
      %v5627 = vadd.f32 %v5595, %v5523
      %v5628 = vadd.f32 %v5596, %v5526
      %v5629 = vadd.f32 %v5597, %v5531
      %v5630 = vadd.f32 %v5598, %v5534
      %v5631 = vadd.f32 %v5599, %v5539
      %v5632 = vadd.f32 %v5600, %v5542
      %v5633 = vadd.f32 %v5601, %v5547
      %v5634 = vadd.f32 %v5602, %v5550
      %v5635 = vadd.f32 %v5603, %v5555
      %v5636 = vadd.f32 %v5604, %v5558
      %v5637 = vadd.f32 %v5605, %v5563
      %v5638 = vadd.f32 %v5606, %v5566
      %v5639 = vadd.f32 %v5607, %v5571
      %v5640 = vadd.f32 %v5608, %v5574
      %v5641 = vmul.f32 %v5609, 0.2
      %v5642 = vmul.f32 %v5610, 0.2
      %v5643 = vmul.f32 %v5611, 0.2
      %v5644 = vmul.f32 %v5612, 0.2
      %v5645 = vmul.f32 %v5613, 0.2
      %v5646 = vmul.f32 %v5614, 0.2
      %v5647 = vmul.f32 %v5615, 0.2
      %v5648 = vmul.f32 %v5616, 0.2
      %v5649 = vmul.f32 %v5617, 0.2
      %v5650 = vmul.f32 %v5618, 0.2
      %v5651 = vmul.f32 %v5619, 0.2
      %v5652 = vmul.f32 %v5620, 0.2
      %v5653 = vmul.f32 %v5621, 0.2
      %v5654 = vmul.f32 %v5622, 0.2
      %v5655 = vmul.f32 %v5623, 0.2
      %v5656 = vmul.f32 %v5624, 0.2
      %v5657 = vmul.f32 %v5625, 0.2
      %v5658 = vmul.f32 %v5626, 0.2
      %v5659 = vmul.f32 %v5627, 0.2
      %v5660 = vmul.f32 %v5628, 0.2
      %v5661 = vmul.f32 %v5629, 0.2
      %v5662 = vmul.f32 %v5630, 0.2
      %v5663 = vmul.f32 %v5631, 0.2
      %v5664 = vmul.f32 %v5632, 0.2
      %v5665 = vmul.f32 %v5633, 0.2
      %v5666 = vmul.f32 %v5634, 0.2
      %v5667 = vmul.f32 %v5635, 0.2
      %v5668 = vmul.f32 %v5636, 0.2
      %v5669 = vmul.f32 %v5637, 0.2
      %v5670 = vmul.f32 %v5638, 0.2
      %v5671 = vmul.f32 %v5639, 0.2
      %v5672 = vmul.f32 %v5640, 0.2
      %v5673 = vmax.f32 %v5609, %v5641
      %v5674 = vmax.f32 %v5610, %v5642
      %v5675 = vmax.f32 %v5611, %v5643
      %v5676 = vmax.f32 %v5612, %v5644
      %v5677 = vmax.f32 %v5613, %v5645
      %v5678 = vmax.f32 %v5614, %v5646
      %v5679 = vmax.f32 %v5615, %v5647
      %v5680 = vmax.f32 %v5616, %v5648
      %v5681 = vmax.f32 %v5617, %v5649
      %v5682 = vmax.f32 %v5618, %v5650
      %v5683 = vmax.f32 %v5619, %v5651
      %v5684 = vmax.f32 %v5620, %v5652
      %v5685 = vmax.f32 %v5621, %v5653
      %v5686 = vmax.f32 %v5622, %v5654
      %v5687 = vmax.f32 %v5623, %v5655
      %v5688 = vmax.f32 %v5624, %v5656
      %v5689 = vmax.f32 %v5625, %v5657
      %v5690 = vmax.f32 %v5626, %v5658
      %v5691 = vmax.f32 %v5627, %v5659
      %v5692 = vmax.f32 %v5628, %v5660
      %v5693 = vmax.f32 %v5629, %v5661
      %v5694 = vmax.f32 %v5630, %v5662
      %v5695 = vmax.f32 %v5631, %v5663
      %v5696 = vmax.f32 %v5632, %v5664
      %v5697 = vmax.f32 %v5633, %v5665
      %v5698 = vmax.f32 %v5634, %v5666
      %v5699 = vmax.f32 %v5635, %v5667
      %v5700 = vmax.f32 %v5636, %v5668
      %v5701 = vmax.f32 %v5637, %v5669
      %v5702 = vmax.f32 %v5638, %v5670
      %v5703 = vmax.f32 %v5639, %v5671
      %v5704 = vmax.f32 %v5640, %v5672
      %v5705 = vpack.c.bf16 %v5674, %v5673
      %v5706 = vpack.c.bf16 %v5676, %v5675
      %v5707 = vpack.c.bf16 %v5678, %v5677
      %v5708 = vpack.c.bf16 %v5680, %v5679
      %v5709 = vpack.c.bf16 %v5682, %v5681
      %v5710 = vpack.c.bf16 %v5684, %v5683
      %v5711 = vpack.c.bf16 %v5686, %v5685
      %v5712 = vpack.c.bf16 %v5688, %v5687
      %v5713 = vpack.c.bf16 %v5690, %v5689
      %v5714 = vpack.c.bf16 %v5692, %v5691
      %v5715 = vpack.c.bf16 %v5694, %v5693
      %v5716 = vpack.c.bf16 %v5696, %v5695
      %v5717 = vpack.c.bf16 %v5698, %v5697
      %v5718 = vpack.c.bf16 %v5700, %v5699
      %v5719 = vpack.c.bf16 %v5702, %v5701
      %v5720 = vpack.c.bf16 %v5704, %v5703
      %5721 = vst [vmem:[#allocation5 + $0x80] sm:$0xff] %v5705
      %5722 = vst [vmem:[#allocation5 + $0x88] sm:$0xff] %v5706
      %5723 = vst [vmem:[#allocation5 + $0x90] sm:$0xff] %v5707
      %5724 = vst [vmem:[#allocation5 + $0x98] sm:$0xff] %v5708
      %5725 = vst [vmem:[#allocation5 + $0xa0] sm:$0xff] %v5709
      %5726 = vst [vmem:[#allocation5 + $0xa8] sm:$0xff] %v5710
      %5727 = vst [vmem:[#allocation5 + $0xb0] sm:$0xff] %v5711
      %5728 = vst [vmem:[#allocation5 + $0xb8] sm:$0xff] %v5712
      %5729 = vst [vmem:[#allocation5 + $0xc0] sm:$0xff] %v5713
      %5730 = vst [vmem:[#allocation5 + $0xc8] sm:$0xff] %v5714
      %5731 = vst [vmem:[#allocation5 + $0xd0] sm:$0xff] %v5715
      %5732 = vst [vmem:[#allocation5 + $0xd8] sm:$0xff] %v5716
      %5733 = vst [vmem:[#allocation5 + $0xe0] sm:$0xff] %v5717
      %5734 = vst [vmem:[#allocation5 + $0xe8] sm:$0xff] %v5718
      %5735 = vst [vmem:[#allocation5 + $0xf0] sm:$0xff] %v5719
      %5736 = vst [vmem:[#allocation5 + $0xf8] sm:$0xff] %v5720
      %v5737 = vld [vmem:[%s13] sm:$0xff]
      %v5738 = vld [vmem:[%s13 + $0x8] sm:$0xff]
      %v5739 = vld [vmem:[%s13 + $0x10] sm:$0xff]
      %v5740 = vld [vmem:[%s13 + $0x18] sm:$0xff]
      %v5741 = vld [vmem:[%s13 + $0x20] sm:$0xff]
      %v5742 = vld [vmem:[%s13 + $0x28] sm:$0xff]
      %v5743 = vld [vmem:[%s13 + $0x30] sm:$0xff]
      %v5744 = vld [vmem:[%s13 + $0x38] sm:$0xff]
      %v5745 = vld [vmem:[%s13 + $0x40] sm:$0xff]
      %v5746 = vld [vmem:[%s13 + $0x48] sm:$0xff]
      %v5747 = vld [vmem:[%s13 + $0x50] sm:$0xff]
      %v5748 = vld [vmem:[%s13 + $0x58] sm:$0xff]
      %v5749 = vld [vmem:[%s13 + $0x60] sm:$0xff]
      %v5750 = vld [vmem:[%s13 + $0x68] sm:$0xff]
      %v5751 = vld [vmem:[%s13 + $0x70] sm:$0xff]
      %v5752 = vld [vmem:[%s13 + $0x78] sm:$0xff]
      %v5753 = vld [vmem:[%s13 + $0x80] sm:$0xff]
      %v5754 = vld [vmem:[%s13 + $0x88] sm:$0xff]
      %v5755 = vld [vmem:[%s13 + $0x90] sm:$0xff]
      %v5756 = vld [vmem:[%s13 + $0x98] sm:$0xff]
      %v5757 = vld [vmem:[%s13 + $0xa0] sm:$0xff]
      %v5758 = vld [vmem:[%s13 + $0xa8] sm:$0xff]
      %v5759 = vld [vmem:[%s13 + $0xb0] sm:$0xff]
      %v5760 = vld [vmem:[%s13 + $0xb8] sm:$0xff]
      %v5761 = vld [vmem:[%s13 + $0xc0] sm:$0xff]
      %v5762 = vld [vmem:[%s13 + $0xc8] sm:$0xff]
      %v5763 = vld [vmem:[%s13 + $0xd0] sm:$0xff]
      %v5764 = vld [vmem:[%s13 + $0xd8] sm:$0xff]
      %v5765 = vld [vmem:[%s13 + $0xe0] sm:$0xff]
      %v5766 = vld [vmem:[%s13 + $0xe8] sm:$0xff]
      %v5767 = vld [vmem:[%s13 + $0xf0] sm:$0xff]
      %v5768 = vld [vmem:[%s13 + $0xf8] sm:$0xff]
      %v5769 = vld [vmem:[%s13 + $0x100] sm:$0xff]
      %v5770 = vld [vmem:[%s13 + $0x108] sm:$0xff]
      %v5771 = vld [vmem:[%s13 + $0x110] sm:$0xff]
      %v5772 = vld [vmem:[%s13 + $0x118] sm:$0xff]
      %v5773 = vld [vmem:[%s13 + $0x120] sm:$0xff]
      %v5774 = vld [vmem:[%s13 + $0x128] sm:$0xff]
      %v5775 = vld [vmem:[%s13 + $0x130] sm:$0xff]
      %v5776 = vld [vmem:[%s13 + $0x138] sm:$0xff]
      %v5777 = vld [vmem:[%s13 + $0x140] sm:$0xff]
      %v5778 = vld [vmem:[%s13 + $0x148] sm:$0xff]
      %v5779 = vld [vmem:[%s13 + $0x150] sm:$0xff]
      %v5780 = vld [vmem:[%s13 + $0x158] sm:$0xff]
      %v5781 = vld [vmem:[%s13 + $0x160] sm:$0xff]
      %v5782 = vld [vmem:[%s13 + $0x168] sm:$0xff]
      %v5783 = vld [vmem:[%s13 + $0x170] sm:$0xff]
      %v5784 = vld [vmem:[%s13 + $0x178] sm:$0xff]
      %v5785 = vld [vmem:[%s13 + $0x180] sm:$0xff]
      %v5786 = vld [vmem:[%s13 + $0x188] sm:$0xff]
      %v5787 = vld [vmem:[%s13 + $0x190] sm:$0xff]
      %v5788 = vld [vmem:[%s13 + $0x198] sm:$0xff]
      %v5789 = vld [vmem:[%s13 + $0x1a0] sm:$0xff]
      %v5790 = vld [vmem:[%s13 + $0x1a8] sm:$0xff]
      %v5791 = vld [vmem:[%s13 + $0x1b0] sm:$0xff]
      %v5792 = vld [vmem:[%s13 + $0x1b8] sm:$0xff]
      %v5793 = vld [vmem:[%s13 + $0x1c0] sm:$0xff]
      %v5794 = vld [vmem:[%s13 + $0x1c8] sm:$0xff]
      %v5795 = vld [vmem:[%s13 + $0x1d0] sm:$0xff]
      %v5796 = vld [vmem:[%s13 + $0x1d8] sm:$0xff]
      %v5797 = vld [vmem:[%s13 + $0x1e0] sm:$0xff]
      %v5798 = vld [vmem:[%s13 + $0x1e8] sm:$0xff]
      %v5799 = vld [vmem:[%s13 + $0x1f0] sm:$0xff]
      %v5800 = vld [vmem:[%s13 + $0x1f8] sm:$0xff]
      %v5801 = vld [vmem:[#allocation5] sm:$0xff]
      %v5802 = vld [vmem:[#allocation5 + $0x8] sm:$0xff]
      %v5803 = vld [vmem:[#allocation5 + $0x10] sm:$0xff]
      %v5804 = vld [vmem:[#allocation5 + $0x18] sm:$0xff]
      %v5805 = vld [vmem:[#allocation5 + $0x20] sm:$0xff]
      %v5806 = vld [vmem:[#allocation5 + $0x28] sm:$0xff]
      %v5807 = vld [vmem:[#allocation5 + $0x30] sm:$0xff]
      %v5808 = vld [vmem:[#allocation5 + $0x38] sm:$0xff]
      %v5809 = vld [vmem:[#allocation5 + $0x40] sm:$0xff]
      %v5810 = vld [vmem:[#allocation5 + $0x48] sm:$0xff]
      %v5811 = vld [vmem:[#allocation5 + $0x50] sm:$0xff]
      %v5812 = vld [vmem:[#allocation5 + $0x58] sm:$0xff]
      %v5813 = vld [vmem:[#allocation5 + $0x60] sm:$0xff]
      %v5814 = vld [vmem:[#allocation5 + $0x68] sm:$0xff]
      %v5815 = vld [vmem:[#allocation5 + $0x70] sm:$0xff]
      %v5816 = vld [vmem:[#allocation5 + $0x78] sm:$0xff]
      %v5817 = vld [vmem:[#allocation5 + $0x80] sm:$0xff]
      %v5818 = vld [vmem:[#allocation5 + $0x88] sm:$0xff]
      %v5819 = vld [vmem:[#allocation5 + $0x90] sm:$0xff]
      %v5820 = vld [vmem:[#allocation5 + $0x98] sm:$0xff]
      %v5821 = vld [vmem:[#allocation5 + $0xa0] sm:$0xff]
      %v5822 = vld [vmem:[#allocation5 + $0xa8] sm:$0xff]
      %v5823 = vld [vmem:[#allocation5 + $0xb0] sm:$0xff]
      %v5824 = vld [vmem:[#allocation5 + $0xb8] sm:$0xff]
      %v5825 = vld [vmem:[#allocation5 + $0xc0] sm:$0xff]
      %v5826 = vld [vmem:[#allocation5 + $0xc8] sm:$0xff]
      %v5827 = vld [vmem:[#allocation5 + $0xd0] sm:$0xff]
      %v5828 = vld [vmem:[#allocation5 + $0xd8] sm:$0xff]
      %v5829 = vld [vmem:[#allocation5 + $0xe0] sm:$0xff]
      %v5830 = vld [vmem:[#allocation5 + $0xe8] sm:$0xff]
      %v5831 = vld [vmem:[#allocation5 + $0xf0] sm:$0xff]
      %v5832 = vld [vmem:[#allocation5 + $0xf8] sm:$0xff]
      %v5833 = vld [vmem:[%s14] sm:$0xff]
      %v5834 = vld [vmem:[%s14 + $0x8] sm:$0xff]
      %v5835 = vld [vmem:[%s14 + $0x10] sm:$0xff]
      %v5836 = vld [vmem:[%s14 + $0x18] sm:$0xff]
      %v5837 = vld [vmem:[%s14 + $0x20] sm:$0xff]
      %v5838 = vld [vmem:[%s14 + $0x28] sm:$0xff]
      %v5839 = vld [vmem:[%s14 + $0x30] sm:$0xff]
      %v5840 = vld [vmem:[%s14 + $0x38] sm:$0xff]
      %v5841 = vld [vmem:[%s14 + $0x40] sm:$0xff]
      %v5842 = vld [vmem:[%s14 + $0x48] sm:$0xff]
      %v5843 = vld [vmem:[%s14 + $0x50] sm:$0xff]
      %v5844 = vld [vmem:[%s14 + $0x58] sm:$0xff]
      %v5845 = vld [vmem:[%s14 + $0x60] sm:$0xff]
      %v5846 = vld [vmem:[%s14 + $0x68] sm:$0xff]
      %v5847 = vld [vmem:[%s14 + $0x70] sm:$0xff]
      %v5848 = vld [vmem:[%s14 + $0x78] sm:$0xff]
      %v5849 = vld [vmem:[%s14 + $0x80] sm:$0xff]
      %v5850 = vld [vmem:[%s14 + $0x88] sm:$0xff]
      %v5851 = vld [vmem:[%s14 + $0x90] sm:$0xff]
      %v5852 = vld [vmem:[%s14 + $0x98] sm:$0xff]
      %v5853 = vld [vmem:[%s14 + $0xa0] sm:$0xff]
      %v5854 = vld [vmem:[%s14 + $0xa8] sm:$0xff]
      %v5855 = vld [vmem:[%s14 + $0xb0] sm:$0xff]
      %v5856 = vld [vmem:[%s14 + $0xb8] sm:$0xff]
      %v5857 = vld [vmem:[%s14 + $0xc0] sm:$0xff]
      %v5858 = vld [vmem:[%s14 + $0xc8] sm:$0xff]
      %v5859 = vld [vmem:[%s14 + $0xd0] sm:$0xff]
      %v5860 = vld [vmem:[%s14 + $0xd8] sm:$0xff]
      %v5861 = vld [vmem:[%s14 + $0xe0] sm:$0xff]
      %v5862 = vld [vmem:[%s14 + $0xe8] sm:$0xff]
      %v5863 = vld [vmem:[%s14 + $0xf0] sm:$0xff]
      %v5864 = vld [vmem:[%s14 + $0xf8] sm:$0xff]
      %5866 = vset.pattern.permute.xlu0 0
      %5867 = vperm.xlu0 %5866, %v5833
      %v5868 = vpop.permute.xlu0 %5867
      %5871 = vset.pattern.permute.xlu0 0
      %5872 = vperm.xlu0 %5871, %v5834
      %v5873 = vpop.permute.xlu0 %5872
      %5876 = vset.pattern.permute.xlu0 0
      %5877 = vperm.xlu0 %5876, %v5835
      %v5878 = vpop.permute.xlu0 %5877
      %5881 = vset.pattern.permute.xlu0 0
      %5882 = vperm.xlu0 %5881, %v5836
      %v5883 = vpop.permute.xlu0 %5882
      %5886 = vset.pattern.permute.xlu0 0
      %5887 = vperm.xlu0 %5886, %v5837
      %v5888 = vpop.permute.xlu0 %5887
      %5891 = vset.pattern.permute.xlu0 0
      %5892 = vperm.xlu0 %5891, %v5838
      %v5893 = vpop.permute.xlu0 %5892
      %5896 = vset.pattern.permute.xlu0 0
      %5897 = vperm.xlu0 %5896, %v5839
      %v5898 = vpop.permute.xlu0 %5897
      %5901 = vset.pattern.permute.xlu0 0
      %5902 = vperm.xlu0 %5901, %v5840
      %v5903 = vpop.permute.xlu0 %5902
      %5906 = vset.pattern.permute.xlu0 0
      %5907 = vperm.xlu0 %5906, %v5841
      %v5908 = vpop.permute.xlu0 %5907
      %5911 = vset.pattern.permute.xlu0 0
      %5912 = vperm.xlu0 %5911, %v5842
      %v5913 = vpop.permute.xlu0 %5912
      %5916 = vset.pattern.permute.xlu0 0
      %5917 = vperm.xlu0 %5916, %v5843
      %v5918 = vpop.permute.xlu0 %5917
      %5921 = vset.pattern.permute.xlu0 0
      %5922 = vperm.xlu0 %5921, %v5844
      %v5923 = vpop.permute.xlu0 %5922
      %5926 = vset.pattern.permute.xlu0 0
      %5927 = vperm.xlu0 %5926, %v5845
      %v5928 = vpop.permute.xlu0 %5927
      %5931 = vset.pattern.permute.xlu0 0
      %5932 = vperm.xlu0 %5931, %v5846
      %v5933 = vpop.permute.xlu0 %5932
      %5936 = vset.pattern.permute.xlu0 0
      %5937 = vperm.xlu0 %5936, %v5847
      %v5938 = vpop.permute.xlu0 %5937
      %5941 = vset.pattern.permute.xlu0 0
      %5942 = vperm.xlu0 %5941, %v5848
      %v5943 = vpop.permute.xlu0 %5942
      %5946 = vset.pattern.permute.xlu0 0
      %5947 = vperm.xlu0 %5946, %v5849
      %v5948 = vpop.permute.xlu0 %5947
      %5951 = vset.pattern.permute.xlu0 0
      %5952 = vperm.xlu0 %5951, %v5850
      %v5953 = vpop.permute.xlu0 %5952
      %5956 = vset.pattern.permute.xlu0 0
      %5957 = vperm.xlu0 %5956, %v5851
      %v5958 = vpop.permute.xlu0 %5957
      %5961 = vset.pattern.permute.xlu0 0
      %5962 = vperm.xlu0 %5961, %v5852
      %v5963 = vpop.permute.xlu0 %5962
      %5966 = vset.pattern.permute.xlu0 0
      %5967 = vperm.xlu0 %5966, %v5853
      %v5968 = vpop.permute.xlu0 %5967
      %5971 = vset.pattern.permute.xlu0 0
      %5972 = vperm.xlu0 %5971, %v5854
      %v5973 = vpop.permute.xlu0 %5972
      %5976 = vset.pattern.permute.xlu0 0
      %5977 = vperm.xlu0 %5976, %v5855
      %v5978 = vpop.permute.xlu0 %5977
      %5981 = vset.pattern.permute.xlu0 0
      %5982 = vperm.xlu0 %5981, %v5856
      %v5983 = vpop.permute.xlu0 %5982
      %5986 = vset.pattern.permute.xlu0 0
      %5987 = vperm.xlu0 %5986, %v5857
      %v5988 = vpop.permute.xlu0 %5987
      %5991 = vset.pattern.permute.xlu0 0
      %5992 = vperm.xlu0 %5991, %v5858
      %v5993 = vpop.permute.xlu0 %5992
      %5996 = vset.pattern.permute.xlu0 0
      %5997 = vperm.xlu0 %5996, %v5859
      %v5998 = vpop.permute.xlu0 %5997
      %6001 = vset.pattern.permute.xlu0 0
      %6002 = vperm.xlu0 %6001, %v5860
      %v6003 = vpop.permute.xlu0 %6002
      %6006 = vset.pattern.permute.xlu0 0
      %6007 = vperm.xlu0 %6006, %v5861
      %v6008 = vpop.permute.xlu0 %6007
      %6011 = vset.pattern.permute.xlu0 0
      %6012 = vperm.xlu0 %6011, %v5862
      %v6013 = vpop.permute.xlu0 %6012
      %6016 = vset.pattern.permute.xlu0 0
      %6017 = vperm.xlu0 %6016, %v5863
      %v6018 = vpop.permute.xlu0 %6017
      %6021 = vset.pattern.permute.xlu0 0
      %6022 = vperm.xlu0 %6021, %v5864
      %v6023 = vpop.permute.xlu0 %6022
      %v6089 = vunpack.c.l.b16 %v5737
      %v6090 = vunpack.c.h.b16 %v5737
      %v6091 = vunpack.c.l.b16 %v5738
      %v6092 = vunpack.c.h.b16 %v5738
      %v6093 = vunpack.c.l.b16 %v5739
      %v6094 = vunpack.c.h.b16 %v5739
      %v6095 = vunpack.c.l.b16 %v5740
      %v6096 = vunpack.c.h.b16 %v5740
      %v6097 = vunpack.c.l.b16 %v5741
      %v6098 = vunpack.c.h.b16 %v5741
      %v6099 = vunpack.c.l.b16 %v5742
      %v6100 = vunpack.c.h.b16 %v5742
      %v6101 = vunpack.c.l.b16 %v5743
      %v6102 = vunpack.c.h.b16 %v5743
      %v6103 = vunpack.c.l.b16 %v5744
      %v6104 = vunpack.c.h.b16 %v5744
      %v6105 = vunpack.c.l.b16 %v5745
      %v6106 = vunpack.c.h.b16 %v5745
      %v6107 = vunpack.c.l.b16 %v5746
      %v6108 = vunpack.c.h.b16 %v5746
      %v6109 = vunpack.c.l.b16 %v5747
      %v6110 = vunpack.c.h.b16 %v5747
      %v6111 = vunpack.c.l.b16 %v5748
      %v6112 = vunpack.c.h.b16 %v5748
      %v6113 = vunpack.c.l.b16 %v5749
      %v6114 = vunpack.c.h.b16 %v5749
      %v6115 = vunpack.c.l.b16 %v5750
      %v6116 = vunpack.c.h.b16 %v5750
      %v6117 = vunpack.c.l.b16 %v5751
      %v6118 = vunpack.c.h.b16 %v5751
      %v6119 = vunpack.c.l.b16 %v5752
      %v6120 = vunpack.c.h.b16 %v5752
      %v6121 = vunpack.c.l.b16 %v5753
      %v6122 = vunpack.c.h.b16 %v5753
      %v6123 = vunpack.c.l.b16 %v5754
      %v6124 = vunpack.c.h.b16 %v5754
      %v6125 = vunpack.c.l.b16 %v5755
      %v6126 = vunpack.c.h.b16 %v5755
      %v6127 = vunpack.c.l.b16 %v5756
      %v6128 = vunpack.c.h.b16 %v5756
      %v6129 = vunpack.c.l.b16 %v5757
      %v6130 = vunpack.c.h.b16 %v5757
      %v6131 = vunpack.c.l.b16 %v5758
      %v6132 = vunpack.c.h.b16 %v5758
      %v6133 = vunpack.c.l.b16 %v5759
      %v6134 = vunpack.c.h.b16 %v5759
      %v6135 = vunpack.c.l.b16 %v5760
      %v6136 = vunpack.c.h.b16 %v5760
      %v6137 = vunpack.c.l.b16 %v5761
      %v6138 = vunpack.c.h.b16 %v5761
      %v6139 = vunpack.c.l.b16 %v5762
      %v6140 = vunpack.c.h.b16 %v5762
      %v6141 = vunpack.c.l.b16 %v5763
      %v6142 = vunpack.c.h.b16 %v5763
      %v6143 = vunpack.c.l.b16 %v5764
      %v6144 = vunpack.c.h.b16 %v5764
      %v6145 = vunpack.c.l.b16 %v5765
      %v6146 = vunpack.c.h.b16 %v5765
      %v6147 = vunpack.c.l.b16 %v5766
      %v6148 = vunpack.c.h.b16 %v5766
      %v6149 = vunpack.c.l.b16 %v5767
      %v6150 = vunpack.c.h.b16 %v5767
      %v6151 = vunpack.c.l.b16 %v5768
      %v6152 = vunpack.c.h.b16 %v5768
      %v6153 = vunpack.c.l.b16 %v5769
      %v6154 = vunpack.c.h.b16 %v5769
      %v6155 = vunpack.c.l.b16 %v5770
      %v6156 = vunpack.c.h.b16 %v5770
      %v6157 = vunpack.c.l.b16 %v5771
      %v6158 = vunpack.c.h.b16 %v5771
      %v6159 = vunpack.c.l.b16 %v5772
      %v6160 = vunpack.c.h.b16 %v5772
      %v6161 = vunpack.c.l.b16 %v5773
      %v6162 = vunpack.c.h.b16 %v5773
      %v6163 = vunpack.c.l.b16 %v5774
      %v6164 = vunpack.c.h.b16 %v5774
      %v6165 = vunpack.c.l.b16 %v5775
      %v6166 = vunpack.c.h.b16 %v5775
      %v6167 = vunpack.c.l.b16 %v5776
      %v6168 = vunpack.c.h.b16 %v5776
      %v6169 = vunpack.c.l.b16 %v5777
      %v6170 = vunpack.c.h.b16 %v5777
      %v6171 = vunpack.c.l.b16 %v5778
      %v6172 = vunpack.c.h.b16 %v5778
      %v6173 = vunpack.c.l.b16 %v5779
      %v6174 = vunpack.c.h.b16 %v5779
      %v6175 = vunpack.c.l.b16 %v5780
      %v6176 = vunpack.c.h.b16 %v5780
      %v6177 = vunpack.c.l.b16 %v5781
      %v6178 = vunpack.c.h.b16 %v5781
      %v6179 = vunpack.c.l.b16 %v5782
      %v6180 = vunpack.c.h.b16 %v5782
      %v6181 = vunpack.c.l.b16 %v5783
      %v6182 = vunpack.c.h.b16 %v5783
      %v6183 = vunpack.c.l.b16 %v5784
      %v6184 = vunpack.c.h.b16 %v5784
      %v6185 = vunpack.c.l.b16 %v5785
      %v6186 = vunpack.c.h.b16 %v5785
      %v6187 = vunpack.c.l.b16 %v5786
      %v6188 = vunpack.c.h.b16 %v5786
      %v6189 = vunpack.c.l.b16 %v5787
      %v6190 = vunpack.c.h.b16 %v5787
      %v6191 = vunpack.c.l.b16 %v5788
      %v6192 = vunpack.c.h.b16 %v5788
      %v6193 = vunpack.c.l.b16 %v5789
      %v6194 = vunpack.c.h.b16 %v5789
      %v6195 = vunpack.c.l.b16 %v5790
      %v6196 = vunpack.c.h.b16 %v5790
      %v6197 = vunpack.c.l.b16 %v5791
      %v6198 = vunpack.c.h.b16 %v5791
      %v6199 = vunpack.c.l.b16 %v5792
      %v6200 = vunpack.c.h.b16 %v5792
      %v6201 = vunpack.c.l.b16 %v5793
      %v6202 = vunpack.c.h.b16 %v5793
      %v6203 = vunpack.c.l.b16 %v5794
      %v6204 = vunpack.c.h.b16 %v5794
      %v6205 = vunpack.c.l.b16 %v5795
      %v6206 = vunpack.c.h.b16 %v5795
      %v6207 = vunpack.c.l.b16 %v5796
      %v6208 = vunpack.c.h.b16 %v5796
      %v6209 = vunpack.c.l.b16 %v5797
      %v6210 = vunpack.c.h.b16 %v5797
      %v6211 = vunpack.c.l.b16 %v5798
      %v6212 = vunpack.c.h.b16 %v5798
      %v6213 = vunpack.c.l.b16 %v5799
      %v6214 = vunpack.c.h.b16 %v5799
      %v6215 = vunpack.c.l.b16 %v5800
      %v6216 = vunpack.c.h.b16 %v5800
      %v6217 = vpack.c.b16 %v6093, %v6089
      %v6218 = vpack.c.b16 %v6094, %v6090
      %v6219 = vpack.c.b16 %v6095, %v6091
      %v6220 = vpack.c.b16 %v6096, %v6092
      %v6221 = vpack.c.b16 %v6101, %v6097
      %v6222 = vpack.c.b16 %v6102, %v6098
      %v6223 = vpack.c.b16 %v6103, %v6099
      %v6224 = vpack.c.b16 %v6104, %v6100
      %v6225 = vpack.c.b16 %v6109, %v6105
      %v6226 = vpack.c.b16 %v6110, %v6106
      %v6227 = vpack.c.b16 %v6111, %v6107
      %v6228 = vpack.c.b16 %v6112, %v6108
      %v6229 = vpack.c.b16 %v6117, %v6113
      %v6230 = vpack.c.b16 %v6118, %v6114
      %v6231 = vpack.c.b16 %v6119, %v6115
      %v6232 = vpack.c.b16 %v6120, %v6116
      %v6233 = vpack.c.b16 %v6125, %v6121
      %v6234 = vpack.c.b16 %v6126, %v6122
      %v6235 = vpack.c.b16 %v6127, %v6123
      %v6236 = vpack.c.b16 %v6128, %v6124
      %v6237 = vpack.c.b16 %v6133, %v6129
      %v6238 = vpack.c.b16 %v6134, %v6130
      %v6239 = vpack.c.b16 %v6135, %v6131
      %v6240 = vpack.c.b16 %v6136, %v6132
      %v6241 = vpack.c.b16 %v6141, %v6137
      %v6242 = vpack.c.b16 %v6142, %v6138
      %v6243 = vpack.c.b16 %v6143, %v6139
      %v6244 = vpack.c.b16 %v6144, %v6140
      %v6245 = vpack.c.b16 %v6149, %v6145
      %v6246 = vpack.c.b16 %v6150, %v6146
      %v6247 = vpack.c.b16 %v6151, %v6147
      %v6248 = vpack.c.b16 %v6152, %v6148
      %v6249 = vpack.c.b16 %v6157, %v6153
      %v6250 = vpack.c.b16 %v6158, %v6154
      %v6251 = vpack.c.b16 %v6159, %v6155
      %v6252 = vpack.c.b16 %v6160, %v6156
      %v6253 = vpack.c.b16 %v6165, %v6161
      %v6254 = vpack.c.b16 %v6166, %v6162
      %v6255 = vpack.c.b16 %v6167, %v6163
      %v6256 = vpack.c.b16 %v6168, %v6164
      %v6257 = vpack.c.b16 %v6173, %v6169
      %v6258 = vpack.c.b16 %v6174, %v6170
      %v6259 = vpack.c.b16 %v6175, %v6171
      %v6260 = vpack.c.b16 %v6176, %v6172
      %v6261 = vpack.c.b16 %v6181, %v6177
      %v6262 = vpack.c.b16 %v6182, %v6178
      %v6263 = vpack.c.b16 %v6183, %v6179
      %v6264 = vpack.c.b16 %v6184, %v6180
      %v6265 = vpack.c.b16 %v6189, %v6185
      %v6266 = vpack.c.b16 %v6190, %v6186
      %v6267 = vpack.c.b16 %v6191, %v6187
      %v6268 = vpack.c.b16 %v6192, %v6188
      %v6269 = vpack.c.b16 %v6197, %v6193
      %v6270 = vpack.c.b16 %v6198, %v6194
      %v6271 = vpack.c.b16 %v6199, %v6195
      %v6272 = vpack.c.b16 %v6200, %v6196
      %v6273 = vpack.c.b16 %v6205, %v6201
      %v6274 = vpack.c.b16 %v6206, %v6202
      %v6275 = vpack.c.b16 %v6207, %v6203
      %v6276 = vpack.c.b16 %v6208, %v6204
      %v6277 = vpack.c.b16 %v6213, %v6209
      %v6278 = vpack.c.b16 %v6214, %v6210
      %v6279 = vpack.c.b16 %v6215, %v6211
      %v6280 = vpack.c.b16 %v6216, %v6212
      %6345 = vmatprep.subr.bf16.mxu0 0
      %6346 = vmatpush1.bf16.msra.mxu0 %v5801
      %6347 = vmatprep.subr.bf16.mxu0 0
      %6348 = vmatpush1.bf16.msra.mxu0 %v5802
      %6349 = vmatprep.subr.bf16.mxu0 0
      %6350 = vmatpush1.bf16.msra.mxu0 %v5803
      %6351 = vmatprep.subr.bf16.mxu0 0
      %6352 = vmatpush1.bf16.msra.mxu0 %v5804
      %6353 = vmatprep.subr.bf16.mxu0 0
      %6354 = vmatpush1.bf16.msra.mxu0 %v5805
      %6355 = vmatprep.subr.bf16.mxu0 0
      %6356 = vmatpush1.bf16.msra.mxu0 %v5806
      %6357 = vmatprep.subr.bf16.mxu0 0
      %6358 = vmatpush1.bf16.msra.mxu0 %v5807
      %6359 = vmatprep.subr.bf16.mxu0 0
      %6360 = vmatpush1.bf16.msra.mxu0 %v5808
      %6361 = vmatprep.subr.bf16.mxu0 0
      %6362 = vmatpush1.bf16.msra.mxu0 %v5809
      %6363 = vmatprep.subr.bf16.mxu0 0
      %6364 = vmatpush1.bf16.msra.mxu0 %v5810
      %6365 = vmatprep.subr.bf16.mxu0 0
      %6366 = vmatpush1.bf16.msra.mxu0 %v5811
      %6367 = vmatprep.subr.bf16.mxu0 0
      %6368 = vmatpush1.bf16.msra.mxu0 %v5812
      %6369 = vmatprep.subr.bf16.mxu0 0
      %6370 = vmatpush1.bf16.msra.mxu0 %v5813
      %6371 = vmatprep.subr.bf16.mxu0 0
      %6372 = vmatpush1.bf16.msra.mxu0 %v5814
      %6373 = vmatprep.subr.bf16.mxu0 0
      %6374 = vmatpush1.bf16.msra.mxu0 %v5815
      %6375 = vmatprep.subr.bf16.mxu0 0
      %6376 = vmatpush1.bf16.msra.mxu0 %v5816
      %6377 = vmatprep.mubr.bf16.mxu0 %v6218
      %6378 = vmatmul.mubr.bf16.gmra.mrb[0].mxu0 %v6217
      %v6379 = vpop.f32.mrb[0].mxu0
      %v6380 = vadd.f32 %v5868, %v6379
      %v6381 = vpop.f32.mrb[0].mxu0
      %v6382 = vpop.f32.mrb[0].mxu0
      %v6383 = vadd.f32 %v5873, %v6382
      %v6384 = vpop.f32.mrb[0].mxu0
      %6385 = vmatprep.mubr.bf16.mxu0 %v6222
      %6386 = vmatmul.mubr.bf16.gmra.mrb[0].mxu0 %v6221
      %v6387 = vpop.f32.mrb[0].mxu0
      %v6388 = vadd.f32 %v5878, %v6387
      %v6389 = vpop.f32.mrb[0].mxu0
      %v6390 = vpop.f32.mrb[0].mxu0
      %v6391 = vadd.f32 %v5883, %v6390
      %v6392 = vpop.f32.mrb[0].mxu0
      %6393 = vmatprep.mubr.bf16.mxu0 %v6226
      %6394 = vmatmul.mubr.bf16.gmra.mrb[0].mxu0 %v6225
      %v6395 = vpop.f32.mrb[0].mxu0
      %v6396 = vadd.f32 %v5888, %v6395
      %v6397 = vpop.f32.mrb[0].mxu0
      %v6398 = vpop.f32.mrb[0].mxu0
      %v6399 = vadd.f32 %v5893, %v6398
      %v6400 = vpop.f32.mrb[0].mxu0
      %6401 = vmatprep.mubr.bf16.mxu0 %v6230
      %6402 = vmatmul.mubr.bf16.gmra.mrb[0].mxu0 %v6229
      %v6403 = vpop.f32.mrb[0].mxu0
      %v6404 = vadd.f32 %v5898, %v6403
      %v6405 = vpop.f32.mrb[0].mxu0
      %v6406 = vpop.f32.mrb[0].mxu0
      %v6407 = vadd.f32 %v5903, %v6406
      %v6408 = vpop.f32.mrb[0].mxu0
      %6409 = vmatprep.mubr.bf16.mxu0 %v6234
      %6410 = vmatmul.mubr.bf16.gmra.mrb[0].mxu0 %v6233
      %v6411 = vpop.f32.mrb[0].mxu0
      %v6412 = vadd.f32 %v5908, %v6411
      %v6413 = vpop.f32.mrb[0].mxu0
      %v6414 = vpop.f32.mrb[0].mxu0
      %v6415 = vadd.f32 %v5913, %v6414
      %v6416 = vpop.f32.mrb[0].mxu0
      %6417 = vmatprep.mubr.bf16.mxu0 %v6238
      %6418 = vmatmul.mubr.bf16.gmra.mrb[0].mxu0 %v6237
      %v6419 = vpop.f32.mrb[0].mxu0
      %v6420 = vadd.f32 %v5918, %v6419
      %v6421 = vpop.f32.mrb[0].mxu0
      %v6422 = vpop.f32.mrb[0].mxu0
      %v6423 = vadd.f32 %v5923, %v6422
      %v6424 = vpop.f32.mrb[0].mxu0
      %6425 = vmatprep.mubr.bf16.mxu0 %v6242
      %6426 = vmatmul.mubr.bf16.gmra.mrb[0].mxu0 %v6241
      %v6427 = vpop.f32.mrb[0].mxu0
      %v6428 = vadd.f32 %v5928, %v6427
      %v6429 = vpop.f32.mrb[0].mxu0
      %v6430 = vpop.f32.mrb[0].mxu0
      %v6431 = vadd.f32 %v5933, %v6430
      %v6432 = vpop.f32.mrb[0].mxu0
      %6433 = vmatprep.mubr.bf16.mxu0 %v6246
      %6434 = vmatmul.mubr.bf16.gmra.mrb[0].mxu0 %v6245
      %v6435 = vpop.f32.mrb[0].mxu0
      %v6436 = vadd.f32 %v5938, %v6435
      %v6437 = vpop.f32.mrb[0].mxu0
      %v6438 = vpop.f32.mrb[0].mxu0
      %v6439 = vadd.f32 %v5943, %v6438
      %v6440 = vpop.f32.mrb[0].mxu0
      %6441 = vmatprep.mubr.bf16.mxu0 %v6250
      %6442 = vmatmul.mubr.bf16.gmra.mrb[0].mxu0 %v6249
      %v6443 = vpop.f32.mrb[0].mxu0
      %v6444 = vadd.f32 %v5948, %v6443
      %v6445 = vpop.f32.mrb[0].mxu0
      %v6446 = vpop.f32.mrb[0].mxu0
      %v6447 = vadd.f32 %v5953, %v6446
      %v6448 = vpop.f32.mrb[0].mxu0
      %6449 = vmatprep.mubr.bf16.mxu0 %v6254
      %6450 = vmatmul.mubr.bf16.gmra.mrb[0].mxu0 %v6253
      %v6451 = vpop.f32.mrb[0].mxu0
      %v6452 = vadd.f32 %v5958, %v6451
      %v6453 = vpop.f32.mrb[0].mxu0
      %v6454 = vpop.f32.mrb[0].mxu0
      %v6455 = vadd.f32 %v5963, %v6454
      %v6456 = vpop.f32.mrb[0].mxu0
      %6457 = vmatprep.mubr.bf16.mxu0 %v6258
      %6458 = vmatmul.mubr.bf16.gmra.mrb[0].mxu0 %v6257
      %v6459 = vpop.f32.mrb[0].mxu0
      %v6460 = vadd.f32 %v5968, %v6459
      %v6461 = vpop.f32.mrb[0].mxu0
      %v6462 = vpop.f32.mrb[0].mxu0
      %v6463 = vadd.f32 %v5973, %v6462
      %v6464 = vpop.f32.mrb[0].mxu0
      %6465 = vmatprep.mubr.bf16.mxu0 %v6262
      %6466 = vmatmul.mubr.bf16.gmra.mrb[0].mxu0 %v6261
      %v6467 = vpop.f32.mrb[0].mxu0
      %v6468 = vadd.f32 %v5978, %v6467
      %v6469 = vpop.f32.mrb[0].mxu0
      %v6470 = vpop.f32.mrb[0].mxu0
      %v6471 = vadd.f32 %v5983, %v6470
      %v6472 = vpop.f32.mrb[0].mxu0
      %6473 = vmatprep.mubr.bf16.mxu0 %v6266
      %6474 = vmatmul.mubr.bf16.gmra.mrb[0].mxu0 %v6265
      %v6475 = vpop.f32.mrb[0].mxu0
      %v6476 = vadd.f32 %v5988, %v6475
      %v6477 = vpop.f32.mrb[0].mxu0
      %v6478 = vpop.f32.mrb[0].mxu0
      %v6479 = vadd.f32 %v5993, %v6478
      %v6480 = vpop.f32.mrb[0].mxu0
      %6481 = vmatprep.mubr.bf16.mxu0 %v6270
      %6482 = vmatmul.mubr.bf16.gmra.mrb[0].mxu0 %v6269
      %v6483 = vpop.f32.mrb[0].mxu0
      %v6484 = vadd.f32 %v5998, %v6483
      %v6485 = vpop.f32.mrb[0].mxu0
      %v6486 = vpop.f32.mrb[0].mxu0
      %v6487 = vadd.f32 %v6003, %v6486
      %v6488 = vpop.f32.mrb[0].mxu0
      %6489 = vmatprep.mubr.bf16.mxu0 %v6274
      %6490 = vmatmul.mubr.bf16.gmra.mrb[0].mxu0 %v6273
      %v6491 = vpop.f32.mrb[0].mxu0
      %v6492 = vadd.f32 %v6008, %v6491
      %v6493 = vpop.f32.mrb[0].mxu0
      %v6494 = vpop.f32.mrb[0].mxu0
      %v6495 = vadd.f32 %v6013, %v6494
      %v6496 = vpop.f32.mrb[0].mxu0
      %6497 = vmatprep.mubr.bf16.mxu0 %v6278
      %6498 = vmatmul.mubr.bf16.gmra.mrb[0].mxu0 %v6277
      %v6499 = vpop.f32.mrb[0].mxu0
      %v6500 = vadd.f32 %v6018, %v6499
      %v6501 = vpop.f32.mrb[0].mxu0
      %v6502 = vpop.f32.mrb[0].mxu0
      %v6503 = vadd.f32 %v6023, %v6502
      %v6504 = vpop.f32.mrb[0].mxu0
      %6505 = vdwg.mxu0
      %6506 = vmatprep.subr.bf16.mxu0 0
      %6507 = vmatpush1.bf16.msra.mxu0 %v5817
      %6508 = vmatprep.subr.bf16.mxu0 0
      %6509 = vmatpush1.bf16.msra.mxu0 %v5818
      %6510 = vmatprep.subr.bf16.mxu0 0
      %6511 = vmatpush1.bf16.msra.mxu0 %v5819
      %6512 = vmatprep.subr.bf16.mxu0 0
      %6513 = vmatpush1.bf16.msra.mxu0 %v5820
      %6514 = vmatprep.subr.bf16.mxu0 0
      %6515 = vmatpush1.bf16.msra.mxu0 %v5821
      %6516 = vmatprep.subr.bf16.mxu0 0
      %6517 = vmatpush1.bf16.msra.mxu0 %v5822
      %6518 = vmatprep.subr.bf16.mxu0 0
      %6519 = vmatpush1.bf16.msra.mxu0 %v5823
      %6520 = vmatprep.subr.bf16.mxu0 0
      %6521 = vmatpush1.bf16.msra.mxu0 %v5824
      %6522 = vmatprep.subr.bf16.mxu0 0
      %6523 = vmatpush1.bf16.msra.mxu0 %v5825
      %6524 = vmatprep.subr.bf16.mxu0 0
      %6525 = vmatpush1.bf16.msra.mxu0 %v5826
      %6526 = vmatprep.subr.bf16.mxu0 0
      %6527 = vmatpush1.bf16.msra.mxu0 %v5827
      %6528 = vmatprep.subr.bf16.mxu0 0
      %6529 = vmatpush1.bf16.msra.mxu0 %v5828
      %6530 = vmatprep.subr.bf16.mxu0 0
      %6531 = vmatpush1.bf16.msra.mxu0 %v5829
      %6532 = vmatprep.subr.bf16.mxu0 0
      %6533 = vmatpush1.bf16.msra.mxu0 %v5830
      %6534 = vmatprep.subr.bf16.mxu0 0
      %6535 = vmatpush1.bf16.msra.mxu0 %v5831
      %6536 = vmatprep.subr.bf16.mxu0 0
      %6537 = vmatpush1.bf16.msra.mxu0 %v5832
      %6538 = vmatprep.mubr.bf16.mxu0 %v6220
      %6539 = vmatmul.mubr.bf16.gmra.mrb[0].mxu0 %v6219
      %v6540 = vpop.f32.mrb[0].mxu0
      %v6541 = vadd.f32 %v6380, %v6540
      %v6542 = vpop.f32.mrb[0].mxu0
      %v6543 = vpop.f32.mrb[0].mxu0
      %v6544 = vadd.f32 %v6383, %v6543
      %v6545 = vpop.f32.mrb[0].mxu0
      %6546 = vmatprep.mubr.bf16.mxu0 %v6224
      %6547 = vmatmul.mubr.bf16.gmra.mrb[0].mxu0 %v6223
      %v6548 = vpop.f32.mrb[0].mxu0
      %v6549 = vadd.f32 %v6388, %v6548
      %v6550 = vpop.f32.mrb[0].mxu0
      %v6551 = vpop.f32.mrb[0].mxu0
      %v6552 = vadd.f32 %v6391, %v6551
      %v6553 = vpop.f32.mrb[0].mxu0
      %6554 = vmatprep.mubr.bf16.mxu0 %v6228
      %6555 = vmatmul.mubr.bf16.gmra.mrb[0].mxu0 %v6227
      %v6556 = vpop.f32.mrb[0].mxu0
      %v6557 = vadd.f32 %v6396, %v6556
      %v6558 = vpop.f32.mrb[0].mxu0
      %v6559 = vpop.f32.mrb[0].mxu0
      %v6560 = vadd.f32 %v6399, %v6559
      %v6561 = vpop.f32.mrb[0].mxu0
      %6562 = vmatprep.mubr.bf16.mxu0 %v6232
      %6563 = vmatmul.mubr.bf16.gmra.mrb[0].mxu0 %v6231
      %v6564 = vpop.f32.mrb[0].mxu0
      %v6565 = vadd.f32 %v6404, %v6564
      %v6566 = vpop.f32.mrb[0].mxu0
      %v6567 = vpop.f32.mrb[0].mxu0
      %v6568 = vadd.f32 %v6407, %v6567
      %v6569 = vpop.f32.mrb[0].mxu0
      %6570 = vmatprep.mubr.bf16.mxu0 %v6236
      %6571 = vmatmul.mubr.bf16.gmra.mrb[0].mxu0 %v6235
      %v6572 = vpop.f32.mrb[0].mxu0
      %v6573 = vadd.f32 %v6412, %v6572
      %v6574 = vpop.f32.mrb[0].mxu0
      %v6575 = vpop.f32.mrb[0].mxu0
      %v6576 = vadd.f32 %v6415, %v6575
      %v6577 = vpop.f32.mrb[0].mxu0
      %6578 = vmatprep.mubr.bf16.mxu0 %v6240
      %6579 = vmatmul.mubr.bf16.gmra.mrb[0].mxu0 %v6239
      %v6580 = vpop.f32.mrb[0].mxu0
      %v6581 = vadd.f32 %v6420, %v6580
      %v6582 = vpop.f32.mrb[0].mxu0
      %v6583 = vpop.f32.mrb[0].mxu0
      %v6584 = vadd.f32 %v6423, %v6583
      %v6585 = vpop.f32.mrb[0].mxu0
      %6586 = vmatprep.mubr.bf16.mxu0 %v6244
      %6587 = vmatmul.mubr.bf16.gmra.mrb[0].mxu0 %v6243
      %v6588 = vpop.f32.mrb[0].mxu0
      %v6589 = vadd.f32 %v6428, %v6588
      %v6590 = vpop.f32.mrb[0].mxu0
      %v6591 = vpop.f32.mrb[0].mxu0
      %v6592 = vadd.f32 %v6431, %v6591
      %v6593 = vpop.f32.mrb[0].mxu0
      %6594 = vmatprep.mubr.bf16.mxu0 %v6248
      %6595 = vmatmul.mubr.bf16.gmra.mrb[0].mxu0 %v6247
      %v6596 = vpop.f32.mrb[0].mxu0
      %v6597 = vadd.f32 %v6436, %v6596
      %v6598 = vpop.f32.mrb[0].mxu0
      %v6599 = vpop.f32.mrb[0].mxu0
      %v6600 = vadd.f32 %v6439, %v6599
      %v6601 = vpop.f32.mrb[0].mxu0
      %6602 = vmatprep.mubr.bf16.mxu0 %v6252
      %6603 = vmatmul.mubr.bf16.gmra.mrb[0].mxu0 %v6251
      %v6604 = vpop.f32.mrb[0].mxu0
      %v6605 = vadd.f32 %v6444, %v6604
      %v6606 = vpop.f32.mrb[0].mxu0
      %v6607 = vpop.f32.mrb[0].mxu0
      %v6608 = vadd.f32 %v6447, %v6607
      %v6609 = vpop.f32.mrb[0].mxu0
      %6610 = vmatprep.mubr.bf16.mxu0 %v6256
      %6611 = vmatmul.mubr.bf16.gmra.mrb[0].mxu0 %v6255
      %v6612 = vpop.f32.mrb[0].mxu0
      %v6613 = vadd.f32 %v6452, %v6612
      %v6614 = vpop.f32.mrb[0].mxu0
      %v6615 = vpop.f32.mrb[0].mxu0
      %v6616 = vadd.f32 %v6455, %v6615
      %v6617 = vpop.f32.mrb[0].mxu0
      %6618 = vmatprep.mubr.bf16.mxu0 %v6260
      %6619 = vmatmul.mubr.bf16.gmra.mrb[0].mxu0 %v6259
      %v6620 = vpop.f32.mrb[0].mxu0
      %v6621 = vadd.f32 %v6460, %v6620
      %v6622 = vpop.f32.mrb[0].mxu0
      %v6623 = vpop.f32.mrb[0].mxu0
      %v6624 = vadd.f32 %v6463, %v6623
      %v6625 = vpop.f32.mrb[0].mxu0
      %6626 = vmatprep.mubr.bf16.mxu0 %v6264
      %6627 = vmatmul.mubr.bf16.gmra.mrb[0].mxu0 %v6263
      %v6628 = vpop.f32.mrb[0].mxu0
      %v6629 = vadd.f32 %v6468, %v6628
      %v6630 = vpop.f32.mrb[0].mxu0
      %v6631 = vpop.f32.mrb[0].mxu0
      %v6632 = vadd.f32 %v6471, %v6631
      %v6633 = vpop.f32.mrb[0].mxu0
      %6634 = vmatprep.mubr.bf16.mxu0 %v6268
      %6635 = vmatmul.mubr.bf16.gmra.mrb[0].mxu0 %v6267
      %v6636 = vpop.f32.mrb[0].mxu0
      %v6637 = vadd.f32 %v6476, %v6636
      %v6638 = vpop.f32.mrb[0].mxu0
      %v6639 = vpop.f32.mrb[0].mxu0
      %v6640 = vadd.f32 %v6479, %v6639
      %v6641 = vpop.f32.mrb[0].mxu0
      %6642 = vmatprep.mubr.bf16.mxu0 %v6272
      %6643 = vmatmul.mubr.bf16.gmra.mrb[0].mxu0 %v6271
      %v6644 = vpop.f32.mrb[0].mxu0
      %v6645 = vadd.f32 %v6484, %v6644
      %v6646 = vpop.f32.mrb[0].mxu0
      %v6647 = vpop.f32.mrb[0].mxu0
      %v6648 = vadd.f32 %v6487, %v6647
      %v6649 = vpop.f32.mrb[0].mxu0
      %6650 = vmatprep.mubr.bf16.mxu0 %v6276
      %6651 = vmatmul.mubr.bf16.gmra.mrb[0].mxu0 %v6275
      %v6652 = vpop.f32.mrb[0].mxu0
      %v6653 = vadd.f32 %v6492, %v6652
      %v6654 = vpop.f32.mrb[0].mxu0
      %v6655 = vpop.f32.mrb[0].mxu0
      %v6656 = vadd.f32 %v6495, %v6655
      %v6657 = vpop.f32.mrb[0].mxu0
      %6658 = vmatprep.mubr.bf16.mxu0 %v6280
      %6659 = vmatmul.mubr.bf16.gmra.mrb[0].mxu0 %v6279
      %v6660 = vpop.f32.mrb[0].mxu0
      %v6661 = vadd.f32 %v6500, %v6660
      %v6662 = vpop.f32.mrb[0].mxu0
      %v6663 = vpop.f32.mrb[0].mxu0
      %v6664 = vadd.f32 %v6503, %v6663
      %v6665 = vpop.f32.mrb[0].mxu0
      %6666 = vdwg.mxu0
      %v6667 = vmax.f32 %v6541, 0.0
      %v6668 = vmax.f32 %v6544, 0.0
      %v6669 = vmax.f32 %v6549, 0.0
      %v6670 = vmax.f32 %v6552, 0.0
      %v6671 = vmax.f32 %v6557, 0.0
      %v6672 = vmax.f32 %v6560, 0.0
      %v6673 = vmax.f32 %v6565, 0.0
      %v6674 = vmax.f32 %v6568, 0.0
      %v6675 = vmax.f32 %v6573, 0.0
      %v6676 = vmax.f32 %v6576, 0.0
      %v6677 = vmax.f32 %v6581, 0.0
      %v6678 = vmax.f32 %v6584, 0.0
      %v6679 = vmax.f32 %v6589, 0.0
      %v6680 = vmax.f32 %v6592, 0.0
      %v6681 = vmax.f32 %v6597, 0.0
      %v6682 = vmax.f32 %v6600, 0.0
      %v6683 = vmax.f32 %v6605, 0.0
      %v6684 = vmax.f32 %v6608, 0.0
      %v6685 = vmax.f32 %v6613, 0.0
      %v6686 = vmax.f32 %v6616, 0.0
      %v6687 = vmax.f32 %v6621, 0.0
      %v6688 = vmax.f32 %v6624, 0.0
      %v6689 = vmax.f32 %v6629, 0.0
      %v6690 = vmax.f32 %v6632, 0.0
      %v6691 = vmax.f32 %v6637, 0.0
      %v6692 = vmax.f32 %v6640, 0.0
      %v6693 = vmax.f32 %v6645, 0.0
      %v6694 = vmax.f32 %v6648, 0.0
      %v6695 = vmax.f32 %v6653, 0.0
      %v6696 = vmax.f32 %v6656, 0.0
      %v6697 = vmax.f32 %v6661, 0.0
      %v6698 = vmax.f32 %v6664, 0.0
      %v6699 = vld [vmem:[%s15] sm:$0xff]
      %v6700 = vld [vmem:[%s15 + $0x8] sm:$0xff]
      %v6701 = vld [vmem:[%s15 + $0x10] sm:$0xff]
      %v6702 = vld [vmem:[%s15 + $0x18] sm:$0xff]
      %v6703 = vld [vmem:[%s15 + $0x20] sm:$0xff]
      %v6704 = vld [vmem:[%s15 + $0x28] sm:$0xff]
      %v6705 = vld [vmem:[%s15 + $0x30] sm:$0xff]
      %v6706 = vld [vmem:[%s15 + $0x38] sm:$0xff]
      %v6707 = vpack.c.bf16 %v6668, %v6667
      %v6708 = vpack.c.bf16 %v6670, %v6669
      %v6709 = vpack.c.bf16 %v6672, %v6671
      %v6710 = vpack.c.bf16 %v6674, %v6673
      %v6711 = vpack.c.bf16 %v6676, %v6675
      %v6712 = vpack.c.bf16 %v6678, %v6677
      %v6713 = vpack.c.bf16 %v6680, %v6679
      %v6714 = vpack.c.bf16 %v6682, %v6681
      %v6715 = vpack.c.bf16 %v6684, %v6683
      %v6716 = vpack.c.bf16 %v6686, %v6685
      %v6717 = vpack.c.bf16 %v6688, %v6687
      %v6718 = vpack.c.bf16 %v6690, %v6689
      %v6719 = vpack.c.bf16 %v6692, %v6691
      %v6720 = vpack.c.bf16 %v6694, %v6693
      %v6721 = vpack.c.bf16 %v6696, %v6695
      %v6722 = vpack.c.bf16 %v6698, %v6697
      %v6723 = vld [vmem:[%s16] sm:$0xff]
      %v6724 = vld [vmem:[%s16 + $0x8] sm:$0xff]
      %v6725 = vld [vmem:[%s16 + $0x10] sm:$0xff]
      %v6726 = vld [vmem:[%s16 + $0x18] sm:$0xff]
      %v6727 = vld [vmem:[%s16 + $0x20] sm:$0xff]
      %v6728 = vld [vmem:[%s16 + $0x28] sm:$0xff]
      %v6729 = vld [vmem:[%s16 + $0x30] sm:$0xff]
      %v6730 = vld [vmem:[%s16 + $0x38] sm:$0xff]
      %6732 = vset.pattern.permute.xlu0 0
      %6733 = vperm.xlu0 %6732, %v6723
      %v6734 = vpop.permute.xlu0 %6733
      %6737 = vset.pattern.permute.xlu0 0
      %6738 = vperm.xlu0 %6737, %v6724
      %v6739 = vpop.permute.xlu0 %6738
      %6742 = vset.pattern.permute.xlu0 0
      %6743 = vperm.xlu0 %6742, %v6725
      %v6744 = vpop.permute.xlu0 %6743
      %6747 = vset.pattern.permute.xlu0 0
      %6748 = vperm.xlu0 %6747, %v6726
      %v6749 = vpop.permute.xlu0 %6748
      %6752 = vset.pattern.permute.xlu0 0
      %6753 = vperm.xlu0 %6752, %v6727
      %v6754 = vpop.permute.xlu0 %6753
      %6757 = vset.pattern.permute.xlu0 0
      %6758 = vperm.xlu0 %6757, %v6728
      %v6759 = vpop.permute.xlu0 %6758
      %6762 = vset.pattern.permute.xlu0 0
      %6763 = vperm.xlu0 %6762, %v6729
      %v6764 = vpop.permute.xlu0 %6763
      %6767 = vset.pattern.permute.xlu0 0
      %6768 = vperm.xlu0 %6767, %v6730
      %v6769 = vpop.permute.xlu0 %6768
      %v6779 = vunpack.c.l.b16 %v6699
      %v6780 = vunpack.c.h.b16 %v6699
      %v6781 = vunpack.c.l.b16 %v6700
      %v6782 = vunpack.c.h.b16 %v6700
      %v6783 = vunpack.c.l.b16 %v6701
      %v6784 = vunpack.c.h.b16 %v6701
      %v6785 = vunpack.c.l.b16 %v6702
      %v6786 = vunpack.c.h.b16 %v6702
      %v6787 = vunpack.c.l.b16 %v6703
      %v6788 = vunpack.c.h.b16 %v6703
      %v6789 = vunpack.c.l.b16 %v6704
      %v6790 = vunpack.c.h.b16 %v6704
      %v6791 = vunpack.c.l.b16 %v6705
      %v6792 = vunpack.c.h.b16 %v6705
      %v6793 = vunpack.c.l.b16 %v6706
      %v6794 = vunpack.c.h.b16 %v6706
      %v6795 = vpack.c.b16 %v6781, %v6779
      %v6796 = vpack.c.b16 %v6782, %v6780
      %v6797 = vpack.c.b16 %v6785, %v6783
      %v6798 = vpack.c.b16 %v6786, %v6784
      %v6799 = vpack.c.b16 %v6789, %v6787
      %v6800 = vpack.c.b16 %v6790, %v6788
      %v6801 = vpack.c.b16 %v6793, %v6791
      %v6802 = vpack.c.b16 %v6794, %v6792
      %6811 = vmatprep.subr.bf16.mxu0 0
      %6812 = vmatpush1.bf16.msra.mxu0 %v6707
      %6813 = vmatprep.subr.bf16.mxu0 0
      %6814 = vmatpush1.bf16.msra.mxu0 %v6708
      %6815 = vmatprep.subr.bf16.mxu0 0
      %6816 = vmatpush1.bf16.msra.mxu0 %v6709
      %6817 = vmatprep.subr.bf16.mxu0 0
      %6818 = vmatpush1.bf16.msra.mxu0 %v6710
      %6819 = vmatprep.subr.bf16.mxu0 0
      %6820 = vmatpush1.bf16.msra.mxu0 %v6711
      %6821 = vmatprep.subr.bf16.mxu0 0
      %6822 = vmatpush1.bf16.msra.mxu0 %v6712
      %6823 = vmatprep.subr.bf16.mxu0 0
      %6824 = vmatpush1.bf16.msra.mxu0 %v6713
      %6825 = vmatprep.subr.bf16.mxu0 0
      %6826 = vmatpush1.bf16.msra.mxu0 %v6714
      %6827 = vmatprep.subr.bf16.mxu0 0
      %6828 = vmatpush1.bf16.msra.mxu0 %v6715
      %6829 = vmatprep.subr.bf16.mxu0 0
      %6830 = vmatpush1.bf16.msra.mxu0 %v6716
      %6831 = vmatprep.subr.bf16.mxu0 0
      %6832 = vmatpush1.bf16.msra.mxu0 %v6717
      %6833 = vmatprep.subr.bf16.mxu0 0
      %6834 = vmatpush1.bf16.msra.mxu0 %v6718
      %6835 = vmatprep.subr.bf16.mxu0 0
      %6836 = vmatpush1.bf16.msra.mxu0 %v6719
      %6837 = vmatprep.subr.bf16.mxu0 0
      %6838 = vmatpush1.bf16.msra.mxu0 %v6720
      %6839 = vmatprep.subr.bf16.mxu0 0
      %6840 = vmatpush1.bf16.msra.mxu0 %v6721
      %6841 = vmatprep.subr.bf16.mxu0 0
      %6842 = vmatpush1.bf16.msra.mxu0 %v6722
      %6843 = vmatprep.mubr.bf16.mxu0 %v6796
      %6844 = vmatmul.mubr.bf16.gmra.mrb[0].mxu0 %v6795
      %v6845 = vpop.f32.mrb[0].mxu0
      %v6846 = vadd.f32 %v6734, %v6845
      %v6847 = vpop.f32.mrb[0].mxu0
      %v6848 = vpop.f32.mrb[0].mxu0
      %v6849 = vadd.f32 %v6739, %v6848
      %v6850 = vpop.f32.mrb[0].mxu0
      %6851 = vmatprep.mubr.bf16.mxu0 %v6798
      %6852 = vmatmul.mubr.bf16.gmra.mrb[0].mxu0 %v6797
      %v6853 = vpop.f32.mrb[0].mxu0
      %v6854 = vadd.f32 %v6744, %v6853
      %v6855 = vpop.f32.mrb[0].mxu0
      %v6856 = vpop.f32.mrb[0].mxu0
      %v6857 = vadd.f32 %v6749, %v6856
      %v6858 = vpop.f32.mrb[0].mxu0
      %6859 = vmatprep.mubr.bf16.mxu0 %v6800
      %6860 = vmatmul.mubr.bf16.gmra.mrb[0].mxu0 %v6799
      %v6861 = vpop.f32.mrb[0].mxu0
      %v6862 = vadd.f32 %v6754, %v6861
      %v6863 = vpop.f32.mrb[0].mxu0
      %v6864 = vpop.f32.mrb[0].mxu0
      %v6865 = vadd.f32 %v6759, %v6864
      %v6866 = vpop.f32.mrb[0].mxu0
      %6867 = vmatprep.mubr.bf16.mxu0 %v6802
      %6868 = vmatmul.mubr.bf16.gmra.mrb[0].mxu0 %v6801
      %v6869 = vpop.f32.mrb[0].mxu0
      %v6870 = vadd.f32 %v6764, %v6869
      %v6871 = vpop.f32.mrb[0].mxu0
      %v6872 = vpop.f32.mrb[0].mxu0
      %v6873 = vadd.f32 %v6769, %v6872
      %v6874 = vpop.f32.mrb[0].mxu0
      %6875 = vdwg.mxu0
      %v6876 = vmax.f32 %v6846, 0.0
      %v6877 = vmax.f32 %v6849, 0.0
      %v6878 = vmax.f32 %v6854, 0.0
      %v6879 = vmax.f32 %v6857, 0.0
      %v6880 = vmax.f32 %v6862, 0.0
      %v6881 = vmax.f32 %v6865, 0.0
      %v6882 = vmax.f32 %v6870, 0.0
      %v6883 = vmax.f32 %v6873, 0.0
      %v6884 = vld [vmem:[%s17] sm:$0x3]
      %v6885 = vpack.c.bf16 %v6877, %v6876
      %v6886 = vpack.c.bf16 %v6879, %v6878
      %v6887 = vpack.c.bf16 %v6881, %v6880
      %v6888 = vpack.c.bf16 %v6883, %v6882
      %v6889 = vld [vmem:[%s18] sm:$0x7]
      %6891 = vset.pattern.permute.xlu0 0
      %6892 = vperm.xlu0 %6891, %v6889
      %v6893 = vpop.permute.xlu0 %6892
      %v6896 = vsel %vm1782, %v6884, 0
      %6898 = vmatprep.subr.bf16.mxu0 0
      %6899 = vmatpush1.bf16.msra.mxu0 %v6885
      %6900 = vmatprep.subr.bf16.mxu0 0
      %6901 = vmatpush1.bf16.msra.mxu0 %v6886
      %6902 = vmatprep.subr.bf16.mxu0 0
      %6903 = vmatpush1.bf16.msra.mxu0 %v6887
      %6904 = vmatprep.subr.bf16.mxu0 0
      %6905 = vmatpush1.bf16.msra.mxu0 %v6888
      %6906 = vmatprep.subr.bf16.mxu0 0
      %6907 = vmatpush1.bf16.msra.mxu0 0
      %6908 = vmatprep.subr.bf16.mxu0 0
      %6909 = vmatpush1.bf16.msra.mxu0 0
      %6910 = vmatprep.subr.bf16.mxu0 0
      %6911 = vmatpush1.bf16.msra.mxu0 0
      %6912 = vmatprep.subr.bf16.mxu0 0
      %6913 = vmatpush1.bf16.msra.mxu0 0
      %6914 = vmatprep.subr.bf16.mxu0 0
      %6915 = vmatpush1.bf16.msra.mxu0 0
      %6916 = vmatprep.subr.bf16.mxu0 0
      %6917 = vmatpush1.bf16.msra.mxu0 0
      %6918 = vmatprep.subr.bf16.mxu0 0
      %6919 = vmatpush1.bf16.msra.mxu0 0
      %6920 = vmatprep.subr.bf16.mxu0 0
      %6921 = vmatpush1.bf16.msra.mxu0 0
      %6922 = vmatprep.subr.bf16.mxu0 0
      %6923 = vmatpush1.bf16.msra.mxu0 0
      %6924 = vmatprep.subr.bf16.mxu0 0
      %6925 = vmatpush1.bf16.msra.mxu0 0
      %6926 = vmatprep.subr.bf16.mxu0 0
      %6927 = vmatpush1.bf16.msra.mxu0 0
      %6928 = vmatprep.subr.bf16.mxu0 0
      %6929 = vmatpush1.bf16.msra.mxu0 0
      %6930 = vmatprep.mubr.bf16.mxu0 0
      %6931 = vmatmul.mubr.bf16.gmra.mrb[0].mxu0 %v6896
      %v6932 = vpop.f32.mrb[0].mxu0
      %v6933 = vadd.f32 %v6893, %v6932
      %v6934 = vpop.f32.mrb[0].mxu0
      %v6935 = vpop.f32.mrb[0].mxu0
      %v6936 = vpop.f32.mrb[0].mxu0
      %6937 = vdwg.mxu0
      %v6938 = vtanh.pop %v6933
      %v6939 = vmul.f32 %v6938, 0.1
      %v6940 = vadd.f32 %v733, %v6939
      %6941 = vst [vmem:[%s726] sm:$0x7] %v6940
      %v6942 = vld [vmem:[%s717] sm:$0xff]
      %v6943 = vld [vmem:[%s717 + $0x8] sm:$0xff]
      %v6944 = vld [vmem:[%s717 + $0x10] sm:$0xff]
      %v6945 = vld [vmem:[%s722] sm:$0xff]
      %v6946 = vld [vmem:[%s722 + $0x8] sm:$0xff]
      %v6947 = vld [vmem:[%s722 + $0x10] sm:$0xff]
      %6949 = vset.pattern.permute.xlu0 0
      %6950 = vperm.xlu0 %6949, %v6942
      %v6951 = vpop.permute.xlu0 %6950
      %6954 = vset.pattern.permute.xlu0 0
      %6955 = vperm.xlu0 %6954, %v6943
      %v6956 = vpop.permute.xlu0 %6955
      %6959 = vset.pattern.permute.xlu0 0
      %6960 = vperm.xlu0 %6959, %v6944
      %v6961 = vpop.permute.xlu0 %6960
      %v6963 = vlaneseq
      %v6964 = vshrl.u32 %v6963, 7
      %v6965 = vsub.s32 0, %v6964
      %v6966 = vrot.slane %v6940, %v6965
      %v6967 = vmul.f32 %v6951, %v6966
      %v6968 = vmul.f32 %v6956, %v6966
      %v6969 = vmul.f32 %v6961, %v6966
      %6970 = vset.pattern.permute.xlu0 1
      %6971 = vperm.xlu0 %6970, %v6942
      %v6972 = vpop.permute.xlu0 %6971
      %6974 = vset.pattern.permute.xlu0 1
      %6975 = vperm.xlu0 %6974, %v6943
      %v6976 = vpop.permute.xlu0 %6975
      %6978 = vset.pattern.permute.xlu0 1
      %6979 = vperm.xlu0 %6978, %v6944
      %v6980 = vpop.permute.xlu0 %6979
      %v6982 = vlaneseq
      %v6983 = vshrl.u32 %v6982, 7
      %v6984 = vsub.s32 1, %v6983
      %v6985 = vrot.slane %v6940, %v6984
      %v6986 = vmul.f32 %v6972, %v6985
      %v6987 = vmul.f32 %v6976, %v6985
      %v6988 = vmul.f32 %v6980, %v6985
      %v6989 = vadd.f32 %v6967, %v6986
      %v6990 = vadd.f32 %v6968, %v6987
      %v6991 = vadd.f32 %v6969, %v6988
      %6992 = vset.pattern.permute.xlu0 2
      %6993 = vperm.xlu0 %6992, %v6942
      %v6994 = vpop.permute.xlu0 %6993
      %6996 = vset.pattern.permute.xlu0 2
      %6997 = vperm.xlu0 %6996, %v6943
      %v6998 = vpop.permute.xlu0 %6997
      %7000 = vset.pattern.permute.xlu0 2
      %7001 = vperm.xlu0 %7000, %v6944
      %v7002 = vpop.permute.xlu0 %7001
      %v7004 = vlaneseq
      %v7005 = vshrl.u32 %v7004, 7
      %v7006 = vsub.s32 2, %v7005
      %v7007 = vrot.slane %v6940, %v7006
      %v7008 = vmul.f32 %v6994, %v7007
      %v7009 = vmul.f32 %v6998, %v7007
      %v7010 = vmul.f32 %v7002, %v7007
      %v7011 = vadd.f32 %v6989, %v7008
      %v7012 = vadd.f32 %v6990, %v7009
      %v7013 = vadd.f32 %v6991, %v7010
      %7015 = vset.pattern.permute.xlu0 0
      %7016 = vperm.xlu0 %7015, %v6945
      %v7017 = vpop.permute.xlu0 %7016
      %7020 = vset.pattern.permute.xlu0 0
      %7021 = vperm.xlu0 %7020, %v6946
      %v7022 = vpop.permute.xlu0 %7021
      %7025 = vset.pattern.permute.xlu0 0
      %7026 = vperm.xlu0 %7025, %v6947
      %v7027 = vpop.permute.xlu0 %7026
      %v7029 = vadd.f32 %v7011, %v7017
      %v7030 = vadd.f32 %v7012, %v7022
      %v7031 = vadd.f32 %v7013, %v7027
      %vm7032 = vcmp.ne.f32.partialorder %v7031, 0.0
      %v7033 = vsel %vm7032, %v7031, 1e-08
      %v7034 = vrcp.pop %v7033
      %v7035 = vmul.f32 %v7029, %v7034
      %7036 = vst [vmem:[%s731] sm:$0xff] %v7035
      %v7037 = vmul.f32 %v7030, %v7034
      %v7038 = vsub.f32 224.0, %v7037
      %7039 = vst [vmem:[%s731 + $0x8] sm:$0xff] %v7038
      %7040 = vst [vmem:[%s731 + $0x10] sm:$0xff] %v7033
      %p7041 = scmp.lt.s32.totalorder %s34, 1
      %s7042 = scalar_select %p7041, %s34, 1
      %s7043 = smul.addr %s7042, 4
      %s7044 = scalar_lea.vmem %s21, %s7043
      %p7045 = scmp.lt.s32.totalorder %s34, 1
      %s7046 = scalar_select %p7045, %s34, 1
      %s7047 = smul.addr %s7046, 3
      %s7048 = smul.addr %s7047, 8
      %s7049 = scalar_lea.vmem %s22, %s7048
      // Predicated region
      $region133: #{refine_forward.1} parent=103 // pred_check
        %p7050 = pneg %p508
      $region134: #{refine_forward.1} parent=103 // pred_check_branch
        %7052 = sbr.rel (%p7050) target = $region136
      $region135: #{refine_forward.1} parent=103 // pred_region
        _
      $region136: #{refine_forward.1} parent=103 // pred_fallthru
        _
      // Predicated region
      $region137: #{refine_forward.1} parent=103 // pred_check
        %p7053 = pneg %p534
      $region138: #{refine_forward.1} parent=103 // pred_check_branch
        %7055 = sbr.rel (%p7053) target = $region140
      $region139: #{refine_forward.1} parent=103 // pred_region
        _
      $region140: #{refine_forward.1} parent=103 // pred_fallthru
        _
    $region104: #{refine_forward.1} parent=5 // pred_fallthru
      _
    %p7056 = scmp.le.s32.totalorder 2, %s29
    // Predicated region
    $region141: #{refine_forward.1} parent=5 // pred_check
      %p7057 = pneg %p7056
    $region142: #{refine_forward.1} parent=5 // pred_check_branch
      %7059 = sbr.rel (%p7057) target = $region144
    $region143: #{refine_forward.1} parent=5 // pred_region
      %s7060 = ssub.s32 %s29, 2
      // Predicated region
      $region145: #{refine_forward.1} parent=143 // pred_check
        %p7061 = pneg %p514
      $region146: #{refine_forward.1} parent=143 // pred_check_branch
        %7063 = sbr.rel (%p7061) target = $region148
      $region147: #{refine_forward.1} parent=143 // pred_region
        %p7064 = scmp.lt.s32.totalorder %s35, 1
        %s7065 = scalar_select %p7064, %s35, 1
        %s7066 = smul.addr %s7065, 4
        %s7067 = scalar_lea.vmem %s21, %s7066
      $region148: #{refine_forward.1} parent=143 // pred_fallthru
        _
      // Predicated region
      $region149: #{refine_forward.1} parent=143 // pred_check
        %p7068 = pneg %p540
      $region150: #{refine_forward.1} parent=143 // pred_check_branch
        %7070 = sbr.rel (%p7068) target = $region152
      $region151: #{refine_forward.1} parent=143 // pred_region
        %p7071 = scmp.lt.s32.totalorder %s35, 1
        %s7072 = scalar_select %p7071, %s35, 1
        %s7073 = smul.addr %s7072, 3
        %s7074 = smul.addr %s7073, 8
        %s7075 = scalar_lea.vmem %s22, %s7074
      $region152: #{refine_forward.1} parent=143 // pred_fallthru
        _
    $region144: #{refine_forward.1} parent=5 // pred_fallthru
      _
  $region6: #{refine_forward.1} parent=0 // loop_footer
    %s33 = sadd.s32 1, %s29
  $region7: #{refine_forward.1} parent=0 // loop_footer_branch
    %28 = sbr.rel target = $region3
  $region8: #{refine_forward.1} parent=0 // loop_exit
    _

</llo_original>
